<compile_context>
chip_gen: v7x
topology: tpu7x:2x2x1
jax: 0.10.0
libtpu: 0.0.40
codegen_flags: <defaults>
</compile_context>

<pallas_src>
import jax
import jax.numpy as jnp
from jax import lax
from jax.experimental import pallas as pl
from jax.experimental.pallas import tpu as pltpu


_PARAM_ORDER = ['sWq', 'sWk', 'sWv', 'sbq', 'sbk', 'sbv', 'sWo', 'sbo', 'g1', 'b1',
                'cWq', 'cWk', 'cWv', 'cbq', 'cbk', 'cbv', 'cWo', 'cbo', 'g2', 'b2',
                'W1', 'bf1', 'W2', 'bf2', 'g3', 'b3']
_MATMUL_WEIGHTS = {'sWq', 'sWk', 'sWv', 'sWo', 'cWq', 'cWk', 'cWv', 'cWo', 'W1', 'W2'}


# ---------------------------------------------------------------------------
# Pallas kernel: one full DecoderLayer for a block of batch elements.
# ---------------------------------------------------------------------------
def _make_decoder_layer_kernel(heads_num: int, d_k: int, eps: float):
    def kernel(tgt_ref, src_ref, bself_ref, bcross_ref,
               # self-attention weights (Wq pre-scaled by 1/sqrt(d_k))
               sWq, sWk, sWv, sbq, sbk, sbv, sWo, sbo, g1, b1,
               # src-tgt (cross) attention weights
               cWq, cWk, cWv, cbq, cbk, cbv, cWo, cbo, g2, b2,
               # FFN weights
               W1, bf1, W2, bf2, g3, b3,
               out_ref,
               ctx_sc):
        Bb, St, D = tgt_ref.shape
        Ss = src_ref.shape[1]
        Rt = Bb * St

        # Row-fold the batch block: projections / FFN / LN see (Bb*S, D) rows.
        xb = tgt_ref[...].reshape(Rt, D)              # bf16 (matmul input)
        xf = xb.astype(jnp.float32)                   # f32 residual
        sb = src_ref[...].reshape(Bb * Ss, D)         # bf16 (cross K/V input)

        def layer_norm(v, g_ref, b_ref):              # f32 math
            mu = jnp.mean(v, axis=-1, keepdims=True)
            var = jnp.mean((v - mu) ** 2, axis=-1, keepdims=True)
            return (v - mu) * lax.rsqrt(var + eps) * g_ref[...] + b_ref[...]

        def mha(q_bf, kv_bf, Sq, Sk, bias_ref,
                Wq_r, Wk_r, Wv_r, bq_r, bk_r, bv_r, Wo_r, bo_r):
            bias = bias_ref[...].astype(jnp.float32)  # hoisted out of head loop
            # Row-folded projections (bf16 in / f32 acc); cast to bf16
            # immediately so no f32 Q/K/V stays live across the head loop.
            # NOTE: 1/sqrt(d_k) is already folded into Wq_r / bq_r.
            Q = (jnp.dot(q_bf, Wq_r[...], preferred_element_type=jnp.float32)
                 + bq_r[...]).astype(jnp.bfloat16).reshape(Bb, Sq, D)
            K = (jnp.dot(kv_bf, Wk_r[...], preferred_element_type=jnp.float32)
                 + bk_r[...]).astype(jnp.bfloat16).reshape(Bb, Sk, D)
            V = (jnp.dot(kv_bf, Wv_r[...], preferred_element_type=jnp.float32)
                 + bv_r[...]).astype(jnp.bfloat16).reshape(Bb, Sk, D)

            # TODO(synk): when d_k < 128 the per-head lane slices below relayout
            # through the XLU; a head-major einshape rearrangement would avoid it.
            for h in range(heads_num):                # static -> unrolled
                lo = h * d_k
                s = jnp.einsum('bqd,bkd->bqk',
                               Q[:, :, lo:lo + d_k], K[:, :, lo:lo + d_k],
                               preferred_element_type=jnp.float32) + bias
                s = s - jnp.max(s, axis=-1, keepdims=True)
                p = jnp.exp(s)
                p = p * pl.reciprocal(jnp.sum(p, axis=-1, keepdims=True),
                                      approx=True)
                ctx = jnp.einsum('bqk,bkd->bqd',
                                 p.astype(jnp.bfloat16), V[:, :, lo:lo + d_k],
                                 preferred_element_type=jnp.float32)
                # Write the head context into the scratch at its lane offset;
                # single full-depth Wo matmul happens after the loop.
                ctx_sc[:, lo:lo + d_k] = (
                    ctx.reshape(Bb * Sq, d_k).astype(jnp.bfloat16))
            return (jnp.dot(ctx_sc[...], Wo_r[...],
                            preferred_element_type=jnp.float32) + bo_r[...])

        # 1) self-attention + residual + LayerNorm (dropout == identity)
        t1 = layer_norm(xf + mha(xb, xb, St, St, bself_ref,
                                 sWq, sWk, sWv, sbq, sbk, sbv, sWo, sbo),
                        g1, b1)
        # 2) src-tgt attention + residual + LayerNorm
        t2 = layer_norm(t1 + mha(t1.astype(jnp.bfloat16), sb, St, Ss, bcross_ref,
                                 cWq, cWk, cWv, cbq, cbk, cbv, cWo, cbo),
                        g2, b2)
        # 3) FFN (Linear -> ReLU -> Linear) + residual + LayerNorm
        hdn = jnp.maximum(
            jnp.dot(t2.astype(jnp.bfloat16), W1[...],
                    preferred_element_type=jnp.float32) + bf1[...], 0.0)
        ffn = jnp.dot(hdn.astype(jnp.bfloat16), W2[...],
                      preferred_element_type=jnp.float32) + bf2[...]
        out_ref[...] = layer_norm(ffn + t2, g3, b3).reshape(Bb, St, D).astype(
            jnp.bfloat16)

    return kernel


# ---------------------------------------------------------------------------
# VMEM planning / block sizing
# ---------------------------------------------------------------------------
def _vmem_plan():
    cap = 64 << 20
    try:
        info = pltpu.get_tpu_info()
        cap = int(getattr(info, "vmem_capacity_bytes", cap))
    except Exception:
        pass
    limit = max(32 << 20, min(int(cap * 0.85), 112 << 20))
    target_rows = 512 if cap >= (100 << 20) else 256
    return limit, target_rows


def _layer_weight_bytes(D, d_ff):
    # bf16 matmul weights (single-buffered) + small f32 bias / LN params.
    return (8 * D * D + 2 * D * d_ff) * 2 + (15 * D + d_ff) * 4


def _act_bytes(b_blk, St, Ss, D, d_ff):
    Rt, Rs = b_blk * St, b_blk * Ss
    Rm = max(Rt, Rs)
    byt = 0
    byt += 2 * Rt * D * 2 * 2                      # tgt in + out (bf16, dbl-buf)
    byt += 2 * Rs * D * 2                          # src in (bf16, dbl-buf)
    byt += 2 * b_blk * St * (St + Ss) * 2          # biases (bf16, dbl-buf)
    byt += Rt * D * 2                              # ctx scratch (bf16)
    byt += 3 * Rm * D * 2                          # Q/K/V (bf16)
    byt += 3 * Rt * D * 4                          # residual / t1 / t2 (f32)
    byt += Rt * d_ff * 4 + Rt * d_ff * 2           # FFN hidden f32 + bf16
    byt += 2 * b_blk * St * max(St, Ss) * 4        # scores + probs (one head)
    return byt


def _pick_b_blk(B, St, Ss, D, d_ff, target_rows, act_budget):
    best = 1
    for d in range(1, B + 1):
        if B % d:
            continue
        if d * St > max(target_rows, St):
            continue
        if _act_bytes(d, St, Ss, D, d_ff) > act_budget:
            continue
        best = d
    return best


# ---------------------------------------------------------------------------
# pallas_call wrapper for one DecoderLayer
# ---------------------------------------------------------------------------
def decoder_layer_pallas(tgt, src, bias_self, bias_cross, weights, kernel,
                         b_blk, vmem_limit_bytes, single_buffer=True):
    B, St, D = tgt.shape
    Ss = src.shape[1]

    data_specs = [
        pl.BlockSpec((b_blk, St, D), lambda b: (b, 0, 0)),
        pl.BlockSpec((b_blk, Ss, D), lambda b: (b, 0, 0)),
        pl.BlockSpec((b_blk, St, St), lambda b: (b, 0, 0)),
        pl.BlockSpec((b_blk, St, Ss), lambda b: (b, 0, 0)),
    ]

    def wspec(shape):
        idx = lambda b, n=len(shape): (0,) * n
        if single_buffer:
            try:
                # Block index never changes across the grid -> single buffer.
                return pl.BlockSpec(shape, idx, pipeline_mode=pl.Buffered(1))
            except TypeError:
                pass
        return pl.BlockSpec(shape, idx)

    weight_specs = [wspec(w.shape) for w in weights]

    return pl.pallas_call(
        kernel,
        out_shape=jax.ShapeDtypeStruct((B, St, D), jnp.bfloat16),
        grid=(B // b_blk,),
        in_specs=data_specs + weight_specs,
        out_specs=pl.BlockSpec((b_blk, St, D), lambda b: (b, 0, 0)),
        scratch_shapes=[pltpu.VMEM((b_blk * St, D), jnp.bfloat16)],
        compiler_params=pltpu.CompilerParams(
            dimension_semantics=("parallel",),
            vmem_limit_bytes=int(vmem_limit_bytes)),
    )(tgt, src, bias_self, bias_cross, *weights)


# ---------------------------------------------------------------------------
# Parameter preparation (done ONCE, not per forward): bf16 matmul weights,
# 1/sqrt(d_k) folded into Wq / bq; biases & LayerNorm params stay f32.
# ---------------------------------------------------------------------------
def prepare_layer_weights(lp, heads_num, d_model):
    scale = 1.0 / ((d_model // heads_num) ** 0.5)
    out = {}
    for n in _PARAM_ORDER:
        w = lp[n]
        if n in ('sWq', 'cWq'):
            out[n] = (w * scale).astype(jnp.bfloat16)
        elif n in ('sbq', 'cbq'):
            out[n] = (w * scale).astype(jnp.float32)
        elif n in _MATMUL_WEIGHTS:
            out[n] = w.astype(jnp.bfloat16)
        else:
            out[n] = w.astype(jnp.float32)
    return out


# ---------------------------------------------------------------------------
# Glue: embedding lookup + positional encoding + layer stack
# ---------------------------------------------------------------------------
def sinusoidal_pe(max_len, d_model):
    pos = jnp.arange(max_len, dtype=jnp.float32)[:, None]
    i = jnp.arange(d_model)[None, :]
    rates = jnp.power(10000.0, -(2 * (i // 2)).astype(jnp.float32) / d_model)
    ang = pos * rates
    return jnp.where(i % 2 == 0, jnp.sin(ang), jnp.cos(ang)).astype(jnp.float32)


def decoder_forward(tgt_ids, src, mask_src_tgt, mask_self, params, heads_num, eps):
    # matches PyTorch Decoder.forward(tgt, src, mask_src_tgt, mask_self)
    # TODO(synk): the token-id embedding gather + PE add stay in plain JAX
    # (data-dependent gather has no clean BlockSpec form at this scale).
    x = params['embedding'][tgt_ids]                              # (B, St, D)
    x = x + params['pe'][: tgt_ids.shape[1]][None, :, :]          # pos encoding
    B, St, D = x.shape
    Ss = src.shape[1]
    d_ff = params['layers'][0]['W1'].shape[1]
    assert D % heads_num == 0, "d_model must be divisible by heads_num"
    assert St % 8 == 0 and Ss % 8 == 0, "sequence lengths must be multiples of 8"

    # mask -> additive bias, computed once for all layers / grid steps (bf16).
    bias_self = jnp.where(mask_self > 0, 0.0, -1e9).astype(jnp.bfloat16)
    bias_cross = jnp.where(mask_src_tgt > 0, 0.0, -1e9).astype(jnp.bfloat16)

    prepped = [prepare_layer_weights(lp, heads_num, D) for lp in params['layers']]

    vmem_limit, target_rows = _vmem_plan()
    act_budget = max(vmem_limit - _layer_weight_bytes(D, d_ff) - (2 << 20), 1)
    b_blk = _pick_b_blk(B, St, Ss, D, d_ff, target_rows, act_budget)
    assert B % b_blk == 0

    kernel = _make_decoder_layer_kernel(heads_num, D // heads_num, eps)

    x = x.astype(jnp.bfloat16)          # inter-layer activations travel bf16
    src_b = src.astype(jnp.bfloat16)

    single_buffer = True
    for li, wdict in enumerate(prepped):
        wlist = [wdict[n] for n in _PARAM_ORDER]
        if li == 0:
            try:
                x = decoder_layer_pallas(x, src_b, bias_self, bias_cross, wlist,
                                         kernel, b_blk, vmem_limit, True)
            except Exception:
                # Fallback if single-buffered weight specs are unsupported.
                single_buffer = False
                x = decoder_layer_pallas(x, src_b, bias_self, bias_cross, wlist,
                                         kernel, b_blk, vmem_limit, False)
        else:
            x = decoder_layer_pallas(x, src_b, bias_self, bias_cross, wlist,
                                     kernel, b_blk, vmem_limit, single_buffer)
    return x.astype(jnp.float32)


# ---------------------------------------------------------------------------
# Deterministic parameter init (shapes follow the module __init__)
# ---------------------------------------------------------------------------
def _linear_init(key, fan_in, fan_out):
    kw, kb = jax.random.split(key)
    bound = 1.0 / (fan_in ** 0.5)
    W = jax.random.uniform(kw, (fan_in, fan_out), jnp.float32, -bound, bound)
    b = jax.random.uniform(kb, (1, fan_out), jnp.float32, -bound, bound)
    return W, b


def init_layer_params(key, d_model, d_ff):
    ks = jax.random.split(key, 10)
    p = {}
    p['sWq'], p['sbq'] = _linear_init(ks[0], d_model, d_model)
    p['sWk'], p['sbk'] = _linear_init(ks[1], d_model, d_model)
    p['sWv'], p['sbv'] = _linear_init(ks[2], d_model, d_model)
    p['sWo'], p['sbo'] = _linear_init(ks[3], d_model, d_model)
    p['g1'] = jnp.ones((1, d_model), jnp.float32)
    p['b1'] = jnp.zeros((1, d_model), jnp.float32)
    p['cWq'], p['cbq'] = _linear_init(ks[4], d_model, d_model)
    p['cWk'], p['cbk'] = _linear_init(ks[5], d_model, d_model)
    p['cWv'], p['cbv'] = _linear_init(ks[6], d_model, d_model)
    p['cWo'], p['cbo'] = _linear_init(ks[7], d_model, d_model)
    p['g2'] = jnp.ones((1, d_model), jnp.float32)
    p['b2'] = jnp.zeros((1, d_model), jnp.float32)
    p['W1'], p['bf1'] = _linear_init(ks[8], d_model, d_ff)
    p['W2'], p['bf2'] = _linear_init(ks[9], d_ff, d_model)
    p['g3'] = jnp.ones((1, d_model), jnp.float32)
    p['b3'] = jnp.zeros((1, d_model), jnp.float32)
    return p


def init_decoder_params(key, tgt_vocab_size, max_len, pad_idx, d_model, N, d_ff):
    kemb, *klayers = jax.random.split(key, N + 1)
    emb = jax.random.normal(kemb, (tgt_vocab_size, d_model), jnp.float32) * 0.02
    emb = emb.at[pad_idx].set(0.0)   # padding_idx row is zero
    return {
        'embedding': emb,
        'pe': sinusoidal_pe(max_len, d_model),
        'layers': [init_layer_params(k, d_model, d_ff) for k in klayers],
    }


# ---------------------------------------------------------------------------
# Pure-JAX reference with the SAME precision policy (same prepared bf16
# weights, f32 accumulation / softmax / LayerNorm, bf16 inter-layer acts).
# ---------------------------------------------------------------------------
def _ref_layer(xb, src_b, bias_self, bias_cross, p, H, eps):
    f32, bf = jnp.float32, jnp.bfloat16
    B, St, D = xb.shape
    dk = D // H

    def ln(v, g, b):
        mu = v.mean(-1, keepdims=True)
        var = ((v - mu) ** 2).mean(-1, keepdims=True)
        return (v - mu) * lax.rsqrt(var + eps) * g + b

    def mha(q_bf, kv_bf, bias, Wq, Wk, Wv, bq, bk, bv, Wo, bo):
        Sq, Sk = q_bf.shape[1], kv_bf.shape[1]
        Q = jnp.dot(q_bf, Wq, preferred_element_type=f32) + bq
        K = jnp.dot(kv_bf, Wk, preferred_element_type=f32) + bk
        V = jnp.dot(kv_bf, Wv, preferred_element_type=f32) + bv
        Q4 = Q.astype(bf).reshape(B, Sq, H, dk).transpose(0, 2, 1, 3)
        K4 = K.astype(bf).reshape(B, Sk, H, dk).transpose(0, 2, 1, 3)
        V4 = V.astype(bf).reshape(B, Sk, H, dk).transpose(0, 2, 1, 3)
        s = jnp.einsum('bhqd,bhkd->bhqk', Q4, K4, preferred_element_type=f32)
        s = s + bias[:, None]
        s = s - s.max(-1, keepdims=True)
        pr = jnp.exp(s)
        pr = pr / pr.sum(-1, keepdims=True)
        ctx = jnp.einsum('bhqk,bhkd->bhqd', pr.astype(bf), V4,
                         preferred_element_type=f32)
        ctx = ctx.transpose(0, 2, 1, 3).reshape(B, Sq, D)
        return jnp.dot(ctx.astype(bf), Wo, preferred_element_type=f32) + bo

    xf = xb.astype(f32)
    t1 = ln(xf + mha(xb, xb, bias_self,
                     p['sWq'], p['sWk'], p['sWv'], p['sbq'], p['sbk'], p['sbv'],
                     p['sWo'], p['sbo']), p['g1'], p['b1'])
    t2 = ln(t1 + mha(t1.astype(bf), src_b, bias_cross,
                     p['cWq'], p['cWk'], p['cWv'], p['cbq'], p['cbk'], p['cbv'],
                     p['cWo'], p['cbo']), p['g2'], p['b2'])
    h = jnp.maximum(jnp.dot(t2.astype(bf), p['W1'], preferred_element_type=f32)
                    + p['bf1'], 0.0)
    f = jnp.dot(h.astype(bf), p['W2'], preferred_element_type=f32) + p['bf2']
    return ln(f + t2, p['g3'], p['b3'])


def _ref_decoder(tgt_ids, src, mask_src_tgt, mask_self, params, prepped, H, eps):
    x = params['embedding'][tgt_ids] + params['pe'][: tgt_ids.shape[1]][None]
    bias_self = jnp.where(mask_self > 0, 0.0, -1e9).astype(jnp.bfloat16).astype(jnp.float32)
    bias_cross = jnp.where(mask_src_tgt > 0, 0.0, -1e9).astype(jnp.bfloat16).astype(jnp.float32)
    x = x.astype(jnp.bfloat16)
    src_b = src.astype(jnp.bfloat16)
    for p in prepped:
        x = _ref_layer(x, src_b, bias_self, bias_cross, p, H, eps).astype(jnp.bfloat16)
    return x.astype(jnp.float32)


# ---------------------------------------------------------------------------
if __name__ == "__main__":
    B, St, Ss = 2, 8, 8
    d_model, heads_num, d_ff, N = 32, 4, 64, 2
    tgt_vocab_size, max_len, pad_idx = 50, 16, 0
    layer_norm_eps = 1e-5

    params = init_decoder_params(jax.random.PRNGKey(0), tgt_vocab_size, max_len,
                                 pad_idx, d_model, N, d_ff)

    k1, k2 = jax.random.split(jax.random.PRNGKey(0), 2)
    tgt_ids = jax.random.randint(k1, (B, St), 1, tgt_vocab_size)     # token ids
    src = jax.random.normal(k2, (B, Ss, d_model), jnp.float32)        # encoder out
    mask_self = jnp.tile(jnp.tril(jnp.ones((St, St), jnp.float32))[None], (B, 1, 1))
    mask_src_tgt = jnp.ones((B, St, Ss), jnp.float32)

    out = decoder_forward(tgt_ids, src, mask_src_tgt, mask_self, params,
                          heads_num, layer_norm_eps)
    out = jax.block_until_ready(out)

    prepped = [prepare_layer_weights(lp, heads_num, d_model)
               for lp in params['layers']]
    ref = _ref_decoder(tgt_ids, src, mask_src_tgt, mask_self, params, prepped,
                       heads_num, layer_norm_eps)

    assert out.shape == (B, St, d_model)
    assert bool(jnp.all(jnp.isfinite(out)))
    # Tolerance covers the approx-reciprocal softmax and one bf16 ulp of
    # rounding on the bf16 inter-layer / output activations.
    assert bool(jnp.allclose(out, ref, atol=1.5e-2, rtol=1.5e-2)), "mismatch vs reference"
    print("KERNEL_OK")
</pallas_src>

<mosaic_0001>
module attributes {stable_mosaic.version = 11 : i64} {
  func.func @kernel(%arg0: i32, %arg1: memref<2x8x32xbf16, #tpu.memory_space<vmem>>, %arg2: memref<2x8x32xbf16, #tpu.memory_space<vmem>>, %arg3: memref<2x8x8xbf16, #tpu.memory_space<vmem>>, %arg4: memref<2x8x8xbf16, #tpu.memory_space<vmem>>, %arg5: memref<32x32xbf16, #tpu.memory_space<vmem>>, %arg6: memref<32x32xbf16, #tpu.memory_space<vmem>>, %arg7: memref<32x32xbf16, #tpu.memory_space<vmem>>, %arg8: memref<1x32xf32, #tpu.memory_space<vmem>>, %arg9: memref<1x32xf32, #tpu.memory_space<vmem>>, %arg10: memref<1x32xf32, #tpu.memory_space<vmem>>, %arg11: memref<32x32xbf16, #tpu.memory_space<vmem>>, %arg12: memref<1x32xf32, #tpu.memory_space<vmem>>, %arg13: memref<1x32xf32, #tpu.memory_space<vmem>>, %arg14: memref<1x32xf32, #tpu.memory_space<vmem>>, %arg15: memref<32x32xbf16, #tpu.memory_space<vmem>>, %arg16: memref<32x32xbf16, #tpu.memory_space<vmem>>, %arg17: memref<32x32xbf16, #tpu.memory_space<vmem>>, %arg18: memref<1x32xf32, #tpu.memory_space<vmem>>, %arg19: memref<1x32xf32, #tpu.memory_space<vmem>>, %arg20: memref<1x32xf32, #tpu.memory_space<vmem>>, %arg21: memref<32x32xbf16, #tpu.memory_space<vmem>>, %arg22: memref<1x32xf32, #tpu.memory_space<vmem>>, %arg23: memref<1x32xf32, #tpu.memory_space<vmem>>, %arg24: memref<1x32xf32, #tpu.memory_space<vmem>>, %arg25: memref<32x64xbf16, #tpu.memory_space<vmem>>, %arg26: memref<1x64xf32, #tpu.memory_space<vmem>>, %arg27: memref<64x32xbf16, #tpu.memory_space<vmem>>, %arg28: memref<1x32xf32, #tpu.memory_space<vmem>>, %arg29: memref<1x32xf32, #tpu.memory_space<vmem>>, %arg30: memref<1x32xf32, #tpu.memory_space<vmem>>, %arg31: memref<2x8x32xbf16, #tpu.memory_space<vmem>>, %arg32: memref<16x32xbf16, #tpu.memory_space<vmem>>) attributes {dimension_semantics = [#tpu.dimension_semantics<parallel>], iteration_bounds = array<i64: 1>, scalar_prefetch = 0 : i64, scratch_operands = 1 : i64, tpu.core_type = #tpu.core_type<tc>, window_params = [{transform_indices = @transform_0, window_bounds = array<i64: 2, 8, 32>}, {transform_indices = @transform_1, window_bounds = array<i64: 2, 8, 32>}, {transform_indices = @transform_2, window_bounds = array<i64: 2, 8, 8>}, {transform_indices = @transform_3, window_bounds = array<i64: 2, 8, 8>}, {pipeline_mode = #tpu.pipeline_mode<synchronous>, transform_indices = @transform_4, window_bounds = array<i64: 32, 32>}, {pipeline_mode = #tpu.pipeline_mode<synchronous>, transform_indices = @transform_5, window_bounds = array<i64: 32, 32>}, {pipeline_mode = #tpu.pipeline_mode<synchronous>, transform_indices = @transform_6, window_bounds = array<i64: 32, 32>}, {pipeline_mode = #tpu.pipeline_mode<synchronous>, transform_indices = @transform_7, window_bounds = array<i64: 1, 32>}, {pipeline_mode = #tpu.pipeline_mode<synchronous>, transform_indices = @transform_8, window_bounds = array<i64: 1, 32>}, {pipeline_mode = #tpu.pipeline_mode<synchronous>, transform_indices = @transform_9, window_bounds = array<i64: 1, 32>}, {pipeline_mode = #tpu.pipeline_mode<synchronous>, transform_indices = @transform_10, window_bounds = array<i64: 32, 32>}, {pipeline_mode = #tpu.pipeline_mode<synchronous>, transform_indices = @transform_11, window_bounds = array<i64: 1, 32>}, {pipeline_mode = #tpu.pipeline_mode<synchronous>, transform_indices = @transform_12, window_bounds = array<i64: 1, 32>}, {pipeline_mode = #tpu.pipeline_mode<synchronous>, transform_indices = @transform_13, window_bounds = array<i64: 1, 32>}, {pipeline_mode = #tpu.pipeline_mode<synchronous>, transform_indices = @transform_14, window_bounds = array<i64: 32, 32>}, {pipeline_mode = #tpu.pipeline_mode<synchronous>, transform_indices = @transform_15, window_bounds = array<i64: 32, 32>}, {pipeline_mode = #tpu.pipeline_mode<synchronous>, transform_indices = @transform_16, window_bounds = array<i64: 32, 32>}, {pipeline_mode = #tpu.pipeline_mode<synchronous>, transform_indices = @transform_17, window_bounds = array<i64: 1, 32>}, {pipeline_mode = #tpu.pipeline_mode<synchronous>, transform_indices = @transform_18, window_bounds = array<i64: 1, 32>}, {pipeline_mode = #tpu.pipeline_mode<synchronous>, transform_indices = @transform_19, window_bounds = array<i64: 1, 32>}, {pipeline_mode = #tpu.pipeline_mode<synchronous>, transform_indices = @transform_20, window_bounds = array<i64: 32, 32>}, {pipeline_mode = #tpu.pipeline_mode<synchronous>, transform_indices = @transform_21, window_bounds = array<i64: 1, 32>}, {pipeline_mode = #tpu.pipeline_mode<synchronous>, transform_indices = @transform_22, window_bounds = array<i64: 1, 32>}, {pipeline_mode = #tpu.pipeline_mode<synchronous>, transform_indices = @transform_23, window_bounds = array<i64: 1, 32>}, {pipeline_mode = #tpu.pipeline_mode<synchronous>, transform_indices = @transform_24, window_bounds = array<i64: 32, 64>}, {pipeline_mode = #tpu.pipeline_mode<synchronous>, transform_indices = @transform_25, window_bounds = array<i64: 1, 64>}, {pipeline_mode = #tpu.pipeline_mode<synchronous>, transform_indices = @transform_26, window_bounds = array<i64: 64, 32>}, {pipeline_mode = #tpu.pipeline_mode<synchronous>, transform_indices = @transform_27, window_bounds = array<i64: 1, 32>}, {pipeline_mode = #tpu.pipeline_mode<synchronous>, transform_indices = @transform_28, window_bounds = array<i64: 1, 32>}, {pipeline_mode = #tpu.pipeline_mode<synchronous>, transform_indices = @transform_29, window_bounds = array<i64: 1, 32>}, {transform_indices = @transform_30, window_bounds = array<i64: 2, 8, 32>}]} {
    %c0 = arith.constant 0 : index
    %c0_0 = arith.constant 0 : index
    %c0_1 = arith.constant 0 : index
    %0 = vector.load %arg1[%c0, %c0_0, %c0_1] : memref<2x8x32xbf16, #tpu.memory_space<vmem>>, vector<2x8x32xbf16>
    %1 = vector.shape_cast %0 : vector<2x8x32xbf16> to vector<16x32xbf16>
    %2 = arith.extf %1 : vector<16x32xbf16> to vector<16x32xf32>
    %c0_2 = arith.constant 0 : index
    %c0_3 = arith.constant 0 : index
    %c0_4 = arith.constant 0 : index
    %3 = vector.load %arg2[%c0_2, %c0_3, %c0_4] : memref<2x8x32xbf16, #tpu.memory_space<vmem>>, vector<2x8x32xbf16>
    %4 = vector.shape_cast %3 : vector<2x8x32xbf16> to vector<16x32xbf16>
    %c0_5 = arith.constant 0 : index
    %c0_6 = arith.constant 0 : index
    %c0_7 = arith.constant 0 : index
    %5 = vector.load %arg3[%c0_5, %c0_6, %c0_7] : memref<2x8x8xbf16, #tpu.memory_space<vmem>>, vector<2x8x8xbf16>
    %6 = arith.extf %5 : vector<2x8x8xbf16> to vector<2x8x8xf32>
    %c0_8 = arith.constant 0 : index
    %c0_9 = arith.constant 0 : index
    %7 = vector.load %arg5[%c0_8, %c0_9] : memref<32x32xbf16, #tpu.memory_space<vmem>>, vector<32x32xbf16>
    %cst = arith.constant dense<0.000000e+00> : vector<16x32xf32>
    %8 = tpu.matmul %1, %7, %cst {dimension_numbers = #tpu.dot_dimension_numbers<[1], [0], [0], [1], [0, 0, 1, 1], [], []>} : vector<16x32xbf16>, vector<32x32xbf16>, vector<16x32xf32> -> vector<16x32xf32>
    %c0_10 = arith.constant 0 : index
    %c0_11 = arith.constant 0 : index
    %9 = vector.load %arg8[%c0_10, %c0_11] : memref<1x32xf32, #tpu.memory_space<vmem>>, vector<1x32xf32>
    %10 = vector.broadcast %9 : vector<1x32xf32> to vector<16x32xf32>
    %11 = arith.addf %8, %10 : vector<16x32xf32>
    %12 = arith.truncf %11 : vector<16x32xf32> to vector<16x32xbf16>
    %13 = vector.shape_cast %12 : vector<16x32xbf16> to vector<2x8x32xbf16>
    %c0_12 = arith.constant 0 : index
    %c0_13 = arith.constant 0 : index
    %14 = vector.load %arg6[%c0_12, %c0_13] : memref<32x32xbf16, #tpu.memory_space<vmem>>, vector<32x32xbf16>
    %cst_14 = arith.constant dense<0.000000e+00> : vector<16x32xf32>
    %15 = tpu.matmul %1, %14, %cst_14 {dimension_numbers = #tpu.dot_dimension_numbers<[1], [0], [0], [1], [0, 0, 1, 1], [], []>} : vector<16x32xbf16>, vector<32x32xbf16>, vector<16x32xf32> -> vector<16x32xf32>
    %c0_15 = arith.constant 0 : index
    %c0_16 = arith.constant 0 : index
    %16 = vector.load %arg9[%c0_15, %c0_16] : memref<1x32xf32, #tpu.memory_space<vmem>>, vector<1x32xf32>
    %17 = vector.broadcast %16 : vector<1x32xf32> to vector<16x32xf32>
    %18 = arith.addf %15, %17 : vector<16x32xf32>
    %19 = arith.truncf %18 : vector<16x32xf32> to vector<16x32xbf16>
    %20 = vector.shape_cast %19 : vector<16x32xbf16> to vector<2x8x32xbf16>
    %c0_17 = arith.constant 0 : index
    %c0_18 = arith.constant 0 : index
    %21 = vector.load %arg7[%c0_17, %c0_18] : memref<32x32xbf16, #tpu.memory_space<vmem>>, vector<32x32xbf16>
    %cst_19 = arith.constant dense<0.000000e+00> : vector<16x32xf32>
    %22 = tpu.matmul %1, %21, %cst_19 {dimension_numbers = #tpu.dot_dimension_numbers<[1], [0], [0], [1], [0, 0, 1, 1], [], []>} : vector<16x32xbf16>, vector<32x32xbf16>, vector<16x32xf32> -> vector<16x32xf32>
    %c0_20 = arith.constant 0 : index
    %c0_21 = arith.constant 0 : index
    %23 = vector.load %arg10[%c0_20, %c0_21] : memref<1x32xf32, #tpu.memory_space<vmem>>, vector<1x32xf32>
    %24 = vector.broadcast %23 : vector<1x32xf32> to vector<16x32xf32>
    %25 = arith.addf %22, %24 : vector<16x32xf32>
    %26 = arith.truncf %25 : vector<16x32xf32> to vector<16x32xbf16>
    %27 = vector.shape_cast %26 : vector<16x32xbf16> to vector<2x8x32xbf16>
    %28 = vector.extract_strided_slice %13 {offsets = [0, 0, 0], sizes = [2, 8, 8], strides = [1, 1, 1]} : vector<2x8x32xbf16> to vector<2x8x8xbf16>
    %29 = vector.extract_strided_slice %20 {offsets = [0, 0, 0], sizes = [2, 8, 8], strides = [1, 1, 1]} : vector<2x8x32xbf16> to vector<2x8x8xbf16>
    "tpu.trace_start"() <{level = 10 : i32, message = "bqd,bkd->bqk"}> : () -> ()
    %cst_22 = arith.constant dense<0.000000e+00> : vector<2x8x8xf32>
    %30 = tpu.matmul %28, %29, %cst_22 {dimension_numbers = #tpu.dot_dimension_numbers<[2], [2], [1], [1], [0, 0, 0, 1, 1, 1], [0], [0]>} : vector<2x8x8xbf16>, vector<2x8x8xbf16>, vector<2x8x8xf32> -> vector<2x8x8xf32>
    "tpu.trace_stop"() : () -> ()
    %31 = arith.addf %30, %6 : vector<2x8x8xf32>
    %cst_23 = arith.constant dense<0xFF800000> : vector<2x8xf32>
    %32 = vector.multi_reduction <maximumf>, %31, %cst_23 [2] : vector<2x8x8xf32> to vector<2x8xf32>
    %33 = vector.shape_cast %32 : vector<2x8xf32> to vector<2x8x1xf32>
    %34 = vector.broadcast %33 : vector<2x8x1xf32> to vector<2x8x8xf32>
    %35 = arith.subf %31, %34 : vector<2x8x8xf32>
    %36 = math.exp %35 : vector<2x8x8xf32>
    %cst_24 = arith.constant dense<0.000000e+00> : vector<2x8xf32>
    %37 = vector.multi_reduction <add>, %36, %cst_24 [2] : vector<2x8x8xf32> to vector<2x8xf32>
    %38 = vector.shape_cast %37 : vector<2x8xf32> to vector<2x8x1xf32>
    %39 = tpu.reciprocal %38 {approx = true} : vector<2x8x1xf32> -> vector<2x8x1xf32>
    %40 = vector.broadcast %39 : vector<2x8x1xf32> to vector<2x8x8xf32>
    %41 = arith.mulf %36, %40 : vector<2x8x8xf32>
    %42 = arith.truncf %41 : vector<2x8x8xf32> to vector<2x8x8xbf16>
    %43 = vector.extract_strided_slice %27 {offsets = [0, 0, 0], sizes = [2, 8, 8], strides = [1, 1, 1]} : vector<2x8x32xbf16> to vector<2x8x8xbf16>
    "tpu.trace_start"() <{level = 10 : i32, message = "bqk,bkd->bqd"}> : () -> ()
    %cst_25 = arith.constant dense<0.000000e+00> : vector<2x8x8xf32>
    %44 = tpu.matmul %42, %43, %cst_25 {dimension_numbers = #tpu.dot_dimension_numbers<[2], [1], [1], [2], [0, 0, 0, 1, 1, 2], [0], [0]>} : vector<2x8x8xbf16>, vector<2x8x8xbf16>, vector<2x8x8xf32> -> vector<2x8x8xf32>
    "tpu.trace_stop"() : () -> ()
    %45 = vector.shape_cast %44 : vector<2x8x8xf32> to vector<16x8xf32>
    %46 = arith.truncf %45 : vector<16x8xf32> to vector<16x8xbf16>
    %c0_26 = arith.constant 0 : index
    %c0_27 = arith.constant 0 : index
    %47 = vector.load %arg32[%c0_26, %c0_27] : memref<16x32xbf16, #tpu.memory_space<vmem>>, vector<16x8xbf16>
    tpu.vector_store %arg32[%c0_26, %c0_27], %46 {strides = array<i32>} : memref<16x32xbf16, #tpu.memory_space<vmem>>, vector<16x8xbf16>,
    %48 = vector.extract_strided_slice %13 {offsets = [0, 0, 8], sizes = [2, 8, 8], strides = [1, 1, 1]} : vector<2x8x32xbf16> to vector<2x8x8xbf16>
    %49 = vector.extract_strided_slice %20 {offsets = [0, 0, 8], sizes = [2, 8, 8], strides = [1, 1, 1]} : vector<2x8x32xbf16> to vector<2x8x8xbf16>
    "tpu.trace_start"() <{level = 10 : i32, message = "bqd,bkd->bqk"}> : () -> ()
    %cst_28 = arith.constant dense<0.000000e+00> : vector<2x8x8xf32>
    %50 = tpu.matmul %48, %49, %cst_28 {dimension_numbers = #tpu.dot_dimension_numbers<[2], [2], [1], [1], [0, 0, 0, 1, 1, 1], [0], [0]>} : vector<2x8x8xbf16>, vector<2x8x8xbf16>, vector<2x8x8xf32> -> vector<2x8x8xf32>
    "tpu.trace_stop"() : () -> ()
    %51 = arith.addf %50, %6 : vector<2x8x8xf32>
    %cst_29 = arith.constant dense<0xFF800000> : vector<2x8xf32>
    %52 = vector.multi_reduction <maximumf>, %51, %cst_29 [2] : vector<2x8x8xf32> to vector<2x8xf32>
    %53 = vector.shape_cast %52 : vector<2x8xf32> to vector<2x8x1xf32>
    %54 = vector.broadcast %53 : vector<2x8x1xf32> to vector<2x8x8xf32>
    %55 = arith.subf %51, %54 : vector<2x8x8xf32>
    %56 = math.exp %55 : vector<2x8x8xf32>
    %cst_30 = arith.constant dense<0.000000e+00> : vector<2x8xf32>
    %57 = vector.multi_reduction <add>, %56, %cst_30 [2] : vector<2x8x8xf32> to vector<2x8xf32>
    %58 = vector.shape_cast %57 : vector<2x8xf32> to vector<2x8x1xf32>
    %59 = tpu.reciprocal %58 {approx = true} : vector<2x8x1xf32> -> vector<2x8x1xf32>
    %60 = vector.broadcast %59 : vector<2x8x1xf32> to vector<2x8x8xf32>
    %61 = arith.mulf %56, %60 : vector<2x8x8xf32>
    %62 = arith.truncf %61 : vector<2x8x8xf32> to vector<2x8x8xbf16>
    %63 = vector.extract_strided_slice %27 {offsets = [0, 0, 8], sizes = [2, 8, 8], strides = [1, 1, 1]} : vector<2x8x32xbf16> to vector<2x8x8xbf16>
    "tpu.trace_start"() <{level = 10 : i32, message = "bqk,bkd->bqd"}> : () -> ()
    %cst_31 = arith.constant dense<0.000000e+00> : vector<2x8x8xf32>
    %64 = tpu.matmul %62, %63, %cst_31 {dimension_numbers = #tpu.dot_dimension_numbers<[2], [1], [1], [2], [0, 0, 0, 1, 1, 2], [0], [0]>} : vector<2x8x8xbf16>, vector<2x8x8xbf16>, vector<2x8x8xf32> -> vector<2x8x8xf32>
    "tpu.trace_stop"() : () -> ()
    %65 = vector.shape_cast %64 : vector<2x8x8xf32> to vector<16x8xf32>
    %66 = arith.truncf %65 : vector<16x8xf32> to vector<16x8xbf16>
    %c0_32 = arith.constant 0 : index
    %c8 = arith.constant 8 : index
    %67 = vector.load %arg32[%c0_32, %c8] : memref<16x32xbf16, #tpu.memory_space<vmem>>, vector<16x8xbf16>
    tpu.vector_store %arg32[%c0_32, %c8], %66 {strides = array<i32>} : memref<16x32xbf16, #tpu.memory_space<vmem>>, vector<16x8xbf16>,
    %68 = vector.extract_strided_slice %13 {offsets = [0, 0, 16], sizes = [2, 8, 8], strides = [1, 1, 1]} : vector<2x8x32xbf16> to vector<2x8x8xbf16>
    %69 = vector.extract_strided_slice %20 {offsets = [0, 0, 16], sizes = [2, 8, 8], strides = [1, 1, 1]} : vector<2x8x32xbf16> to vector<2x8x8xbf16>
    "tpu.trace_start"() <{level = 10 : i32, message = "bqd,bkd->bqk"}> : () -> ()
    %cst_33 = arith.constant dense<0.000000e+00> : vector<2x8x8xf32>
    %70 = tpu.matmul %68, %69, %cst_33 {dimension_numbers = #tpu.dot_dimension_numbers<[2], [2], [1], [1], [0, 0, 0, 1, 1, 1], [0], [0]>} : vector<2x8x8xbf16>, vector<2x8x8xbf16>, vector<2x8x8xf32> -> vector<2x8x8xf32>
    "tpu.trace_stop"() : () -> ()
    %71 = arith.addf %70, %6 : vector<2x8x8xf32>
    %cst_34 = arith.constant dense<0xFF800000> : vector<2x8xf32>
    %72 = vector.multi_reduction <maximumf>, %71, %cst_34 [2] : vector<2x8x8xf32> to vector<2x8xf32>
    %73 = vector.shape_cast %72 : vector<2x8xf32> to vector<2x8x1xf32>
    %74 = vector.broadcast %73 : vector<2x8x1xf32> to vector<2x8x8xf32>
    %75 = arith.subf %71, %74 : vector<2x8x8xf32>
    %76 = math.exp %75 : vector<2x8x8xf32>
    %cst_35 = arith.constant dense<0.000000e+00> : vector<2x8xf32>
    %77 = vector.multi_reduction <add>, %76, %cst_35 [2] : vector<2x8x8xf32> to vector<2x8xf32>
    %78 = vector.shape_cast %77 : vector<2x8xf32> to vector<2x8x1xf32>
    %79 = tpu.reciprocal %78 {approx = true} : vector<2x8x1xf32> -> vector<2x8x1xf32>
    %80 = vector.broadcast %79 : vector<2x8x1xf32> to vector<2x8x8xf32>
    %81 = arith.mulf %76, %80 : vector<2x8x8xf32>
    %82 = arith.truncf %81 : vector<2x8x8xf32> to vector<2x8x8xbf16>
    %83 = vector.extract_strided_slice %27 {offsets = [0, 0, 16], sizes = [2, 8, 8], strides = [1, 1, 1]} : vector<2x8x32xbf16> to vector<2x8x8xbf16>
    "tpu.trace_start"() <{level = 10 : i32, message = "bqk,bkd->bqd"}> : () -> ()
    %cst_36 = arith.constant dense<0.000000e+00> : vector<2x8x8xf32>
    %84 = tpu.matmul %82, %83, %cst_36 {dimension_numbers = #tpu.dot_dimension_numbers<[2], [1], [1], [2], [0, 0, 0, 1, 1, 2], [0], [0]>} : vector<2x8x8xbf16>, vector<2x8x8xbf16>, vector<2x8x8xf32> -> vector<2x8x8xf32>
    "tpu.trace_stop"() : () -> ()
    %85 = vector.shape_cast %84 : vector<2x8x8xf32> to vector<16x8xf32>
    %86 = arith.truncf %85 : vector<16x8xf32> to vector<16x8xbf16>
    %c0_37 = arith.constant 0 : index
    %c16 = arith.constant 16 : index
    %87 = vector.load %arg32[%c0_37, %c16] : memref<16x32xbf16, #tpu.memory_space<vmem>>, vector<16x8xbf16>
    tpu.vector_store %arg32[%c0_37, %c16], %86 {strides = array<i32>} : memref<16x32xbf16, #tpu.memory_space<vmem>>, vector<16x8xbf16>,
    %88 = vector.extract_strided_slice %13 {offsets = [0, 0, 24], sizes = [2, 8, 8], strides = [1, 1, 1]} : vector<2x8x32xbf16> to vector<2x8x8xbf16>
    %89 = vector.extract_strided_slice %20 {offsets = [0, 0, 24], sizes = [2, 8, 8], strides = [1, 1, 1]} : vector<2x8x32xbf16> to vector<2x8x8xbf16>
    "tpu.trace_start"() <{level = 10 : i32, message = "bqd,bkd->bqk"}> : () -> ()
    %cst_38 = arith.constant dense<0.000000e+00> : vector<2x8x8xf32>
    %90 = tpu.matmul %88, %89, %cst_38 {dimension_numbers = #tpu.dot_dimension_numbers<[2], [2], [1], [1], [0, 0, 0, 1, 1, 1], [0], [0]>} : vector<2x8x8xbf16>, vector<2x8x8xbf16>, vector<2x8x8xf32> -> vector<2x8x8xf32>
    "tpu.trace_stop"() : () -> ()
    %91 = arith.addf %90, %6 : vector<2x8x8xf32>
    %cst_39 = arith.constant dense<0xFF800000> : vector<2x8xf32>
    %92 = vector.multi_reduction <maximumf>, %91, %cst_39 [2] : vector<2x8x8xf32> to vector<2x8xf32>
    %93 = vector.shape_cast %92 : vector<2x8xf32> to vector<2x8x1xf32>
    %94 = vector.broadcast %93 : vector<2x8x1xf32> to vector<2x8x8xf32>
    %95 = arith.subf %91, %94 : vector<2x8x8xf32>
    %96 = math.exp %95 : vector<2x8x8xf32>
    %cst_40 = arith.constant dense<0.000000e+00> : vector<2x8xf32>
    %97 = vector.multi_reduction <add>, %96, %cst_40 [2] : vector<2x8x8xf32> to vector<2x8xf32>
    %98 = vector.shape_cast %97 : vector<2x8xf32> to vector<2x8x1xf32>
    %99 = tpu.reciprocal %98 {approx = true} : vector<2x8x1xf32> -> vector<2x8x1xf32>
    %100 = vector.broadcast %99 : vector<2x8x1xf32> to vector<2x8x8xf32>
    %101 = arith.mulf %96, %100 : vector<2x8x8xf32>
    %102 = arith.truncf %101 : vector<2x8x8xf32> to vector<2x8x8xbf16>
    %103 = vector.extract_strided_slice %27 {offsets = [0, 0, 24], sizes = [2, 8, 8], strides = [1, 1, 1]} : vector<2x8x32xbf16> to vector<2x8x8xbf16>
    "tpu.trace_start"() <{level = 10 : i32, message = "bqk,bkd->bqd"}> : () -> ()
    %cst_41 = arith.constant dense<0.000000e+00> : vector<2x8x8xf32>
    %104 = tpu.matmul %102, %103, %cst_41 {dimension_numbers = #tpu.dot_dimension_numbers<[2], [1], [1], [2], [0, 0, 0, 1, 1, 2], [0], [0]>} : vector<2x8x8xbf16>, vector<2x8x8xbf16>, vector<2x8x8xf32> -> vector<2x8x8xf32>
    "tpu.trace_stop"() : () -> ()
    %105 = vector.shape_cast %104 : vector<2x8x8xf32> to vector<16x8xf32>
    %106 = arith.truncf %105 : vector<16x8xf32> to vector<16x8xbf16>
    %c0_42 = arith.constant 0 : index
    %c24 = arith.constant 24 : index
    %107 = vector.load %arg32[%c0_42, %c24] : memref<16x32xbf16, #tpu.memory_space<vmem>>, vector<16x8xbf16>
    tpu.vector_store %arg32[%c0_42, %c24], %106 {strides = array<i32>} : memref<16x32xbf16, #tpu.memory_space<vmem>>, vector<16x8xbf16>,
    %c0_43 = arith.constant 0 : index
    %c0_44 = arith.constant 0 : index
    %108 = vector.load %arg32[%c0_43, %c0_44] : memref<16x32xbf16, #tpu.memory_space<vmem>>, vector<16x32xbf16>
    %c0_45 = arith.constant 0 : index
    %c0_46 = arith.constant 0 : index
    %109 = vector.load %arg11[%c0_45, %c0_46] : memref<32x32xbf16, #tpu.memory_space<vmem>>, vector<32x32xbf16>
    %cst_47 = arith.constant dense<0.000000e+00> : vector<16x32xf32>
    %110 = tpu.matmul %108, %109, %cst_47 {dimension_numbers = #tpu.dot_dimension_numbers<[1], [0], [0], [1], [0, 0, 1, 1], [], []>} : vector<16x32xbf16>, vector<32x32xbf16>, vector<16x32xf32> -> vector<16x32xf32>
    %c0_48 = arith.constant 0 : index
    %c0_49 = arith.constant 0 : index
    %111 = vector.load %arg12[%c0_48, %c0_49] : memref<1x32xf32, #tpu.memory_space<vmem>>, vector<1x32xf32>
    %112 = vector.broadcast %111 : vector<1x32xf32> to vector<16x32xf32>
    %113 = arith.addf %110, %112 : vector<16x32xf32>
    %114 = arith.addf %2, %113 : vector<16x32xf32>
    %cst_50 = arith.constant dense<0.000000e+00> : vector<16xf32>
    %115 = vector.multi_reduction <add>, %114, %cst_50 [1] : vector<16x32xf32> to vector<16xf32>
    %116 = vector.shape_cast %115 : vector<16xf32> to vector<16x1xf32>
    %cst_51 = arith.constant 3.200000e+01 : f32
    %117 = vector.broadcast %cst_51 : f32 to vector<16x1xf32>
    %118 = arith.divf %116, %117 : vector<16x1xf32>
    %119 = vector.broadcast %118 : vector<16x1xf32> to vector<16x32xf32>
    %120 = arith.subf %114, %119 : vector<16x32xf32>
    %121 = arith.mulf %120, %120 : vector<16x32xf32>
    %cst_52 = arith.constant dense<0.000000e+00> : vector<16xf32>
    %122 = vector.multi_reduction <add>, %121, %cst_52 [1] : vector<16x32xf32> to vector<16xf32>
    %123 = vector.shape_cast %122 : vector<16xf32> to vector<16x1xf32>
    %cst_53 = arith.constant 3.200000e+01 : f32
    %124 = vector.broadcast %cst_53 : f32 to vector<16x1xf32>
    %125 = arith.divf %123, %124 : vector<16x1xf32>
    %126 = vector.broadcast %118 : vector<16x1xf32> to vector<16x32xf32>
    %127 = arith.subf %114, %126 : vector<16x32xf32>
    %cst_54 = arith.constant 9.99999974E-6 : f32
    %128 = vector.broadcast %cst_54 : f32 to vector<16x1xf32>
    %129 = arith.addf %125, %128 : vector<16x1xf32>
    %130 = math.rsqrt %129 : vector<16x1xf32>
    %131 = vector.broadcast %130 : vector<16x1xf32> to vector<16x32xf32>
    %132 = arith.mulf %127, %131 : vector<16x32xf32>
    %c0_55 = arith.constant 0 : index
    %c0_56 = arith.constant 0 : index
    %133 = vector.load %arg13[%c0_55, %c0_56] : memref<1x32xf32, #tpu.memory_space<vmem>>, vector<1x32xf32>
    %134 = vector.broadcast %133 : vector<1x32xf32> to vector<16x32xf32>
    %135 = arith.mulf %132, %134 : vector<16x32xf32>
    %c0_57 = arith.constant 0 : index
    %c0_58 = arith.constant 0 : index
    %136 = vector.load %arg14[%c0_57, %c0_58] : memref<1x32xf32, #tpu.memory_space<vmem>>, vector<1x32xf32>
    %137 = vector.broadcast %136 : vector<1x32xf32> to vector<16x32xf32>
    %138 = arith.addf %135, %137 : vector<16x32xf32>
    %139 = arith.truncf %138 : vector<16x32xf32> to vector<16x32xbf16>
    %c0_59 = arith.constant 0 : index
    %c0_60 = arith.constant 0 : index
    %c0_61 = arith.constant 0 : index
    %140 = vector.load %arg4[%c0_59, %c0_60, %c0_61] : memref<2x8x8xbf16, #tpu.memory_space<vmem>>, vector<2x8x8xbf16>
    %141 = arith.extf %140 : vector<2x8x8xbf16> to vector<2x8x8xf32>
    %c0_62 = arith.constant 0 : index
    %c0_63 = arith.constant 0 : index
    %142 = vector.load %arg15[%c0_62, %c0_63] : memref<32x32xbf16, #tpu.memory_space<vmem>>, vector<32x32xbf16>
    %cst_64 = arith.constant dense<0.000000e+00> : vector<16x32xf32>
    %143 = tpu.matmul %139, %142, %cst_64 {dimension_numbers = #tpu.dot_dimension_numbers<[1], [0], [0], [1], [0, 0, 1, 1], [], []>} : vector<16x32xbf16>, vector<32x32xbf16>, vector<16x32xf32> -> vector<16x32xf32>
    %c0_65 = arith.constant 0 : index
    %c0_66 = arith.constant 0 : index
    %144 = vector.load %arg18[%c0_65, %c0_66] : memref<1x32xf32, #tpu.memory_space<vmem>>, vector<1x32xf32>
    %145 = vector.broadcast %144 : vector<1x32xf32> to vector<16x32xf32>
    %146 = arith.addf %143, %145 : vector<16x32xf32>
    %147 = arith.truncf %146 : vector<16x32xf32> to vector<16x32xbf16>
    %148 = vector.shape_cast %147 : vector<16x32xbf16> to vector<2x8x32xbf16>
    %c0_67 = arith.constant 0 : index
    %c0_68 = arith.constant 0 : index
    %149 = vector.load %arg16[%c0_67, %c0_68] : memref<32x32xbf16, #tpu.memory_space<vmem>>, vector<32x32xbf16>
    %cst_69 = arith.constant dense<0.000000e+00> : vector<16x32xf32>
    %150 = tpu.matmul %4, %149, %cst_69 {dimension_numbers = #tpu.dot_dimension_numbers<[1], [0], [0], [1], [0, 0, 1, 1], [], []>} : vector<16x32xbf16>, vector<32x32xbf16>, vector<16x32xf32> -> vector<16x32xf32>
    %c0_70 = arith.constant 0 : index
    %c0_71 = arith.constant 0 : index
    %151 = vector.load %arg19[%c0_70, %c0_71] : memref<1x32xf32, #tpu.memory_space<vmem>>, vector<1x32xf32>
    %152 = vector.broadcast %151 : vector<1x32xf32> to vector<16x32xf32>
    %153 = arith.addf %150, %152 : vector<16x32xf32>
    %154 = arith.truncf %153 : vector<16x32xf32> to vector<16x32xbf16>
    %155 = vector.shape_cast %154 : vector<16x32xbf16> to vector<2x8x32xbf16>
    %c0_72 = arith.constant 0 : index
    %c0_73 = arith.constant 0 : index
    %156 = vector.load %arg17[%c0_72, %c0_73] : memref<32x32xbf16, #tpu.memory_space<vmem>>, vector<32x32xbf16>
    %cst_74 = arith.constant dense<0.000000e+00> : vector<16x32xf32>
    %157 = tpu.matmul %4, %156, %cst_74 {dimension_numbers = #tpu.dot_dimension_numbers<[1], [0], [0], [1], [0, 0, 1, 1], [], []>} : vector<16x32xbf16>, vector<32x32xbf16>, vector<16x32xf32> -> vector<16x32xf32>
    %c0_75 = arith.constant 0 : index
    %c0_76 = arith.constant 0 : index
    %158 = vector.load %arg20[%c0_75, %c0_76] : memref<1x32xf32, #tpu.memory_space<vmem>>, vector<1x32xf32>
    %159 = vector.broadcast %158 : vector<1x32xf32> to vector<16x32xf32>
    %160 = arith.addf %157, %159 : vector<16x32xf32>
    %161 = arith.truncf %160 : vector<16x32xf32> to vector<16x32xbf16>
    %162 = vector.shape_cast %161 : vector<16x32xbf16> to vector<2x8x32xbf16>
    %163 = vector.extract_strided_slice %148 {offsets = [0, 0, 0], sizes = [2, 8, 8], strides = [1, 1, 1]} : vector<2x8x32xbf16> to vector<2x8x8xbf16>
    %164 = vector.extract_strided_slice %155 {offsets = [0, 0, 0], sizes = [2, 8, 8], strides = [1, 1, 1]} : vector<2x8x32xbf16> to vector<2x8x8xbf16>
    "tpu.trace_start"() <{level = 10 : i32, message = "bqd,bkd->bqk"}> : () -> ()
    %cst_77 = arith.constant dense<0.000000e+00> : vector<2x8x8xf32>
    %165 = tpu.matmul %163, %164, %cst_77 {dimension_numbers = #tpu.dot_dimension_numbers<[2], [2], [1], [1], [0, 0, 0, 1, 1, 1], [0], [0]>} : vector<2x8x8xbf16>, vector<2x8x8xbf16>, vector<2x8x8xf32> -> vector<2x8x8xf32>
    "tpu.trace_stop"() : () -> ()
    %166 = arith.addf %165, %141 : vector<2x8x8xf32>
    %cst_78 = arith.constant dense<0xFF800000> : vector<2x8xf32>
    %167 = vector.multi_reduction <maximumf>, %166, %cst_78 [2] : vector<2x8x8xf32> to vector<2x8xf32>
    %168 = vector.shape_cast %167 : vector<2x8xf32> to vector<2x8x1xf32>
    %169 = vector.broadcast %168 : vector<2x8x1xf32> to vector<2x8x8xf32>
    %170 = arith.subf %166, %169 : vector<2x8x8xf32>
    %171 = math.exp %170 : vector<2x8x8xf32>
    %cst_79 = arith.constant dense<0.000000e+00> : vector<2x8xf32>
    %172 = vector.multi_reduction <add>, %171, %cst_79 [2] : vector<2x8x8xf32> to vector<2x8xf32>
    %173 = vector.shape_cast %172 : vector<2x8xf32> to vector<2x8x1xf32>
    %174 = tpu.reciprocal %173 {approx = true} : vector<2x8x1xf32> -> vector<2x8x1xf32>
    %175 = vector.broadcast %174 : vector<2x8x1xf32> to vector<2x8x8xf32>
    %176 = arith.mulf %171, %175 : vector<2x8x8xf32>
    %177 = arith.truncf %176 : vector<2x8x8xf32> to vector<2x8x8xbf16>
    %178 = vector.extract_strided_slice %162 {offsets = [0, 0, 0], sizes = [2, 8, 8], strides = [1, 1, 1]} : vector<2x8x32xbf16> to vector<2x8x8xbf16>
    "tpu.trace_start"() <{level = 10 : i32, message = "bqk,bkd->bqd"}> : () -> ()
    %cst_80 = arith.constant dense<0.000000e+00> : vector<2x8x8xf32>
    %179 = tpu.matmul %177, %178, %cst_80 {dimension_numbers = #tpu.dot_dimension_numbers<[2], [1], [1], [2], [0, 0, 0, 1, 1, 2], [0], [0]>} : vector<2x8x8xbf16>, vector<2x8x8xbf16>, vector<2x8x8xf32> -> vector<2x8x8xf32>
    "tpu.trace_stop"() : () -> ()
    %180 = vector.shape_cast %179 : vector<2x8x8xf32> to vector<16x8xf32>
    %181 = arith.truncf %180 : vector<16x8xf32> to vector<16x8xbf16>
    %c0_81 = arith.constant 0 : index
    %c0_82 = arith.constant 0 : index
    %182 = vector.load %arg32[%c0_81, %c0_82] : memref<16x32xbf16, #tpu.memory_space<vmem>>, vector<16x8xbf16>
    tpu.vector_store %arg32[%c0_81, %c0_82], %181 {strides = array<i32>} : memref<16x32xbf16, #tpu.memory_space<vmem>>, vector<16x8xbf16>,
    %183 = vector.extract_strided_slice %148 {offsets = [0, 0, 8], sizes = [2, 8, 8], strides = [1, 1, 1]} : vector<2x8x32xbf16> to vector<2x8x8xbf16>
    %184 = vector.extract_strided_slice %155 {offsets = [0, 0, 8], sizes = [2, 8, 8], strides = [1, 1, 1]} : vector<2x8x32xbf16> to vector<2x8x8xbf16>
    "tpu.trace_start"() <{level = 10 : i32, message = "bqd,bkd->bqk"}> : () -> ()
    %cst_83 = arith.constant dense<0.000000e+00> : vector<2x8x8xf32>
    %185 = tpu.matmul %183, %184, %cst_83 {dimension_numbers = #tpu.dot_dimension_numbers<[2], [2], [1], [1], [0, 0, 0, 1, 1, 1], [0], [0]>} : vector<2x8x8xbf16>, vector<2x8x8xbf16>, vector<2x8x8xf32> -> vector<2x8x8xf32>
    "tpu.trace_stop"() : () -> ()
    %186 = arith.addf %185, %141 : vector<2x8x8xf32>
    %cst_84 = arith.constant dense<0xFF800000> : vector<2x8xf32>
    %187 = vector.multi_reduction <maximumf>, %186, %cst_84 [2] : vector<2x8x8xf32> to vector<2x8xf32>
    %188 = vector.shape_cast %187 : vector<2x8xf32> to vector<2x8x1xf32>
    %189 = vector.broadcast %188 : vector<2x8x1xf32> to vector<2x8x8xf32>
    %190 = arith.subf %186, %189 : vector<2x8x8xf32>
    %191 = math.exp %190 : vector<2x8x8xf32>
    %cst_85 = arith.constant dense<0.000000e+00> : vector<2x8xf32>
    %192 = vector.multi_reduction <add>, %191, %cst_85 [2] : vector<2x8x8xf32> to vector<2x8xf32>
    %193 = vector.shape_cast %192 : vector<2x8xf32> to vector<2x8x1xf32>
    %194 = tpu.reciprocal %193 {approx = true} : vector<2x8x1xf32> -> vector<2x8x1xf32>
    %195 = vector.broadcast %194 : vector<2x8x1xf32> to vector<2x8x8xf32>
    %196 = arith.mulf %191, %195 : vector<2x8x8xf32>
    %197 = arith.truncf %196 : vector<2x8x8xf32> to vector<2x8x8xbf16>
    %198 = vector.extract_strided_slice %162 {offsets = [0, 0, 8], sizes = [2, 8, 8], strides = [1, 1, 1]} : vector<2x8x32xbf16> to vector<2x8x8xbf16>
    "tpu.trace_start"() <{level = 10 : i32, message = "bqk,bkd->bqd"}> : () -> ()
    %cst_86 = arith.constant dense<0.000000e+00> : vector<2x8x8xf32>
    %199 = tpu.matmul %197, %198, %cst_86 {dimension_numbers = #tpu.dot_dimension_numbers<[2], [1], [1], [2], [0, 0, 0, 1, 1, 2], [0], [0]>} : vector<2x8x8xbf16>, vector<2x8x8xbf16>, vector<2x8x8xf32> -> vector<2x8x8xf32>
    "tpu.trace_stop"() : () -> ()
    %200 = vector.shape_cast %199 : vector<2x8x8xf32> to vector<16x8xf32>
    %201 = arith.truncf %200 : vector<16x8xf32> to vector<16x8xbf16>
    %c0_87 = arith.constant 0 : index
    %c8_88 = arith.constant 8 : index
    %202 = vector.load %arg32[%c0_87, %c8_88] : memref<16x32xbf16, #tpu.memory_space<vmem>>, vector<16x8xbf16>
    tpu.vector_store %arg32[%c0_87, %c8_88], %201 {strides = array<i32>} : memref<16x32xbf16, #tpu.memory_space<vmem>>, vector<16x8xbf16>,
    %203 = vector.extract_strided_slice %148 {offsets = [0, 0, 16], sizes = [2, 8, 8], strides = [1, 1, 1]} : vector<2x8x32xbf16> to vector<2x8x8xbf16>
    %204 = vector.extract_strided_slice %155 {offsets = [0, 0, 16], sizes = [2, 8, 8], strides = [1, 1, 1]} : vector<2x8x32xbf16> to vector<2x8x8xbf16>
    "tpu.trace_start"() <{level = 10 : i32, message = "bqd,bkd->bqk"}> : () -> ()
    %cst_89 = arith.constant dense<0.000000e+00> : vector<2x8x8xf32>
    %205 = tpu.matmul %203, %204, %cst_89 {dimension_numbers = #tpu.dot_dimension_numbers<[2], [2], [1], [1], [0, 0, 0, 1, 1, 1], [0], [0]>} : vector<2x8x8xbf16>, vector<2x8x8xbf16>, vector<2x8x8xf32> -> vector<2x8x8xf32>
    "tpu.trace_stop"() : () -> ()
    %206 = arith.addf %205, %141 : vector<2x8x8xf32>
    %cst_90 = arith.constant dense<0xFF800000> : vector<2x8xf32>
    %207 = vector.multi_reduction <maximumf>, %206, %cst_90 [2] : vector<2x8x8xf32> to vector<2x8xf32>
    %208 = vector.shape_cast %207 : vector<2x8xf32> to vector<2x8x1xf32>
    %209 = vector.broadcast %208 : vector<2x8x1xf32> to vector<2x8x8xf32>
    %210 = arith.subf %206, %209 : vector<2x8x8xf32>
    %211 = math.exp %210 : vector<2x8x8xf32>
    %cst_91 = arith.constant dense<0.000000e+00> : vector<2x8xf32>
    %212 = vector.multi_reduction <add>, %211, %cst_91 [2] : vector<2x8x8xf32> to vector<2x8xf32>
    %213 = vector.shape_cast %212 : vector<2x8xf32> to vector<2x8x1xf32>
    %214 = tpu.reciprocal %213 {approx = true} : vector<2x8x1xf32> -> vector<2x8x1xf32>
    %215 = vector.broadcast %214 : vector<2x8x1xf32> to vector<2x8x8xf32>
    %216 = arith.mulf %211, %215 : vector<2x8x8xf32>
    %217 = arith.truncf %216 : vector<2x8x8xf32> to vector<2x8x8xbf16>
    %218 = vector.extract_strided_slice %162 {offsets = [0, 0, 16], sizes = [2, 8, 8], strides = [1, 1, 1]} : vector<2x8x32xbf16> to vector<2x8x8xbf16>
    "tpu.trace_start"() <{level = 10 : i32, message = "bqk,bkd->bqd"}> : () -> ()
    %cst_92 = arith.constant dense<0.000000e+00> : vector<2x8x8xf32>
    %219 = tpu.matmul %217, %218, %cst_92 {dimension_numbers = #tpu.dot_dimension_numbers<[2], [1], [1], [2], [0, 0, 0, 1, 1, 2], [0], [0]>} : vector<2x8x8xbf16>, vector<2x8x8xbf16>, vector<2x8x8xf32> -> vector<2x8x8xf32>
    "tpu.trace_stop"() : () -> ()
    %220 = vector.shape_cast %219 : vector<2x8x8xf32> to vector<16x8xf32>
    %221 = arith.truncf %220 : vector<16x8xf32> to vector<16x8xbf16>
    %c0_93 = arith.constant 0 : index
    %c16_94 = arith.constant 16 : index
    %222 = vector.load %arg32[%c0_93, %c16_94] : memref<16x32xbf16, #tpu.memory_space<vmem>>, vector<16x8xbf16>
    tpu.vector_store %arg32[%c0_93, %c16_94], %221 {strides = array<i32>} : memref<16x32xbf16, #tpu.memory_space<vmem>>, vector<16x8xbf16>,
    %223 = vector.extract_strided_slice %148 {offsets = [0, 0, 24], sizes = [2, 8, 8], strides = [1, 1, 1]} : vector<2x8x32xbf16> to vector<2x8x8xbf16>
    %224 = vector.extract_strided_slice %155 {offsets = [0, 0, 24], sizes = [2, 8, 8], strides = [1, 1, 1]} : vector<2x8x32xbf16> to vector<2x8x8xbf16>
    "tpu.trace_start"() <{level = 10 : i32, message = "bqd,bkd->bqk"}> : () -> ()
    %cst_95 = arith.constant dense<0.000000e+00> : vector<2x8x8xf32>
    %225 = tpu.matmul %223, %224, %cst_95 {dimension_numbers = #tpu.dot_dimension_numbers<[2], [2], [1], [1], [0, 0, 0, 1, 1, 1], [0], [0]>} : vector<2x8x8xbf16>, vector<2x8x8xbf16>, vector<2x8x8xf32> -> vector<2x8x8xf32>
    "tpu.trace_stop"() : () -> ()
    %226 = arith.addf %225, %141 : vector<2x8x8xf32>
    %cst_96 = arith.constant dense<0xFF800000> : vector<2x8xf32>
    %227 = vector.multi_reduction <maximumf>, %226, %cst_96 [2] : vector<2x8x8xf32> to vector<2x8xf32>
    %228 = vector.shape_cast %227 : vector<2x8xf32> to vector<2x8x1xf32>
    %229 = vector.broadcast %228 : vector<2x8x1xf32> to vector<2x8x8xf32>
    %230 = arith.subf %226, %229 : vector<2x8x8xf32>
    %231 = math.exp %230 : vector<2x8x8xf32>
    %cst_97 = arith.constant dense<0.000000e+00> : vector<2x8xf32>
    %232 = vector.multi_reduction <add>, %231, %cst_97 [2] : vector<2x8x8xf32> to vector<2x8xf32>
    %233 = vector.shape_cast %232 : vector<2x8xf32> to vector<2x8x1xf32>
    %234 = tpu.reciprocal %233 {approx = true} : vector<2x8x1xf32> -> vector<2x8x1xf32>
    %235 = vector.broadcast %234 : vector<2x8x1xf32> to vector<2x8x8xf32>
    %236 = arith.mulf %231, %235 : vector<2x8x8xf32>
    %237 = arith.truncf %236 : vector<2x8x8xf32> to vector<2x8x8xbf16>
    %238 = vector.extract_strided_slice %162 {offsets = [0, 0, 24], sizes = [2, 8, 8], strides = [1, 1, 1]} : vector<2x8x32xbf16> to vector<2x8x8xbf16>
    "tpu.trace_start"() <{level = 10 : i32, message = "bqk,bkd->bqd"}> : () -> ()
    %cst_98 = arith.constant dense<0.000000e+00> : vector<2x8x8xf32>
    %239 = tpu.matmul %237, %238, %cst_98 {dimension_numbers = #tpu.dot_dimension_numbers<[2], [1], [1], [2], [0, 0, 0, 1, 1, 2], [0], [0]>} : vector<2x8x8xbf16>, vector<2x8x8xbf16>, vector<2x8x8xf32> -> vector<2x8x8xf32>
    "tpu.trace_stop"() : () -> ()
    %240 = vector.shape_cast %239 : vector<2x8x8xf32> to vector<16x8xf32>
    %241 = arith.truncf %240 : vector<16x8xf32> to vector<16x8xbf16>
    %c0_99 = arith.constant 0 : index
    %c24_100 = arith.constant 24 : index
    %242 = vector.load %arg32[%c0_99, %c24_100] : memref<16x32xbf16, #tpu.memory_space<vmem>>, vector<16x8xbf16>
    tpu.vector_store %arg32[%c0_99, %c24_100], %241 {strides = array<i32>} : memref<16x32xbf16, #tpu.memory_space<vmem>>, vector<16x8xbf16>,
    %c0_101 = arith.constant 0 : index
    %c0_102 = arith.constant 0 : index
    %243 = vector.load %arg32[%c0_101, %c0_102] : memref<16x32xbf16, #tpu.memory_space<vmem>>, vector<16x32xbf16>
    %c0_103 = arith.constant 0 : index
    %c0_104 = arith.constant 0 : index
    %244 = vector.load %arg21[%c0_103, %c0_104] : memref<32x32xbf16, #tpu.memory_space<vmem>>, vector<32x32xbf16>
    %cst_105 = arith.constant dense<0.000000e+00> : vector<16x32xf32>
    %245 = tpu.matmul %243, %244, %cst_105 {dimension_numbers = #tpu.dot_dimension_numbers<[1], [0], [0], [1], [0, 0, 1, 1], [], []>} : vector<16x32xbf16>, vector<32x32xbf16>, vector<16x32xf32> -> vector<16x32xf32>
    %c0_106 = arith.constant 0 : index
    %c0_107 = arith.constant 0 : index
    %246 = vector.load %arg22[%c0_106, %c0_107] : memref<1x32xf32, #tpu.memory_space<vmem>>, vector<1x32xf32>
    %247 = vector.broadcast %246 : vector<1x32xf32> to vector<16x32xf32>
    %248 = arith.addf %245, %247 : vector<16x32xf32>
    %249 = arith.addf %138, %248 : vector<16x32xf32>
    %cst_108 = arith.constant dense<0.000000e+00> : vector<16xf32>
    %250 = vector.multi_reduction <add>, %249, %cst_108 [1] : vector<16x32xf32> to vector<16xf32>
    %251 = vector.shape_cast %250 : vector<16xf32> to vector<16x1xf32>
    %cst_109 = arith.constant 3.200000e+01 : f32
    %252 = vector.broadcast %cst_109 : f32 to vector<16x1xf32>
    %253 = arith.divf %251, %252 : vector<16x1xf32>
    %254 = vector.broadcast %253 : vector<16x1xf32> to vector<16x32xf32>
    %255 = arith.subf %249, %254 : vector<16x32xf32>
    %256 = arith.mulf %255, %255 : vector<16x32xf32>
    %cst_110 = arith.constant dense<0.000000e+00> : vector<16xf32>
    %257 = vector.multi_reduction <add>, %256, %cst_110 [1] : vector<16x32xf32> to vector<16xf32>
    %258 = vector.shape_cast %257 : vector<16xf32> to vector<16x1xf32>
    %cst_111 = arith.constant 3.200000e+01 : f32
    %259 = vector.broadcast %cst_111 : f32 to vector<16x1xf32>
    %260 = arith.divf %258, %259 : vector<16x1xf32>
    %261 = vector.broadcast %253 : vector<16x1xf32> to vector<16x32xf32>
    %262 = arith.subf %249, %261 : vector<16x32xf32>
    %cst_112 = arith.constant 9.99999974E-6 : f32
    %263 = vector.broadcast %cst_112 : f32 to vector<16x1xf32>
    %264 = arith.addf %260, %263 : vector<16x1xf32>
    %265 = math.rsqrt %264 : vector<16x1xf32>
    %266 = vector.broadcast %265 : vector<16x1xf32> to vector<16x32xf32>
    %267 = arith.mulf %262, %266 : vector<16x32xf32>
    %c0_113 = arith.constant 0 : index
    %c0_114 = arith.constant 0 : index
    %268 = vector.load %arg23[%c0_113, %c0_114] : memref<1x32xf32, #tpu.memory_space<vmem>>, vector<1x32xf32>
    %269 = vector.broadcast %268 : vector<1x32xf32> to vector<16x32xf32>
    %270 = arith.mulf %267, %269 : vector<16x32xf32>
    %c0_115 = arith.constant 0 : index
    %c0_116 = arith.constant 0 : index
    %271 = vector.load %arg24[%c0_115, %c0_116] : memref<1x32xf32, #tpu.memory_space<vmem>>, vector<1x32xf32>
    %272 = vector.broadcast %271 : vector<1x32xf32> to vector<16x32xf32>
    %273 = arith.addf %270, %272 : vector<16x32xf32>
    %274 = arith.truncf %273 : vector<16x32xf32> to vector<16x32xbf16>
    %c0_117 = arith.constant 0 : index
    %c0_118 = arith.constant 0 : index
    %275 = vector.load %arg25[%c0_117, %c0_118] : memref<32x64xbf16, #tpu.memory_space<vmem>>, vector<32x64xbf16>
    %cst_119 = arith.constant dense<0.000000e+00> : vector<16x64xf32>
    %276 = tpu.matmul %274, %275, %cst_119 {dimension_numbers = #tpu.dot_dimension_numbers<[1], [0], [0], [1], [0, 0, 1, 1], [], []>} : vector<16x32xbf16>, vector<32x64xbf16>, vector<16x64xf32> -> vector<16x64xf32>
    %c0_120 = arith.constant 0 : index
    %c0_121 = arith.constant 0 : index
    %277 = vector.load %arg26[%c0_120, %c0_121] : memref<1x64xf32, #tpu.memory_space<vmem>>, vector<1x64xf32>
    %278 = vector.broadcast %277 : vector<1x64xf32> to vector<16x64xf32>
    %279 = arith.addf %276, %278 : vector<16x64xf32>
    %cst_122 = arith.constant 0.000000e+00 : f32
    %280 = vector.broadcast %cst_122 : f32 to vector<16x64xf32>
    %281 = arith.maximumf %279, %280 : vector<16x64xf32>
    %282 = arith.truncf %281 : vector<16x64xf32> to vector<16x64xbf16>
    %c0_123 = arith.constant 0 : index
    %c0_124 = arith.constant 0 : index
    %283 = vector.load %arg27[%c0_123, %c0_124] : memref<64x32xbf16, #tpu.memory_space<vmem>>, vector<64x32xbf16>
    %cst_125 = arith.constant dense<0.000000e+00> : vector<16x32xf32>
    %284 = tpu.matmul %282, %283, %cst_125 {dimension_numbers = #tpu.dot_dimension_numbers<[1], [0], [0], [1], [0, 0, 1, 1], [], []>} : vector<16x64xbf16>, vector<64x32xbf16>, vector<16x32xf32> -> vector<16x32xf32>
    %c0_126 = arith.constant 0 : index
    %c0_127 = arith.constant 0 : index
    %285 = vector.load %arg28[%c0_126, %c0_127] : memref<1x32xf32, #tpu.memory_space<vmem>>, vector<1x32xf32>
    %286 = vector.broadcast %285 : vector<1x32xf32> to vector<16x32xf32>
    %287 = arith.addf %284, %286 : vector<16x32xf32>
    %288 = arith.addf %287, %273 : vector<16x32xf32>
    %cst_128 = arith.constant dense<0.000000e+00> : vector<16xf32>
    %289 = vector.multi_reduction <add>, %288, %cst_128 [1] : vector<16x32xf32> to vector<16xf32>
    %290 = vector.shape_cast %289 : vector<16xf32> to vector<16x1xf32>
    %cst_129 = arith.constant 3.200000e+01 : f32
    %291 = vector.broadcast %cst_129 : f32 to vector<16x1xf32>
    %292 = arith.divf %290, %291 : vector<16x1xf32>
    %293 = vector.broadcast %292 : vector<16x1xf32> to vector<16x32xf32>
    %294 = arith.subf %288, %293 : vector<16x32xf32>
    %295 = arith.mulf %294, %294 : vector<16x32xf32>
    %cst_130 = arith.constant dense<0.000000e+00> : vector<16xf32>
    %296 = vector.multi_reduction <add>, %295, %cst_130 [1] : vector<16x32xf32> to vector<16xf32>
    %297 = vector.shape_cast %296 : vector<16xf32> to vector<16x1xf32>
    %cst_131 = arith.constant 3.200000e+01 : f32
    %298 = vector.broadcast %cst_131 : f32 to vector<16x1xf32>
    %299 = arith.divf %297, %298 : vector<16x1xf32>
    %300 = vector.broadcast %292 : vector<16x1xf32> to vector<16x32xf32>
    %301 = arith.subf %288, %300 : vector<16x32xf32>
    %cst_132 = arith.constant 9.99999974E-6 : f32
    %302 = vector.broadcast %cst_132 : f32 to vector<16x1xf32>
    %303 = arith.addf %299, %302 : vector<16x1xf32>
    %304 = math.rsqrt %303 : vector<16x1xf32>
    %305 = vector.broadcast %304 : vector<16x1xf32> to vector<16x32xf32>
    %306 = arith.mulf %301, %305 : vector<16x32xf32>
    %c0_133 = arith.constant 0 : index
    %c0_134 = arith.constant 0 : index
    %307 = vector.load %arg29[%c0_133, %c0_134] : memref<1x32xf32, #tpu.memory_space<vmem>>, vector<1x32xf32>
    %308 = vector.broadcast %307 : vector<1x32xf32> to vector<16x32xf32>
    %309 = arith.mulf %306, %308 : vector<16x32xf32>
    %c0_135 = arith.constant 0 : index
    %c0_136 = arith.constant 0 : index
    %310 = vector.load %arg30[%c0_135, %c0_136] : memref<1x32xf32, #tpu.memory_space<vmem>>, vector<1x32xf32>
    %311 = vector.broadcast %310 : vector<1x32xf32> to vector<16x32xf32>
    %312 = arith.addf %309, %311 : vector<16x32xf32>
    %313 = vector.shape_cast %312 : vector<16x32xf32> to vector<2x8x32xf32>
    %314 = arith.truncf %313 : vector<2x8x32xf32> to vector<2x8x32xbf16>
    %c0_137 = arith.constant 0 : index
    %c0_138 = arith.constant 0 : index
    %c0_139 = arith.constant 0 : index
    %315 = vector.load %arg31[%c0_137, %c0_138, %c0_139] : memref<2x8x32xbf16, #tpu.memory_space<vmem>>, vector<2x8x32xbf16>
    tpu.vector_store %arg31[%c0_137, %c0_138, %c0_139], %314 {strides = array<i32>} : memref<2x8x32xbf16, #tpu.memory_space<vmem>>, vector<2x8x32xbf16>,
    return
  }
  func.func @transform_0(%arg0: i32) -> (i32, i32, i32) {
    %c0_i32 = arith.constant 0 : i32
    %c0_i32_0 = arith.constant 0 : i32
    %c0_i32_1 = arith.constant 0 : i32
    return %arg0, %c0_i32, %c0_i32_0 : i32, i32, i32
  }
  func.func @transform_1(%arg0: i32) -> (i32, i32, i32) {
    %c0_i32 = arith.constant 0 : i32
    %c0_i32_0 = arith.constant 0 : i32
    %c0_i32_1 = arith.constant 0 : i32
    return %arg0, %c0_i32, %c0_i32_0 : i32, i32, i32
  }
  func.func @transform_2(%arg0: i32) -> (i32, i32, i32) {
    %c0_i32 = arith.constant 0 : i32
    %c0_i32_0 = arith.constant 0 : i32
    %c0_i32_1 = arith.constant 0 : i32
    return %arg0, %c0_i32, %c0_i32_0 : i32, i32, i32
  }
  func.func @transform_3(%arg0: i32) -> (i32, i32, i32) {
    %c0_i32 = arith.constant 0 : i32
    %c0_i32_0 = arith.constant 0 : i32
    %c0_i32_1 = arith.constant 0 : i32
    return %arg0, %c0_i32, %c0_i32_0 : i32, i32, i32
  }
  func.func @transform_4(%arg0: i32) -> (i32, i32) {
    %c0_i32 = arith.constant 0 : i32
    %c0_i32_0 = arith.constant 0 : i32
    %c0_i32_1 = arith.constant 0 : i32
    return %c0_i32, %c0_i32_0 : i32, i32
  }
  func.func @transform_5(%arg0: i32) -> (i32, i32) {
    %c0_i32 = arith.constant 0 : i32
    %c0_i32_0 = arith.constant 0 : i32
    %c0_i32_1 = arith.constant 0 : i32
    return %c0_i32, %c0_i32_0 : i32, i32
  }
  func.func @transform_6(%arg0: i32) -> (i32, i32) {
    %c0_i32 = arith.constant 0 : i32
    %c0_i32_0 = arith.constant 0 : i32
    %c0_i32_1 = arith.constant 0 : i32
    return %c0_i32, %c0_i32_0 : i32, i32
  }
  func.func @transform_7(%arg0: i32) -> (i32, i32) {
    %c0_i32 = arith.constant 0 : i32
    %c0_i32_0 = arith.constant 0 : i32
    %c0_i32_1 = arith.constant 0 : i32
    return %c0_i32, %c0_i32_0 : i32, i32
  }
  func.func @transform_8(%arg0: i32) -> (i32, i32) {
    %c0_i32 = arith.constant 0 : i32
    %c0_i32_0 = arith.constant 0 : i32
    %c0_i32_1 = arith.constant 0 : i32
    return %c0_i32, %c0_i32_0 : i32, i32
  }
  func.func @transform_9(%arg0: i32) -> (i32, i32) {
    %c0_i32 = arith.constant 0 : i32
    %c0_i32_0 = arith.constant 0 : i32
    %c0_i32_1 = arith.constant 0 : i32
    return %c0_i32, %c0_i32_0 : i32, i32
  }
  func.func @transform_10(%arg0: i32) -> (i32, i32) {
    %c0_i32 = arith.constant 0 : i32
    %c0_i32_0 = arith.constant 0 : i32
    %c0_i32_1 = arith.constant 0 : i32
    return %c0_i32, %c0_i32_0 : i32, i32
  }
  func.func @transform_11(%arg0: i32) -> (i32, i32) {
    %c0_i32 = arith.constant 0 : i32
    %c0_i32_0 = arith.constant 0 : i32
    %c0_i32_1 = arith.constant 0 : i32
    return %c0_i32, %c0_i32_0 : i32, i32
  }
  func.func @transform_12(%arg0: i32) -> (i32, i32) {
    %c0_i32 = arith.constant 0 : i32
    %c0_i32_0 = arith.constant 0 : i32
    %c0_i32_1 = arith.constant 0 : i32
    return %c0_i32, %c0_i32_0 : i32, i32
  }
  func.func @transform_13(%arg0: i32) -> (i32, i32) {
    %c0_i32 = arith.constant 0 : i32
    %c0_i32_0 = arith.constant 0 : i32
    %c0_i32_1 = arith.constant 0 : i32
    return %c0_i32, %c0_i32_0 : i32, i32
  }
  func.func @transform_14(%arg0: i32) -> (i32, i32) {
    %c0_i32 = arith.constant 0 : i32
    %c0_i32_0 = arith.constant 0 : i32
    %c0_i32_1 = arith.constant 0 : i32
    return %c0_i32, %c0_i32_0 : i32, i32
  }
  func.func @transform_15(%arg0: i32) -> (i32, i32) {
    %c0_i32 = arith.constant 0 : i32
    %c0_i32_0 = arith.constant 0 : i32
    %c0_i32_1 = arith.constant 0 : i32
    return %c0_i32, %c0_i32_0 : i32, i32
  }
  func.func @transform_16(%arg0: i32) -> (i32, i32) {
    %c0_i32 = arith.constant 0 : i32
    %c0_i32_0 = arith.constant 0 : i32
    %c0_i32_1 = arith.constant 0 : i32
    return %c0_i32, %c0_i32_0 : i32, i32
  }
  func.func @transform_17(%arg0: i32) -> (i32, i32) {
    %c0_i32 = arith.constant 0 : i32
    %c0_i32_0 = arith.constant 0 : i32
    %c0_i32_1 = arith.constant 0 : i32
    return %c0_i32, %c0_i32_0 : i32, i32
  }
  func.func @transform_18(%arg0: i32) -> (i32, i32) {
    %c0_i32 = arith.constant 0 : i32
    %c0_i32_0 = arith.constant 0 : i32
    %c0_i32_1 = arith.constant 0 : i32
    return %c0_i32, %c0_i32_0 : i32, i32
  }
  func.func @transform_19(%arg0: i32) -> (i32, i32) {
    %c0_i32 = arith.constant 0 : i32
    %c0_i32_0 = arith.constant 0 : i32
    %c0_i32_1 = arith.constant 0 : i32
    return %c0_i32, %c0_i32_0 : i32, i32
  }
  func.func @transform_20(%arg0: i32) -> (i32, i32) {
    %c0_i32 = arith.constant 0 : i32
    %c0_i32_0 = arith.constant 0 : i32
    %c0_i32_1 = arith.constant 0 : i32
    return %c0_i32, %c0_i32_0 : i32, i32
  }
  func.func @transform_21(%arg0: i32) -> (i32, i32) {
    %c0_i32 = arith.constant 0 : i32
    %c0_i32_0 = arith.constant 0 : i32
    %c0_i32_1 = arith.constant 0 : i32
    return %c0_i32, %c0_i32_0 : i32, i32
  }
  func.func @transform_22(%arg0: i32) -> (i32, i32) {
    %c0_i32 = arith.constant 0 : i32
    %c0_i32_0 = arith.constant 0 : i32
    %c0_i32_1 = arith.constant 0 : i32
    return %c0_i32, %c0_i32_0 : i32, i32
  }
  func.func @transform_23(%arg0: i32) -> (i32, i32) {
    %c0_i32 = arith.constant 0 : i32
    %c0_i32_0 = arith.constant 0 : i32
    %c0_i32_1 = arith.constant 0 : i32
    return %c0_i32, %c0_i32_0 : i32, i32
  }
  func.func @transform_24(%arg0: i32) -> (i32, i32) {
    %c0_i32 = arith.constant 0 : i32
    %c0_i32_0 = arith.constant 0 : i32
    %c0_i32_1 = arith.constant 0 : i32
    return %c0_i32, %c0_i32_0 : i32, i32
  }
  func.func @transform_25(%arg0: i32) -> (i32, i32) {
    %c0_i32 = arith.constant 0 : i32
    %c0_i32_0 = arith.constant 0 : i32
    %c0_i32_1 = arith.constant 0 : i32
    return %c0_i32, %c0_i32_0 : i32, i32
  }
  func.func @transform_26(%arg0: i32) -> (i32, i32) {
    %c0_i32 = arith.constant 0 : i32
    %c0_i32_0 = arith.constant 0 : i32
    %c0_i32_1 = arith.constant 0 : i32
    return %c0_i32, %c0_i32_0 : i32, i32
  }
  func.func @transform_27(%arg0: i32) -> (i32, i32) {
    %c0_i32 = arith.constant 0 : i32
    %c0_i32_0 = arith.constant 0 : i32
    %c0_i32_1 = arith.constant 0 : i32
    return %c0_i32, %c0_i32_0 : i32, i32
  }
  func.func @transform_28(%arg0: i32) -> (i32, i32) {
    %c0_i32 = arith.constant 0 : i32
    %c0_i32_0 = arith.constant 0 : i32
    %c0_i32_1 = arith.constant 0 : i32
    return %c0_i32, %c0_i32_0 : i32, i32
  }
  func.func @transform_29(%arg0: i32) -> (i32, i32) {
    %c0_i32 = arith.constant 0 : i32
    %c0_i32_0 = arith.constant 0 : i32
    %c0_i32_1 = arith.constant 0 : i32
    return %c0_i32, %c0_i32_0 : i32, i32
  }
  func.func @transform_30(%arg0: i32) -> (i32, i32, i32) {
    %c0_i32 = arith.constant 0 : i32
    %c0_i32_0 = arith.constant 0 : i32
    %c0_i32_1 = arith.constant 0 : i32
    return %arg0, %c0_i32, %c0_i32_0 : i32, i32, i32
  }
}

module attributes {stable_mosaic.version = 11 : i64} {
  func.func @kernel(%arg0: i32, %arg1: memref<2x8x32xbf16, #tpu.memory_space<vmem>>, %arg2: memref<2x8x32xbf16, #tpu.memory_space<vmem>>, %arg3: memref<2x8x8xbf16, #tpu.memory_space<vmem>>, %arg4: memref<2x8x8xbf16, #tpu.memory_space<vmem>>, %arg5: memref<32x32xbf16, #tpu.memory_space<vmem>>, %arg6: memref<32x32xbf16, #tpu.memory_space<vmem>>, %arg7: memref<32x32xbf16, #tpu.memory_space<vmem>>, %arg8: memref<1x32xf32, #tpu.memory_space<vmem>>, %arg9: memref<1x32xf32, #tpu.memory_space<vmem>>, %arg10: memref<1x32xf32, #tpu.memory_space<vmem>>, %arg11: memref<32x32xbf16, #tpu.memory_space<vmem>>, %arg12: memref<1x32xf32, #tpu.memory_space<vmem>>, %arg13: memref<1x32xf32, #tpu.memory_space<vmem>>, %arg14: memref<1x32xf32, #tpu.memory_space<vmem>>, %arg15: memref<32x32xbf16, #tpu.memory_space<vmem>>, %arg16: memref<32x32xbf16, #tpu.memory_space<vmem>>, %arg17: memref<32x32xbf16, #tpu.memory_space<vmem>>, %arg18: memref<1x32xf32, #tpu.memory_space<vmem>>, %arg19: memref<1x32xf32, #tpu.memory_space<vmem>>, %arg20: memref<1x32xf32, #tpu.memory_space<vmem>>, %arg21: memref<32x32xbf16, #tpu.memory_space<vmem>>, %arg22: memref<1x32xf32, #tpu.memory_space<vmem>>, %arg23: memref<1x32xf32, #tpu.memory_space<vmem>>, %arg24: memref<1x32xf32, #tpu.memory_space<vmem>>, %arg25: memref<32x64xbf16, #tpu.memory_space<vmem>>, %arg26: memref<1x64xf32, #tpu.memory_space<vmem>>, %arg27: memref<64x32xbf16, #tpu.memory_space<vmem>>, %arg28: memref<1x32xf32, #tpu.memory_space<vmem>>, %arg29: memref<1x32xf32, #tpu.memory_space<vmem>>, %arg30: memref<1x32xf32, #tpu.memory_space<vmem>>, %arg31: memref<2x8x32xbf16, #tpu.memory_space<vmem>>, %arg32: memref<16x32xbf16, #tpu.memory_space<vmem>>) attributes {dimension_semantics = [#tpu.dimension_semantics<parallel>], iteration_bounds = array<i64: 1>, scalar_prefetch = 0 : i64, scratch_operands = 1 : i64, tpu.core_type = #tpu.core_type<tc>, window_params = [{transform_indices = @transform_0, window_bounds = array<i64: 2, 8, 32>}, {transform_indices = @transform_1, window_bounds = array<i64: 2, 8, 32>}, {transform_indices = @transform_2, window_bounds = array<i64: 2, 8, 8>}, {transform_indices = @transform_3, window_bounds = array<i64: 2, 8, 8>}, {pipeline_mode = #tpu.pipeline_mode<synchronous>, transform_indices = @transform_4, window_bounds = array<i64: 32, 32>}, {pipeline_mode = #tpu.pipeline_mode<synchronous>, transform_indices = @transform_5, window_bounds = array<i64: 32, 32>}, {pipeline_mode = #tpu.pipeline_mode<synchronous>, transform_indices = @transform_6, window_bounds = array<i64: 32, 32>}, {pipeline_mode = #tpu.pipeline_mode<synchronous>, transform_indices = @transform_7, window_bounds = array<i64: 1, 32>}, {pipeline_mode = #tpu.pipeline_mode<synchronous>, transform_indices = @transform_8, window_bounds = array<i64: 1, 32>}, {pipeline_mode = #tpu.pipeline_mode<synchronous>, transform_indices = @transform_9, window_bounds = array<i64: 1, 32>}, {pipeline_mode = #tpu.pipeline_mode<synchronous>, transform_indices = @transform_10, window_bounds = array<i64: 32, 32>}, {pipeline_mode = #tpu.pipeline_mode<synchronous>, transform_indices = @transform_11, window_bounds = array<i64: 1, 32>}, {pipeline_mode = #tpu.pipeline_mode<synchronous>, transform_indices = @transform_12, window_bounds = array<i64: 1, 32>}, {pipeline_mode = #tpu.pipeline_mode<synchronous>, transform_indices = @transform_13, window_bounds = array<i64: 1, 32>}, {pipeline_mode = #tpu.pipeline_mode<synchronous>, transform_indices = @transform_14, window_bounds = array<i64: 32, 32>}, {pipeline_mode = #tpu.pipeline_mode<synchronous>, transform_indices = @transform_15, window_bounds = array<i64: 32, 32>}, {pipeline_mode = #tpu.pipeline_mode<synchronous>, transform_indices = @transform_16, window_bounds = array<i64: 32, 32>}, {pipeline_mode = #tpu.pipeline_mode<synchronous>, transform_indices = @transform_17, window_bounds = array<i64: 1, 32>}, {pipeline_mode = #tpu.pipeline_mode<synchronous>, transform_indices = @transform_18, window_bounds = array<i64: 1, 32>}, {pipeline_mode = #tpu.pipeline_mode<synchronous>, transform_indices = @transform_19, window_bounds = array<i64: 1, 32>}, {pipeline_mode = #tpu.pipeline_mode<synchronous>, transform_indices = @transform_20, window_bounds = array<i64: 32, 32>}, {pipeline_mode = #tpu.pipeline_mode<synchronous>, transform_indices = @transform_21, window_bounds = array<i64: 1, 32>}, {pipeline_mode = #tpu.pipeline_mode<synchronous>, transform_indices = @transform_22, window_bounds = array<i64: 1, 32>}, {pipeline_mode = #tpu.pipeline_mode<synchronous>, transform_indices = @transform_23, window_bounds = array<i64: 1, 32>}, {pipeline_mode = #tpu.pipeline_mode<synchronous>, transform_indices = @transform_24, window_bounds = array<i64: 32, 64>}, {pipeline_mode = #tpu.pipeline_mode<synchronous>, transform_indices = @transform_25, window_bounds = array<i64: 1, 64>}, {pipeline_mode = #tpu.pipeline_mode<synchronous>, transform_indices = @transform_26, window_bounds = array<i64: 64, 32>}, {pipeline_mode = #tpu.pipeline_mode<synchronous>, transform_indices = @transform_27, window_bounds = array<i64: 1, 32>}, {pipeline_mode = #tpu.pipeline_mode<synchronous>, transform_indices = @transform_28, window_bounds = array<i64: 1, 32>}, {pipeline_mode = #tpu.pipeline_mode<synchronous>, transform_indices = @transform_29, window_bounds = array<i64: 1, 32>}, {transform_indices = @transform_30, window_bounds = array<i64: 2, 8, 32>}]} {
    %c0 = arith.constant 0 : index
    %c0_0 = arith.constant 0 : index
    %c0_1 = arith.constant 0 : index
    %0 = vector.load %arg1[%c0, %c0_0, %c0_1] : memref<2x8x32xbf16, #tpu.memory_space<vmem>>, vector<2x8x32xbf16>
    %1 = vector.shape_cast %0 : vector<2x8x32xbf16> to vector<16x32xbf16>
    %2 = arith.extf %1 : vector<16x32xbf16> to vector<16x32xf32>
    %c0_2 = arith.constant 0 : index
    %c0_3 = arith.constant 0 : index
    %c0_4 = arith.constant 0 : index
    %3 = vector.load %arg2[%c0_2, %c0_3, %c0_4] : memref<2x8x32xbf16, #tpu.memory_space<vmem>>, vector<2x8x32xbf16>
    %4 = vector.shape_cast %3 : vector<2x8x32xbf16> to vector<16x32xbf16>
    %c0_5 = arith.constant 0 : index
    %c0_6 = arith.constant 0 : index
    %c0_7 = arith.constant 0 : index
    %5 = vector.load %arg3[%c0_5, %c0_6, %c0_7] : memref<2x8x8xbf16, #tpu.memory_space<vmem>>, vector<2x8x8xbf16>
    %6 = arith.extf %5 : vector<2x8x8xbf16> to vector<2x8x8xf32>
    %c0_8 = arith.constant 0 : index
    %c0_9 = arith.constant 0 : index
    %7 = vector.load %arg5[%c0_8, %c0_9] : memref<32x32xbf16, #tpu.memory_space<vmem>>, vector<32x32xbf16>
    %cst = arith.constant dense<0.000000e+00> : vector<16x32xf32>
    %8 = tpu.matmul %1, %7, %cst {dimension_numbers = #tpu.dot_dimension_numbers<[1], [0], [0], [1], [0, 0, 1, 1], [], []>} : vector<16x32xbf16>, vector<32x32xbf16>, vector<16x32xf32> -> vector<16x32xf32>
    %c0_10 = arith.constant 0 : index
    %c0_11 = arith.constant 0 : index
    %9 = vector.load %arg8[%c0_10, %c0_11] : memref<1x32xf32, #tpu.memory_space<vmem>>, vector<1x32xf32>
    %10 = vector.broadcast %9 : vector<1x32xf32> to vector<16x32xf32>
    %11 = arith.addf %8, %10 : vector<16x32xf32>
    %12 = arith.truncf %11 : vector<16x32xf32> to vector<16x32xbf16>
    %13 = vector.shape_cast %12 : vector<16x32xbf16> to vector<2x8x32xbf16>
    %c0_12 = arith.constant 0 : index
    %c0_13 = arith.constant 0 : index
    %14 = vector.load %arg6[%c0_12, %c0_13] : memref<32x32xbf16, #tpu.memory_space<vmem>>, vector<32x32xbf16>
    %cst_14 = arith.constant dense<0.000000e+00> : vector<16x32xf32>
    %15 = tpu.matmul %1, %14, %cst_14 {dimension_numbers = #tpu.dot_dimension_numbers<[1], [0], [0], [1], [0, 0, 1, 1], [], []>} : vector<16x32xbf16>, vector<32x32xbf16>, vector<16x32xf32> -> vector<16x32xf32>
    %c0_15 = arith.constant 0 : index
    %c0_16 = arith.constant 0 : index
    %16 = vector.load %arg9[%c0_15, %c0_16] : memref<1x32xf32, #tpu.memory_space<vmem>>, vector<1x32xf32>
    %17 = vector.broadcast %16 : vector<1x32xf32> to vector<16x32xf32>
    %18 = arith.addf %15, %17 : vector<16x32xf32>
    %19 = arith.truncf %18 : vector<16x32xf32> to vector<16x32xbf16>
    %20 = vector.shape_cast %19 : vector<16x32xbf16> to vector<2x8x32xbf16>
    %c0_17 = arith.constant 0 : index
    %c0_18 = arith.constant 0 : index
    %21 = vector.load %arg7[%c0_17, %c0_18] : memref<32x32xbf16, #tpu.memory_space<vmem>>, vector<32x32xbf16>
    %cst_19 = arith.constant dense<0.000000e+00> : vector<16x32xf32>
    %22 = tpu.matmul %1, %21, %cst_19 {dimension_numbers = #tpu.dot_dimension_numbers<[1], [0], [0], [1], [0, 0, 1, 1], [], []>} : vector<16x32xbf16>, vector<32x32xbf16>, vector<16x32xf32> -> vector<16x32xf32>
    %c0_20 = arith.constant 0 : index
    %c0_21 = arith.constant 0 : index
    %23 = vector.load %arg10[%c0_20, %c0_21] : memref<1x32xf32, #tpu.memory_space<vmem>>, vector<1x32xf32>
    %24 = vector.broadcast %23 : vector<1x32xf32> to vector<16x32xf32>
    %25 = arith.addf %22, %24 : vector<16x32xf32>
    %26 = arith.truncf %25 : vector<16x32xf32> to vector<16x32xbf16>
    %27 = vector.shape_cast %26 : vector<16x32xbf16> to vector<2x8x32xbf16>
    %28 = vector.extract_strided_slice %13 {offsets = [0, 0, 0], sizes = [2, 8, 8], strides = [1, 1, 1]} : vector<2x8x32xbf16> to vector<2x8x8xbf16>
    %29 = vector.extract_strided_slice %20 {offsets = [0, 0, 0], sizes = [2, 8, 8], strides = [1, 1, 1]} : vector<2x8x32xbf16> to vector<2x8x8xbf16>
    "tpu.trace_start"() <{level = 10 : i32, message = "bqd,bkd->bqk"}> : () -> ()
    %cst_22 = arith.constant dense<0.000000e+00> : vector<2x8x8xf32>
    %30 = tpu.matmul %28, %29, %cst_22 {dimension_numbers = #tpu.dot_dimension_numbers<[2], [2], [1], [1], [0, 0, 0, 1, 1, 1], [0], [0]>} : vector<2x8x8xbf16>, vector<2x8x8xbf16>, vector<2x8x8xf32> -> vector<2x8x8xf32>
    "tpu.trace_stop"() : () -> ()
    %31 = arith.addf %30, %6 : vector<2x8x8xf32>
    %cst_23 = arith.constant dense<0xFF800000> : vector<2x8xf32>
    %32 = vector.multi_reduction <maximumf>, %31, %cst_23 [2] : vector<2x8x8xf32> to vector<2x8xf32>
    %33 = vector.shape_cast %32 : vector<2x8xf32> to vector<2x8x1xf32>
    %34 = vector.broadcast %33 : vector<2x8x1xf32> to vector<2x8x8xf32>
    %35 = arith.subf %31, %34 : vector<2x8x8xf32>
    %36 = math.exp %35 : vector<2x8x8xf32>
    %cst_24 = arith.constant dense<0.000000e+00> : vector<2x8xf32>
    %37 = vector.multi_reduction <add>, %36, %cst_24 [2] : vector<2x8x8xf32> to vector<2x8xf32>
    %38 = vector.shape_cast %37 : vector<2x8xf32> to vector<2x8x1xf32>
    %39 = tpu.reciprocal %38 {approx = true} : vector<2x8x1xf32> -> vector<2x8x1xf32>
    %40 = vector.broadcast %39 : vector<2x8x1xf32> to vector<2x8x8xf32>
    %41 = arith.mulf %36, %40 : vector<2x8x8xf32>
    %42 = arith.truncf %41 : vector<2x8x8xf32> to vector<2x8x8xbf16>
    %43 = vector.extract_strided_slice %27 {offsets = [0, 0, 0], sizes = [2, 8, 8], strides = [1, 1, 1]} : vector<2x8x32xbf16> to vector<2x8x8xbf16>
    "tpu.trace_start"() <{level = 10 : i32, message = "bqk,bkd->bqd"}> : () -> ()
    %cst_25 = arith.constant dense<0.000000e+00> : vector<2x8x8xf32>
    %44 = tpu.matmul %42, %43, %cst_25 {dimension_numbers = #tpu.dot_dimension_numbers<[2], [1], [1], [2], [0, 0, 0, 1, 1, 2], [0], [0]>} : vector<2x8x8xbf16>, vector<2x8x8xbf16>, vector<2x8x8xf32> -> vector<2x8x8xf32>
    "tpu.trace_stop"() : () -> ()
    %45 = vector.shape_cast %44 : vector<2x8x8xf32> to vector<16x8xf32>
    %46 = arith.truncf %45 : vector<16x8xf32> to vector<16x8xbf16>
    %c0_26 = arith.constant 0 : index
    %c0_27 = arith.constant 0 : index
    %47 = vector.load %arg32[%c0_26, %c0_27] : memref<16x32xbf16, #tpu.memory_space<vmem>>, vector<16x8xbf16>
    tpu.vector_store %arg32[%c0_26, %c0_27], %46 {strides = array<i32>} : memref<16x32xbf16, #tpu.memory_space<vmem>>, vector<16x8xbf16>,
    %48 = vector.extract_strided_slice %13 {offsets = [0, 0, 8], sizes = [2, 8, 8], strides = [1, 1, 1]} : vector<2x8x32xbf16> to vector<2x8x8xbf16>
    %49 = vector.extract_strided_slice %20 {offsets = [0, 0, 8], sizes = [2, 8, 8], strides = [1, 1, 1]} : vector<2x8x32xbf16> to vector<2x8x8xbf16>
    "tpu.trace_start"() <{level = 10 : i32, message = "bqd,bkd->bqk"}> : () -> ()
    %cst_28 = arith.constant dense<0.000000e+00> : vector<2x8x8xf32>
    %50 = tpu.matmul %48, %49, %cst_28 {dimension_numbers = #tpu.dot_dimension_numbers<[2], [2], [1], [1], [0, 0, 0, 1, 1, 1], [0], [0]>} : vector<2x8x8xbf16>, vector<2x8x8xbf16>, vector<2x8x8xf32> -> vector<2x8x8xf32>
    "tpu.trace_stop"() : () -> ()
    %51 = arith.addf %50, %6 : vector<2x8x8xf32>
    %cst_29 = arith.constant dense<0xFF800000> : vector<2x8xf32>
    %52 = vector.multi_reduction <maximumf>, %51, %cst_29 [2] : vector<2x8x8xf32> to vector<2x8xf32>
    %53 = vector.shape_cast %52 : vector<2x8xf32> to vector<2x8x1xf32>
    %54 = vector.broadcast %53 : vector<2x8x1xf32> to vector<2x8x8xf32>
    %55 = arith.subf %51, %54 : vector<2x8x8xf32>
    %56 = math.exp %55 : vector<2x8x8xf32>
    %cst_30 = arith.constant dense<0.000000e+00> : vector<2x8xf32>
    %57 = vector.multi_reduction <add>, %56, %cst_30 [2] : vector<2x8x8xf32> to vector<2x8xf32>
    %58 = vector.shape_cast %57 : vector<2x8xf32> to vector<2x8x1xf32>
    %59 = tpu.reciprocal %58 {approx = true} : vector<2x8x1xf32> -> vector<2x8x1xf32>
    %60 = vector.broadcast %59 : vector<2x8x1xf32> to vector<2x8x8xf32>
    %61 = arith.mulf %56, %60 : vector<2x8x8xf32>
    %62 = arith.truncf %61 : vector<2x8x8xf32> to vector<2x8x8xbf16>
    %63 = vector.extract_strided_slice %27 {offsets = [0, 0, 8], sizes = [2, 8, 8], strides = [1, 1, 1]} : vector<2x8x32xbf16> to vector<2x8x8xbf16>
    "tpu.trace_start"() <{level = 10 : i32, message = "bqk,bkd->bqd"}> : () -> ()
    %cst_31 = arith.constant dense<0.000000e+00> : vector<2x8x8xf32>
    %64 = tpu.matmul %62, %63, %cst_31 {dimension_numbers = #tpu.dot_dimension_numbers<[2], [1], [1], [2], [0, 0, 0, 1, 1, 2], [0], [0]>} : vector<2x8x8xbf16>, vector<2x8x8xbf16>, vector<2x8x8xf32> -> vector<2x8x8xf32>
    "tpu.trace_stop"() : () -> ()
    %65 = vector.shape_cast %64 : vector<2x8x8xf32> to vector<16x8xf32>
    %66 = arith.truncf %65 : vector<16x8xf32> to vector<16x8xbf16>
    %c0_32 = arith.constant 0 : index
    %c8 = arith.constant 8 : index
    %67 = vector.load %arg32[%c0_32, %c8] : memref<16x32xbf16, #tpu.memory_space<vmem>>, vector<16x8xbf16>
    tpu.vector_store %arg32[%c0_32, %c8], %66 {strides = array<i32>} : memref<16x32xbf16, #tpu.memory_space<vmem>>, vector<16x8xbf16>,
    %68 = vector.extract_strided_slice %13 {offsets = [0, 0, 16], sizes = [2, 8, 8], strides = [1, 1, 1]} : vector<2x8x32xbf16> to vector<2x8x8xbf16>
    %69 = vector.extract_strided_slice %20 {offsets = [0, 0, 16], sizes = [2, 8, 8], strides = [1, 1, 1]} : vector<2x8x32xbf16> to vector<2x8x8xbf16>
    "tpu.trace_start"() <{level = 10 : i32, message = "bqd,bkd->bqk"}> : () -> ()
    %cst_33 = arith.constant dense<0.000000e+00> : vector<2x8x8xf32>
    %70 = tpu.matmul %68, %69, %cst_33 {dimension_numbers = #tpu.dot_dimension_numbers<[2], [2], [1], [1], [0, 0, 0, 1, 1, 1], [0], [0]>} : vector<2x8x8xbf16>, vector<2x8x8xbf16>, vector<2x8x8xf32> -> vector<2x8x8xf32>
    "tpu.trace_stop"() : () -> ()
    %71 = arith.addf %70, %6 : vector<2x8x8xf32>
    %cst_34 = arith.constant dense<0xFF800000> : vector<2x8xf32>
    %72 = vector.multi_reduction <maximumf>, %71, %cst_34 [2] : vector<2x8x8xf32> to vector<2x8xf32>
    %73 = vector.shape_cast %72 : vector<2x8xf32> to vector<2x8x1xf32>
    %74 = vector.broadcast %73 : vector<2x8x1xf32> to vector<2x8x8xf32>
    %75 = arith.subf %71, %74 : vector<2x8x8xf32>
    %76 = math.exp %75 : vector<2x8x8xf32>
    %cst_35 = arith.constant dense<0.000000e+00> : vector<2x8xf32>
    %77 = vector.multi_reduction <add>, %76, %cst_35 [2] : vector<2x8x8xf32> to vector<2x8xf32>
    %78 = vector.shape_cast %77 : vector<2x8xf32> to vector<2x8x1xf32>
    %79 = tpu.reciprocal %78 {approx = true} : vector<2x8x1xf32> -> vector<2x8x1xf32>
    %80 = vector.broadcast %79 : vector<2x8x1xf32> to vector<2x8x8xf32>
    %81 = arith.mulf %76, %80 : vector<2x8x8xf32>
    %82 = arith.truncf %81 : vector<2x8x8xf32> to vector<2x8x8xbf16>
    %83 = vector.extract_strided_slice %27 {offsets = [0, 0, 16], sizes = [2, 8, 8], strides = [1, 1, 1]} : vector<2x8x32xbf16> to vector<2x8x8xbf16>
    "tpu.trace_start"() <{level = 10 : i32, message = "bqk,bkd->bqd"}> : () -> ()
    %cst_36 = arith.constant dense<0.000000e+00> : vector<2x8x8xf32>
    %84 = tpu.matmul %82, %83, %cst_36 {dimension_numbers = #tpu.dot_dimension_numbers<[2], [1], [1], [2], [0, 0, 0, 1, 1, 2], [0], [0]>} : vector<2x8x8xbf16>, vector<2x8x8xbf16>, vector<2x8x8xf32> -> vector<2x8x8xf32>
    "tpu.trace_stop"() : () -> ()
    %85 = vector.shape_cast %84 : vector<2x8x8xf32> to vector<16x8xf32>
    %86 = arith.truncf %85 : vector<16x8xf32> to vector<16x8xbf16>
    %c0_37 = arith.constant 0 : index
    %c16 = arith.constant 16 : index
    %87 = vector.load %arg32[%c0_37, %c16] : memref<16x32xbf16, #tpu.memory_space<vmem>>, vector<16x8xbf16>
    tpu.vector_store %arg32[%c0_37, %c16], %86 {strides = array<i32>} : memref<16x32xbf16, #tpu.memory_space<vmem>>, vector<16x8xbf16>,
    %88 = vector.extract_strided_slice %13 {offsets = [0, 0, 24], sizes = [2, 8, 8], strides = [1, 1, 1]} : vector<2x8x32xbf16> to vector<2x8x8xbf16>
    %89 = vector.extract_strided_slice %20 {offsets = [0, 0, 24], sizes = [2, 8, 8], strides = [1, 1, 1]} : vector<2x8x32xbf16> to vector<2x8x8xbf16>
    "tpu.trace_start"() <{level = 10 : i32, message = "bqd,bkd->bqk"}> : () -> ()
    %cst_38 = arith.constant dense<0.000000e+00> : vector<2x8x8xf32>
    %90 = tpu.matmul %88, %89, %cst_38 {dimension_numbers = #tpu.dot_dimension_numbers<[2], [2], [1], [1], [0, 0, 0, 1, 1, 1], [0], [0]>} : vector<2x8x8xbf16>, vector<2x8x8xbf16>, vector<2x8x8xf32> -> vector<2x8x8xf32>
    "tpu.trace_stop"() : () -> ()
    %91 = arith.addf %90, %6 : vector<2x8x8xf32>
    %cst_39 = arith.constant dense<0xFF800000> : vector<2x8xf32>
    %92 = vector.multi_reduction <maximumf>, %91, %cst_39 [2] : vector<2x8x8xf32> to vector<2x8xf32>
    %93 = vector.shape_cast %92 : vector<2x8xf32> to vector<2x8x1xf32>
    %94 = vector.broadcast %93 : vector<2x8x1xf32> to vector<2x8x8xf32>
    %95 = arith.subf %91, %94 : vector<2x8x8xf32>
    %96 = math.exp %95 : vector<2x8x8xf32>
    %cst_40 = arith.constant dense<0.000000e+00> : vector<2x8xf32>
    %97 = vector.multi_reduction <add>, %96, %cst_40 [2] : vector<2x8x8xf32> to vector<2x8xf32>
    %98 = vector.shape_cast %97 : vector<2x8xf32> to vector<2x8x1xf32>
    %99 = tpu.reciprocal %98 {approx = true} : vector<2x8x1xf32> -> vector<2x8x1xf32>
    %100 = vector.broadcast %99 : vector<2x8x1xf32> to vector<2x8x8xf32>
    %101 = arith.mulf %96, %100 : vector<2x8x8xf32>
    %102 = arith.truncf %101 : vector<2x8x8xf32> to vector<2x8x8xbf16>
    %103 = vector.extract_strided_slice %27 {offsets = [0, 0, 24], sizes = [2, 8, 8], strides = [1, 1, 1]} : vector<2x8x32xbf16> to vector<2x8x8xbf16>
    "tpu.trace_start"() <{level = 10 : i32, message = "bqk,bkd->bqd"}> : () -> ()
    %cst_41 = arith.constant dense<0.000000e+00> : vector<2x8x8xf32>
    %104 = tpu.matmul %102, %103, %cst_41 {dimension_numbers = #tpu.dot_dimension_numbers<[2], [1], [1], [2], [0, 0, 0, 1, 1, 2], [0], [0]>} : vector<2x8x8xbf16>, vector<2x8x8xbf16>, vector<2x8x8xf32> -> vector<2x8x8xf32>
    "tpu.trace_stop"() : () -> ()
    %105 = vector.shape_cast %104 : vector<2x8x8xf32> to vector<16x8xf32>
    %106 = arith.truncf %105 : vector<16x8xf32> to vector<16x8xbf16>
    %c0_42 = arith.constant 0 : index
    %c24 = arith.constant 24 : index
    %107 = vector.load %arg32[%c0_42, %c24] : memref<16x32xbf16, #tpu.memory_space<vmem>>, vector<16x8xbf16>
    tpu.vector_store %arg32[%c0_42, %c24], %106 {strides = array<i32>} : memref<16x32xbf16, #tpu.memory_space<vmem>>, vector<16x8xbf16>,
    %c0_43 = arith.constant 0 : index
    %c0_44 = arith.constant 0 : index
    %108 = vector.load %arg32[%c0_43, %c0_44] : memref<16x32xbf16, #tpu.memory_space<vmem>>, vector<16x32xbf16>
    %c0_45 = arith.constant 0 : index
    %c0_46 = arith.constant 0 : index
    %109 = vector.load %arg11[%c0_45, %c0_46] : memref<32x32xbf16, #tpu.memory_space<vmem>>, vector<32x32xbf16>
    %cst_47 = arith.constant dense<0.000000e+00> : vector<16x32xf32>
    %110 = tpu.matmul %108, %109, %cst_47 {dimension_numbers = #tpu.dot_dimension_numbers<[1], [0], [0], [1], [0, 0, 1, 1], [], []>} : vector<16x32xbf16>, vector<32x32xbf16>, vector<16x32xf32> -> vector<16x32xf32>
    %c0_48 = arith.constant 0 : index
    %c0_49 = arith.constant 0 : index
    %111 = vector.load %arg12[%c0_48, %c0_49] : memref<1x32xf32, #tpu.memory_space<vmem>>, vector<1x32xf32>
    %112 = vector.broadcast %111 : vector<1x32xf32> to vector<16x32xf32>
    %113 = arith.addf %110, %112 : vector<16x32xf32>
    %114 = arith.addf %2, %113 : vector<16x32xf32>
    %cst_50 = arith.constant dense<0.000000e+00> : vector<16xf32>
    %115 = vector.multi_reduction <add>, %114, %cst_50 [1] : vector<16x32xf32> to vector<16xf32>
    %116 = vector.shape_cast %115 : vector<16xf32> to vector<16x1xf32>
    %cst_51 = arith.constant 3.200000e+01 : f32
    %117 = vector.broadcast %cst_51 : f32 to vector<16x1xf32>
    %118 = arith.divf %116, %117 : vector<16x1xf32>
    %119 = vector.broadcast %118 : vector<16x1xf32> to vector<16x32xf32>
    %120 = arith.subf %114, %119 : vector<16x32xf32>
    %121 = arith.mulf %120, %120 : vector<16x32xf32>
    %cst_52 = arith.constant dense<0.000000e+00> : vector<16xf32>
    %122 = vector.multi_reduction <add>, %121, %cst_52 [1] : vector<16x32xf32> to vector<16xf32>
    %123 = vector.shape_cast %122 : vector<16xf32> to vector<16x1xf32>
    %cst_53 = arith.constant 3.200000e+01 : f32
    %124 = vector.broadcast %cst_53 : f32 to vector<16x1xf32>
    %125 = arith.divf %123, %124 : vector<16x1xf32>
    %126 = vector.broadcast %118 : vector<16x1xf32> to vector<16x32xf32>
    %127 = arith.subf %114, %126 : vector<16x32xf32>
    %cst_54 = arith.constant 9.99999974E-6 : f32
    %128 = vector.broadcast %cst_54 : f32 to vector<16x1xf32>
    %129 = arith.addf %125, %128 : vector<16x1xf32>
    %130 = math.rsqrt %129 : vector<16x1xf32>
    %131 = vector.broadcast %130 : vector<16x1xf32> to vector<16x32xf32>
    %132 = arith.mulf %127, %131 : vector<16x32xf32>
    %c0_55 = arith.constant 0 : index
    %c0_56 = arith.constant 0 : index
    %133 = vector.load %arg13[%c0_55, %c0_56] : memref<1x32xf32, #tpu.memory_space<vmem>>, vector<1x32xf32>
    %134 = vector.broadcast %133 : vector<1x32xf32> to vector<16x32xf32>
    %135 = arith.mulf %132, %134 : vector<16x32xf32>
    %c0_57 = arith.constant 0 : index
    %c0_58 = arith.constant 0 : index
    %136 = vector.load %arg14[%c0_57, %c0_58] : memref<1x32xf32, #tpu.memory_space<vmem>>, vector<1x32xf32>
    %137 = vector.broadcast %136 : vector<1x32xf32> to vector<16x32xf32>
    %138 = arith.addf %135, %137 : vector<16x32xf32>
    %139 = arith.truncf %138 : vector<16x32xf32> to vector<16x32xbf16>
    %c0_59 = arith.constant 0 : index
    %c0_60 = arith.constant 0 : index
    %c0_61 = arith.constant 0 : index
    %140 = vector.load %arg4[%c0_59, %c0_60, %c0_61] : memref<2x8x8xbf16, #tpu.memory_space<vmem>>, vector<2x8x8xbf16>
    %141 = arith.extf %140 : vector<2x8x8xbf16> to vector<2x8x8xf32>
    %c0_62 = arith.constant 0 : index
    %c0_63 = arith.constant 0 : index
    %142 = vector.load %arg15[%c0_62, %c0_63] : memref<32x32xbf16, #tpu.memory_space<vmem>>, vector<32x32xbf16>
    %cst_64 = arith.constant dense<0.000000e+00> : vector<16x32xf32>
    %143 = tpu.matmul %139, %142, %cst_64 {dimension_numbers = #tpu.dot_dimension_numbers<[1], [0], [0], [1], [0, 0, 1, 1], [], []>} : vector<16x32xbf16>, vector<32x32xbf16>, vector<16x32xf32> -> vector<16x32xf32>
    %c0_65 = arith.constant 0 : index
    %c0_66 = arith.constant 0 : index
    %144 = vector.load %arg18[%c0_65, %c0_66] : memref<1x32xf32, #tpu.memory_space<vmem>>, vector<1x32xf32>
    %145 = vector.broadcast %144 : vector<1x32xf32> to vector<16x32xf32>
    %146 = arith.addf %143, %145 : vector<16x32xf32>
    %147 = arith.truncf %146 : vector<16x32xf32> to vector<16x32xbf16>
    %148 = vector.shape_cast %147 : vector<16x32xbf16> to vector<2x8x32xbf16>
    %c0_67 = arith.constant 0 : index
    %c0_68 = arith.constant 0 : index
    %149 = vector.load %arg16[%c0_67, %c0_68] : memref<32x32xbf16, #tpu.memory_space<vmem>>, vector<32x32xbf16>
    %cst_69 = arith.constant dense<0.000000e+00> : vector<16x32xf32>
    %150 = tpu.matmul %4, %149, %cst_69 {dimension_numbers = #tpu.dot_dimension_numbers<[1], [0], [0], [1], [0, 0, 1, 1], [], []>} : vector<16x32xbf16>, vector<32x32xbf16>, vector<16x32xf32> -> vector<16x32xf32>
    %c0_70 = arith.constant 0 : index
    %c0_71 = arith.constant 0 : index
    %151 = vector.load %arg19[%c0_70, %c0_71] : memref<1x32xf32, #tpu.memory_space<vmem>>, vector<1x32xf32>
    %152 = vector.broadcast %151 : vector<1x32xf32> to vector<16x32xf32>
    %153 = arith.addf %150, %152 : vector<16x32xf32>
    %154 = arith.truncf %153 : vector<16x32xf32> to vector<16x32xbf16>
    %155 = vector.shape_cast %154 : vector<16x32xbf16> to vector<2x8x32xbf16>
    %c0_72 = arith.constant 0 : index
    %c0_73 = arith.constant 0 : index
    %156 = vector.load %arg17[%c0_72, %c0_73] : memref<32x32xbf16, #tpu.memory_space<vmem>>, vector<32x32xbf16>
    %cst_74 = arith.constant dense<0.000000e+00> : vector<16x32xf32>
    %157 = tpu.matmul %4, %156, %cst_74 {dimension_numbers = #tpu.dot_dimension_numbers<[1], [0], [0], [1], [0, 0, 1, 1], [], []>} : vector<16x32xbf16>, vector<32x32xbf16>, vector<16x32xf32> -> vector<16x32xf32>
    %c0_75 = arith.constant 0 : index
    %c0_76 = arith.constant 0 : index
    %158 = vector.load %arg20[%c0_75, %c0_76] : memref<1x32xf32, #tpu.memory_space<vmem>>, vector<1x32xf32>
    %159 = vector.broadcast %158 : vector<1x32xf32> to vector<16x32xf32>
    %160 = arith.addf %157, %159 : vector<16x32xf32>
    %161 = arith.truncf %160 : vector<16x32xf32> to vector<16x32xbf16>
    %162 = vector.shape_cast %161 : vector<16x32xbf16> to vector<2x8x32xbf16>
    %163 = vector.extract_strided_slice %148 {offsets = [0, 0, 0], sizes = [2, 8, 8], strides = [1, 1, 1]} : vector<2x8x32xbf16> to vector<2x8x8xbf16>
    %164 = vector.extract_strided_slice %155 {offsets = [0, 0, 0], sizes = [2, 8, 8], strides = [1, 1, 1]} : vector<2x8x32xbf16> to vector<2x8x8xbf16>
    "tpu.trace_start"() <{level = 10 : i32, message = "bqd,bkd->bqk"}> : () -> ()
    %cst_77 = arith.constant dense<0.000000e+00> : vector<2x8x8xf32>
    %165 = tpu.matmul %163, %164, %cst_77 {dimension_numbers = #tpu.dot_dimension_numbers<[2], [2], [1], [1], [0, 0, 0, 1, 1, 1], [0], [0]>} : vector<2x8x8xbf16>, vector<2x8x8xbf16>, vector<2x8x8xf32> -> vector<2x8x8xf32>
    "tpu.trace_stop"() : () -> ()
    %166 = arith.addf %165, %141 : vector<2x8x8xf32>
    %cst_78 = arith.constant dense<0xFF800000> : vector<2x8xf32>
    %167 = vector.multi_reduction <maximumf>, %166, %cst_78 [2] : vector<2x8x8xf32> to vector<2x8xf32>
    %168 = vector.shape_cast %167 : vector<2x8xf32> to vector<2x8x1xf32>
    %169 = vector.broadcast %168 : vector<2x8x1xf32> to vector<2x8x8xf32>
    %170 = arith.subf %166, %169 : vector<2x8x8xf32>
    %171 = math.exp %170 : vector<2x8x8xf32>
    %cst_79 = arith.constant dense<0.000000e+00> : vector<2x8xf32>
    %172 = vector.multi_reduction <add>, %171, %cst_79 [2] : vector<2x8x8xf32> to vector<2x8xf32>
    %173 = vector.shape_cast %172 : vector<2x8xf32> to vector<2x8x1xf32>
    %174 = tpu.reciprocal %173 {approx = true} : vector<2x8x1xf32> -> vector<2x8x1xf32>
    %175 = vector.broadcast %174 : vector<2x8x1xf32> to vector<2x8x8xf32>
    %176 = arith.mulf %171, %175 : vector<2x8x8xf32>
    %177 = arith.truncf %176 : vector<2x8x8xf32> to vector<2x8x8xbf16>
    %178 = vector.extract_strided_slice %162 {offsets = [0, 0, 0], sizes = [2, 8, 8], strides = [1, 1, 1]} : vector<2x8x32xbf16> to vector<2x8x8xbf16>
    "tpu.trace_start"() <{level = 10 : i32, message = "bqk,bkd->bqd"}> : () -> ()
    %cst_80 = arith.constant dense<0.000000e+00> : vector<2x8x8xf32>
    %179 = tpu.matmul %177, %178, %cst_80 {dimension_numbers = #tpu.dot_dimension_numbers<[2], [1], [1], [2], [0, 0, 0, 1, 1, 2], [0], [0]>} : vector<2x8x8xbf16>, vector<2x8x8xbf16>, vector<2x8x8xf32> -> vector<2x8x8xf32>
    "tpu.trace_stop"() : () -> ()
    %180 = vector.shape_cast %179 : vector<2x8x8xf32> to vector<16x8xf32>
    %181 = arith.truncf %180 : vector<16x8xf32> to vector<16x8xbf16>
    %c0_81 = arith.constant 0 : index
    %c0_82 = arith.constant 0 : index
    %182 = vector.load %arg32[%c0_81, %c0_82] : memref<16x32xbf16, #tpu.memory_space<vmem>>, vector<16x8xbf16>
    tpu.vector_store %arg32[%c0_81, %c0_82], %181 {strides = array<i32>} : memref<16x32xbf16, #tpu.memory_space<vmem>>, vector<16x8xbf16>,
    %183 = vector.extract_strided_slice %148 {offsets = [0, 0, 8], sizes = [2, 8, 8], strides = [1, 1, 1]} : vector<2x8x32xbf16> to vector<2x8x8xbf16>
    %184 = vector.extract_strided_slice %155 {offsets = [0, 0, 8], sizes = [2, 8, 8], strides = [1, 1, 1]} : vector<2x8x32xbf16> to vector<2x8x8xbf16>
    "tpu.trace_start"() <{level = 10 : i32, message = "bqd,bkd->bqk"}> : () -> ()
    %cst_83 = arith.constant dense<0.000000e+00> : vector<2x8x8xf32>
    %185 = tpu.matmul %183, %184, %cst_83 {dimension_numbers = #tpu.dot_dimension_numbers<[2], [2], [1], [1], [0, 0, 0, 1, 1, 1], [0], [0]>} : vector<2x8x8xbf16>, vector<2x8x8xbf16>, vector<2x8x8xf32> -> vector<2x8x8xf32>
    "tpu.trace_stop"() : () -> ()
    %186 = arith.addf %185, %141 : vector<2x8x8xf32>
    %cst_84 = arith.constant dense<0xFF800000> : vector<2x8xf32>
    %187 = vector.multi_reduction <maximumf>, %186, %cst_84 [2] : vector<2x8x8xf32> to vector<2x8xf32>
    %188 = vector.shape_cast %187 : vector<2x8xf32> to vector<2x8x1xf32>
    %189 = vector.broadcast %188 : vector<2x8x1xf32> to vector<2x8x8xf32>
    %190 = arith.subf %186, %189 : vector<2x8x8xf32>
    %191 = math.exp %190 : vector<2x8x8xf32>
    %cst_85 = arith.constant dense<0.000000e+00> : vector<2x8xf32>
    %192 = vector.multi_reduction <add>, %191, %cst_85 [2] : vector<2x8x8xf32> to vector<2x8xf32>
    %193 = vector.shape_cast %192 : vector<2x8xf32> to vector<2x8x1xf32>
    %194 = tpu.reciprocal %193 {approx = true} : vector<2x8x1xf32> -> vector<2x8x1xf32>
    %195 = vector.broadcast %194 : vector<2x8x1xf32> to vector<2x8x8xf32>
    %196 = arith.mulf %191, %195 : vector<2x8x8xf32>
    %197 = arith.truncf %196 : vector<2x8x8xf32> to vector<2x8x8xbf16>
    %198 = vector.extract_strided_slice %162 {offsets = [0, 0, 8], sizes = [2, 8, 8], strides = [1, 1, 1]} : vector<2x8x32xbf16> to vector<2x8x8xbf16>
    "tpu.trace_start"() <{level = 10 : i32, message = "bqk,bkd->bqd"}> : () -> ()
    %cst_86 = arith.constant dense<0.000000e+00> : vector<2x8x8xf32>
    %199 = tpu.matmul %197, %198, %cst_86 {dimension_numbers = #tpu.dot_dimension_numbers<[2], [1], [1], [2], [0, 0, 0, 1, 1, 2], [0], [0]>} : vector<2x8x8xbf16>, vector<2x8x8xbf16>, vector<2x8x8xf32> -> vector<2x8x8xf32>
    "tpu.trace_stop"() : () -> ()
    %200 = vector.shape_cast %199 : vector<2x8x8xf32> to vector<16x8xf32>
    %201 = arith.truncf %200 : vector<16x8xf32> to vector<16x8xbf16>
    %c0_87 = arith.constant 0 : index
    %c8_88 = arith.constant 8 : index
    %202 = vector.load %arg32[%c0_87, %c8_88] : memref<16x32xbf16, #tpu.memory_space<vmem>>, vector<16x8xbf16>
    tpu.vector_store %arg32[%c0_87, %c8_88], %201 {strides = array<i32>} : memref<16x32xbf16, #tpu.memory_space<vmem>>, vector<16x8xbf16>,
    %203 = vector.extract_strided_slice %148 {offsets = [0, 0, 16], sizes = [2, 8, 8], strides = [1, 1, 1]} : vector<2x8x32xbf16> to vector<2x8x8xbf16>
    %204 = vector.extract_strided_slice %155 {offsets = [0, 0, 16], sizes = [2, 8, 8], strides = [1, 1, 1]} : vector<2x8x32xbf16> to vector<2x8x8xbf16>
    "tpu.trace_start"() <{level = 10 : i32, message = "bqd,bkd->bqk"}> : () -> ()
    %cst_89 = arith.constant dense<0.000000e+00> : vector<2x8x8xf32>
    %205 = tpu.matmul %203, %204, %cst_89 {dimension_numbers = #tpu.dot_dimension_numbers<[2], [2], [1], [1], [0, 0, 0, 1, 1, 1], [0], [0]>} : vector<2x8x8xbf16>, vector<2x8x8xbf16>, vector<2x8x8xf32> -> vector<2x8x8xf32>
    "tpu.trace_stop"() : () -> ()
    %206 = arith.addf %205, %141 : vector<2x8x8xf32>
    %cst_90 = arith.constant dense<0xFF800000> : vector<2x8xf32>
    %207 = vector.multi_reduction <maximumf>, %206, %cst_90 [2] : vector<2x8x8xf32> to vector<2x8xf32>
    %208 = vector.shape_cast %207 : vector<2x8xf32> to vector<2x8x1xf32>
    %209 = vector.broadcast %208 : vector<2x8x1xf32> to vector<2x8x8xf32>
    %210 = arith.subf %206, %209 : vector<2x8x8xf32>
    %211 = math.exp %210 : vector<2x8x8xf32>
    %cst_91 = arith.constant dense<0.000000e+00> : vector<2x8xf32>
    %212 = vector.multi_reduction <add>, %211, %cst_91 [2] : vector<2x8x8xf32> to vector<2x8xf32>
    %213 = vector.shape_cast %212 : vector<2x8xf32> to vector<2x8x1xf32>
    %214 = tpu.reciprocal %213 {approx = true} : vector<2x8x1xf32> -> vector<2x8x1xf32>
    %215 = vector.broadcast %214 : vector<2x8x1xf32> to vector<2x8x8xf32>
    %216 = arith.mulf %211, %215 : vector<2x8x8xf32>
    %217 = arith.truncf %216 : vector<2x8x8xf32> to vector<2x8x8xbf16>
    %218 = vector.extract_strided_slice %162 {offsets = [0, 0, 16], sizes = [2, 8, 8], strides = [1, 1, 1]} : vector<2x8x32xbf16> to vector<2x8x8xbf16>
    "tpu.trace_start"() <{level = 10 : i32, message = "bqk,bkd->bqd"}> : () -> ()
    %cst_92 = arith.constant dense<0.000000e+00> : vector<2x8x8xf32>
    %219 = tpu.matmul %217, %218, %cst_92 {dimension_numbers = #tpu.dot_dimension_numbers<[2], [1], [1], [2], [0, 0, 0, 1, 1, 2], [0], [0]>} : vector<2x8x8xbf16>, vector<2x8x8xbf16>, vector<2x8x8xf32> -> vector<2x8x8xf32>
    "tpu.trace_stop"() : () -> ()
    %220 = vector.shape_cast %219 : vector<2x8x8xf32> to vector<16x8xf32>
    %221 = arith.truncf %220 : vector<16x8xf32> to vector<16x8xbf16>
    %c0_93 = arith.constant 0 : index
    %c16_94 = arith.constant 16 : index
    %222 = vector.load %arg32[%c0_93, %c16_94] : memref<16x32xbf16, #tpu.memory_space<vmem>>, vector<16x8xbf16>
    tpu.vector_store %arg32[%c0_93, %c16_94], %221 {strides = array<i32>} : memref<16x32xbf16, #tpu.memory_space<vmem>>, vector<16x8xbf16>,
    %223 = vector.extract_strided_slice %148 {offsets = [0, 0, 24], sizes = [2, 8, 8], strides = [1, 1, 1]} : vector<2x8x32xbf16> to vector<2x8x8xbf16>
    %224 = vector.extract_strided_slice %155 {offsets = [0, 0, 24], sizes = [2, 8, 8], strides = [1, 1, 1]} : vector<2x8x32xbf16> to vector<2x8x8xbf16>
    "tpu.trace_start"() <{level = 10 : i32, message = "bqd,bkd->bqk"}> : () -> ()
    %cst_95 = arith.constant dense<0.000000e+00> : vector<2x8x8xf32>
    %225 = tpu.matmul %223, %224, %cst_95 {dimension_numbers = #tpu.dot_dimension_numbers<[2], [2], [1], [1], [0, 0, 0, 1, 1, 1], [0], [0]>} : vector<2x8x8xbf16>, vector<2x8x8xbf16>, vector<2x8x8xf32> -> vector<2x8x8xf32>
    "tpu.trace_stop"() : () -> ()
    %226 = arith.addf %225, %141 : vector<2x8x8xf32>
    %cst_96 = arith.constant dense<0xFF800000> : vector<2x8xf32>
    %227 = vector.multi_reduction <maximumf>, %226, %cst_96 [2] : vector<2x8x8xf32> to vector<2x8xf32>
    %228 = vector.shape_cast %227 : vector<2x8xf32> to vector<2x8x1xf32>
    %229 = vector.broadcast %228 : vector<2x8x1xf32> to vector<2x8x8xf32>
    %230 = arith.subf %226, %229 : vector<2x8x8xf32>
    %231 = math.exp %230 : vector<2x8x8xf32>
    %cst_97 = arith.constant dense<0.000000e+00> : vector<2x8xf32>
    %232 = vector.multi_reduction <add>, %231, %cst_97 [2] : vector<2x8x8xf32> to vector<2x8xf32>
    %233 = vector.shape_cast %232 : vector<2x8xf32> to vector<2x8x1xf32>
    %234 = tpu.reciprocal %233 {approx = true} : vector<2x8x1xf32> -> vector<2x8x1xf32>
    %235 = vector.broadcast %234 : vector<2x8x1xf32> to vector<2x8x8xf32>
    %236 = arith.mulf %231, %235 : vector<2x8x8xf32>
    %237 = arith.truncf %236 : vector<2x8x8xf32> to vector<2x8x8xbf16>
    %238 = vector.extract_strided_slice %162 {offsets = [0, 0, 24], sizes = [2, 8, 8], strides = [1, 1, 1]} : vector<2x8x32xbf16> to vector<2x8x8xbf16>
    "tpu.trace_start"() <{level = 10 : i32, message = "bqk,bkd->bqd"}> : () -> ()
    %cst_98 = arith.constant dense<0.000000e+00> : vector<2x8x8xf32>
    %239 = tpu.matmul %237, %238, %cst_98 {dimension_numbers = #tpu.dot_dimension_numbers<[2], [1], [1], [2], [0, 0, 0, 1, 1, 2], [0], [0]>} : vector<2x8x8xbf16>, vector<2x8x8xbf16>, vector<2x8x8xf32> -> vector<2x8x8xf32>
    "tpu.trace_stop"() : () -> ()
    %240 = vector.shape_cast %239 : vector<2x8x8xf32> to vector<16x8xf32>
    %241 = arith.truncf %240 : vector<16x8xf32> to vector<16x8xbf16>
    %c0_99 = arith.constant 0 : index
    %c24_100 = arith.constant 24 : index
    %242 = vector.load %arg32[%c0_99, %c24_100] : memref<16x32xbf16, #tpu.memory_space<vmem>>, vector<16x8xbf16>
    tpu.vector_store %arg32[%c0_99, %c24_100], %241 {strides = array<i32>} : memref<16x32xbf16, #tpu.memory_space<vmem>>, vector<16x8xbf16>,
    %c0_101 = arith.constant 0 : index
    %c0_102 = arith.constant 0 : index
    %243 = vector.load %arg32[%c0_101, %c0_102] : memref<16x32xbf16, #tpu.memory_space<vmem>>, vector<16x32xbf16>
    %c0_103 = arith.constant 0 : index
    %c0_104 = arith.constant 0 : index
    %244 = vector.load %arg21[%c0_103, %c0_104] : memref<32x32xbf16, #tpu.memory_space<vmem>>, vector<32x32xbf16>
    %cst_105 = arith.constant dense<0.000000e+00> : vector<16x32xf32>
    %245 = tpu.matmul %243, %244, %cst_105 {dimension_numbers = #tpu.dot_dimension_numbers<[1], [0], [0], [1], [0, 0, 1, 1], [], []>} : vector<16x32xbf16>, vector<32x32xbf16>, vector<16x32xf32> -> vector<16x32xf32>
    %c0_106 = arith.constant 0 : index
    %c0_107 = arith.constant 0 : index
    %246 = vector.load %arg22[%c0_106, %c0_107] : memref<1x32xf32, #tpu.memory_space<vmem>>, vector<1x32xf32>
    %247 = vector.broadcast %246 : vector<1x32xf32> to vector<16x32xf32>
    %248 = arith.addf %245, %247 : vector<16x32xf32>
    %249 = arith.addf %138, %248 : vector<16x32xf32>
    %cst_108 = arith.constant dense<0.000000e+00> : vector<16xf32>
    %250 = vector.multi_reduction <add>, %249, %cst_108 [1] : vector<16x32xf32> to vector<16xf32>
    %251 = vector.shape_cast %250 : vector<16xf32> to vector<16x1xf32>
    %cst_109 = arith.constant 3.200000e+01 : f32
    %252 = vector.broadcast %cst_109 : f32 to vector<16x1xf32>
    %253 = arith.divf %251, %252 : vector<16x1xf32>
    %254 = vector.broadcast %253 : vector<16x1xf32> to vector<16x32xf32>
    %255 = arith.subf %249, %254 : vector<16x32xf32>
    %256 = arith.mulf %255, %255 : vector<16x32xf32>
    %cst_110 = arith.constant dense<0.000000e+00> : vector<16xf32>
    %257 = vector.multi_reduction <add>, %256, %cst_110 [1] : vector<16x32xf32> to vector<16xf32>
    %258 = vector.shape_cast %257 : vector<16xf32> to vector<16x1xf32>
    %cst_111 = arith.constant 3.200000e+01 : f32
    %259 = vector.broadcast %cst_111 : f32 to vector<16x1xf32>
    %260 = arith.divf %258, %259 : vector<16x1xf32>
    %261 = vector.broadcast %253 : vector<16x1xf32> to vector<16x32xf32>
    %262 = arith.subf %249, %261 : vector<16x32xf32>
    %cst_112 = arith.constant 9.99999974E-6 : f32
    %263 = vector.broadcast %cst_112 : f32 to vector<16x1xf32>
    %264 = arith.addf %260, %263 : vector<16x1xf32>
    %265 = math.rsqrt %264 : vector<16x1xf32>
    %266 = vector.broadcast %265 : vector<16x1xf32> to vector<16x32xf32>
    %267 = arith.mulf %262, %266 : vector<16x32xf32>
    %c0_113 = arith.constant 0 : index
    %c0_114 = arith.constant 0 : index
    %268 = vector.load %arg23[%c0_113, %c0_114] : memref<1x32xf32, #tpu.memory_space<vmem>>, vector<1x32xf32>
    %269 = vector.broadcast %268 : vector<1x32xf32> to vector<16x32xf32>
    %270 = arith.mulf %267, %269 : vector<16x32xf32>
    %c0_115 = arith.constant 0 : index
    %c0_116 = arith.constant 0 : index
    %271 = vector.load %arg24[%c0_115, %c0_116] : memref<1x32xf32, #tpu.memory_space<vmem>>, vector<1x32xf32>
    %272 = vector.broadcast %271 : vector<1x32xf32> to vector<16x32xf32>
    %273 = arith.addf %270, %272 : vector<16x32xf32>
    %274 = arith.truncf %273 : vector<16x32xf32> to vector<16x32xbf16>
    %c0_117 = arith.constant 0 : index
    %c0_118 = arith.constant 0 : index
    %275 = vector.load %arg25[%c0_117, %c0_118] : memref<32x64xbf16, #tpu.memory_space<vmem>>, vector<32x64xbf16>
    %cst_119 = arith.constant dense<0.000000e+00> : vector<16x64xf32>
    %276 = tpu.matmul %274, %275, %cst_119 {dimension_numbers = #tpu.dot_dimension_numbers<[1], [0], [0], [1], [0, 0, 1, 1], [], []>} : vector<16x32xbf16>, vector<32x64xbf16>, vector<16x64xf32> -> vector<16x64xf32>
    %c0_120 = arith.constant 0 : index
    %c0_121 = arith.constant 0 : index
    %277 = vector.load %arg26[%c0_120, %c0_121] : memref<1x64xf32, #tpu.memory_space<vmem>>, vector<1x64xf32>
    %278 = vector.broadcast %277 : vector<1x64xf32> to vector<16x64xf32>
    %279 = arith.addf %276, %278 : vector<16x64xf32>
    %cst_122 = arith.constant 0.000000e+00 : f32
    %280 = vector.broadcast %cst_122 : f32 to vector<16x64xf32>
    %281 = arith.maximumf %279, %280 : vector<16x64xf32>
    %282 = arith.truncf %281 : vector<16x64xf32> to vector<16x64xbf16>
    %c0_123 = arith.constant 0 : index
    %c0_124 = arith.constant 0 : index
    %283 = vector.load %arg27[%c0_123, %c0_124] : memref<64x32xbf16, #tpu.memory_space<vmem>>, vector<64x32xbf16>
    %cst_125 = arith.constant dense<0.000000e+00> : vector<16x32xf32>
    %284 = tpu.matmul %282, %283, %cst_125 {dimension_numbers = #tpu.dot_dimension_numbers<[1], [0], [0], [1], [0, 0, 1, 1], [], []>} : vector<16x64xbf16>, vector<64x32xbf16>, vector<16x32xf32> -> vector<16x32xf32>
    %c0_126 = arith.constant 0 : index
    %c0_127 = arith.constant 0 : index
    %285 = vector.load %arg28[%c0_126, %c0_127] : memref<1x32xf32, #tpu.memory_space<vmem>>, vector<1x32xf32>
    %286 = vector.broadcast %285 : vector<1x32xf32> to vector<16x32xf32>
    %287 = arith.addf %284, %286 : vector<16x32xf32>
    %288 = arith.addf %287, %273 : vector<16x32xf32>
    %cst_128 = arith.constant dense<0.000000e+00> : vector<16xf32>
    %289 = vector.multi_reduction <add>, %288, %cst_128 [1] : vector<16x32xf32> to vector<16xf32>
    %290 = vector.shape_cast %289 : vector<16xf32> to vector<16x1xf32>
    %cst_129 = arith.constant 3.200000e+01 : f32
    %291 = vector.broadcast %cst_129 : f32 to vector<16x1xf32>
    %292 = arith.divf %290, %291 : vector<16x1xf32>
    %293 = vector.broadcast %292 : vector<16x1xf32> to vector<16x32xf32>
    %294 = arith.subf %288, %293 : vector<16x32xf32>
    %295 = arith.mulf %294, %294 : vector<16x32xf32>
    %cst_130 = arith.constant dense<0.000000e+00> : vector<16xf32>
    %296 = vector.multi_reduction <add>, %295, %cst_130 [1] : vector<16x32xf32> to vector<16xf32>
    %297 = vector.shape_cast %296 : vector<16xf32> to vector<16x1xf32>
    %cst_131 = arith.constant 3.200000e+01 : f32
    %298 = vector.broadcast %cst_131 : f32 to vector<16x1xf32>
    %299 = arith.divf %297, %298 : vector<16x1xf32>
    %300 = vector.broadcast %292 : vector<16x1xf32> to vector<16x32xf32>
    %301 = arith.subf %288, %300 : vector<16x32xf32>
    %cst_132 = arith.constant 9.99999974E-6 : f32
    %302 = vector.broadcast %cst_132 : f32 to vector<16x1xf32>
    %303 = arith.addf %299, %302 : vector<16x1xf32>
    %304 = math.rsqrt %303 : vector<16x1xf32>
    %305 = vector.broadcast %304 : vector<16x1xf32> to vector<16x32xf32>
    %306 = arith.mulf %301, %305 : vector<16x32xf32>
    %c0_133 = arith.constant 0 : index
    %c0_134 = arith.constant 0 : index
    %307 = vector.load %arg29[%c0_133, %c0_134] : memref<1x32xf32, #tpu.memory_space<vmem>>, vector<1x32xf32>
    %308 = vector.broadcast %307 : vector<1x32xf32> to vector<16x32xf32>
    %309 = arith.mulf %306, %308 : vector<16x32xf32>
    %c0_135 = arith.constant 0 : index
    %c0_136 = arith.constant 0 : index
    %310 = vector.load %arg30[%c0_135, %c0_136] : memref<1x32xf32, #tpu.memory_space<vmem>>, vector<1x32xf32>
    %311 = vector.broadcast %310 : vector<1x32xf32> to vector<16x32xf32>
    %312 = arith.addf %309, %311 : vector<16x32xf32>
    %313 = vector.shape_cast %312 : vector<16x32xf32> to vector<2x8x32xf32>
    %314 = arith.truncf %313 : vector<2x8x32xf32> to vector<2x8x32xbf16>
    %c0_137 = arith.constant 0 : index
    %c0_138 = arith.constant 0 : index
    %c0_139 = arith.constant 0 : index
    %315 = vector.load %arg31[%c0_137, %c0_138, %c0_139] : memref<2x8x32xbf16, #tpu.memory_space<vmem>>, vector<2x8x32xbf16>
    tpu.vector_store %arg31[%c0_137, %c0_138, %c0_139], %314 {strides = array<i32>} : memref<2x8x32xbf16, #tpu.memory_space<vmem>>, vector<2x8x32xbf16>,
    return
  }
  func.func @transform_0(%arg0: i32) -> (i32, i32, i32) {
    %c0_i32 = arith.constant 0 : i32
    %c0_i32_0 = arith.constant 0 : i32
    %c0_i32_1 = arith.constant 0 : i32
    return %arg0, %c0_i32, %c0_i32_0 : i32, i32, i32
  }
  func.func @transform_1(%arg0: i32) -> (i32, i32, i32) {
    %c0_i32 = arith.constant 0 : i32
    %c0_i32_0 = arith.constant 0 : i32
    %c0_i32_1 = arith.constant 0 : i32
    return %arg0, %c0_i32, %c0_i32_0 : i32, i32, i32
  }
  func.func @transform_2(%arg0: i32) -> (i32, i32, i32) {
    %c0_i32 = arith.constant 0 : i32
    %c0_i32_0 = arith.constant 0 : i32
    %c0_i32_1 = arith.constant 0 : i32
    return %arg0, %c0_i32, %c0_i32_0 : i32, i32, i32
  }
  func.func @transform_3(%arg0: i32) -> (i32, i32, i32) {
    %c0_i32 = arith.constant 0 : i32
    %c0_i32_0 = arith.constant 0 : i32
    %c0_i32_1 = arith.constant 0 : i32
    return %arg0, %c0_i32, %c0_i32_0 : i32, i32, i32
  }
  func.func @transform_4(%arg0: i32) -> (i32, i32) {
    %c0_i32 = arith.constant 0 : i32
    %c0_i32_0 = arith.constant 0 : i32
    %c0_i32_1 = arith.constant 0 : i32
    return %c0_i32, %c0_i32_0 : i32, i32
  }
  func.func @transform_5(%arg0: i32) -> (i32, i32) {
    %c0_i32 = arith.constant 0 : i32
    %c0_i32_0 = arith.constant 0 : i32
    %c0_i32_1 = arith.constant 0 : i32
    return %c0_i32, %c0_i32_0 : i32, i32
  }
  func.func @transform_6(%arg0: i32) -> (i32, i32) {
    %c0_i32 = arith.constant 0 : i32
    %c0_i32_0 = arith.constant 0 : i32
    %c0_i32_1 = arith.constant 0 : i32
    return %c0_i32, %c0_i32_0 : i32, i32
  }
  func.func @transform_7(%arg0: i32) -> (i32, i32) {
    %c0_i32 = arith.constant 0 : i32
    %c0_i32_0 = arith.constant 0 : i32
    %c0_i32_1 = arith.constant 0 : i32
    return %c0_i32, %c0_i32_0 : i32, i32
  }
  func.func @transform_8(%arg0: i32) -> (i32, i32) {
    %c0_i32 = arith.constant 0 : i32
    %c0_i32_0 = arith.constant 0 : i32
    %c0_i32_1 = arith.constant 0 : i32
    return %c0_i32, %c0_i32_0 : i32, i32
  }
  func.func @transform_9(%arg0: i32) -> (i32, i32) {
    %c0_i32 = arith.constant 0 : i32
    %c0_i32_0 = arith.constant 0 : i32
    %c0_i32_1 = arith.constant 0 : i32
    return %c0_i32, %c0_i32_0 : i32, i32
  }
  func.func @transform_10(%arg0: i32) -> (i32, i32) {
    %c0_i32 = arith.constant 0 : i32
    %c0_i32_0 = arith.constant 0 : i32
    %c0_i32_1 = arith.constant 0 : i32
    return %c0_i32, %c0_i32_0 : i32, i32
  }
  func.func @transform_11(%arg0: i32) -> (i32, i32) {
    %c0_i32 = arith.constant 0 : i32
    %c0_i32_0 = arith.constant 0 : i32
    %c0_i32_1 = arith.constant 0 : i32
    return %c0_i32, %c0_i32_0 : i32, i32
  }
  func.func @transform_12(%arg0: i32) -> (i32, i32) {
    %c0_i32 = arith.constant 0 : i32
    %c0_i32_0 = arith.constant 0 : i32
    %c0_i32_1 = arith.constant 0 : i32
    return %c0_i32, %c0_i32_0 : i32, i32
  }
  func.func @transform_13(%arg0: i32) -> (i32, i32) {
    %c0_i32 = arith.constant 0 : i32
    %c0_i32_0 = arith.constant 0 : i32
    %c0_i32_1 = arith.constant 0 : i32
    return %c0_i32, %c0_i32_0 : i32, i32
  }
  func.func @transform_14(%arg0: i32) -> (i32, i32) {
    %c0_i32 = arith.constant 0 : i32
    %c0_i32_0 = arith.constant 0 : i32
    %c0_i32_1 = arith.constant 0 : i32
    return %c0_i32, %c0_i32_0 : i32, i32
  }
  func.func @transform_15(%arg0: i32) -> (i32, i32) {
    %c0_i32 = arith.constant 0 : i32
    %c0_i32_0 = arith.constant 0 : i32
    %c0_i32_1 = arith.constant 0 : i32
    return %c0_i32, %c0_i32_0 : i32, i32
  }
  func.func @transform_16(%arg0: i32) -> (i32, i32) {
    %c0_i32 = arith.constant 0 : i32
    %c0_i32_0 = arith.constant 0 : i32
    %c0_i32_1 = arith.constant 0 : i32
    return %c0_i32, %c0_i32_0 : i32, i32
  }
  func.func @transform_17(%arg0: i32) -> (i32, i32) {
    %c0_i32 = arith.constant 0 : i32
    %c0_i32_0 = arith.constant 0 : i32
    %c0_i32_1 = arith.constant 0 : i32
    return %c0_i32, %c0_i32_0 : i32, i32
  }
  func.func @transform_18(%arg0: i32) -> (i32, i32) {
    %c0_i32 = arith.constant 0 : i32
    %c0_i32_0 = arith.constant 0 : i32
    %c0_i32_1 = arith.constant 0 : i32
    return %c0_i32, %c0_i32_0 : i32, i32
  }
  func.func @transform_19(%arg0: i32) -> (i32, i32) {
    %c0_i32 = arith.constant 0 : i32
    %c0_i32_0 = arith.constant 0 : i32
    %c0_i32_1 = arith.constant 0 : i32
    return %c0_i32, %c0_i32_0 : i32, i32
  }
  func.func @transform_20(%arg0: i32) -> (i32, i32) {
    %c0_i32 = arith.constant 0 : i32
    %c0_i32_0 = arith.constant 0 : i32
    %c0_i32_1 = arith.constant 0 : i32
    return %c0_i32, %c0_i32_0 : i32, i32
  }
  func.func @transform_21(%arg0: i32) -> (i32, i32) {
    %c0_i32 = arith.constant 0 : i32
    %c0_i32_0 = arith.constant 0 : i32
    %c0_i32_1 = arith.constant 0 : i32
    return %c0_i32, %c0_i32_0 : i32, i32
  }
  func.func @transform_22(%arg0: i32) -> (i32, i32) {
    %c0_i32 = arith.constant 0 : i32
    %c0_i32_0 = arith.constant 0 : i32
    %c0_i32_1 = arith.constant 0 : i32
    return %c0_i32, %c0_i32_0 : i32, i32
  }
  func.func @transform_23(%arg0: i32) -> (i32, i32) {
    %c0_i32 = arith.constant 0 : i32
    %c0_i32_0 = arith.constant 0 : i32
    %c0_i32_1 = arith.constant 0 : i32
    return %c0_i32, %c0_i32_0 : i32, i32
  }
  func.func @transform_24(%arg0: i32) -> (i32, i32) {
    %c0_i32 = arith.constant 0 : i32
    %c0_i32_0 = arith.constant 0 : i32
    %c0_i32_1 = arith.constant 0 : i32
    return %c0_i32, %c0_i32_0 : i32, i32
  }
  func.func @transform_25(%arg0: i32) -> (i32, i32) {
    %c0_i32 = arith.constant 0 : i32
    %c0_i32_0 = arith.constant 0 : i32
    %c0_i32_1 = arith.constant 0 : i32
    return %c0_i32, %c0_i32_0 : i32, i32
  }
  func.func @transform_26(%arg0: i32) -> (i32, i32) {
    %c0_i32 = arith.constant 0 : i32
    %c0_i32_0 = arith.constant 0 : i32
    %c0_i32_1 = arith.constant 0 : i32
    return %c0_i32, %c0_i32_0 : i32, i32
  }
  func.func @transform_27(%arg0: i32) -> (i32, i32) {
    %c0_i32 = arith.constant 0 : i32
    %c0_i32_0 = arith.constant 0 : i32
    %c0_i32_1 = arith.constant 0 : i32
    return %c0_i32, %c0_i32_0 : i32, i32
  }
  func.func @transform_28(%arg0: i32) -> (i32, i32) {
    %c0_i32 = arith.constant 0 : i32
    %c0_i32_0 = arith.constant 0 : i32
    %c0_i32_1 = arith.constant 0 : i32
    return %c0_i32, %c0_i32_0 : i32, i32
  }
  func.func @transform_29(%arg0: i32) -> (i32, i32) {
    %c0_i32 = arith.constant 0 : i32
    %c0_i32_0 = arith.constant 0 : i32
    %c0_i32_1 = arith.constant 0 : i32
    return %c0_i32, %c0_i32_0 : i32, i32
  }
  func.func @transform_30(%arg0: i32) -> (i32, i32, i32) {
    %c0_i32 = arith.constant 0 : i32
    %c0_i32_0 = arith.constant 0 : i32
    %c0_i32_1 = arith.constant 0 : i32
    return %arg0, %c0_i32, %c0_i32_0 : i32, i32, i32
  }
}

</mosaic_0001>

<llo_original>
// kernel: tpu_custom_call.1
$region0: #{tpu_custom_call.1}
  #allocation0 [shape = 'u32[]', space=smem, size = 0x4, offset = 0x4, fixed_abs, tag = 'smem constant byte address 0x4 - core index']
  #allocation1 [shape = 'u32[144,128]{1,0:T(1,128)}', space=vmem, size = 0x12000, scoped, tag = 'internal scratch']
  #allocation2 [shape = 'bf16[16,32]{1,0:T(16,128)(2,1)}', space=vmem, size = 0x1000, scoped, tag = 'scratch operand']
  %s0 = inlined_call_operand.smem [shape: u32[31], index: -1, kind: input, shape index: {}]
  %s1 = sld [smem:[%s0]]
  %s2 = scalar_lea.smem %s0, 1
  %s3 = sld [smem:[%s2]]
  %s4 = scalar_lea.smem %s0, 2
  %s5 = sld [smem:[%s4]]
  %s6 = scalar_lea.smem %s0, 3
  %s7 = sld [smem:[%s6]]
  %s8 = scalar_lea.smem %s0, 4
  %s9 = sld [smem:[%s8]]
  %s10 = scalar_lea.smem %s0, 5
  %s11 = sld [smem:[%s10]]
  %s12 = scalar_lea.smem %s0, 6
  %s13 = sld [smem:[%s12]]
  %s14 = scalar_lea.smem %s0, 7
  %s15 = sld [smem:[%s14]]
  %s16 = scalar_lea.smem %s0, 8
  %s17 = sld [smem:[%s16]]
  %s18 = scalar_lea.smem %s0, 9
  %s19 = sld [smem:[%s18]]
  %s20 = scalar_lea.smem %s0, 10
  %s21 = sld [smem:[%s20]]
  %s22 = scalar_lea.smem %s0, 11
  %s23 = sld [smem:[%s22]]
  %s24 = scalar_lea.smem %s0, 12
  %s25 = sld [smem:[%s24]]
  %s26 = scalar_lea.smem %s0, 13
  %s27 = sld [smem:[%s26]]
  %s28 = scalar_lea.smem %s0, 14
  %s29 = sld [smem:[%s28]]
  %s30 = scalar_lea.smem %s0, 15
  %s31 = sld [smem:[%s30]]
  %s32 = scalar_lea.smem %s0, 16
  %s33 = sld [smem:[%s32]]
  %s34 = scalar_lea.smem %s0, 17
  %s35 = sld [smem:[%s34]]
  %s36 = scalar_lea.smem %s0, 18
  %s37 = sld [smem:[%s36]]
  %s38 = scalar_lea.smem %s0, 19
  %s39 = sld [smem:[%s38]]
  %s40 = scalar_lea.smem %s0, 20
  %s41 = sld [smem:[%s40]]
  %s42 = scalar_lea.smem %s0, 21
  %s43 = sld [smem:[%s42]]
  %s44 = scalar_lea.smem %s0, 22
  %s45 = sld [smem:[%s44]]
  %s46 = scalar_lea.smem %s0, 23
  %s47 = sld [smem:[%s46]]
  %s48 = scalar_lea.smem %s0, 24
  %s49 = sld [smem:[%s48]]
  %s50 = scalar_lea.smem %s0, 25
  %s51 = sld [smem:[%s50]]
  %s52 = scalar_lea.smem %s0, 26
  %s53 = sld [smem:[%s52]]
  %s54 = scalar_lea.smem %s0, 27
  %s55 = sld [smem:[%s54]]
  %s56 = scalar_lea.smem %s0, 28
  %s57 = sld [smem:[%s56]]
  %s58 = scalar_lea.smem %s0, 29
  %s59 = sld [smem:[%s58]]
  %s60 = scalar_lea.smem %s0, 30
  %s61 = sld [smem:[%s60]]
  %s62 = sld [smem:[#allocation0]]
  $region186: #{tpu_custom_call.1} parent=0
    _
  %s64 = ssub.s32 1, %s62
  %s65 = scalar_select 0, %s64, %s62
  $region1: #{tpu_custom_call.1} parent=0
    #allocation3 [shape = 'u8[4096]{0}', space=vmem, size = 0x1000, scoped, tag = 'input window, operand 0, single buffered']
    #allocation4 [shape = 's32[1]{0}', space=sflag, size = 0x4, scoped, tag = 'scoped memory for tpu_custom_call.1']
    #allocation5 [shape = 's32[1]{0}', space=sflag, size = 0x4, scoped, tag = 'scoped memory for tpu_custom_call.1']
    #allocation6 [shape = 'u8[4096]{0}', space=vmem, size = 0x1000, scoped, tag = 'input window, operand 1, single buffered']
    #allocation7 [shape = 's32[1]{0}', space=sflag, size = 0x4, scoped, tag = 'scoped memory for tpu_custom_call.1']
    #allocation8 [shape = 'u8[4096]{0}', space=vmem, size = 0x1000, scoped, tag = 'input window, operand 2, single buffered']
    #allocation9 [shape = 'u8[4096]{0}', space=vmem, size = 0x1000, scoped, tag = 'input window, operand 3, single buffered']
    #allocation10 [shape = 's32[1]{0}', space=sflag, size = 0x4, scoped, tag = 'scoped memory for tpu_custom_call.1']
    #allocation11 [shape = 'u8[512]{0}', space=vmem, size = 0x400, scoped, tag = 'input window, operand 7, single buffered']
    #allocation12 [shape = 'u8[512]{0}', space=vmem, size = 0x400, scoped, tag = 'input window, operand 8, single buffered']
    #allocation13 [shape = 's32[1]{0}', space=sflag, size = 0x4, scoped, tag = 'scoped memory for tpu_custom_call.1']
    #allocation14 [shape = 'u8[512]{0}', space=vmem, size = 0x400, scoped, tag = 'input window, operand 9, single buffered']
    #allocation15 [shape = 'u8[512]{0}', space=vmem, size = 0x400, scoped, tag = 'input window, operand 11, single buffered']
    #allocation16 [shape = 's32[1]{0}', space=sflag, size = 0x4, scoped, tag = 'scoped memory for tpu_custom_call.1']
    #allocation17 [shape = 'u8[512]{0}', space=vmem, size = 0x400, scoped, tag = 'input window, operand 12, single buffered']
    #allocation18 [shape = 'u8[512]{0}', space=vmem, size = 0x400, scoped, tag = 'input window, operand 13, single buffered']
    #allocation19 [shape = 's32[1]{0}', space=sflag, size = 0x4, scoped, tag = 'scoped memory for tpu_custom_call.1']
    #allocation20 [shape = 'u8[8192]{0}', space=vmem, size = 0x2000, scoped, tag = 'input window, operand 15, single buffered']
    #allocation21 [shape = 'u8[8192]{0}', space=vmem, size = 0x2000, scoped, tag = 'input window, operand 16, single buffered']
    #allocation22 [shape = 's32[1]{0}', space=sflag, size = 0x4, scoped, tag = 'scoped memory for tpu_custom_call.1']
    #allocation23 [shape = 'u8[512]{0}', space=vmem, size = 0x400, scoped, tag = 'input window, operand 17, single buffered']
    #allocation24 [shape = 'u8[512]{0}', space=vmem, size = 0x400, scoped, tag = 'input window, operand 22, single buffered']
    #allocation25 [shape = 's32[1]{0}', space=sflag, size = 0x4, scoped, tag = 'scoped memory for tpu_custom_call.1']
    #allocation26 [shape = 'u8[4096]{0}', space=vmem, size = 0x1000, scoped, tag = 'output window, operand 0, single buffered']
    %66 = vsyncpa [#allocation4], 0
    %67 = vsyncpa [#allocation7], 0
    %68 = vsyncpa [#allocation10], 0
    %69 = vsyncpa [#allocation13], 0
    %70 = vsyncpa [#allocation16], 0
    %71 = vsyncpa [#allocation19], 0
    %72 = vsyncpa [#allocation22], 0
    %73 = vsyncpa [#allocation25], 0
    %74 = vsyncpa [#allocation5], 0
    // Predicated region
    $region2: #{tpu_custom_call.1} parent=1 // pred_check
      _
    $region3: #{tpu_custom_call.1} parent=1 // pred_check_branch
      %76 = sbr.rel (0) target = $region5
    $region4: #{tpu_custom_call.1} parent=1 // pred_region
      %s78 = ssub.s32 128, 128
      %79 = vsyncadd [#allocation4], %s78
      %s80 = sshll.u32 [#allocation3], 4
      %s81 = int_to_ptr.vmem [resolvable:$true] %s80
      %86 = dma.hbm_to_vmem [thread:$0]  %s1, 128, %s81, [#allocation4], 64, 64, 4
    $region5: #{tpu_custom_call.1} parent=1 // pred_fallthru
      _
    // Predicated region
    $region6: #{tpu_custom_call.1} parent=1 // pred_check
      _
    $region7: #{tpu_custom_call.1} parent=1 // pred_check_branch
      %88 = sbr.rel (0) target = $region9
    $region8: #{tpu_custom_call.1} parent=1 // pred_region
      %s90 = ssub.s32 128, 128
      %91 = vsyncadd [#allocation7], %s90
      %s92 = sshll.u32 [#allocation6], 4
      %s93 = int_to_ptr.vmem [resolvable:$true] %s92
      %98 = dma.hbm_to_vmem [thread:$0]  %s3, 128, %s93, [#allocation7], 64, 64, 4
    $region9: #{tpu_custom_call.1} parent=1 // pred_fallthru
      _
    // Predicated region
    $region10: #{tpu_custom_call.1} parent=1 // pred_check
      _
    $region11: #{tpu_custom_call.1} parent=1 // pred_check_branch
      %100 = sbr.rel (0) target = $region13
    $region12: #{tpu_custom_call.1} parent=1 // pred_region
      %s102 = ssub.s32 128, 128
      %103 = vsyncadd [#allocation7], %s102
      %s104 = sshll.u32 [#allocation8], 4
      %s105 = int_to_ptr.vmem [resolvable:$true] %s104
      %110 = dma.hbm_to_vmem [thread:$0]  %s5, 128, %s105, [#allocation7], 64, 64, 4
    $region13: #{tpu_custom_call.1} parent=1 // pred_fallthru
      _
    // Predicated region
    $region14: #{tpu_custom_call.1} parent=1 // pred_check
      _
    $region15: #{tpu_custom_call.1} parent=1 // pred_check_branch
      %112 = sbr.rel (0) target = $region17
    $region16: #{tpu_custom_call.1} parent=1 // pred_region
      %s114 = ssub.s32 128, 128
      %115 = vsyncadd [#allocation10], %s114
      %s116 = sshll.u32 [#allocation9], 4
      %s117 = int_to_ptr.vmem [resolvable:$true] %s116
      %122 = dma.hbm_to_vmem [thread:$0]  %s7, 128, %s117, [#allocation10], 64, 64, 4
    $region17: #{tpu_custom_call.1} parent=1 // pred_fallthru
      _
    // Predicated region
    $region18: #{tpu_custom_call.1} parent=1 // pred_check
      _
    $region19: #{tpu_custom_call.1} parent=1 // pred_check_branch
      %124 = sbr.rel (0) target = $region21
    $region20: #{tpu_custom_call.1} parent=1 // pred_region
      _
    $region21: #{tpu_custom_call.1} parent=1 // pred_fallthru
      _
    // Predicated region
    $region22: #{tpu_custom_call.1} parent=1 // pred_check
      _
    $region23: #{tpu_custom_call.1} parent=1 // pred_check_branch
      %126 = sbr.rel (0) target = $region25
    $region24: #{tpu_custom_call.1} parent=1 // pred_region
      _
    $region25: #{tpu_custom_call.1} parent=1 // pred_fallthru
      _
    // Predicated region
    $region26: #{tpu_custom_call.1} parent=1 // pred_check
      _
    $region27: #{tpu_custom_call.1} parent=1 // pred_check_branch
      %128 = sbr.rel (0) target = $region29
    $region28: #{tpu_custom_call.1} parent=1 // pred_region
      _
    $region29: #{tpu_custom_call.1} parent=1 // pred_fallthru
      _
    // Predicated region
    $region30: #{tpu_custom_call.1} parent=1 // pred_check
      _
    $region31: #{tpu_custom_call.1} parent=1 // pred_check_branch
      %130 = sbr.rel (0) target = $region33
    $region32: #{tpu_custom_call.1} parent=1 // pred_region
      %s132 = ssub.s32 16, 16
      %133 = vsyncadd [#allocation10], %s132
      %s135 = sshll.u32 [#allocation11], 4
      %s136 = int_to_ptr.vmem [resolvable:$true] %s135
      %138 = dma.hbm_to_vmem [thread:$0]  %s15, 16, %s136, [#allocation10]
    $region33: #{tpu_custom_call.1} parent=1 // pred_fallthru
      _
    // Predicated region
    $region34: #{tpu_custom_call.1} parent=1 // pred_check
      _
    $region35: #{tpu_custom_call.1} parent=1 // pred_check_branch
      %140 = sbr.rel (0) target = $region37
    $region36: #{tpu_custom_call.1} parent=1 // pred_region
      %s142 = ssub.s32 16, 16
      %143 = vsyncadd [#allocation13], %s142
      %s145 = sshll.u32 [#allocation12], 4
      %s146 = int_to_ptr.vmem [resolvable:$true] %s145
      %148 = dma.hbm_to_vmem [thread:$0]  %s17, 16, %s146, [#allocation13]
    $region37: #{tpu_custom_call.1} parent=1 // pred_fallthru
      _
    // Predicated region
    $region38: #{tpu_custom_call.1} parent=1 // pred_check
      _
    $region39: #{tpu_custom_call.1} parent=1 // pred_check_branch
      %150 = sbr.rel (0) target = $region41
    $region40: #{tpu_custom_call.1} parent=1 // pred_region
      %s152 = ssub.s32 16, 16
      %153 = vsyncadd [#allocation13], %s152
      %s155 = sshll.u32 [#allocation14], 4
      %s156 = int_to_ptr.vmem [resolvable:$true] %s155
      %158 = dma.hbm_to_vmem [thread:$0]  %s19, 16, %s156, [#allocation13]
    $region41: #{tpu_custom_call.1} parent=1 // pred_fallthru
      _
    // Predicated region
    $region42: #{tpu_custom_call.1} parent=1 // pred_check
      _
    $region43: #{tpu_custom_call.1} parent=1 // pred_check_branch
      %160 = sbr.rel (0) target = $region45
    $region44: #{tpu_custom_call.1} parent=1 // pred_region
      _
    $region45: #{tpu_custom_call.1} parent=1 // pred_fallthru
      _
    // Predicated region
    $region46: #{tpu_custom_call.1} parent=1 // pred_check
      _
    $region47: #{tpu_custom_call.1} parent=1 // pred_check_branch
      %162 = sbr.rel (0) target = $region49
    $region48: #{tpu_custom_call.1} parent=1 // pred_region
      %s164 = ssub.s32 16, 16
      %165 = vsyncadd [#allocation16], %s164
      %s167 = sshll.u32 [#allocation15], 4
      %s168 = int_to_ptr.vmem [resolvable:$true] %s167
      %170 = dma.hbm_to_vmem [thread:$0]  %s23, 16, %s168, [#allocation16]
    $region49: #{tpu_custom_call.1} parent=1 // pred_fallthru
      _
    // Predicated region
    $region50: #{tpu_custom_call.1} parent=1 // pred_check
      _
    $region51: #{tpu_custom_call.1} parent=1 // pred_check_branch
      %172 = sbr.rel (0) target = $region53
    $region52: #{tpu_custom_call.1} parent=1 // pred_region
      %s174 = ssub.s32 16, 16
      %175 = vsyncadd [#allocation16], %s174
      %s177 = sshll.u32 [#allocation17], 4
      %s178 = int_to_ptr.vmem [resolvable:$true] %s177
      %180 = dma.hbm_to_vmem [thread:$0]  %s25, 16, %s178, [#allocation16]
    $region53: #{tpu_custom_call.1} parent=1 // pred_fallthru
      _
    // Predicated region
    $region54: #{tpu_custom_call.1} parent=1 // pred_check
      _
    $region55: #{tpu_custom_call.1} parent=1 // pred_check_branch
      %182 = sbr.rel (0) target = $region57
    $region56: #{tpu_custom_call.1} parent=1 // pred_region
      %s184 = ssub.s32 16, 16
      %185 = vsyncadd [#allocation19], %s184
      %s187 = sshll.u32 [#allocation18], 4
      %s188 = int_to_ptr.vmem [resolvable:$true] %s187
      %190 = dma.hbm_to_vmem [thread:$0]  %s27, 16, %s188, [#allocation19]
    $region57: #{tpu_custom_call.1} parent=1 // pred_fallthru
      _
    // Predicated region
    $region58: #{tpu_custom_call.1} parent=1 // pred_check
      _
    $region59: #{tpu_custom_call.1} parent=1 // pred_check_branch
      %192 = sbr.rel (0) target = $region61
    $region60: #{tpu_custom_call.1} parent=1 // pred_region
      _
    $region61: #{tpu_custom_call.1} parent=1 // pred_fallthru
      _
    // Predicated region
    $region62: #{tpu_custom_call.1} parent=1 // pred_check
      _
    $region63: #{tpu_custom_call.1} parent=1 // pred_check_branch
      %194 = sbr.rel (0) target = $region65
    $region64: #{tpu_custom_call.1} parent=1 // pred_region
      %s196 = ssub.s32 256, 256
      %197 = vsyncadd [#allocation19], %s196
      %s198 = sshll.u32 [#allocation20], 4
      %s199 = int_to_ptr.vmem [resolvable:$true] %s198
      %204 = dma.hbm_to_vmem [thread:$0]  %s31, 256, %s199, [#allocation19], 64, 64, 4
    $region65: #{tpu_custom_call.1} parent=1 // pred_fallthru
      _
    // Predicated region
    $region66: #{tpu_custom_call.1} parent=1 // pred_check
      _
    $region67: #{tpu_custom_call.1} parent=1 // pred_check_branch
      %206 = sbr.rel (0) target = $region69
    $region68: #{tpu_custom_call.1} parent=1 // pred_region
      %s208 = ssub.s32 256, 256
      %209 = vsyncadd [#allocation22], %s208
      %s210 = sshll.u32 [#allocation21], 4
      %s211 = int_to_ptr.vmem [resolvable:$true] %s210
      %216 = dma.hbm_to_vmem [thread:$0]  %s33, 256, %s211, [#allocation22], 64, 64, 4
    $region69: #{tpu_custom_call.1} parent=1 // pred_fallthru
      _
    // Predicated region
    $region70: #{tpu_custom_call.1} parent=1 // pred_check
      _
    $region71: #{tpu_custom_call.1} parent=1 // pred_check_branch
      %218 = sbr.rel (0) target = $region73
    $region72: #{tpu_custom_call.1} parent=1 // pred_region
      %s220 = ssub.s32 16, 16
      %221 = vsyncadd [#allocation22], %s220
      %s223 = sshll.u32 [#allocation23], 4
      %s224 = int_to_ptr.vmem [resolvable:$true] %s223
      %226 = dma.hbm_to_vmem [thread:$0]  %s35, 16, %s224, [#allocation22]
    $region73: #{tpu_custom_call.1} parent=1 // pred_fallthru
      _
    // Predicated region
    $region74: #{tpu_custom_call.1} parent=1 // pred_check
      _
    $region75: #{tpu_custom_call.1} parent=1 // pred_check_branch
      %228 = sbr.rel (0) target = $region77
    $region76: #{tpu_custom_call.1} parent=1 // pred_region
      _
    $region77: #{tpu_custom_call.1} parent=1 // pred_fallthru
      _
    // Predicated region
    $region78: #{tpu_custom_call.1} parent=1 // pred_check
      _
    $region79: #{tpu_custom_call.1} parent=1 // pred_check_branch
      %230 = sbr.rel (0) target = $region81
    $region80: #{tpu_custom_call.1} parent=1 // pred_region
      _
    $region81: #{tpu_custom_call.1} parent=1 // pred_fallthru
      _
    // Predicated region
    $region82: #{tpu_custom_call.1} parent=1 // pred_check
      _
    $region83: #{tpu_custom_call.1} parent=1 // pred_check_branch
      %232 = sbr.rel (0) target = $region85
    $region84: #{tpu_custom_call.1} parent=1 // pred_region
      _
    $region85: #{tpu_custom_call.1} parent=1 // pred_fallthru
      _
    // Predicated region
    $region86: #{tpu_custom_call.1} parent=1 // pred_check
      _
    $region87: #{tpu_custom_call.1} parent=1 // pred_check_branch
      %234 = sbr.rel (0) target = $region89
    $region88: #{tpu_custom_call.1} parent=1 // pred_region
      _
    $region89: #{tpu_custom_call.1} parent=1 // pred_fallthru
      _
    // Predicated region
    $region90: #{tpu_custom_call.1} parent=1 // pred_check
      _
    $region91: #{tpu_custom_call.1} parent=1 // pred_check_branch
      %236 = sbr.rel (0) target = $region93
    $region92: #{tpu_custom_call.1} parent=1 // pred_region
      %s238 = ssub.s32 16, 16
      %239 = vsyncadd [#allocation25], %s238
      %s241 = sshll.u32 [#allocation24], 4
      %s242 = int_to_ptr.vmem [resolvable:$true] %s241
      %244 = dma.hbm_to_vmem [thread:$0]  %s45, 16, %s242, [#allocation25]
    $region93: #{tpu_custom_call.1} parent=1 // pred_fallthru
      _
    // Predicated region
    $region94: #{tpu_custom_call.1} parent=1 // pred_check
      _
    $region95: #{tpu_custom_call.1} parent=1 // pred_check_branch
      %246 = sbr.rel (0) target = $region97
    $region96: #{tpu_custom_call.1} parent=1 // pred_region
      _
    $region97: #{tpu_custom_call.1} parent=1 // pred_fallthru
      _
    // Predicated region
    $region98: #{tpu_custom_call.1} parent=1 // pred_check
      _
    $region99: #{tpu_custom_call.1} parent=1 // pred_check_branch
      %248 = sbr.rel (0) target = $region101
    $region100: #{tpu_custom_call.1} parent=1 // pred_region
      _
    $region101: #{tpu_custom_call.1} parent=1 // pred_fallthru
      _
    // Predicated region
    $region102: #{tpu_custom_call.1} parent=1 // pred_check
      _
    $region103: #{tpu_custom_call.1} parent=1 // pred_check_branch
      %250 = sbr.rel (0) target = $region105
    $region104: #{tpu_custom_call.1} parent=1 // pred_region
      _
    $region105: #{tpu_custom_call.1} parent=1 // pred_fallthru
      _
    // Predicated region
    $region106: #{tpu_custom_call.1} parent=1 // pred_check
      _
    $region107: #{tpu_custom_call.1} parent=1 // pred_check_branch
      %252 = sbr.rel (0) target = $region109
    $region108: #{tpu_custom_call.1} parent=1 // pred_region
      _
    $region109: #{tpu_custom_call.1} parent=1 // pred_fallthru
      _
    // Predicated region
    $region110: #{tpu_custom_call.1} parent=1 // pred_check
      _
    $region111: #{tpu_custom_call.1} parent=1 // pred_check_branch
      %254 = sbr.rel (0) target = $region113
    $region112: #{tpu_custom_call.1} parent=1 // pred_region
      _
    $region113: #{tpu_custom_call.1} parent=1 // pred_fallthru
      _
    // Predicated region
    $region114: #{tpu_custom_call.1} parent=1 // pred_check
      _
    $region115: #{tpu_custom_call.1} parent=1 // pred_check_branch
      %256 = sbr.rel (0) target = $region117
    $region116: #{tpu_custom_call.1} parent=1 // pred_region
      _
    $region117: #{tpu_custom_call.1} parent=1 // pred_fallthru
      _
    // Predicated region
    $region118: #{tpu_custom_call.1} parent=1 // pred_check
      _
    $region119: #{tpu_custom_call.1} parent=1 // pred_check_branch
      %258 = sbr.rel (0) target = $region121
    $region120: #{tpu_custom_call.1} parent=1 // pred_region
      _
    $region121: #{tpu_custom_call.1} parent=1 // pred_fallthru
      _
    // Predicated region
    $region122: #{tpu_custom_call.1} parent=1 // pred_check
      _
    $region123: #{tpu_custom_call.1} parent=1 // pred_check_branch
      %260 = sbr.rel (0) target = $region125
    $region124: #{tpu_custom_call.1} parent=1 // pred_region
      %261 = dma.done [#allocation4], 128
    $region125: #{tpu_custom_call.1} parent=1 // pred_fallthru
      _
    // Predicated region
    $region126: #{tpu_custom_call.1} parent=1 // pred_check
      _
    $region127: #{tpu_custom_call.1} parent=1 // pred_check_branch
      %263 = sbr.rel (0) target = $region129
    $region128: #{tpu_custom_call.1} parent=1 // pred_region
      %264 = dma.done [#allocation7], 128
    $region129: #{tpu_custom_call.1} parent=1 // pred_fallthru
      _
    // Predicated region
    $region130: #{tpu_custom_call.1} parent=1 // pred_check
      _
    $region131: #{tpu_custom_call.1} parent=1 // pred_check_branch
      %266 = sbr.rel (0) target = $region133
    $region132: #{tpu_custom_call.1} parent=1 // pred_region
      %267 = dma.done [#allocation7], 128
    $region133: #{tpu_custom_call.1} parent=1 // pred_fallthru
      _
    // Predicated region
    $region134: #{tpu_custom_call.1} parent=1 // pred_check
      _
    $region135: #{tpu_custom_call.1} parent=1 // pred_check_branch
      %269 = sbr.rel (0) target = $region137
    $region136: #{tpu_custom_call.1} parent=1 // pred_region
      %270 = dma.done [#allocation10], 128
    $region137: #{tpu_custom_call.1} parent=1 // pred_fallthru
      _
    // Predicated region
    $region138: #{tpu_custom_call.1} parent=1 // pred_check
      _
    $region139: #{tpu_custom_call.1} parent=1 // pred_check_branch
      %272 = sbr.rel (0) target = $region141
    $region140: #{tpu_custom_call.1} parent=1 // pred_region
      %273 = dma.done [#allocation10], 16
    $region141: #{tpu_custom_call.1} parent=1 // pred_fallthru
      _
    // Predicated region
    $region142: #{tpu_custom_call.1} parent=1 // pred_check
      _
    $region143: #{tpu_custom_call.1} parent=1 // pred_check_branch
      %275 = sbr.rel (0) target = $region145
    $region144: #{tpu_custom_call.1} parent=1 // pred_region
      %276 = dma.done [#allocation13], 16
    $region145: #{tpu_custom_call.1} parent=1 // pred_fallthru
      _
    // Predicated region
    $region146: #{tpu_custom_call.1} parent=1 // pred_check
      _
    $region147: #{tpu_custom_call.1} parent=1 // pred_check_branch
      %278 = sbr.rel (0) target = $region149
    $region148: #{tpu_custom_call.1} parent=1 // pred_region
      %279 = dma.done [#allocation13], 16
    $region149: #{tpu_custom_call.1} parent=1 // pred_fallthru
      _
    // Predicated region
    $region150: #{tpu_custom_call.1} parent=1 // pred_check
      _
    $region151: #{tpu_custom_call.1} parent=1 // pred_check_branch
      %281 = sbr.rel (0) target = $region153
    $region152: #{tpu_custom_call.1} parent=1 // pred_region
      %282 = dma.done [#allocation16], 16
    $region153: #{tpu_custom_call.1} parent=1 // pred_fallthru
      _
    // Predicated region
    $region154: #{tpu_custom_call.1} parent=1 // pred_check
      _
    $region155: #{tpu_custom_call.1} parent=1 // pred_check_branch
      %284 = sbr.rel (0) target = $region157
    $region156: #{tpu_custom_call.1} parent=1 // pred_region
      %285 = dma.done [#allocation16], 16
    $region157: #{tpu_custom_call.1} parent=1 // pred_fallthru
      _
    // Predicated region
    $region158: #{tpu_custom_call.1} parent=1 // pred_check
      _
    $region159: #{tpu_custom_call.1} parent=1 // pred_check_branch
      %287 = sbr.rel (0) target = $region161
    $region160: #{tpu_custom_call.1} parent=1 // pred_region
      %288 = dma.done [#allocation19], 16
    $region161: #{tpu_custom_call.1} parent=1 // pred_fallthru
      _
    // Predicated region
    $region162: #{tpu_custom_call.1} parent=1 // pred_check
      _
    $region163: #{tpu_custom_call.1} parent=1 // pred_check_branch
      %290 = sbr.rel (0) target = $region165
    $region164: #{tpu_custom_call.1} parent=1 // pred_region
      %291 = dma.done [#allocation19], 256
    $region165: #{tpu_custom_call.1} parent=1 // pred_fallthru
      _
    // Predicated region
    $region166: #{tpu_custom_call.1} parent=1 // pred_check
      _
    $region167: #{tpu_custom_call.1} parent=1 // pred_check_branch
      %293 = sbr.rel (0) target = $region169
    $region168: #{tpu_custom_call.1} parent=1 // pred_region
      %294 = dma.done [#allocation22], 256
    $region169: #{tpu_custom_call.1} parent=1 // pred_fallthru
      _
    // Predicated region
    $region170: #{tpu_custom_call.1} parent=1 // pred_check
      _
    $region171: #{tpu_custom_call.1} parent=1 // pred_check_branch
      %296 = sbr.rel (0) target = $region173
    $region172: #{tpu_custom_call.1} parent=1 // pred_region
      %297 = dma.done [#allocation22], 16
    $region173: #{tpu_custom_call.1} parent=1 // pred_fallthru
      _
    // Predicated region
    $region174: #{tpu_custom_call.1} parent=1 // pred_check
      _
    $region175: #{tpu_custom_call.1} parent=1 // pred_check_branch
      %299 = sbr.rel (0) target = $region177
    $region176: #{tpu_custom_call.1} parent=1 // pred_region
      %300 = dma.done [#allocation25], 16
    $region177: #{tpu_custom_call.1} parent=1 // pred_fallthru
      _
    %v302 = vld [vmem:[#allocation3] sm:$0xf]
    %v303 = vld [vmem:[#allocation3 + $0x4] sm:$0xf]
    %v304 = vunpack.c.l.bf16 %v302
    %v305 = vunpack.c.l.bf16 %v303
    %v306 = vld [vmem:[#allocation6] sm:$0xf]
    %v307 = vld [vmem:[#allocation6 + $0x4] sm:$0xf]
    %v308 = vld [vmem:[#allocation8] sm:$0xf]
    %v309 = vld [vmem:[#allocation8 + $0x4] sm:$0xf]
    %v310 = vunpack.c.l.bf16 %v308
    %v311 = vunpack.c.l.bf16 %v309
    %v312 = vld [vmem:[%s9] sm:$0xf]
    %v313 = vld [vmem:[%s9 + $0x4] sm:$0xf]
    %v314 = vld [vmem:[%s9 + $0x8] sm:$0xf]
    %v315 = vld [vmem:[%s9 + $0xc] sm:$0xf]
    %v316 = vld [vmem:[#allocation11] sm:$0x1]
    %v318 = vlaneseq
    %v319 = vshrl.u32 %v318, 7
    %v320 = vsub.s32 0, %v319
    %v321 = vrot.slane %v316, %v320
    %v325 = vunpack.c.l.b16 %v302
    %v326 = vunpack.c.l.b16 %v303
    %v327 = vpack.c.b16 %v326, %v325
    %v332 = vunpack.c.l.b16 %v312
    %v333 = vunpack.c.l.b16 %v313
    %v334 = vunpack.c.l.b16 %v314
    %v335 = vunpack.c.l.b16 %v315
    %v336 = vpack.c.b16 %v333, %v332
    %v337 = vpack.c.b16 %v335, %v334
    %vm340 = vcmask 261120
    %v342 = vsel %vm340, %v327, 0
    %344 = vmatprep.subr.bf16.mxu0 0
    %345 = vmatpush1.bf16.msra.mxu0 %v336
    %346 = vmatprep.subr.bf16.mxu0 0
    %347 = vmatpush1.bf16.msra.mxu0 %v337
    %348 = vmatprep.subr.bf16.mxu0 0
    %349 = vmatpush1.bf16.msra.mxu0 0
    %350 = vmatprep.subr.bf16.mxu0 0
    %351 = vmatpush1.bf16.msra.mxu0 0
    %352 = vmatprep.subr.bf16.mxu0 0
    %353 = vmatpush1.bf16.msra.mxu0 0
    %354 = vmatprep.subr.bf16.mxu0 0
    %355 = vmatpush1.bf16.msra.mxu0 0
    %356 = vmatprep.subr.bf16.mxu0 0
    %357 = vmatpush1.bf16.msra.mxu0 0
    %358 = vmatprep.subr.bf16.mxu0 0
    %359 = vmatpush1.bf16.msra.mxu0 0
    %360 = vmatprep.subr.bf16.mxu0 0
    %361 = vmatpush1.bf16.msra.mxu0 0
    %362 = vmatprep.subr.bf16.mxu0 0
    %363 = vmatpush1.bf16.msra.mxu0 0
    %364 = vmatprep.subr.bf16.mxu0 0
    %365 = vmatpush1.bf16.msra.mxu0 0
    %366 = vmatprep.subr.bf16.mxu0 0
    %367 = vmatpush1.bf16.msra.mxu0 0
    %368 = vmatprep.subr.bf16.mxu0 0
    %369 = vmatpush1.bf16.msra.mxu0 0
    %370 = vmatprep.subr.bf16.mxu0 0
    %371 = vmatpush1.bf16.msra.mxu0 0
    %372 = vmatprep.subr.bf16.mxu0 0
    %373 = vmatpush1.bf16.msra.mxu0 0
    %374 = vmatprep.subr.bf16.mxu0 0
    %375 = vmatpush1.bf16.msra.mxu0 0
    %376 = vmatprep.mubr.bf16.mxu0 0
    %377 = vmatmul.mubr.bf16.gmra.mrb[0].mxu0 %v342
    %v378 = vpop.f32.mrb[0].mxu0
    %v379 = vadd.f32 %v321, %v378
    %v380 = vpop.f32.mrb[0].mxu0
    %v381 = vpop.f32.mrb[0].mxu0
    %v382 = vadd.f32 %v321, %v381
    %v383 = vpop.f32.mrb[0].mxu0
    %384 = vdwg.mxu0
    %v385 = vpack.c.bf16 %v382, %v379
    %v387 = vunpack.c.l.b16 %v385
    %v388 = vunpack.c.h.b16 %v385
    %v389 = vpack.c.b16 %v387, %v387
    %v390 = vpack.c.b16 %v388, %v388
    %v391 = vld [vmem:[%s11] sm:$0xf]
    %v392 = vld [vmem:[%s11 + $0x4] sm:$0xf]
    %v393 = vld [vmem:[%s11 + $0x8] sm:$0xf]
    %v394 = vld [vmem:[%s11 + $0xc] sm:$0xf]
    %v395 = vld [vmem:[#allocation12] sm:$0x1]
    %v397 = vlaneseq
    %v398 = vshrl.u32 %v397, 7
    %v399 = vsub.s32 0, %v398
    %v400 = vrot.slane %v395, %v399
    %v406 = vunpack.c.l.b16 %v391
    %v407 = vunpack.c.l.b16 %v392
    %v408 = vunpack.c.l.b16 %v393
    %v409 = vunpack.c.l.b16 %v394
    %v410 = vpack.c.b16 %v407, %v406
    %v411 = vpack.c.b16 %v409, %v408
    %414 = vmatprep.subr.bf16.mxu0 0
    %415 = vmatpush1.bf16.msra.mxu0 %v410
    %416 = vmatprep.subr.bf16.mxu0 0
    %417 = vmatpush1.bf16.msra.mxu0 %v411
    %418 = vmatprep.subr.bf16.mxu0 0
    %419 = vmatpush1.bf16.msra.mxu0 0
    %420 = vmatprep.subr.bf16.mxu0 0
    %421 = vmatpush1.bf16.msra.mxu0 0
    %422 = vmatprep.subr.bf16.mxu0 0
    %423 = vmatpush1.bf16.msra.mxu0 0
    %424 = vmatprep.subr.bf16.mxu0 0
    %425 = vmatpush1.bf16.msra.mxu0 0
    %426 = vmatprep.subr.bf16.mxu0 0
    %427 = vmatpush1.bf16.msra.mxu0 0
    %428 = vmatprep.subr.bf16.mxu0 0
    %429 = vmatpush1.bf16.msra.mxu0 0
    %430 = vmatprep.subr.bf16.mxu0 0
    %431 = vmatpush1.bf16.msra.mxu0 0
    %432 = vmatprep.subr.bf16.mxu0 0
    %433 = vmatpush1.bf16.msra.mxu0 0
    %434 = vmatprep.subr.bf16.mxu0 0
    %435 = vmatpush1.bf16.msra.mxu0 0
    %436 = vmatprep.subr.bf16.mxu0 0
    %437 = vmatpush1.bf16.msra.mxu0 0
    %438 = vmatprep.subr.bf16.mxu0 0
    %439 = vmatpush1.bf16.msra.mxu0 0
    %440 = vmatprep.subr.bf16.mxu0 0
    %441 = vmatpush1.bf16.msra.mxu0 0
    %442 = vmatprep.subr.bf16.mxu0 0
    %443 = vmatpush1.bf16.msra.mxu0 0
    %444 = vmatprep.subr.bf16.mxu0 0
    %445 = vmatpush1.bf16.msra.mxu0 0
    %446 = vmatprep.mubr.bf16.mxu0 0
    %447 = vmatmul.mubr.bf16.gmra.mrb[0].mxu0 %v342
    %v448 = vpop.f32.mrb[0].mxu0
    %v449 = vadd.f32 %v400, %v448
    %v450 = vpop.f32.mrb[0].mxu0
    %v451 = vpop.f32.mrb[0].mxu0
    %v452 = vadd.f32 %v400, %v451
    %v453 = vpop.f32.mrb[0].mxu0
    %454 = vdwg.mxu0
    %v455 = vpack.c.bf16 %v452, %v449
    %v457 = vunpack.c.l.b16 %v455
    %v458 = vunpack.c.h.b16 %v455
    %v459 = vpack.c.b16 %v457, %v457
    %v460 = vpack.c.b16 %v458, %v458
    %v461 = vld [vmem:[%s13] sm:$0xf]
    %v462 = vld [vmem:[%s13 + $0x4] sm:$0xf]
    %v463 = vld [vmem:[%s13 + $0x8] sm:$0xf]
    %v464 = vld [vmem:[%s13 + $0xc] sm:$0xf]
    %v465 = vld [vmem:[#allocation14] sm:$0x1]
    %v467 = vlaneseq
    %v468 = vshrl.u32 %v467, 7
    %v469 = vsub.s32 0, %v468
    %v470 = vrot.slane %v465, %v469
    %v476 = vunpack.c.l.b16 %v461
    %v477 = vunpack.c.l.b16 %v462
    %v478 = vunpack.c.l.b16 %v463
    %v479 = vunpack.c.l.b16 %v464
    %v480 = vpack.c.b16 %v477, %v476
    %v481 = vpack.c.b16 %v479, %v478
    %484 = vmatprep.subr.bf16.mxu0 0
    %485 = vmatpush1.bf16.msra.mxu0 %v480
    %486 = vmatprep.subr.bf16.mxu0 0
    %487 = vmatpush1.bf16.msra.mxu0 %v481
    %488 = vmatprep.subr.bf16.mxu0 0
    %489 = vmatpush1.bf16.msra.mxu0 0
    %490 = vmatprep.subr.bf16.mxu0 0
    %491 = vmatpush1.bf16.msra.mxu0 0
    %492 = vmatprep.subr.bf16.mxu0 0
    %493 = vmatpush1.bf16.msra.mxu0 0
    %494 = vmatprep.subr.bf16.mxu0 0
    %495 = vmatpush1.bf16.msra.mxu0 0
    %496 = vmatprep.subr.bf16.mxu0 0
    %497 = vmatpush1.bf16.msra.mxu0 0
    %498 = vmatprep.subr.bf16.mxu0 0
    %499 = vmatpush1.bf16.msra.mxu0 0
    %500 = vmatprep.subr.bf16.mxu0 0
    %501 = vmatpush1.bf16.msra.mxu0 0
    %502 = vmatprep.subr.bf16.mxu0 0
    %503 = vmatpush1.bf16.msra.mxu0 0
    %504 = vmatprep.subr.bf16.mxu0 0
    %505 = vmatpush1.bf16.msra.mxu0 0
    %506 = vmatprep.subr.bf16.mxu0 0
    %507 = vmatpush1.bf16.msra.mxu0 0
    %508 = vmatprep.subr.bf16.mxu0 0
    %509 = vmatpush1.bf16.msra.mxu0 0
    %510 = vmatprep.subr.bf16.mxu0 0
    %511 = vmatpush1.bf16.msra.mxu0 0
    %512 = vmatprep.subr.bf16.mxu0 0
    %513 = vmatpush1.bf16.msra.mxu0 0
    %514 = vmatprep.subr.bf16.mxu0 0
    %515 = vmatpush1.bf16.msra.mxu0 0
    %516 = vmatprep.mubr.bf16.mxu0 0
    %517 = vmatmul.mubr.bf16.gmra.mrb[0].mxu0 %v342
    %v518 = vpop.f32.mrb[0].mxu0
    %v519 = vadd.f32 %v470, %v518
    %v520 = vpop.f32.mrb[0].mxu0
    %v521 = vpop.f32.mrb[0].mxu0
    %v522 = vadd.f32 %v470, %v521
    %v523 = vpop.f32.mrb[0].mxu0
    %524 = vdwg.mxu0
    %v525 = vpack.c.bf16 %v522, %v519
    %v527 = vunpack.c.l.b16 %v525
    %v528 = vunpack.c.h.b16 %v525
    %v529 = vpack.c.b16 %v527, %v527
    %v530 = vpack.c.b16 %v528, %v528
    %vm531 = vcmask 64512
    %v533 = vsel %vm531, %v389, 0
    %v536 = vsel %vm531, %v459, 0
    %538 = vmatprep.subr.bf16.mxu0 0
    %539 = vmatpush1.bf16.xpose.msra.mxu0 %v536
    %540 = vmatprep.subr.bf16.mxu0 0
    %541 = vmatpush1.bf16.xpose.msra.mxu0 0
    %542 = vmatprep.subr.bf16.mxu0 0
    %543 = vmatpush1.bf16.xpose.msra.mxu0 0
    %544 = vmatprep.subr.bf16.mxu0 0
    %545 = vmatpush1.bf16.xpose.msra.mxu0 0
    %546 = vmatprep.subr.bf16.mxu0 0
    %547 = vmatpush1.bf16.xpose.msra.mxu0 0
    %548 = vmatprep.subr.bf16.mxu0 0
    %549 = vmatpush1.bf16.xpose.msra.mxu0 0
    %550 = vmatprep.subr.bf16.mxu0 0
    %551 = vmatpush1.bf16.xpose.msra.mxu0 0
    %552 = vmatprep.subr.bf16.mxu0 0
    %553 = vmatpush1.bf16.xpose.msra.mxu0 0
    %554 = vmatprep.subr.bf16.mxu0 0
    %555 = vmatpush1.bf16.xpose.msra.mxu0 0
    %556 = vmatprep.subr.bf16.mxu0 0
    %557 = vmatpush1.bf16.xpose.msra.mxu0 0
    %558 = vmatprep.subr.bf16.mxu0 0
    %559 = vmatpush1.bf16.xpose.msra.mxu0 0
    %560 = vmatprep.subr.bf16.mxu0 0
    %561 = vmatpush1.bf16.xpose.msra.mxu0 0
    %562 = vmatprep.subr.bf16.mxu0 0
    %563 = vmatpush1.bf16.xpose.msra.mxu0 0
    %564 = vmatprep.subr.bf16.mxu0 0
    %565 = vmatpush1.bf16.xpose.msra.mxu0 0
    %566 = vmatprep.subr.bf16.mxu0 0
    %567 = vmatpush1.bf16.xpose.msra.mxu0 0
    %568 = vmatprep.subr.bf16.mxu0 0
    %569 = vmatpush1.bf16.xpose.msra.mxu0 0
    %570 = vmatprep.mubr.bf16.mxu0 0
    %571 = vmatmul.mubr.bf16.gmra.mrb[0].mxu0 %v533
    %v572 = vpop.f32.mrb[0].mxu0
    %v573 = vadd.f32 %v310, %v572
    %v574 = vpop.f32.mrb[0].mxu0
    %v575 = vpop.f32.mrb[0].mxu0
    %v576 = vpop.f32.mrb[0].mxu0
    %577 = vdwg.mxu0
    %v579 = vsel %vm531, %v390, 0
    %v582 = vsel %vm531, %v460, 0
    %584 = vmatprep.subr.bf16.mxu0 0
    %585 = vmatpush1.bf16.xpose.msra.mxu0 %v582
    %586 = vmatprep.subr.bf16.mxu0 0
    %587 = vmatpush1.bf16.xpose.msra.mxu0 0
    %588 = vmatprep.subr.bf16.mxu0 0
    %589 = vmatpush1.bf16.xpose.msra.mxu0 0
    %590 = vmatprep.subr.bf16.mxu0 0
    %591 = vmatpush1.bf16.xpose.msra.mxu0 0
    %592 = vmatprep.subr.bf16.mxu0 0
    %593 = vmatpush1.bf16.xpose.msra.mxu0 0
    %594 = vmatprep.subr.bf16.mxu0 0
    %595 = vmatpush1.bf16.xpose.msra.mxu0 0
    %596 = vmatprep.subr.bf16.mxu0 0
    %597 = vmatpush1.bf16.xpose.msra.mxu0 0
    %598 = vmatprep.subr.bf16.mxu0 0
    %599 = vmatpush1.bf16.xpose.msra.mxu0 0
    %600 = vmatprep.subr.bf16.mxu0 0
    %601 = vmatpush1.bf16.xpose.msra.mxu0 0
    %602 = vmatprep.subr.bf16.mxu0 0
    %603 = vmatpush1.bf16.xpose.msra.mxu0 0
    %604 = vmatprep.subr.bf16.mxu0 0
    %605 = vmatpush1.bf16.xpose.msra.mxu0 0
    %606 = vmatprep.subr.bf16.mxu0 0
    %607 = vmatpush1.bf16.xpose.msra.mxu0 0
    %608 = vmatprep.subr.bf16.mxu0 0
    %609 = vmatpush1.bf16.xpose.msra.mxu0 0
    %610 = vmatprep.subr.bf16.mxu0 0
    %611 = vmatpush1.bf16.xpose.msra.mxu0 0
    %612 = vmatprep.subr.bf16.mxu0 0
    %613 = vmatpush1.bf16.xpose.msra.mxu0 0
    %614 = vmatprep.subr.bf16.mxu0 0
    %615 = vmatpush1.bf16.xpose.msra.mxu0 0
    %616 = vmatprep.mubr.bf16.mxu0 0
    %617 = vmatmul.mubr.bf16.gmra.mrb[0].mxu0 %v579
    %v618 = vpop.f32.mrb[0].mxu0
    %v619 = vadd.f32 %v311, %v618
    %v620 = vpop.f32.mrb[0].mxu0
    %v621 = vpop.f32.mrb[0].mxu0
    %v622 = vpop.f32.mrb[0].mxu0
    %623 = vdwg.mxu0
    %v624 = vsel %vm531, %v573, -inf
    %625 = vmax.xlane.f32.xlu0 %v624
    %v626 = vpop.xlane.xlu0 %625
    %v627 = vsel %vm531, %v619, -inf
    %628 = vmax.xlane.f32.xlu0 %v627
    %v629 = vpop.xlane.xlu0 %628
    %v630 = vsub.f32 %v573, %v626
    %v631 = vsub.f32 %v619, %v629
    %v632 = vmul.f32 %v630, 1.442695
    %v633 = vpow.pop %v632
    %v634 = vmul.f32 %v631, 1.442695
    %v635 = vpow.pop %v634
    %v636 = vsel %vm531, %v633, 0.0
    %637 = vadd.xlane.f32.xlu0 %v636
    %v638 = vpop.xlane.xlu0 %637
    %v639 = vsel %vm531, %v635, 0.0
    %640 = vadd.xlane.f32.xlu0 %v639
    %v641 = vpop.xlane.xlu0 %640
    %v642 = vrcp.pop %v638
    %v643 = vrcp.pop %v641
    %v644 = vmul.f32 %v633, %v642
    %v645 = vmul.f32 %v635, %v643
    %v646 = vpack.c.bf16 %v644, %v644
    %v647 = vpack.c.bf16 %v645, %v645
    %v649 = vsel %vm531, %v646, 0
    %vm651 = vcmask 1043456
    %v653 = vsel %vm651, %v529, 0
    %655 = vmatprep.subr.bf16.mxu0 0
    %656 = vmatpush1.bf16.msra.mxu0 %v653
    %657 = vmatprep.subr.bf16.mxu0 0
    %658 = vmatpush1.bf16.msra.mxu0 0
    %659 = vmatprep.subr.bf16.mxu0 0
    %660 = vmatpush1.bf16.msra.mxu0 0
    %661 = vmatprep.subr.bf16.mxu0 0
    %662 = vmatpush1.bf16.msra.mxu0 0
    %663 = vmatprep.subr.bf16.mxu0 0
    %664 = vmatpush1.bf16.msra.mxu0 0
    %665 = vmatprep.subr.bf16.mxu0 0
    %666 = vmatpush1.bf16.msra.mxu0 0
    %667 = vmatprep.subr.bf16.mxu0 0
    %668 = vmatpush1.bf16.msra.mxu0 0
    %669 = vmatprep.subr.bf16.mxu0 0
    %670 = vmatpush1.bf16.msra.mxu0 0
    %671 = vmatprep.subr.bf16.mxu0 0
    %672 = vmatpush1.bf16.msra.mxu0 0
    %673 = vmatprep.subr.bf16.mxu0 0
    %674 = vmatpush1.bf16.msra.mxu0 0
    %675 = vmatprep.subr.bf16.mxu0 0
    %676 = vmatpush1.bf16.msra.mxu0 0
    %677 = vmatprep.subr.bf16.mxu0 0
    %678 = vmatpush1.bf16.msra.mxu0 0
    %679 = vmatprep.subr.bf16.mxu0 0
    %680 = vmatpush1.bf16.msra.mxu0 0
    %681 = vmatprep.subr.bf16.mxu0 0
    %682 = vmatpush1.bf16.msra.mxu0 0
    %683 = vmatprep.subr.bf16.mxu0 0
    %684 = vmatpush1.bf16.msra.mxu0 0
    %685 = vmatprep.subr.bf16.mxu0 0
    %686 = vmatpush1.bf16.msra.mxu0 0
    %687 = vmatprep.mubr.bf16.mxu0 0
    %688 = vmatmul.mubr.bf16.gmra.mrb[0].mxu0 %v649
    %v689 = vpop.f32.mrb[0].mxu0
    %v690 = vadd.f32 0.0, %v689
    %v691 = vpop.f32.mrb[0].mxu0
    %v692 = vpop.f32.mrb[0].mxu0
    %v693 = vpop.f32.mrb[0].mxu0
    %694 = vdwg.mxu0
    %v696 = vsel %vm531, %v647, 0
    %v699 = vsel %vm651, %v530, 0
    %701 = vmatprep.subr.bf16.mxu0 0
    %702 = vmatpush1.bf16.msra.mxu0 %v699
    %703 = vmatprep.subr.bf16.mxu0 0
    %704 = vmatpush1.bf16.msra.mxu0 0
    %705 = vmatprep.subr.bf16.mxu0 0
    %706 = vmatpush1.bf16.msra.mxu0 0
    %707 = vmatprep.subr.bf16.mxu0 0
    %708 = vmatpush1.bf16.msra.mxu0 0
    %709 = vmatprep.subr.bf16.mxu0 0
    %710 = vmatpush1.bf16.msra.mxu0 0
    %711 = vmatprep.subr.bf16.mxu0 0
    %712 = vmatpush1.bf16.msra.mxu0 0
    %713 = vmatprep.subr.bf16.mxu0 0
    %714 = vmatpush1.bf16.msra.mxu0 0
    %715 = vmatprep.subr.bf16.mxu0 0
    %716 = vmatpush1.bf16.msra.mxu0 0
    %717 = vmatprep.subr.bf16.mxu0 0
    %718 = vmatpush1.bf16.msra.mxu0 0
    %719 = vmatprep.subr.bf16.mxu0 0
    %720 = vmatpush1.bf16.msra.mxu0 0
    %721 = vmatprep.subr.bf16.mxu0 0
    %722 = vmatpush1.bf16.msra.mxu0 0
    %723 = vmatprep.subr.bf16.mxu0 0
    %724 = vmatpush1.bf16.msra.mxu0 0
    %725 = vmatprep.subr.bf16.mxu0 0
    %726 = vmatpush1.bf16.msra.mxu0 0
    %727 = vmatprep.subr.bf16.mxu0 0
    %728 = vmatpush1.bf16.msra.mxu0 0
    %729 = vmatprep.subr.bf16.mxu0 0
    %730 = vmatpush1.bf16.msra.mxu0 0
    %731 = vmatprep.subr.bf16.mxu0 0
    %732 = vmatpush1.bf16.msra.mxu0 0
    %733 = vmatprep.mubr.bf16.mxu0 0
    %734 = vmatmul.mubr.bf16.gmra.mrb[0].mxu0 %v696
    %v735 = vpop.f32.mrb[0].mxu0
    %v736 = vadd.f32 0.0, %v735
    %v737 = vpop.f32.mrb[0].mxu0
    %v738 = vpop.f32.mrb[0].mxu0
    %v739 = vpop.f32.mrb[0].mxu0
    %740 = vdwg.mxu0
    %v741 = vpack.c.bf16 %v736, %v690
    %742 = vst.msk [vmem:[#allocation2] sm:$0xff] %vm531, %v741
    %743 = vrot.lane.b32.xlu0 %v389, 120
    %v744 = vpop.permute.xlu0 %743
    %745 = vrot.lane.b32.xlu0 %v459, 120
    %v746 = vpop.permute.xlu0 %745
    %v748 = vsel %vm531, %v744, 0
    %v751 = vsel %vm531, %v746, 0
    %753 = vmatprep.subr.bf16.mxu0 0
    %754 = vmatpush1.bf16.xpose.msra.mxu0 %v751
    %755 = vmatprep.subr.bf16.mxu0 0
    %756 = vmatpush1.bf16.xpose.msra.mxu0 0
    %757 = vmatprep.subr.bf16.mxu0 0
    %758 = vmatpush1.bf16.xpose.msra.mxu0 0
    %759 = vmatprep.subr.bf16.mxu0 0
    %760 = vmatpush1.bf16.xpose.msra.mxu0 0
    %761 = vmatprep.subr.bf16.mxu0 0
    %762 = vmatpush1.bf16.xpose.msra.mxu0 0
    %763 = vmatprep.subr.bf16.mxu0 0
    %764 = vmatpush1.bf16.xpose.msra.mxu0 0
    %765 = vmatprep.subr.bf16.mxu0 0
    %766 = vmatpush1.bf16.xpose.msra.mxu0 0
    %767 = vmatprep.subr.bf16.mxu0 0
    %768 = vmatpush1.bf16.xpose.msra.mxu0 0
    %769 = vmatprep.subr.bf16.mxu0 0
    %770 = vmatpush1.bf16.xpose.msra.mxu0 0
    %771 = vmatprep.subr.bf16.mxu0 0
    %772 = vmatpush1.bf16.xpose.msra.mxu0 0
    %773 = vmatprep.subr.bf16.mxu0 0
    %774 = vmatpush1.bf16.xpose.msra.mxu0 0
    %775 = vmatprep.subr.bf16.mxu0 0
    %776 = vmatpush1.bf16.xpose.msra.mxu0 0
    %777 = vmatprep.subr.bf16.mxu0 0
    %778 = vmatpush1.bf16.xpose.msra.mxu0 0
    %779 = vmatprep.subr.bf16.mxu0 0
    %780 = vmatpush1.bf16.xpose.msra.mxu0 0
    %781 = vmatprep.subr.bf16.mxu0 0
    %782 = vmatpush1.bf16.xpose.msra.mxu0 0
    %783 = vmatprep.subr.bf16.mxu0 0
    %784 = vmatpush1.bf16.xpose.msra.mxu0 0
    %785 = vmatprep.mubr.bf16.mxu0 0
    %786 = vmatmul.mubr.bf16.gmra.mrb[0].mxu0 %v748
    %v787 = vpop.f32.mrb[0].mxu0
    %v788 = vadd.f32 %v310, %v787
    %v789 = vpop.f32.mrb[0].mxu0
    %v790 = vpop.f32.mrb[0].mxu0
    %v791 = vpop.f32.mrb[0].mxu0
    %792 = vdwg.mxu0
    %793 = vrot.lane.b32.xlu0 %v390, 120
    %v794 = vpop.permute.xlu0 %793
    %795 = vrot.lane.b32.xlu0 %v460, 120
    %v796 = vpop.permute.xlu0 %795
    %v798 = vsel %vm531, %v794, 0
    %v801 = vsel %vm531, %v796, 0
    %803 = vmatprep.subr.bf16.mxu0 0
    %804 = vmatpush1.bf16.xpose.msra.mxu0 %v801
    %805 = vmatprep.subr.bf16.mxu0 0
    %806 = vmatpush1.bf16.xpose.msra.mxu0 0
    %807 = vmatprep.subr.bf16.mxu0 0
    %808 = vmatpush1.bf16.xpose.msra.mxu0 0
    %809 = vmatprep.subr.bf16.mxu0 0
    %810 = vmatpush1.bf16.xpose.msra.mxu0 0
    %811 = vmatprep.subr.bf16.mxu0 0
    %812 = vmatpush1.bf16.xpose.msra.mxu0 0
    %813 = vmatprep.subr.bf16.mxu0 0
    %814 = vmatpush1.bf16.xpose.msra.mxu0 0
    %815 = vmatprep.subr.bf16.mxu0 0
    %816 = vmatpush1.bf16.xpose.msra.mxu0 0
    %817 = vmatprep.subr.bf16.mxu0 0
    %818 = vmatpush1.bf16.xpose.msra.mxu0 0
    %819 = vmatprep.subr.bf16.mxu0 0
    %820 = vmatpush1.bf16.xpose.msra.mxu0 0
    %821 = vmatprep.subr.bf16.mxu0 0
    %822 = vmatpush1.bf16.xpose.msra.mxu0 0
    %823 = vmatprep.subr.bf16.mxu0 0
    %824 = vmatpush1.bf16.xpose.msra.mxu0 0
    %825 = vmatprep.subr.bf16.mxu0 0
    %826 = vmatpush1.bf16.xpose.msra.mxu0 0
    %827 = vmatprep.subr.bf16.mxu0 0
    %828 = vmatpush1.bf16.xpose.msra.mxu0 0
    %829 = vmatprep.subr.bf16.mxu0 0
    %830 = vmatpush1.bf16.xpose.msra.mxu0 0
    %831 = vmatprep.subr.bf16.mxu0 0
    %832 = vmatpush1.bf16.xpose.msra.mxu0 0
    %833 = vmatprep.subr.bf16.mxu0 0
    %834 = vmatpush1.bf16.xpose.msra.mxu0 0
    %835 = vmatprep.mubr.bf16.mxu0 0
    %836 = vmatmul.mubr.bf16.gmra.mrb[0].mxu0 %v798
    %v837 = vpop.f32.mrb[0].mxu0
    %v838 = vadd.f32 %v311, %v837
    %v839 = vpop.f32.mrb[0].mxu0
    %v840 = vpop.f32.mrb[0].mxu0
    %v841 = vpop.f32.mrb[0].mxu0
    %842 = vdwg.mxu0
    %v843 = vsel %vm531, %v788, -inf
    %844 = vmax.xlane.f32.xlu0 %v843
    %v845 = vpop.xlane.xlu0 %844
    %v846 = vsel %vm531, %v838, -inf
    %847 = vmax.xlane.f32.xlu0 %v846
    %v848 = vpop.xlane.xlu0 %847
    %v849 = vsub.f32 %v788, %v845
    %v850 = vsub.f32 %v838, %v848
    %v851 = vmul.f32 %v849, 1.442695
    %v852 = vpow.pop %v851
    %v853 = vmul.f32 %v850, 1.442695
    %v854 = vpow.pop %v853
    %v855 = vsel %vm531, %v852, 0.0
    %856 = vadd.xlane.f32.xlu0 %v855
    %v857 = vpop.xlane.xlu0 %856
    %v858 = vsel %vm531, %v854, 0.0
    %859 = vadd.xlane.f32.xlu0 %v858
    %v860 = vpop.xlane.xlu0 %859
    %v861 = vrcp.pop %v857
    %v862 = vrcp.pop %v860
    %v863 = vmul.f32 %v852, %v861
    %v864 = vmul.f32 %v854, %v862
    %v865 = vpack.c.bf16 %v863, %v863
    %v866 = vpack.c.bf16 %v864, %v864
    %867 = vrot.lane.b32.xlu0 %v529, 120
    %v868 = vpop.permute.xlu0 %867
    %v870 = vsel %vm531, %v865, 0
    %v873 = vsel %vm651, %v868, 0
    %875 = vmatprep.subr.bf16.mxu0 0
    %876 = vmatpush1.bf16.msra.mxu0 %v873
    %877 = vmatprep.subr.bf16.mxu0 0
    %878 = vmatpush1.bf16.msra.mxu0 0
    %879 = vmatprep.subr.bf16.mxu0 0
    %880 = vmatpush1.bf16.msra.mxu0 0
    %881 = vmatprep.subr.bf16.mxu0 0
    %882 = vmatpush1.bf16.msra.mxu0 0
    %883 = vmatprep.subr.bf16.mxu0 0
    %884 = vmatpush1.bf16.msra.mxu0 0
    %885 = vmatprep.subr.bf16.mxu0 0
    %886 = vmatpush1.bf16.msra.mxu0 0
    %887 = vmatprep.subr.bf16.mxu0 0
    %888 = vmatpush1.bf16.msra.mxu0 0
    %889 = vmatprep.subr.bf16.mxu0 0
    %890 = vmatpush1.bf16.msra.mxu0 0
    %891 = vmatprep.subr.bf16.mxu0 0
    %892 = vmatpush1.bf16.msra.mxu0 0
    %893 = vmatprep.subr.bf16.mxu0 0
    %894 = vmatpush1.bf16.msra.mxu0 0
    %895 = vmatprep.subr.bf16.mxu0 0
    %896 = vmatpush1.bf16.msra.mxu0 0
    %897 = vmatprep.subr.bf16.mxu0 0
    %898 = vmatpush1.bf16.msra.mxu0 0
    %899 = vmatprep.subr.bf16.mxu0 0
    %900 = vmatpush1.bf16.msra.mxu0 0
    %901 = vmatprep.subr.bf16.mxu0 0
    %902 = vmatpush1.bf16.msra.mxu0 0
    %903 = vmatprep.subr.bf16.mxu0 0
    %904 = vmatpush1.bf16.msra.mxu0 0
    %905 = vmatprep.subr.bf16.mxu0 0
    %906 = vmatpush1.bf16.msra.mxu0 0
    %907 = vmatprep.mubr.bf16.mxu0 0
    %908 = vmatmul.mubr.bf16.gmra.mrb[0].mxu0 %v870
    %v909 = vpop.f32.mrb[0].mxu0
    %v910 = vadd.f32 0.0, %v909
    %v911 = vpop.f32.mrb[0].mxu0
    %v912 = vpop.f32.mrb[0].mxu0
    %v913 = vpop.f32.mrb[0].mxu0
    %914 = vdwg.mxu0
    %915 = vrot.lane.b32.xlu0 %v530, 120
    %v916 = vpop.permute.xlu0 %915
    %v918 = vsel %vm531, %v866, 0
    %v921 = vsel %vm651, %v916, 0
    %923 = vmatprep.subr.bf16.mxu0 0
    %924 = vmatpush1.bf16.msra.mxu0 %v921
    %925 = vmatprep.subr.bf16.mxu0 0
    %926 = vmatpush1.bf16.msra.mxu0 0
    %927 = vmatprep.subr.bf16.mxu0 0
    %928 = vmatpush1.bf16.msra.mxu0 0
    %929 = vmatprep.subr.bf16.mxu0 0
    %930 = vmatpush1.bf16.msra.mxu0 0
    %931 = vmatprep.subr.bf16.mxu0 0
    %932 = vmatpush1.bf16.msra.mxu0 0
    %933 = vmatprep.subr.bf16.mxu0 0
    %934 = vmatpush1.bf16.msra.mxu0 0
    %935 = vmatprep.subr.bf16.mxu0 0
    %936 = vmatpush1.bf16.msra.mxu0 0
    %937 = vmatprep.subr.bf16.mxu0 0
    %938 = vmatpush1.bf16.msra.mxu0 0
    %939 = vmatprep.subr.bf16.mxu0 0
    %940 = vmatpush1.bf16.msra.mxu0 0
    %941 = vmatprep.subr.bf16.mxu0 0
    %942 = vmatpush1.bf16.msra.mxu0 0
    %943 = vmatprep.subr.bf16.mxu0 0
    %944 = vmatpush1.bf16.msra.mxu0 0
    %945 = vmatprep.subr.bf16.mxu0 0
    %946 = vmatpush1.bf16.msra.mxu0 0
    %947 = vmatprep.subr.bf16.mxu0 0
    %948 = vmatpush1.bf16.msra.mxu0 0
    %949 = vmatprep.subr.bf16.mxu0 0
    %950 = vmatpush1.bf16.msra.mxu0 0
    %951 = vmatprep.subr.bf16.mxu0 0
    %952 = vmatpush1.bf16.msra.mxu0 0
    %953 = vmatprep.subr.bf16.mxu0 0
    %954 = vmatpush1.bf16.msra.mxu0 0
    %955 = vmatprep.mubr.bf16.mxu0 0
    %956 = vmatmul.mubr.bf16.gmra.mrb[0].mxu0 %v918
    %v957 = vpop.f32.mrb[0].mxu0
    %v958 = vadd.f32 0.0, %v957
    %v959 = vpop.f32.mrb[0].mxu0
    %v960 = vpop.f32.mrb[0].mxu0
    %v961 = vpop.f32.mrb[0].mxu0
    %962 = vdwg.mxu0
    %v963 = vpack.c.bf16 %v958, %v910
    %965 = vrot.lane.b32.xlu0 %v963, 8
    %v966 = vpop.permute.xlu0 %965
    %vm968 = vcmask 130112
    %969 = vst.msk [vmem:[#allocation2] sm:$0xff] %vm968, %v966
    %970 = vrot.lane.b32.xlu0 %v389, 112
    %v971 = vpop.permute.xlu0 %970
    %972 = vrot.lane.b32.xlu0 %v459, 112
    %v973 = vpop.permute.xlu0 %972
    %v975 = vsel %vm531, %v971, 0
    %v978 = vsel %vm531, %v973, 0
    %980 = vmatprep.subr.bf16.mxu0 0
    %981 = vmatpush1.bf16.xpose.msra.mxu0 %v978
    %982 = vmatprep.subr.bf16.mxu0 0
    %983 = vmatpush1.bf16.xpose.msra.mxu0 0
    %984 = vmatprep.subr.bf16.mxu0 0
    %985 = vmatpush1.bf16.xpose.msra.mxu0 0
    %986 = vmatprep.subr.bf16.mxu0 0
    %987 = vmatpush1.bf16.xpose.msra.mxu0 0
    %988 = vmatprep.subr.bf16.mxu0 0
    %989 = vmatpush1.bf16.xpose.msra.mxu0 0
    %990 = vmatprep.subr.bf16.mxu0 0
    %991 = vmatpush1.bf16.xpose.msra.mxu0 0
    %992 = vmatprep.subr.bf16.mxu0 0
    %993 = vmatpush1.bf16.xpose.msra.mxu0 0
    %994 = vmatprep.subr.bf16.mxu0 0
    %995 = vmatpush1.bf16.xpose.msra.mxu0 0
    %996 = vmatprep.subr.bf16.mxu0 0
    %997 = vmatpush1.bf16.xpose.msra.mxu0 0
    %998 = vmatprep.subr.bf16.mxu0 0
    %999 = vmatpush1.bf16.xpose.msra.mxu0 0
    %1000 = vmatprep.subr.bf16.mxu0 0
    %1001 = vmatpush1.bf16.xpose.msra.mxu0 0
    %1002 = vmatprep.subr.bf16.mxu0 0
    %1003 = vmatpush1.bf16.xpose.msra.mxu0 0
    %1004 = vmatprep.subr.bf16.mxu0 0
    %1005 = vmatpush1.bf16.xpose.msra.mxu0 0
    %1006 = vmatprep.subr.bf16.mxu0 0
    %1007 = vmatpush1.bf16.xpose.msra.mxu0 0
    %1008 = vmatprep.subr.bf16.mxu0 0
    %1009 = vmatpush1.bf16.xpose.msra.mxu0 0
    %1010 = vmatprep.subr.bf16.mxu0 0
    %1011 = vmatpush1.bf16.xpose.msra.mxu0 0
    %1012 = vmatprep.mubr.bf16.mxu0 0
    %1013 = vmatmul.mubr.bf16.gmra.mrb[0].mxu0 %v975
    %v1014 = vpop.f32.mrb[0].mxu0
    %v1015 = vadd.f32 %v310, %v1014
    %v1016 = vpop.f32.mrb[0].mxu0
    %v1017 = vpop.f32.mrb[0].mxu0
    %v1018 = vpop.f32.mrb[0].mxu0
    %1019 = vdwg.mxu0
    %1020 = vrot.lane.b32.xlu0 %v390, 112
    %v1021 = vpop.permute.xlu0 %1020
    %1022 = vrot.lane.b32.xlu0 %v460, 112
    %v1023 = vpop.permute.xlu0 %1022
    %v1025 = vsel %vm531, %v1021, 0
    %v1028 = vsel %vm531, %v1023, 0
    %1030 = vmatprep.subr.bf16.mxu0 0
    %1031 = vmatpush1.bf16.xpose.msra.mxu0 %v1028
    %1032 = vmatprep.subr.bf16.mxu0 0
    %1033 = vmatpush1.bf16.xpose.msra.mxu0 0
    %1034 = vmatprep.subr.bf16.mxu0 0
    %1035 = vmatpush1.bf16.xpose.msra.mxu0 0
    %1036 = vmatprep.subr.bf16.mxu0 0
    %1037 = vmatpush1.bf16.xpose.msra.mxu0 0
    %1038 = vmatprep.subr.bf16.mxu0 0
    %1039 = vmatpush1.bf16.xpose.msra.mxu0 0
    %1040 = vmatprep.subr.bf16.mxu0 0
    %1041 = vmatpush1.bf16.xpose.msra.mxu0 0
    %1042 = vmatprep.subr.bf16.mxu0 0
    %1043 = vmatpush1.bf16.xpose.msra.mxu0 0
    %1044 = vmatprep.subr.bf16.mxu0 0
    %1045 = vmatpush1.bf16.xpose.msra.mxu0 0
    %1046 = vmatprep.subr.bf16.mxu0 0
    %1047 = vmatpush1.bf16.xpose.msra.mxu0 0
    %1048 = vmatprep.subr.bf16.mxu0 0
    %1049 = vmatpush1.bf16.xpose.msra.mxu0 0
    %1050 = vmatprep.subr.bf16.mxu0 0
    %1051 = vmatpush1.bf16.xpose.msra.mxu0 0
    %1052 = vmatprep.subr.bf16.mxu0 0
    %1053 = vmatpush1.bf16.xpose.msra.mxu0 0
    %1054 = vmatprep.subr.bf16.mxu0 0
    %1055 = vmatpush1.bf16.xpose.msra.mxu0 0
    %1056 = vmatprep.subr.bf16.mxu0 0
    %1057 = vmatpush1.bf16.xpose.msra.mxu0 0
    %1058 = vmatprep.subr.bf16.mxu0 0
    %1059 = vmatpush1.bf16.xpose.msra.mxu0 0
    %1060 = vmatprep.subr.bf16.mxu0 0
    %1061 = vmatpush1.bf16.xpose.msra.mxu0 0
    %1062 = vmatprep.mubr.bf16.mxu0 0
    %1063 = vmatmul.mubr.bf16.gmra.mrb[0].mxu0 %v1025
    %v1064 = vpop.f32.mrb[0].mxu0
    %v1065 = vadd.f32 %v311, %v1064
    %v1066 = vpop.f32.mrb[0].mxu0
    %v1067 = vpop.f32.mrb[0].mxu0
    %v1068 = vpop.f32.mrb[0].mxu0
    %1069 = vdwg.mxu0
    %v1070 = vsel %vm531, %v1015, -inf
    %1071 = vmax.xlane.f32.xlu0 %v1070
    %v1072 = vpop.xlane.xlu0 %1071
    %v1073 = vsel %vm531, %v1065, -inf
    %1074 = vmax.xlane.f32.xlu0 %v1073
    %v1075 = vpop.xlane.xlu0 %1074
    %v1076 = vsub.f32 %v1015, %v1072
    %v1077 = vsub.f32 %v1065, %v1075
    %v1078 = vmul.f32 %v1076, 1.442695
    %v1079 = vpow.pop %v1078
    %v1080 = vmul.f32 %v1077, 1.442695
    %v1081 = vpow.pop %v1080
    %v1082 = vsel %vm531, %v1079, 0.0
    %1083 = vadd.xlane.f32.xlu0 %v1082
    %v1084 = vpop.xlane.xlu0 %1083
    %v1085 = vsel %vm531, %v1081, 0.0
    %1086 = vadd.xlane.f32.xlu0 %v1085
    %v1087 = vpop.xlane.xlu0 %1086
    %v1088 = vrcp.pop %v1084
    %v1089 = vrcp.pop %v1087
    %v1090 = vmul.f32 %v1079, %v1088
    %v1091 = vmul.f32 %v1081, %v1089
    %v1092 = vpack.c.bf16 %v1090, %v1090
    %v1093 = vpack.c.bf16 %v1091, %v1091
    %1094 = vrot.lane.b32.xlu0 %v529, 112
    %v1095 = vpop.permute.xlu0 %1094
    %v1097 = vsel %vm531, %v1092, 0
    %v1100 = vsel %vm651, %v1095, 0
    %1102 = vmatprep.subr.bf16.mxu0 0
    %1103 = vmatpush1.bf16.msra.mxu0 %v1100
    %1104 = vmatprep.subr.bf16.mxu0 0
    %1105 = vmatpush1.bf16.msra.mxu0 0
    %1106 = vmatprep.subr.bf16.mxu0 0
    %1107 = vmatpush1.bf16.msra.mxu0 0
    %1108 = vmatprep.subr.bf16.mxu0 0
    %1109 = vmatpush1.bf16.msra.mxu0 0
    %1110 = vmatprep.subr.bf16.mxu0 0
    %1111 = vmatpush1.bf16.msra.mxu0 0
    %1112 = vmatprep.subr.bf16.mxu0 0
    %1113 = vmatpush1.bf16.msra.mxu0 0
    %1114 = vmatprep.subr.bf16.mxu0 0
    %1115 = vmatpush1.bf16.msra.mxu0 0
    %1116 = vmatprep.subr.bf16.mxu0 0
    %1117 = vmatpush1.bf16.msra.mxu0 0
    %1118 = vmatprep.subr.bf16.mxu0 0
    %1119 = vmatpush1.bf16.msra.mxu0 0
    %1120 = vmatprep.subr.bf16.mxu0 0
    %1121 = vmatpush1.bf16.msra.mxu0 0
    %1122 = vmatprep.subr.bf16.mxu0 0
    %1123 = vmatpush1.bf16.msra.mxu0 0
    %1124 = vmatprep.subr.bf16.mxu0 0
    %1125 = vmatpush1.bf16.msra.mxu0 0
    %1126 = vmatprep.subr.bf16.mxu0 0
    %1127 = vmatpush1.bf16.msra.mxu0 0
    %1128 = vmatprep.subr.bf16.mxu0 0
    %1129 = vmatpush1.bf16.msra.mxu0 0
    %1130 = vmatprep.subr.bf16.mxu0 0
    %1131 = vmatpush1.bf16.msra.mxu0 0
    %1132 = vmatprep.subr.bf16.mxu0 0
    %1133 = vmatpush1.bf16.msra.mxu0 0
    %1134 = vmatprep.mubr.bf16.mxu0 0
    %1135 = vmatmul.mubr.bf16.gmra.mrb[0].mxu0 %v1097
    %v1136 = vpop.f32.mrb[0].mxu0
    %v1137 = vadd.f32 0.0, %v1136
    %v1138 = vpop.f32.mrb[0].mxu0
    %v1139 = vpop.f32.mrb[0].mxu0
    %v1140 = vpop.f32.mrb[0].mxu0
    %1141 = vdwg.mxu0
    %1142 = vrot.lane.b32.xlu0 %v530, 112
    %v1143 = vpop.permute.xlu0 %1142
    %v1145 = vsel %vm531, %v1093, 0
    %v1148 = vsel %vm651, %v1143, 0
    %1150 = vmatprep.subr.bf16.mxu0 0
    %1151 = vmatpush1.bf16.msra.mxu0 %v1148
    %1152 = vmatprep.subr.bf16.mxu0 0
    %1153 = vmatpush1.bf16.msra.mxu0 0
    %1154 = vmatprep.subr.bf16.mxu0 0
    %1155 = vmatpush1.bf16.msra.mxu0 0
    %1156 = vmatprep.subr.bf16.mxu0 0
    %1157 = vmatpush1.bf16.msra.mxu0 0
    %1158 = vmatprep.subr.bf16.mxu0 0
    %1159 = vmatpush1.bf16.msra.mxu0 0
    %1160 = vmatprep.subr.bf16.mxu0 0
    %1161 = vmatpush1.bf16.msra.mxu0 0
    %1162 = vmatprep.subr.bf16.mxu0 0
    %1163 = vmatpush1.bf16.msra.mxu0 0
    %1164 = vmatprep.subr.bf16.mxu0 0
    %1165 = vmatpush1.bf16.msra.mxu0 0
    %1166 = vmatprep.subr.bf16.mxu0 0
    %1167 = vmatpush1.bf16.msra.mxu0 0
    %1168 = vmatprep.subr.bf16.mxu0 0
    %1169 = vmatpush1.bf16.msra.mxu0 0
    %1170 = vmatprep.subr.bf16.mxu0 0
    %1171 = vmatpush1.bf16.msra.mxu0 0
    %1172 = vmatprep.subr.bf16.mxu0 0
    %1173 = vmatpush1.bf16.msra.mxu0 0
    %1174 = vmatprep.subr.bf16.mxu0 0
    %1175 = vmatpush1.bf16.msra.mxu0 0
    %1176 = vmatprep.subr.bf16.mxu0 0
    %1177 = vmatpush1.bf16.msra.mxu0 0
    %1178 = vmatprep.subr.bf16.mxu0 0
    %1179 = vmatpush1.bf16.msra.mxu0 0
    %1180 = vmatprep.subr.bf16.mxu0 0
    %1181 = vmatpush1.bf16.msra.mxu0 0
    %1182 = vmatprep.mubr.bf16.mxu0 0
    %1183 = vmatmul.mubr.bf16.gmra.mrb[0].mxu0 %v1145
    %v1184 = vpop.f32.mrb[0].mxu0
    %v1185 = vadd.f32 0.0, %v1184
    %v1186 = vpop.f32.mrb[0].mxu0
    %v1187 = vpop.f32.mrb[0].mxu0
    %v1188 = vpop.f32.mrb[0].mxu0
    %1189 = vdwg.mxu0
    %v1190 = vpack.c.bf16 %v1185, %v1137
    %1192 = vrot.lane.b32.xlu0 %v1190, 16
    %v1193 = vpop.permute.xlu0 %1192
    %vm1195 = vcmask 195712
    %1196 = vst.msk [vmem:[#allocation2] sm:$0xff] %vm1195, %v1193
    %1197 = vrot.lane.b32.xlu0 %v389, 104
    %v1198 = vpop.permute.xlu0 %1197
    %1199 = vrot.lane.b32.xlu0 %v459, 104
    %v1200 = vpop.permute.xlu0 %1199
    %v1202 = vsel %vm531, %v1198, 0
    %v1205 = vsel %vm531, %v1200, 0
    %1207 = vmatprep.subr.bf16.mxu0 0
    %1208 = vmatpush1.bf16.xpose.msra.mxu0 %v1205
    %1209 = vmatprep.subr.bf16.mxu0 0
    %1210 = vmatpush1.bf16.xpose.msra.mxu0 0
    %1211 = vmatprep.subr.bf16.mxu0 0
    %1212 = vmatpush1.bf16.xpose.msra.mxu0 0
    %1213 = vmatprep.subr.bf16.mxu0 0
    %1214 = vmatpush1.bf16.xpose.msra.mxu0 0
    %1215 = vmatprep.subr.bf16.mxu0 0
    %1216 = vmatpush1.bf16.xpose.msra.mxu0 0
    %1217 = vmatprep.subr.bf16.mxu0 0
    %1218 = vmatpush1.bf16.xpose.msra.mxu0 0
    %1219 = vmatprep.subr.bf16.mxu0 0
    %1220 = vmatpush1.bf16.xpose.msra.mxu0 0
    %1221 = vmatprep.subr.bf16.mxu0 0
    %1222 = vmatpush1.bf16.xpose.msra.mxu0 0
    %1223 = vmatprep.subr.bf16.mxu0 0
    %1224 = vmatpush1.bf16.xpose.msra.mxu0 0
    %1225 = vmatprep.subr.bf16.mxu0 0
    %1226 = vmatpush1.bf16.xpose.msra.mxu0 0
    %1227 = vmatprep.subr.bf16.mxu0 0
    %1228 = vmatpush1.bf16.xpose.msra.mxu0 0
    %1229 = vmatprep.subr.bf16.mxu0 0
    %1230 = vmatpush1.bf16.xpose.msra.mxu0 0
    %1231 = vmatprep.subr.bf16.mxu0 0
    %1232 = vmatpush1.bf16.xpose.msra.mxu0 0
    %1233 = vmatprep.subr.bf16.mxu0 0
    %1234 = vmatpush1.bf16.xpose.msra.mxu0 0
    %1235 = vmatprep.subr.bf16.mxu0 0
    %1236 = vmatpush1.bf16.xpose.msra.mxu0 0
    %1237 = vmatprep.subr.bf16.mxu0 0
    %1238 = vmatpush1.bf16.xpose.msra.mxu0 0
    %1239 = vmatprep.mubr.bf16.mxu0 0
    %1240 = vmatmul.mubr.bf16.gmra.mrb[0].mxu0 %v1202
    %v1241 = vpop.f32.mrb[0].mxu0
    %v1242 = vadd.f32 %v310, %v1241
    %v1243 = vpop.f32.mrb[0].mxu0
    %v1244 = vpop.f32.mrb[0].mxu0
    %v1245 = vpop.f32.mrb[0].mxu0
    %1246 = vdwg.mxu0
    %1247 = vrot.lane.b32.xlu0 %v390, 104
    %v1248 = vpop.permute.xlu0 %1247
    %1249 = vrot.lane.b32.xlu0 %v460, 104
    %v1250 = vpop.permute.xlu0 %1249
    %v1252 = vsel %vm531, %v1248, 0
    %v1255 = vsel %vm531, %v1250, 0
    %1257 = vmatprep.subr.bf16.mxu0 0
    %1258 = vmatpush1.bf16.xpose.msra.mxu0 %v1255
    %1259 = vmatprep.subr.bf16.mxu0 0
    %1260 = vmatpush1.bf16.xpose.msra.mxu0 0
    %1261 = vmatprep.subr.bf16.mxu0 0
    %1262 = vmatpush1.bf16.xpose.msra.mxu0 0
    %1263 = vmatprep.subr.bf16.mxu0 0
    %1264 = vmatpush1.bf16.xpose.msra.mxu0 0
    %1265 = vmatprep.subr.bf16.mxu0 0
    %1266 = vmatpush1.bf16.xpose.msra.mxu0 0
    %1267 = vmatprep.subr.bf16.mxu0 0
    %1268 = vmatpush1.bf16.xpose.msra.mxu0 0
    %1269 = vmatprep.subr.bf16.mxu0 0
    %1270 = vmatpush1.bf16.xpose.msra.mxu0 0
    %1271 = vmatprep.subr.bf16.mxu0 0
    %1272 = vmatpush1.bf16.xpose.msra.mxu0 0
    %1273 = vmatprep.subr.bf16.mxu0 0
    %1274 = vmatpush1.bf16.xpose.msra.mxu0 0
    %1275 = vmatprep.subr.bf16.mxu0 0
    %1276 = vmatpush1.bf16.xpose.msra.mxu0 0
    %1277 = vmatprep.subr.bf16.mxu0 0
    %1278 = vmatpush1.bf16.xpose.msra.mxu0 0
    %1279 = vmatprep.subr.bf16.mxu0 0
    %1280 = vmatpush1.bf16.xpose.msra.mxu0 0
    %1281 = vmatprep.subr.bf16.mxu0 0
    %1282 = vmatpush1.bf16.xpose.msra.mxu0 0
    %1283 = vmatprep.subr.bf16.mxu0 0
    %1284 = vmatpush1.bf16.xpose.msra.mxu0 0
    %1285 = vmatprep.subr.bf16.mxu0 0
    %1286 = vmatpush1.bf16.xpose.msra.mxu0 0
    %1287 = vmatprep.subr.bf16.mxu0 0
    %1288 = vmatpush1.bf16.xpose.msra.mxu0 0
    %1289 = vmatprep.mubr.bf16.mxu0 0
    %1290 = vmatmul.mubr.bf16.gmra.mrb[0].mxu0 %v1252
    %v1291 = vpop.f32.mrb[0].mxu0
    %v1292 = vadd.f32 %v311, %v1291
    %v1293 = vpop.f32.mrb[0].mxu0
    %v1294 = vpop.f32.mrb[0].mxu0
    %v1295 = vpop.f32.mrb[0].mxu0
    %1296 = vdwg.mxu0
    %v1297 = vsel %vm531, %v1242, -inf
    %1298 = vmax.xlane.f32.xlu0 %v1297
    %v1299 = vpop.xlane.xlu0 %1298
    %v1300 = vsel %vm531, %v1292, -inf
    %1301 = vmax.xlane.f32.xlu0 %v1300
    %v1302 = vpop.xlane.xlu0 %1301
    %v1303 = vsub.f32 %v1242, %v1299
    %v1304 = vsub.f32 %v1292, %v1302
    %v1305 = vmul.f32 %v1303, 1.442695
    %v1306 = vpow.pop %v1305
    %v1307 = vmul.f32 %v1304, 1.442695
    %v1308 = vpow.pop %v1307
    %v1309 = vsel %vm531, %v1306, 0.0
    %1310 = vadd.xlane.f32.xlu0 %v1309
    %v1311 = vpop.xlane.xlu0 %1310
    %v1312 = vsel %vm531, %v1308, 0.0
    %1313 = vadd.xlane.f32.xlu0 %v1312
    %v1314 = vpop.xlane.xlu0 %1313
    %v1315 = vrcp.pop %v1311
    %v1316 = vrcp.pop %v1314
    %v1317 = vmul.f32 %v1306, %v1315
    %v1318 = vmul.f32 %v1308, %v1316
    %v1319 = vpack.c.bf16 %v1317, %v1317
    %v1320 = vpack.c.bf16 %v1318, %v1318
    %1321 = vrot.lane.b32.xlu0 %v529, 104
    %v1322 = vpop.permute.xlu0 %1321
    %v1324 = vsel %vm531, %v1319, 0
    %v1327 = vsel %vm651, %v1322, 0
    %1329 = vmatprep.subr.bf16.mxu0 0
    %1330 = vmatpush1.bf16.msra.mxu0 %v1327
    %1331 = vmatprep.subr.bf16.mxu0 0
    %1332 = vmatpush1.bf16.msra.mxu0 0
    %1333 = vmatprep.subr.bf16.mxu0 0
    %1334 = vmatpush1.bf16.msra.mxu0 0
    %1335 = vmatprep.subr.bf16.mxu0 0
    %1336 = vmatpush1.bf16.msra.mxu0 0
    %1337 = vmatprep.subr.bf16.mxu0 0
    %1338 = vmatpush1.bf16.msra.mxu0 0
    %1339 = vmatprep.subr.bf16.mxu0 0
    %1340 = vmatpush1.bf16.msra.mxu0 0
    %1341 = vmatprep.subr.bf16.mxu0 0
    %1342 = vmatpush1.bf16.msra.mxu0 0
    %1343 = vmatprep.subr.bf16.mxu0 0
    %1344 = vmatpush1.bf16.msra.mxu0 0
    %1345 = vmatprep.subr.bf16.mxu0 0
    %1346 = vmatpush1.bf16.msra.mxu0 0
    %1347 = vmatprep.subr.bf16.mxu0 0
    %1348 = vmatpush1.bf16.msra.mxu0 0
    %1349 = vmatprep.subr.bf16.mxu0 0
    %1350 = vmatpush1.bf16.msra.mxu0 0
    %1351 = vmatprep.subr.bf16.mxu0 0
    %1352 = vmatpush1.bf16.msra.mxu0 0
    %1353 = vmatprep.subr.bf16.mxu0 0
    %1354 = vmatpush1.bf16.msra.mxu0 0
    %1355 = vmatprep.subr.bf16.mxu0 0
    %1356 = vmatpush1.bf16.msra.mxu0 0
    %1357 = vmatprep.subr.bf16.mxu0 0
    %1358 = vmatpush1.bf16.msra.mxu0 0
    %1359 = vmatprep.subr.bf16.mxu0 0
    %1360 = vmatpush1.bf16.msra.mxu0 0
    %1361 = vmatprep.mubr.bf16.mxu0 0
    %1362 = vmatmul.mubr.bf16.gmra.mrb[0].mxu0 %v1324
    %v1363 = vpop.f32.mrb[0].mxu0
    %v1364 = vadd.f32 0.0, %v1363
    %v1365 = vpop.f32.mrb[0].mxu0
    %v1366 = vpop.f32.mrb[0].mxu0
    %v1367 = vpop.f32.mrb[0].mxu0
    %1368 = vdwg.mxu0
    %1369 = vrot.lane.b32.xlu0 %v530, 104
    %v1370 = vpop.permute.xlu0 %1369
    %v1372 = vsel %vm531, %v1320, 0
    %v1375 = vsel %vm651, %v1370, 0
    %1377 = vmatprep.subr.bf16.mxu0 0
    %1378 = vmatpush1.bf16.msra.mxu0 %v1375
    %1379 = vmatprep.subr.bf16.mxu0 0
    %1380 = vmatpush1.bf16.msra.mxu0 0
    %1381 = vmatprep.subr.bf16.mxu0 0
    %1382 = vmatpush1.bf16.msra.mxu0 0
    %1383 = vmatprep.subr.bf16.mxu0 0
    %1384 = vmatpush1.bf16.msra.mxu0 0
    %1385 = vmatprep.subr.bf16.mxu0 0
    %1386 = vmatpush1.bf16.msra.mxu0 0
    %1387 = vmatprep.subr.bf16.mxu0 0
    %1388 = vmatpush1.bf16.msra.mxu0 0
    %1389 = vmatprep.subr.bf16.mxu0 0
    %1390 = vmatpush1.bf16.msra.mxu0 0
    %1391 = vmatprep.subr.bf16.mxu0 0
    %1392 = vmatpush1.bf16.msra.mxu0 0
    %1393 = vmatprep.subr.bf16.mxu0 0
    %1394 = vmatpush1.bf16.msra.mxu0 0
    %1395 = vmatprep.subr.bf16.mxu0 0
    %1396 = vmatpush1.bf16.msra.mxu0 0
    %1397 = vmatprep.subr.bf16.mxu0 0
    %1398 = vmatpush1.bf16.msra.mxu0 0
    %1399 = vmatprep.subr.bf16.mxu0 0
    %1400 = vmatpush1.bf16.msra.mxu0 0
    %1401 = vmatprep.subr.bf16.mxu0 0
    %1402 = vmatpush1.bf16.msra.mxu0 0
    %1403 = vmatprep.subr.bf16.mxu0 0
    %1404 = vmatpush1.bf16.msra.mxu0 0
    %1405 = vmatprep.subr.bf16.mxu0 0
    %1406 = vmatpush1.bf16.msra.mxu0 0
    %1407 = vmatprep.subr.bf16.mxu0 0
    %1408 = vmatpush1.bf16.msra.mxu0 0
    %1409 = vmatprep.mubr.bf16.mxu0 0
    %1410 = vmatmul.mubr.bf16.gmra.mrb[0].mxu0 %v1372
    %v1411 = vpop.f32.mrb[0].mxu0
    %v1412 = vadd.f32 0.0, %v1411
    %v1413 = vpop.f32.mrb[0].mxu0
    %v1414 = vpop.f32.mrb[0].mxu0
    %v1415 = vpop.f32.mrb[0].mxu0
    %1416 = vdwg.mxu0
    %v1417 = vpack.c.bf16 %v1412, %v1364
    %1419 = vrot.lane.b32.xlu0 %v1417, 24
    %v1420 = vpop.permute.xlu0 %1419
    %vm1422 = vcmask 261312
    %1423 = vst.msk [vmem:[#allocation2] sm:$0xff] %vm1422, %v1420
    %v1424 = vld [vmem:[#allocation2] sm:$0xff]
    %v1425 = vld [vmem:[%s21] sm:$0xf]
    %v1426 = vld [vmem:[%s21 + $0x4] sm:$0xf]
    %v1427 = vld [vmem:[%s21 + $0x8] sm:$0xf]
    %v1428 = vld [vmem:[%s21 + $0xc] sm:$0xf]
    %v1429 = vld [vmem:[#allocation15] sm:$0x1]
    %v1431 = vlaneseq
    %v1432 = vshrl.u32 %v1431, 7
    %v1433 = vsub.s32 0, %v1432
    %v1434 = vrot.slane %v1429, %v1433
    %v1440 = vunpack.c.l.b16 %v1425
    %v1441 = vunpack.c.l.b16 %v1426
    %v1442 = vunpack.c.l.b16 %v1427
    %v1443 = vunpack.c.l.b16 %v1428
    %v1444 = vpack.c.b16 %v1441, %v1440
    %v1445 = vpack.c.b16 %v1443, %v1442
    %v1449 = vsel %vm340, %v1424, 0
    %1451 = vmatprep.subr.bf16.mxu0 0
    %1452 = vmatpush1.bf16.msra.mxu0 %v1444
    %1453 = vmatprep.subr.bf16.mxu0 0
    %1454 = vmatpush1.bf16.msra.mxu0 %v1445
    %1455 = vmatprep.subr.bf16.mxu0 0
    %1456 = vmatpush1.bf16.msra.mxu0 0
    %1457 = vmatprep.subr.bf16.mxu0 0
    %1458 = vmatpush1.bf16.msra.mxu0 0
    %1459 = vmatprep.subr.bf16.mxu0 0
    %1460 = vmatpush1.bf16.msra.mxu0 0
    %1461 = vmatprep.subr.bf16.mxu0 0
    %1462 = vmatpush1.bf16.msra.mxu0 0
    %1463 = vmatprep.subr.bf16.mxu0 0
    %1464 = vmatpush1.bf16.msra.mxu0 0
    %1465 = vmatprep.subr.bf16.mxu0 0
    %1466 = vmatpush1.bf16.msra.mxu0 0
    %1467 = vmatprep.subr.bf16.mxu0 0
    %1468 = vmatpush1.bf16.msra.mxu0 0
    %1469 = vmatprep.subr.bf16.mxu0 0
    %1470 = vmatpush1.bf16.msra.mxu0 0
    %1471 = vmatprep.subr.bf16.mxu0 0
    %1472 = vmatpush1.bf16.msra.mxu0 0
    %1473 = vmatprep.subr.bf16.mxu0 0
    %1474 = vmatpush1.bf16.msra.mxu0 0
    %1475 = vmatprep.subr.bf16.mxu0 0
    %1476 = vmatpush1.bf16.msra.mxu0 0
    %1477 = vmatprep.subr.bf16.mxu0 0
    %1478 = vmatpush1.bf16.msra.mxu0 0
    %1479 = vmatprep.subr.bf16.mxu0 0
    %1480 = vmatpush1.bf16.msra.mxu0 0
    %1481 = vmatprep.subr.bf16.mxu0 0
    %1482 = vmatpush1.bf16.msra.mxu0 0
    %1483 = vmatprep.mubr.bf16.mxu0 0
    %1484 = vmatmul.mubr.bf16.gmra.mrb[0].mxu0 %v1449
    %v1485 = vpop.f32.mrb[0].mxu0
    %v1486 = vadd.f32 %v1434, %v1485
    %v1487 = vpop.f32.mrb[0].mxu0
    %v1488 = vpop.f32.mrb[0].mxu0
    %v1489 = vadd.f32 %v1434, %v1488
    %v1490 = vpop.f32.mrb[0].mxu0
    %1491 = vdwg.mxu0
    %v1492 = vadd.f32 %v304, %v1486
    %v1493 = vadd.f32 %v305, %v1489
    %v1494 = vsel %vm340, %v1492, 0.0
    %1495 = vadd.xlane.f32.xlu0 %v1494
    %v1496 = vpop.xlane.xlu0 %1495
    %v1497 = vsel %vm340, %v1493, 0.0
    %1498 = vadd.xlane.f32.xlu0 %v1497
    %v1499 = vpop.xlane.xlu0 %1498
    %v1500 = vrcp.pop 32.0
    %v1501 = vmul.f32 %v1496, %v1500
    %v1502 = vmul.f32 %v1499, %v1500
    %v1503 = vsub.f32 %v1492, %v1501
    %v1504 = vsub.f32 %v1493, %v1502
    %v1505 = vmul.f32 %v1503, %v1503
    %v1506 = vmul.f32 %v1504, %v1504
    %v1507 = vsel %vm340, %v1505, 0.0
    %1508 = vadd.xlane.f32.xlu0 %v1507
    %v1509 = vpop.xlane.xlu0 %1508
    %v1510 = vsel %vm340, %v1506, 0.0
    %1511 = vadd.xlane.f32.xlu0 %v1510
    %v1512 = vpop.xlane.xlu0 %1511
    %v1513 = vmul.f32 %v1509, %v1500
    %v1514 = vmul.f32 %v1512, %v1500
    %v1515 = vadd.f32 %v1513, 1e-05
    %v1516 = vadd.f32 %v1514, 1e-05
    %v1517 = vrsqrt.pop %v1515
    %v1518 = vrsqrt.pop %v1516
    %v1519 = vmul.f32 %v1503, %v1517
    %v1520 = vmul.f32 %v1504, %v1518
    %v1521 = vld [vmem:[#allocation17] sm:$0x1]
    %v1523 = vlaneseq
    %v1524 = vshrl.u32 %v1523, 7
    %v1525 = vsub.s32 0, %v1524
    %v1526 = vrot.slane %v1521, %v1525
    %v1528 = vmul.f32 %v1519, %v1526
    %v1529 = vmul.f32 %v1520, %v1526
    %v1530 = vld [vmem:[#allocation18] sm:$0x1]
    %v1532 = vlaneseq
    %v1533 = vshrl.u32 %v1532, 7
    %v1534 = vsub.s32 0, %v1533
    %v1535 = vrot.slane %v1530, %v1534
    %v1537 = vadd.f32 %v1528, %v1535
    %v1538 = vadd.f32 %v1529, %v1535
    %v1539 = vpack.c.bf16 %v1538, %v1537
    %v1540 = vld [vmem:[#allocation9] sm:$0xf]
    %v1541 = vld [vmem:[#allocation9 + $0x4] sm:$0xf]
    %v1542 = vunpack.c.l.bf16 %v1540
    %v1543 = vunpack.c.l.bf16 %v1541
    %v1544 = vld [vmem:[%s29] sm:$0xf]
    %v1545 = vld [vmem:[%s29 + $0x4] sm:$0xf]
    %v1546 = vld [vmem:[%s29 + $0x8] sm:$0xf]
    %v1547 = vld [vmem:[%s29 + $0xc] sm:$0xf]
    %v1548 = vld [vmem:[#allocation23] sm:$0x1]
    %v1550 = vlaneseq
    %v1551 = vshrl.u32 %v1550, 7
    %v1552 = vsub.s32 0, %v1551
    %v1553 = vrot.slane %v1548, %v1552
    %v1559 = vunpack.c.l.b16 %v1544
    %v1560 = vunpack.c.l.b16 %v1545
    %v1561 = vunpack.c.l.b16 %v1546
    %v1562 = vunpack.c.l.b16 %v1547
    %v1563 = vpack.c.b16 %v1560, %v1559
    %v1564 = vpack.c.b16 %v1562, %v1561
    %v1568 = vsel %vm340, %v1539, 0
    %1570 = vmatprep.subr.bf16.mxu0 0
    %1571 = vmatpush1.bf16.msra.mxu0 %v1563
    %1572 = vmatprep.subr.bf16.mxu0 0
    %1573 = vmatpush1.bf16.msra.mxu0 %v1564
    %1574 = vmatprep.subr.bf16.mxu0 0
    %1575 = vmatpush1.bf16.msra.mxu0 0
    %1576 = vmatprep.subr.bf16.mxu0 0
    %1577 = vmatpush1.bf16.msra.mxu0 0
    %1578 = vmatprep.subr.bf16.mxu0 0
    %1579 = vmatpush1.bf16.msra.mxu0 0
    %1580 = vmatprep.subr.bf16.mxu0 0
    %1581 = vmatpush1.bf16.msra.mxu0 0
    %1582 = vmatprep.subr.bf16.mxu0 0
    %1583 = vmatpush1.bf16.msra.mxu0 0
    %1584 = vmatprep.subr.bf16.mxu0 0
    %1585 = vmatpush1.bf16.msra.mxu0 0
    %1586 = vmatprep.subr.bf16.mxu0 0
    %1587 = vmatpush1.bf16.msra.mxu0 0
    %1588 = vmatprep.subr.bf16.mxu0 0
    %1589 = vmatpush1.bf16.msra.mxu0 0
    %1590 = vmatprep.subr.bf16.mxu0 0
    %1591 = vmatpush1.bf16.msra.mxu0 0
    %1592 = vmatprep.subr.bf16.mxu0 0
    %1593 = vmatpush1.bf16.msra.mxu0 0
    %1594 = vmatprep.subr.bf16.mxu0 0
    %1595 = vmatpush1.bf16.msra.mxu0 0
    %1596 = vmatprep.subr.bf16.mxu0 0
    %1597 = vmatpush1.bf16.msra.mxu0 0
    %1598 = vmatprep.subr.bf16.mxu0 0
    %1599 = vmatpush1.bf16.msra.mxu0 0
    %1600 = vmatprep.subr.bf16.mxu0 0
    %1601 = vmatpush1.bf16.msra.mxu0 0
    %1602 = vmatprep.mubr.bf16.mxu0 0
    %1603 = vmatmul.mubr.bf16.gmra.mrb[0].mxu0 %v1568
    %v1604 = vpop.f32.mrb[0].mxu0
    %v1605 = vadd.f32 %v1553, %v1604
    %v1606 = vpop.f32.mrb[0].mxu0
    %v1607 = vpop.f32.mrb[0].mxu0
    %v1608 = vadd.f32 %v1553, %v1607
    %v1609 = vpop.f32.mrb[0].mxu0
    %1610 = vdwg.mxu0
    %v1611 = vpack.c.bf16 %v1608, %v1605
    %v1613 = vunpack.c.l.b16 %v1611
    %v1614 = vunpack.c.h.b16 %v1611
    %v1615 = vpack.c.b16 %v1613, %v1613
    %v1616 = vpack.c.b16 %v1614, %v1614
    %v1617 = vld [vmem:[#allocation20] sm:$0xf]
    %v1618 = vld [vmem:[#allocation20 + $0x4] sm:$0xf]
    %v1619 = vld [vmem:[#allocation20 + $0x8] sm:$0xf]
    %v1620 = vld [vmem:[#allocation20 + $0xc] sm:$0xf]
    %v1621 = vld [vmem:[%s37] sm:$0x1]
    %v1623 = vlaneseq
    %v1624 = vshrl.u32 %v1623, 7
    %v1625 = vsub.s32 0, %v1624
    %v1626 = vrot.slane %v1621, %v1625
    %v1630 = vunpack.c.l.b16 %v306
    %v1631 = vunpack.c.l.b16 %v307
    %v1632 = vpack.c.b16 %v1631, %v1630
    %v1637 = vunpack.c.l.b16 %v1617
    %v1638 = vunpack.c.l.b16 %v1618
    %v1639 = vunpack.c.l.b16 %v1619
    %v1640 = vunpack.c.l.b16 %v1620
    %v1641 = vpack.c.b16 %v1638, %v1637
    %v1642 = vpack.c.b16 %v1640, %v1639
    %v1646 = vsel %vm340, %v1632, 0
    %1648 = vmatprep.subr.bf16.mxu0 0
    %1649 = vmatpush1.bf16.msra.mxu0 %v1641
    %1650 = vmatprep.subr.bf16.mxu0 0
    %1651 = vmatpush1.bf16.msra.mxu0 %v1642
    %1652 = vmatprep.subr.bf16.mxu0 0
    %1653 = vmatpush1.bf16.msra.mxu0 0
    %1654 = vmatprep.subr.bf16.mxu0 0
    %1655 = vmatpush1.bf16.msra.mxu0 0
    %1656 = vmatprep.subr.bf16.mxu0 0
    %1657 = vmatpush1.bf16.msra.mxu0 0
    %1658 = vmatprep.subr.bf16.mxu0 0
    %1659 = vmatpush1.bf16.msra.mxu0 0
    %1660 = vmatprep.subr.bf16.mxu0 0
    %1661 = vmatpush1.bf16.msra.mxu0 0
    %1662 = vmatprep.subr.bf16.mxu0 0
    %1663 = vmatpush1.bf16.msra.mxu0 0
    %1664 = vmatprep.subr.bf16.mxu0 0
    %1665 = vmatpush1.bf16.msra.mxu0 0
    %1666 = vmatprep.subr.bf16.mxu0 0
    %1667 = vmatpush1.bf16.msra.mxu0 0
    %1668 = vmatprep.subr.bf16.mxu0 0
    %1669 = vmatpush1.bf16.msra.mxu0 0
    %1670 = vmatprep.subr.bf16.mxu0 0
    %1671 = vmatpush1.bf16.msra.mxu0 0
    %1672 = vmatprep.subr.bf16.mxu0 0
    %1673 = vmatpush1.bf16.msra.mxu0 0
    %1674 = vmatprep.subr.bf16.mxu0 0
    %1675 = vmatpush1.bf16.msra.mxu0 0
    %1676 = vmatprep.subr.bf16.mxu0 0
    %1677 = vmatpush1.bf16.msra.mxu0 0
    %1678 = vmatprep.subr.bf16.mxu0 0
    %1679 = vmatpush1.bf16.msra.mxu0 0
    %1680 = vmatprep.mubr.bf16.mxu0 0
    %1681 = vmatmul.mubr.bf16.gmra.mrb[0].mxu0 %v1646
    %v1682 = vpop.f32.mrb[0].mxu0
    %v1683 = vadd.f32 %v1626, %v1682
    %v1684 = vpop.f32.mrb[0].mxu0
    %v1685 = vpop.f32.mrb[0].mxu0
    %v1686 = vadd.f32 %v1626, %v1685
    %v1687 = vpop.f32.mrb[0].mxu0
    %1688 = vdwg.mxu0
    %v1689 = vpack.c.bf16 %v1686, %v1683
    %v1691 = vunpack.c.l.b16 %v1689
    %v1692 = vunpack.c.h.b16 %v1689
    %v1693 = vpack.c.b16 %v1691, %v1691
    %v1694 = vpack.c.b16 %v1692, %v1692
    %v1695 = vld [vmem:[#allocation21] sm:$0xf]
    %v1696 = vld [vmem:[#allocation21 + $0x4] sm:$0xf]
    %v1697 = vld [vmem:[#allocation21 + $0x8] sm:$0xf]
    %v1698 = vld [vmem:[#allocation21 + $0xc] sm:$0xf]
    %v1699 = vld [vmem:[%s39] sm:$0x1]
    %v1701 = vlaneseq
    %v1702 = vshrl.u32 %v1701, 7
    %v1703 = vsub.s32 0, %v1702
    %v1704 = vrot.slane %v1699, %v1703
    %v1710 = vunpack.c.l.b16 %v1695
    %v1711 = vunpack.c.l.b16 %v1696
    %v1712 = vunpack.c.l.b16 %v1697
    %v1713 = vunpack.c.l.b16 %v1698
    %v1714 = vpack.c.b16 %v1711, %v1710
    %v1715 = vpack.c.b16 %v1713, %v1712
    %1718 = vmatprep.subr.bf16.mxu0 0
    %1719 = vmatpush1.bf16.msra.mxu0 %v1714
    %1720 = vmatprep.subr.bf16.mxu0 0
    %1721 = vmatpush1.bf16.msra.mxu0 %v1715
    %1722 = vmatprep.subr.bf16.mxu0 0
    %1723 = vmatpush1.bf16.msra.mxu0 0
    %1724 = vmatprep.subr.bf16.mxu0 0
    %1725 = vmatpush1.bf16.msra.mxu0 0
    %1726 = vmatprep.subr.bf16.mxu0 0
    %1727 = vmatpush1.bf16.msra.mxu0 0
    %1728 = vmatprep.subr.bf16.mxu0 0
    %1729 = vmatpush1.bf16.msra.mxu0 0
    %1730 = vmatprep.subr.bf16.mxu0 0
    %1731 = vmatpush1.bf16.msra.mxu0 0
    %1732 = vmatprep.subr.bf16.mxu0 0
    %1733 = vmatpush1.bf16.msra.mxu0 0
    %1734 = vmatprep.subr.bf16.mxu0 0
    %1735 = vmatpush1.bf16.msra.mxu0 0
    %1736 = vmatprep.subr.bf16.mxu0 0
    %1737 = vmatpush1.bf16.msra.mxu0 0
    %1738 = vmatprep.subr.bf16.mxu0 0
    %1739 = vmatpush1.bf16.msra.mxu0 0
    %1740 = vmatprep.subr.bf16.mxu0 0
    %1741 = vmatpush1.bf16.msra.mxu0 0
    %1742 = vmatprep.subr.bf16.mxu0 0
    %1743 = vmatpush1.bf16.msra.mxu0 0
    %1744 = vmatprep.subr.bf16.mxu0 0
    %1745 = vmatpush1.bf16.msra.mxu0 0
    %1746 = vmatprep.subr.bf16.mxu0 0
    %1747 = vmatpush1.bf16.msra.mxu0 0
    %1748 = vmatprep.subr.bf16.mxu0 0
    %1749 = vmatpush1.bf16.msra.mxu0 0
    %1750 = vmatprep.mubr.bf16.mxu0 0
    %1751 = vmatmul.mubr.bf16.gmra.mrb[0].mxu0 %v1646
    %v1752 = vpop.f32.mrb[0].mxu0
    %v1753 = vadd.f32 %v1704, %v1752
    %v1754 = vpop.f32.mrb[0].mxu0
    %v1755 = vpop.f32.mrb[0].mxu0
    %v1756 = vadd.f32 %v1704, %v1755
    %v1757 = vpop.f32.mrb[0].mxu0
    %1758 = vdwg.mxu0
    %v1759 = vpack.c.bf16 %v1756, %v1753
    %v1761 = vunpack.c.l.b16 %v1759
    %v1762 = vunpack.c.h.b16 %v1759
    %v1763 = vpack.c.b16 %v1761, %v1761
    %v1764 = vpack.c.b16 %v1762, %v1762
    %v1766 = vsel %vm531, %v1615, 0
    %v1769 = vsel %vm531, %v1693, 0
    %1771 = vmatprep.subr.bf16.mxu0 0
    %1772 = vmatpush1.bf16.xpose.msra.mxu0 %v1769
    %1773 = vmatprep.subr.bf16.mxu0 0
    %1774 = vmatpush1.bf16.xpose.msra.mxu0 0
    %1775 = vmatprep.subr.bf16.mxu0 0
    %1776 = vmatpush1.bf16.xpose.msra.mxu0 0
    %1777 = vmatprep.subr.bf16.mxu0 0
    %1778 = vmatpush1.bf16.xpose.msra.mxu0 0
    %1779 = vmatprep.subr.bf16.mxu0 0
    %1780 = vmatpush1.bf16.xpose.msra.mxu0 0
    %1781 = vmatprep.subr.bf16.mxu0 0
    %1782 = vmatpush1.bf16.xpose.msra.mxu0 0
    %1783 = vmatprep.subr.bf16.mxu0 0
    %1784 = vmatpush1.bf16.xpose.msra.mxu0 0
    %1785 = vmatprep.subr.bf16.mxu0 0
    %1786 = vmatpush1.bf16.xpose.msra.mxu0 0
    %1787 = vmatprep.subr.bf16.mxu0 0
    %1788 = vmatpush1.bf16.xpose.msra.mxu0 0
    %1789 = vmatprep.subr.bf16.mxu0 0
    %1790 = vmatpush1.bf16.xpose.msra.mxu0 0
    %1791 = vmatprep.subr.bf16.mxu0 0
    %1792 = vmatpush1.bf16.xpose.msra.mxu0 0
    %1793 = vmatprep.subr.bf16.mxu0 0
    %1794 = vmatpush1.bf16.xpose.msra.mxu0 0
    %1795 = vmatprep.subr.bf16.mxu0 0
    %1796 = vmatpush1.bf16.xpose.msra.mxu0 0
    %1797 = vmatprep.subr.bf16.mxu0 0
    %1798 = vmatpush1.bf16.xpose.msra.mxu0 0
    %1799 = vmatprep.subr.bf16.mxu0 0
    %1800 = vmatpush1.bf16.xpose.msra.mxu0 0
    %1801 = vmatprep.subr.bf16.mxu0 0
    %1802 = vmatpush1.bf16.xpose.msra.mxu0 0
    %1803 = vmatprep.mubr.bf16.mxu0 0
    %1804 = vmatmul.mubr.bf16.gmra.mrb[0].mxu0 %v1766
    %v1805 = vpop.f32.mrb[0].mxu0
    %v1806 = vadd.f32 %v1542, %v1805
    %v1807 = vpop.f32.mrb[0].mxu0
    %v1808 = vpop.f32.mrb[0].mxu0
    %v1809 = vpop.f32.mrb[0].mxu0
    %1810 = vdwg.mxu0
    %v1812 = vsel %vm531, %v1616, 0
    %v1815 = vsel %vm531, %v1694, 0
    %1817 = vmatprep.subr.bf16.mxu0 0
    %1818 = vmatpush1.bf16.xpose.msra.mxu0 %v1815
    %1819 = vmatprep.subr.bf16.mxu0 0
    %1820 = vmatpush1.bf16.xpose.msra.mxu0 0
    %1821 = vmatprep.subr.bf16.mxu0 0
    %1822 = vmatpush1.bf16.xpose.msra.mxu0 0
    %1823 = vmatprep.subr.bf16.mxu0 0
    %1824 = vmatpush1.bf16.xpose.msra.mxu0 0
    %1825 = vmatprep.subr.bf16.mxu0 0
    %1826 = vmatpush1.bf16.xpose.msra.mxu0 0
    %1827 = vmatprep.subr.bf16.mxu0 0
    %1828 = vmatpush1.bf16.xpose.msra.mxu0 0
    %1829 = vmatprep.subr.bf16.mxu0 0
    %1830 = vmatpush1.bf16.xpose.msra.mxu0 0
    %1831 = vmatprep.subr.bf16.mxu0 0
    %1832 = vmatpush1.bf16.xpose.msra.mxu0 0
    %1833 = vmatprep.subr.bf16.mxu0 0
    %1834 = vmatpush1.bf16.xpose.msra.mxu0 0
    %1835 = vmatprep.subr.bf16.mxu0 0
    %1836 = vmatpush1.bf16.xpose.msra.mxu0 0
    %1837 = vmatprep.subr.bf16.mxu0 0
    %1838 = vmatpush1.bf16.xpose.msra.mxu0 0
    %1839 = vmatprep.subr.bf16.mxu0 0
    %1840 = vmatpush1.bf16.xpose.msra.mxu0 0
    %1841 = vmatprep.subr.bf16.mxu0 0
    %1842 = vmatpush1.bf16.xpose.msra.mxu0 0
    %1843 = vmatprep.subr.bf16.mxu0 0
    %1844 = vmatpush1.bf16.xpose.msra.mxu0 0
    %1845 = vmatprep.subr.bf16.mxu0 0
    %1846 = vmatpush1.bf16.xpose.msra.mxu0 0
    %1847 = vmatprep.subr.bf16.mxu0 0
    %1848 = vmatpush1.bf16.xpose.msra.mxu0 0
    %1849 = vmatprep.mubr.bf16.mxu0 0
    %1850 = vmatmul.mubr.bf16.gmra.mrb[0].mxu0 %v1812
    %v1851 = vpop.f32.mrb[0].mxu0
    %v1852 = vadd.f32 %v1543, %v1851
    %v1853 = vpop.f32.mrb[0].mxu0
    %v1854 = vpop.f32.mrb[0].mxu0
    %v1855 = vpop.f32.mrb[0].mxu0
    %1856 = vdwg.mxu0
    %v1857 = vsel %vm531, %v1806, -inf
    %1858 = vmax.xlane.f32.xlu0 %v1857
    %v1859 = vpop.xlane.xlu0 %1858
    %v1860 = vsel %vm531, %v1852, -inf
    %1861 = vmax.xlane.f32.xlu0 %v1860
    %v1862 = vpop.xlane.xlu0 %1861
    %v1863 = vsub.f32 %v1806, %v1859
    %v1864 = vsub.f32 %v1852, %v1862
    %v1865 = vmul.f32 %v1863, 1.442695
    %v1866 = vpow.pop %v1865
    %v1867 = vmul.f32 %v1864, 1.442695
    %v1868 = vpow.pop %v1867
    %v1869 = vsel %vm531, %v1866, 0.0
    %1870 = vadd.xlane.f32.xlu0 %v1869
    %v1871 = vpop.xlane.xlu0 %1870
    %v1872 = vsel %vm531, %v1868, 0.0
    %1873 = vadd.xlane.f32.xlu0 %v1872
    %v1874 = vpop.xlane.xlu0 %1873
    %v1875 = vrcp.pop %v1871
    %v1876 = vrcp.pop %v1874
    %v1877 = vmul.f32 %v1866, %v1875
    %v1878 = vmul.f32 %v1868, %v1876
    %v1879 = vpack.c.bf16 %v1877, %v1877
    %v1880 = vpack.c.bf16 %v1878, %v1878
    %v1882 = vsel %vm531, %v1879, 0
    %v1885 = vsel %vm651, %v1763, 0
    %1887 = vmatprep.subr.bf16.mxu0 0
    %1888 = vmatpush1.bf16.msra.mxu0 %v1885
    %1889 = vmatprep.subr.bf16.mxu0 0
    %1890 = vmatpush1.bf16.msra.mxu0 0
    %1891 = vmatprep.subr.bf16.mxu0 0
    %1892 = vmatpush1.bf16.msra.mxu0 0
    %1893 = vmatprep.subr.bf16.mxu0 0
    %1894 = vmatpush1.bf16.msra.mxu0 0
    %1895 = vmatprep.subr.bf16.mxu0 0
    %1896 = vmatpush1.bf16.msra.mxu0 0
    %1897 = vmatprep.subr.bf16.mxu0 0
    %1898 = vmatpush1.bf16.msra.mxu0 0
    %1899 = vmatprep.subr.bf16.mxu0 0
    %1900 = vmatpush1.bf16.msra.mxu0 0
    %1901 = vmatprep.subr.bf16.mxu0 0
    %1902 = vmatpush1.bf16.msra.mxu0 0
    %1903 = vmatprep.subr.bf16.mxu0 0
    %1904 = vmatpush1.bf16.msra.mxu0 0
    %1905 = vmatprep.subr.bf16.mxu0 0
    %1906 = vmatpush1.bf16.msra.mxu0 0
    %1907 = vmatprep.subr.bf16.mxu0 0
    %1908 = vmatpush1.bf16.msra.mxu0 0
    %1909 = vmatprep.subr.bf16.mxu0 0
    %1910 = vmatpush1.bf16.msra.mxu0 0
    %1911 = vmatprep.subr.bf16.mxu0 0
    %1912 = vmatpush1.bf16.msra.mxu0 0
    %1913 = vmatprep.subr.bf16.mxu0 0
    %1914 = vmatpush1.bf16.msra.mxu0 0
    %1915 = vmatprep.subr.bf16.mxu0 0
    %1916 = vmatpush1.bf16.msra.mxu0 0
    %1917 = vmatprep.subr.bf16.mxu0 0
    %1918 = vmatpush1.bf16.msra.mxu0 0
    %1919 = vmatprep.mubr.bf16.mxu0 0
    %1920 = vmatmul.mubr.bf16.gmra.mrb[0].mxu0 %v1882
    %v1921 = vpop.f32.mrb[0].mxu0
    %v1922 = vadd.f32 0.0, %v1921
    %v1923 = vpop.f32.mrb[0].mxu0
    %v1924 = vpop.f32.mrb[0].mxu0
    %v1925 = vpop.f32.mrb[0].mxu0
    %1926 = vdwg.mxu0
    %v1928 = vsel %vm531, %v1880, 0
    %v1931 = vsel %vm651, %v1764, 0
    %1933 = vmatprep.subr.bf16.mxu0 0
    %1934 = vmatpush1.bf16.msra.mxu0 %v1931
    %1935 = vmatprep.subr.bf16.mxu0 0
    %1936 = vmatpush1.bf16.msra.mxu0 0
    %1937 = vmatprep.subr.bf16.mxu0 0
    %1938 = vmatpush1.bf16.msra.mxu0 0
    %1939 = vmatprep.subr.bf16.mxu0 0
    %1940 = vmatpush1.bf16.msra.mxu0 0
    %1941 = vmatprep.subr.bf16.mxu0 0
    %1942 = vmatpush1.bf16.msra.mxu0 0
    %1943 = vmatprep.subr.bf16.mxu0 0
    %1944 = vmatpush1.bf16.msra.mxu0 0
    %1945 = vmatprep.subr.bf16.mxu0 0
    %1946 = vmatpush1.bf16.msra.mxu0 0
    %1947 = vmatprep.subr.bf16.mxu0 0
    %1948 = vmatpush1.bf16.msra.mxu0 0
    %1949 = vmatprep.subr.bf16.mxu0 0
    %1950 = vmatpush1.bf16.msra.mxu0 0
    %1951 = vmatprep.subr.bf16.mxu0 0
    %1952 = vmatpush1.bf16.msra.mxu0 0
    %1953 = vmatprep.subr.bf16.mxu0 0
    %1954 = vmatpush1.bf16.msra.mxu0 0
    %1955 = vmatprep.subr.bf16.mxu0 0
    %1956 = vmatpush1.bf16.msra.mxu0 0
    %1957 = vmatprep.subr.bf16.mxu0 0
    %1958 = vmatpush1.bf16.msra.mxu0 0
    %1959 = vmatprep.subr.bf16.mxu0 0
    %1960 = vmatpush1.bf16.msra.mxu0 0
    %1961 = vmatprep.subr.bf16.mxu0 0
    %1962 = vmatpush1.bf16.msra.mxu0 0
    %1963 = vmatprep.subr.bf16.mxu0 0
    %1964 = vmatpush1.bf16.msra.mxu0 0
    %1965 = vmatprep.mubr.bf16.mxu0 0
    %1966 = vmatmul.mubr.bf16.gmra.mrb[0].mxu0 %v1928
    %v1967 = vpop.f32.mrb[0].mxu0
    %v1968 = vadd.f32 0.0, %v1967
    %v1969 = vpop.f32.mrb[0].mxu0
    %v1970 = vpop.f32.mrb[0].mxu0
    %v1971 = vpop.f32.mrb[0].mxu0
    %1972 = vdwg.mxu0
    %v1973 = vpack.c.bf16 %v1968, %v1922
    %1974 = vst.msk [vmem:[#allocation2] sm:$0xff] %vm531, %v1973
    %1975 = vrot.lane.b32.xlu0 %v1615, 120
    %v1976 = vpop.permute.xlu0 %1975
    %1977 = vrot.lane.b32.xlu0 %v1693, 120
    %v1978 = vpop.permute.xlu0 %1977
    %v1980 = vsel %vm531, %v1976, 0
    %v1983 = vsel %vm531, %v1978, 0
    %1985 = vmatprep.subr.bf16.mxu0 0
    %1986 = vmatpush1.bf16.xpose.msra.mxu0 %v1983
    %1987 = vmatprep.subr.bf16.mxu0 0
    %1988 = vmatpush1.bf16.xpose.msra.mxu0 0
    %1989 = vmatprep.subr.bf16.mxu0 0
    %1990 = vmatpush1.bf16.xpose.msra.mxu0 0
    %1991 = vmatprep.subr.bf16.mxu0 0
    %1992 = vmatpush1.bf16.xpose.msra.mxu0 0
    %1993 = vmatprep.subr.bf16.mxu0 0
    %1994 = vmatpush1.bf16.xpose.msra.mxu0 0
    %1995 = vmatprep.subr.bf16.mxu0 0
    %1996 = vmatpush1.bf16.xpose.msra.mxu0 0
    %1997 = vmatprep.subr.bf16.mxu0 0
    %1998 = vmatpush1.bf16.xpose.msra.mxu0 0
    %1999 = vmatprep.subr.bf16.mxu0 0
    %2000 = vmatpush1.bf16.xpose.msra.mxu0 0
    %2001 = vmatprep.subr.bf16.mxu0 0
    %2002 = vmatpush1.bf16.xpose.msra.mxu0 0
    %2003 = vmatprep.subr.bf16.mxu0 0
    %2004 = vmatpush1.bf16.xpose.msra.mxu0 0
    %2005 = vmatprep.subr.bf16.mxu0 0
    %2006 = vmatpush1.bf16.xpose.msra.mxu0 0
    %2007 = vmatprep.subr.bf16.mxu0 0
    %2008 = vmatpush1.bf16.xpose.msra.mxu0 0
    %2009 = vmatprep.subr.bf16.mxu0 0
    %2010 = vmatpush1.bf16.xpose.msra.mxu0 0
    %2011 = vmatprep.subr.bf16.mxu0 0
    %2012 = vmatpush1.bf16.xpose.msra.mxu0 0
    %2013 = vmatprep.subr.bf16.mxu0 0
    %2014 = vmatpush1.bf16.xpose.msra.mxu0 0
    %2015 = vmatprep.subr.bf16.mxu0 0
    %2016 = vmatpush1.bf16.xpose.msra.mxu0 0
    %2017 = vmatprep.mubr.bf16.mxu0 0
    %2018 = vmatmul.mubr.bf16.gmra.mrb[0].mxu0 %v1980
    %v2019 = vpop.f32.mrb[0].mxu0
    %v2020 = vadd.f32 %v1542, %v2019
    %v2021 = vpop.f32.mrb[0].mxu0
    %v2022 = vpop.f32.mrb[0].mxu0
    %v2023 = vpop.f32.mrb[0].mxu0
    %2024 = vdwg.mxu0
    %2025 = vrot.lane.b32.xlu0 %v1616, 120
    %v2026 = vpop.permute.xlu0 %2025
    %2027 = vrot.lane.b32.xlu0 %v1694, 120
    %v2028 = vpop.permute.xlu0 %2027
    %v2030 = vsel %vm531, %v2026, 0
    %v2033 = vsel %vm531, %v2028, 0
    %2035 = vmatprep.subr.bf16.mxu0 0
    %2036 = vmatpush1.bf16.xpose.msra.mxu0 %v2033
    %2037 = vmatprep.subr.bf16.mxu0 0
    %2038 = vmatpush1.bf16.xpose.msra.mxu0 0
    %2039 = vmatprep.subr.bf16.mxu0 0
    %2040 = vmatpush1.bf16.xpose.msra.mxu0 0
    %2041 = vmatprep.subr.bf16.mxu0 0
    %2042 = vmatpush1.bf16.xpose.msra.mxu0 0
    %2043 = vmatprep.subr.bf16.mxu0 0
    %2044 = vmatpush1.bf16.xpose.msra.mxu0 0
    %2045 = vmatprep.subr.bf16.mxu0 0
    %2046 = vmatpush1.bf16.xpose.msra.mxu0 0
    %2047 = vmatprep.subr.bf16.mxu0 0
    %2048 = vmatpush1.bf16.xpose.msra.mxu0 0
    %2049 = vmatprep.subr.bf16.mxu0 0
    %2050 = vmatpush1.bf16.xpose.msra.mxu0 0
    %2051 = vmatprep.subr.bf16.mxu0 0
    %2052 = vmatpush1.bf16.xpose.msra.mxu0 0
    %2053 = vmatprep.subr.bf16.mxu0 0
    %2054 = vmatpush1.bf16.xpose.msra.mxu0 0
    %2055 = vmatprep.subr.bf16.mxu0 0
    %2056 = vmatpush1.bf16.xpose.msra.mxu0 0
    %2057 = vmatprep.subr.bf16.mxu0 0
    %2058 = vmatpush1.bf16.xpose.msra.mxu0 0
    %2059 = vmatprep.subr.bf16.mxu0 0
    %2060 = vmatpush1.bf16.xpose.msra.mxu0 0
    %2061 = vmatprep.subr.bf16.mxu0 0
    %2062 = vmatpush1.bf16.xpose.msra.mxu0 0
    %2063 = vmatprep.subr.bf16.mxu0 0
    %2064 = vmatpush1.bf16.xpose.msra.mxu0 0
    %2065 = vmatprep.subr.bf16.mxu0 0
    %2066 = vmatpush1.bf16.xpose.msra.mxu0 0
    %2067 = vmatprep.mubr.bf16.mxu0 0
    %2068 = vmatmul.mubr.bf16.gmra.mrb[0].mxu0 %v2030
    %v2069 = vpop.f32.mrb[0].mxu0
    %v2070 = vadd.f32 %v1543, %v2069
    %v2071 = vpop.f32.mrb[0].mxu0
    %v2072 = vpop.f32.mrb[0].mxu0
    %v2073 = vpop.f32.mrb[0].mxu0
    %2074 = vdwg.mxu0
    %v2075 = vsel %vm531, %v2020, -inf
    %2076 = vmax.xlane.f32.xlu0 %v2075
    %v2077 = vpop.xlane.xlu0 %2076
    %v2078 = vsel %vm531, %v2070, -inf
    %2079 = vmax.xlane.f32.xlu0 %v2078
    %v2080 = vpop.xlane.xlu0 %2079
    %v2081 = vsub.f32 %v2020, %v2077
    %v2082 = vsub.f32 %v2070, %v2080
    %v2083 = vmul.f32 %v2081, 1.442695
    %v2084 = vpow.pop %v2083
    %v2085 = vmul.f32 %v2082, 1.442695
    %v2086 = vpow.pop %v2085
    %v2087 = vsel %vm531, %v2084, 0.0
    %2088 = vadd.xlane.f32.xlu0 %v2087
    %v2089 = vpop.xlane.xlu0 %2088
    %v2090 = vsel %vm531, %v2086, 0.0
    %2091 = vadd.xlane.f32.xlu0 %v2090
    %v2092 = vpop.xlane.xlu0 %2091
    %v2093 = vrcp.pop %v2089
    %v2094 = vrcp.pop %v2092
    %v2095 = vmul.f32 %v2084, %v2093
    %v2096 = vmul.f32 %v2086, %v2094
    %v2097 = vpack.c.bf16 %v2095, %v2095
    %v2098 = vpack.c.bf16 %v2096, %v2096
    %2099 = vrot.lane.b32.xlu0 %v1763, 120
    %v2100 = vpop.permute.xlu0 %2099
    %v2102 = vsel %vm531, %v2097, 0
    %v2105 = vsel %vm651, %v2100, 0
    %2107 = vmatprep.subr.bf16.mxu0 0
    %2108 = vmatpush1.bf16.msra.mxu0 %v2105
    %2109 = vmatprep.subr.bf16.mxu0 0
    %2110 = vmatpush1.bf16.msra.mxu0 0
    %2111 = vmatprep.subr.bf16.mxu0 0
    %2112 = vmatpush1.bf16.msra.mxu0 0
    %2113 = vmatprep.subr.bf16.mxu0 0
    %2114 = vmatpush1.bf16.msra.mxu0 0
    %2115 = vmatprep.subr.bf16.mxu0 0
    %2116 = vmatpush1.bf16.msra.mxu0 0
    %2117 = vmatprep.subr.bf16.mxu0 0
    %2118 = vmatpush1.bf16.msra.mxu0 0
    %2119 = vmatprep.subr.bf16.mxu0 0
    %2120 = vmatpush1.bf16.msra.mxu0 0
    %2121 = vmatprep.subr.bf16.mxu0 0
    %2122 = vmatpush1.bf16.msra.mxu0 0
    %2123 = vmatprep.subr.bf16.mxu0 0
    %2124 = vmatpush1.bf16.msra.mxu0 0
    %2125 = vmatprep.subr.bf16.mxu0 0
    %2126 = vmatpush1.bf16.msra.mxu0 0
    %2127 = vmatprep.subr.bf16.mxu0 0
    %2128 = vmatpush1.bf16.msra.mxu0 0
    %2129 = vmatprep.subr.bf16.mxu0 0
    %2130 = vmatpush1.bf16.msra.mxu0 0
    %2131 = vmatprep.subr.bf16.mxu0 0
    %2132 = vmatpush1.bf16.msra.mxu0 0
    %2133 = vmatprep.subr.bf16.mxu0 0
    %2134 = vmatpush1.bf16.msra.mxu0 0
    %2135 = vmatprep.subr.bf16.mxu0 0
    %2136 = vmatpush1.bf16.msra.mxu0 0
    %2137 = vmatprep.subr.bf16.mxu0 0
    %2138 = vmatpush1.bf16.msra.mxu0 0
    %2139 = vmatprep.mubr.bf16.mxu0 0
    %2140 = vmatmul.mubr.bf16.gmra.mrb[0].mxu0 %v2102
    %v2141 = vpop.f32.mrb[0].mxu0
    %v2142 = vadd.f32 0.0, %v2141
    %v2143 = vpop.f32.mrb[0].mxu0
    %v2144 = vpop.f32.mrb[0].mxu0
    %v2145 = vpop.f32.mrb[0].mxu0
    %2146 = vdwg.mxu0
    %2147 = vrot.lane.b32.xlu0 %v1764, 120
    %v2148 = vpop.permute.xlu0 %2147
    %v2150 = vsel %vm531, %v2098, 0
    %v2153 = vsel %vm651, %v2148, 0
    %2155 = vmatprep.subr.bf16.mxu0 0
    %2156 = vmatpush1.bf16.msra.mxu0 %v2153
    %2157 = vmatprep.subr.bf16.mxu0 0
    %2158 = vmatpush1.bf16.msra.mxu0 0
    %2159 = vmatprep.subr.bf16.mxu0 0
    %2160 = vmatpush1.bf16.msra.mxu0 0
    %2161 = vmatprep.subr.bf16.mxu0 0
    %2162 = vmatpush1.bf16.msra.mxu0 0
    %2163 = vmatprep.subr.bf16.mxu0 0
    %2164 = vmatpush1.bf16.msra.mxu0 0
    %2165 = vmatprep.subr.bf16.mxu0 0
    %2166 = vmatpush1.bf16.msra.mxu0 0
    %2167 = vmatprep.subr.bf16.mxu0 0
    %2168 = vmatpush1.bf16.msra.mxu0 0
    %2169 = vmatprep.subr.bf16.mxu0 0
    %2170 = vmatpush1.bf16.msra.mxu0 0
    %2171 = vmatprep.subr.bf16.mxu0 0
    %2172 = vmatpush1.bf16.msra.mxu0 0
    %2173 = vmatprep.subr.bf16.mxu0 0
    %2174 = vmatpush1.bf16.msra.mxu0 0
    %2175 = vmatprep.subr.bf16.mxu0 0
    %2176 = vmatpush1.bf16.msra.mxu0 0
    %2177 = vmatprep.subr.bf16.mxu0 0
    %2178 = vmatpush1.bf16.msra.mxu0 0
    %2179 = vmatprep.subr.bf16.mxu0 0
    %2180 = vmatpush1.bf16.msra.mxu0 0
    %2181 = vmatprep.subr.bf16.mxu0 0
    %2182 = vmatpush1.bf16.msra.mxu0 0
    %2183 = vmatprep.subr.bf16.mxu0 0
    %2184 = vmatpush1.bf16.msra.mxu0 0
    %2185 = vmatprep.subr.bf16.mxu0 0
    %2186 = vmatpush1.bf16.msra.mxu0 0
    %2187 = vmatprep.mubr.bf16.mxu0 0
    %2188 = vmatmul.mubr.bf16.gmra.mrb[0].mxu0 %v2150
    %v2189 = vpop.f32.mrb[0].mxu0
    %v2190 = vadd.f32 0.0, %v2189
    %v2191 = vpop.f32.mrb[0].mxu0
    %v2192 = vpop.f32.mrb[0].mxu0
    %v2193 = vpop.f32.mrb[0].mxu0
    %2194 = vdwg.mxu0
    %v2195 = vpack.c.bf16 %v2190, %v2142
    %2197 = vrot.lane.b32.xlu0 %v2195, 8
    %v2198 = vpop.permute.xlu0 %2197
    %2200 = vst.msk [vmem:[#allocation2] sm:$0xff] %vm968, %v2198
    %2201 = vrot.lane.b32.xlu0 %v1615, 112
    %v2202 = vpop.permute.xlu0 %2201
    %2203 = vrot.lane.b32.xlu0 %v1693, 112
    %v2204 = vpop.permute.xlu0 %2203
    %v2206 = vsel %vm531, %v2202, 0
    %v2209 = vsel %vm531, %v2204, 0
    %2211 = vmatprep.subr.bf16.mxu0 0
    %2212 = vmatpush1.bf16.xpose.msra.mxu0 %v2209
    %2213 = vmatprep.subr.bf16.mxu0 0
    %2214 = vmatpush1.bf16.xpose.msra.mxu0 0
    %2215 = vmatprep.subr.bf16.mxu0 0
    %2216 = vmatpush1.bf16.xpose.msra.mxu0 0
    %2217 = vmatprep.subr.bf16.mxu0 0
    %2218 = vmatpush1.bf16.xpose.msra.mxu0 0
    %2219 = vmatprep.subr.bf16.mxu0 0
    %2220 = vmatpush1.bf16.xpose.msra.mxu0 0
    %2221 = vmatprep.subr.bf16.mxu0 0
    %2222 = vmatpush1.bf16.xpose.msra.mxu0 0
    %2223 = vmatprep.subr.bf16.mxu0 0
    %2224 = vmatpush1.bf16.xpose.msra.mxu0 0
    %2225 = vmatprep.subr.bf16.mxu0 0
    %2226 = vmatpush1.bf16.xpose.msra.mxu0 0
    %2227 = vmatprep.subr.bf16.mxu0 0
    %2228 = vmatpush1.bf16.xpose.msra.mxu0 0
    %2229 = vmatprep.subr.bf16.mxu0 0
    %2230 = vmatpush1.bf16.xpose.msra.mxu0 0
    %2231 = vmatprep.subr.bf16.mxu0 0
    %2232 = vmatpush1.bf16.xpose.msra.mxu0 0
    %2233 = vmatprep.subr.bf16.mxu0 0
    %2234 = vmatpush1.bf16.xpose.msra.mxu0 0
    %2235 = vmatprep.subr.bf16.mxu0 0
    %2236 = vmatpush1.bf16.xpose.msra.mxu0 0
    %2237 = vmatprep.subr.bf16.mxu0 0
    %2238 = vmatpush1.bf16.xpose.msra.mxu0 0
    %2239 = vmatprep.subr.bf16.mxu0 0
    %2240 = vmatpush1.bf16.xpose.msra.mxu0 0
    %2241 = vmatprep.subr.bf16.mxu0 0
    %2242 = vmatpush1.bf16.xpose.msra.mxu0 0
    %2243 = vmatprep.mubr.bf16.mxu0 0
    %2244 = vmatmul.mubr.bf16.gmra.mrb[0].mxu0 %v2206
    %v2245 = vpop.f32.mrb[0].mxu0
    %v2246 = vadd.f32 %v1542, %v2245
    %v2247 = vpop.f32.mrb[0].mxu0
    %v2248 = vpop.f32.mrb[0].mxu0
    %v2249 = vpop.f32.mrb[0].mxu0
    %2250 = vdwg.mxu0
    %2251 = vrot.lane.b32.xlu0 %v1616, 112
    %v2252 = vpop.permute.xlu0 %2251
    %2253 = vrot.lane.b32.xlu0 %v1694, 112
    %v2254 = vpop.permute.xlu0 %2253
    %v2256 = vsel %vm531, %v2252, 0
    %v2259 = vsel %vm531, %v2254, 0
    %2261 = vmatprep.subr.bf16.mxu0 0
    %2262 = vmatpush1.bf16.xpose.msra.mxu0 %v2259
    %2263 = vmatprep.subr.bf16.mxu0 0
    %2264 = vmatpush1.bf16.xpose.msra.mxu0 0
    %2265 = vmatprep.subr.bf16.mxu0 0
    %2266 = vmatpush1.bf16.xpose.msra.mxu0 0
    %2267 = vmatprep.subr.bf16.mxu0 0
    %2268 = vmatpush1.bf16.xpose.msra.mxu0 0
    %2269 = vmatprep.subr.bf16.mxu0 0
    %2270 = vmatpush1.bf16.xpose.msra.mxu0 0
    %2271 = vmatprep.subr.bf16.mxu0 0
    %2272 = vmatpush1.bf16.xpose.msra.mxu0 0
    %2273 = vmatprep.subr.bf16.mxu0 0
    %2274 = vmatpush1.bf16.xpose.msra.mxu0 0
    %2275 = vmatprep.subr.bf16.mxu0 0
    %2276 = vmatpush1.bf16.xpose.msra.mxu0 0
    %2277 = vmatprep.subr.bf16.mxu0 0
    %2278 = vmatpush1.bf16.xpose.msra.mxu0 0
    %2279 = vmatprep.subr.bf16.mxu0 0
    %2280 = vmatpush1.bf16.xpose.msra.mxu0 0
    %2281 = vmatprep.subr.bf16.mxu0 0
    %2282 = vmatpush1.bf16.xpose.msra.mxu0 0
    %2283 = vmatprep.subr.bf16.mxu0 0
    %2284 = vmatpush1.bf16.xpose.msra.mxu0 0
    %2285 = vmatprep.subr.bf16.mxu0 0
    %2286 = vmatpush1.bf16.xpose.msra.mxu0 0
    %2287 = vmatprep.subr.bf16.mxu0 0
    %2288 = vmatpush1.bf16.xpose.msra.mxu0 0
    %2289 = vmatprep.subr.bf16.mxu0 0
    %2290 = vmatpush1.bf16.xpose.msra.mxu0 0
    %2291 = vmatprep.subr.bf16.mxu0 0
    %2292 = vmatpush1.bf16.xpose.msra.mxu0 0
    %2293 = vmatprep.mubr.bf16.mxu0 0
    %2294 = vmatmul.mubr.bf16.gmra.mrb[0].mxu0 %v2256
    %v2295 = vpop.f32.mrb[0].mxu0
    %v2296 = vadd.f32 %v1543, %v2295
    %v2297 = vpop.f32.mrb[0].mxu0
    %v2298 = vpop.f32.mrb[0].mxu0
    %v2299 = vpop.f32.mrb[0].mxu0
    %2300 = vdwg.mxu0
    %v2301 = vsel %vm531, %v2246, -inf
    %2302 = vmax.xlane.f32.xlu0 %v2301
    %v2303 = vpop.xlane.xlu0 %2302
    %v2304 = vsel %vm531, %v2296, -inf
    %2305 = vmax.xlane.f32.xlu0 %v2304
    %v2306 = vpop.xlane.xlu0 %2305
    %v2307 = vsub.f32 %v2246, %v2303
    %v2308 = vsub.f32 %v2296, %v2306
    %v2309 = vmul.f32 %v2307, 1.442695
    %v2310 = vpow.pop %v2309
    %v2311 = vmul.f32 %v2308, 1.442695
    %v2312 = vpow.pop %v2311
    %v2313 = vsel %vm531, %v2310, 0.0
    %2314 = vadd.xlane.f32.xlu0 %v2313
    %v2315 = vpop.xlane.xlu0 %2314
    %v2316 = vsel %vm531, %v2312, 0.0
    %2317 = vadd.xlane.f32.xlu0 %v2316
    %v2318 = vpop.xlane.xlu0 %2317
    %v2319 = vrcp.pop %v2315
    %v2320 = vrcp.pop %v2318
    %v2321 = vmul.f32 %v2310, %v2319
    %v2322 = vmul.f32 %v2312, %v2320
    %v2323 = vpack.c.bf16 %v2321, %v2321
    %v2324 = vpack.c.bf16 %v2322, %v2322
    %2325 = vrot.lane.b32.xlu0 %v1763, 112
    %v2326 = vpop.permute.xlu0 %2325
    %v2328 = vsel %vm531, %v2323, 0
    %v2331 = vsel %vm651, %v2326, 0
    %2333 = vmatprep.subr.bf16.mxu0 0
    %2334 = vmatpush1.bf16.msra.mxu0 %v2331
    %2335 = vmatprep.subr.bf16.mxu0 0
    %2336 = vmatpush1.bf16.msra.mxu0 0
    %2337 = vmatprep.subr.bf16.mxu0 0
    %2338 = vmatpush1.bf16.msra.mxu0 0
    %2339 = vmatprep.subr.bf16.mxu0 0
    %2340 = vmatpush1.bf16.msra.mxu0 0
    %2341 = vmatprep.subr.bf16.mxu0 0
    %2342 = vmatpush1.bf16.msra.mxu0 0
    %2343 = vmatprep.subr.bf16.mxu0 0
    %2344 = vmatpush1.bf16.msra.mxu0 0
    %2345 = vmatprep.subr.bf16.mxu0 0
    %2346 = vmatpush1.bf16.msra.mxu0 0
    %2347 = vmatprep.subr.bf16.mxu0 0
    %2348 = vmatpush1.bf16.msra.mxu0 0
    %2349 = vmatprep.subr.bf16.mxu0 0
    %2350 = vmatpush1.bf16.msra.mxu0 0
    %2351 = vmatprep.subr.bf16.mxu0 0
    %2352 = vmatpush1.bf16.msra.mxu0 0
    %2353 = vmatprep.subr.bf16.mxu0 0
    %2354 = vmatpush1.bf16.msra.mxu0 0
    %2355 = vmatprep.subr.bf16.mxu0 0
    %2356 = vmatpush1.bf16.msra.mxu0 0
    %2357 = vmatprep.subr.bf16.mxu0 0
    %2358 = vmatpush1.bf16.msra.mxu0 0
    %2359 = vmatprep.subr.bf16.mxu0 0
    %2360 = vmatpush1.bf16.msra.mxu0 0
    %2361 = vmatprep.subr.bf16.mxu0 0
    %2362 = vmatpush1.bf16.msra.mxu0 0
    %2363 = vmatprep.subr.bf16.mxu0 0
    %2364 = vmatpush1.bf16.msra.mxu0 0
    %2365 = vmatprep.mubr.bf16.mxu0 0
    %2366 = vmatmul.mubr.bf16.gmra.mrb[0].mxu0 %v2328
    %v2367 = vpop.f32.mrb[0].mxu0
    %v2368 = vadd.f32 0.0, %v2367
    %v2369 = vpop.f32.mrb[0].mxu0
    %v2370 = vpop.f32.mrb[0].mxu0
    %v2371 = vpop.f32.mrb[0].mxu0
    %2372 = vdwg.mxu0
    %2373 = vrot.lane.b32.xlu0 %v1764, 112
    %v2374 = vpop.permute.xlu0 %2373
    %v2376 = vsel %vm531, %v2324, 0
    %v2379 = vsel %vm651, %v2374, 0
    %2381 = vmatprep.subr.bf16.mxu0 0
    %2382 = vmatpush1.bf16.msra.mxu0 %v2379
    %2383 = vmatprep.subr.bf16.mxu0 0
    %2384 = vmatpush1.bf16.msra.mxu0 0
    %2385 = vmatprep.subr.bf16.mxu0 0
    %2386 = vmatpush1.bf16.msra.mxu0 0
    %2387 = vmatprep.subr.bf16.mxu0 0
    %2388 = vmatpush1.bf16.msra.mxu0 0
    %2389 = vmatprep.subr.bf16.mxu0 0
    %2390 = vmatpush1.bf16.msra.mxu0 0
    %2391 = vmatprep.subr.bf16.mxu0 0
    %2392 = vmatpush1.bf16.msra.mxu0 0
    %2393 = vmatprep.subr.bf16.mxu0 0
    %2394 = vmatpush1.bf16.msra.mxu0 0
    %2395 = vmatprep.subr.bf16.mxu0 0
    %2396 = vmatpush1.bf16.msra.mxu0 0
    %2397 = vmatprep.subr.bf16.mxu0 0
    %2398 = vmatpush1.bf16.msra.mxu0 0
    %2399 = vmatprep.subr.bf16.mxu0 0
    %2400 = vmatpush1.bf16.msra.mxu0 0
    %2401 = vmatprep.subr.bf16.mxu0 0
    %2402 = vmatpush1.bf16.msra.mxu0 0
    %2403 = vmatprep.subr.bf16.mxu0 0
    %2404 = vmatpush1.bf16.msra.mxu0 0
    %2405 = vmatprep.subr.bf16.mxu0 0
    %2406 = vmatpush1.bf16.msra.mxu0 0
    %2407 = vmatprep.subr.bf16.mxu0 0
    %2408 = vmatpush1.bf16.msra.mxu0 0
    %2409 = vmatprep.subr.bf16.mxu0 0
    %2410 = vmatpush1.bf16.msra.mxu0 0
    %2411 = vmatprep.subr.bf16.mxu0 0
    %2412 = vmatpush1.bf16.msra.mxu0 0
    %2413 = vmatprep.mubr.bf16.mxu0 0
    %2414 = vmatmul.mubr.bf16.gmra.mrb[0].mxu0 %v2376
    %v2415 = vpop.f32.mrb[0].mxu0
    %v2416 = vadd.f32 0.0, %v2415
    %v2417 = vpop.f32.mrb[0].mxu0
    %v2418 = vpop.f32.mrb[0].mxu0
    %v2419 = vpop.f32.mrb[0].mxu0
    %2420 = vdwg.mxu0
    %v2421 = vpack.c.bf16 %v2416, %v2368
    %2423 = vrot.lane.b32.xlu0 %v2421, 16
    %v2424 = vpop.permute.xlu0 %2423
    %2426 = vst.msk [vmem:[#allocation2] sm:$0xff] %vm1195, %v2424
    %2427 = vrot.lane.b32.xlu0 %v1615, 104
    %v2428 = vpop.permute.xlu0 %2427
    %2429 = vrot.lane.b32.xlu0 %v1693, 104
    %v2430 = vpop.permute.xlu0 %2429
    %v2432 = vsel %vm531, %v2428, 0
    %v2435 = vsel %vm531, %v2430, 0
    %2437 = vmatprep.subr.bf16.mxu0 0
    %2438 = vmatpush1.bf16.xpose.msra.mxu0 %v2435
    %2439 = vmatprep.subr.bf16.mxu0 0
    %2440 = vmatpush1.bf16.xpose.msra.mxu0 0
    %2441 = vmatprep.subr.bf16.mxu0 0
    %2442 = vmatpush1.bf16.xpose.msra.mxu0 0
    %2443 = vmatprep.subr.bf16.mxu0 0
    %2444 = vmatpush1.bf16.xpose.msra.mxu0 0
    %2445 = vmatprep.subr.bf16.mxu0 0
    %2446 = vmatpush1.bf16.xpose.msra.mxu0 0
    %2447 = vmatprep.subr.bf16.mxu0 0
    %2448 = vmatpush1.bf16.xpose.msra.mxu0 0
    %2449 = vmatprep.subr.bf16.mxu0 0
    %2450 = vmatpush1.bf16.xpose.msra.mxu0 0
    %2451 = vmatprep.subr.bf16.mxu0 0
    %2452 = vmatpush1.bf16.xpose.msra.mxu0 0
    %2453 = vmatprep.subr.bf16.mxu0 0
    %2454 = vmatpush1.bf16.xpose.msra.mxu0 0
    %2455 = vmatprep.subr.bf16.mxu0 0
    %2456 = vmatpush1.bf16.xpose.msra.mxu0 0
    %2457 = vmatprep.subr.bf16.mxu0 0
    %2458 = vmatpush1.bf16.xpose.msra.mxu0 0
    %2459 = vmatprep.subr.bf16.mxu0 0
    %2460 = vmatpush1.bf16.xpose.msra.mxu0 0
    %2461 = vmatprep.subr.bf16.mxu0 0
    %2462 = vmatpush1.bf16.xpose.msra.mxu0 0
    %2463 = vmatprep.subr.bf16.mxu0 0
    %2464 = vmatpush1.bf16.xpose.msra.mxu0 0
    %2465 = vmatprep.subr.bf16.mxu0 0
    %2466 = vmatpush1.bf16.xpose.msra.mxu0 0
    %2467 = vmatprep.subr.bf16.mxu0 0
    %2468 = vmatpush1.bf16.xpose.msra.mxu0 0
    %2469 = vmatprep.mubr.bf16.mxu0 0
    %2470 = vmatmul.mubr.bf16.gmra.mrb[0].mxu0 %v2432
    %v2471 = vpop.f32.mrb[0].mxu0
    %v2472 = vadd.f32 %v1542, %v2471
    %v2473 = vpop.f32.mrb[0].mxu0
    %v2474 = vpop.f32.mrb[0].mxu0
    %v2475 = vpop.f32.mrb[0].mxu0
    %2476 = vdwg.mxu0
    %2477 = vrot.lane.b32.xlu0 %v1616, 104
    %v2478 = vpop.permute.xlu0 %2477
    %2479 = vrot.lane.b32.xlu0 %v1694, 104
    %v2480 = vpop.permute.xlu0 %2479
    %v2482 = vsel %vm531, %v2478, 0
    %v2485 = vsel %vm531, %v2480, 0
    %2487 = vmatprep.subr.bf16.mxu0 0
    %2488 = vmatpush1.bf16.xpose.msra.mxu0 %v2485
    %2489 = vmatprep.subr.bf16.mxu0 0
    %2490 = vmatpush1.bf16.xpose.msra.mxu0 0
    %2491 = vmatprep.subr.bf16.mxu0 0
    %2492 = vmatpush1.bf16.xpose.msra.mxu0 0
    %2493 = vmatprep.subr.bf16.mxu0 0
    %2494 = vmatpush1.bf16.xpose.msra.mxu0 0
    %2495 = vmatprep.subr.bf16.mxu0 0
    %2496 = vmatpush1.bf16.xpose.msra.mxu0 0
    %2497 = vmatprep.subr.bf16.mxu0 0
    %2498 = vmatpush1.bf16.xpose.msra.mxu0 0
    %2499 = vmatprep.subr.bf16.mxu0 0
    %2500 = vmatpush1.bf16.xpose.msra.mxu0 0
    %2501 = vmatprep.subr.bf16.mxu0 0
    %2502 = vmatpush1.bf16.xpose.msra.mxu0 0
    %2503 = vmatprep.subr.bf16.mxu0 0
    %2504 = vmatpush1.bf16.xpose.msra.mxu0 0
    %2505 = vmatprep.subr.bf16.mxu0 0
    %2506 = vmatpush1.bf16.xpose.msra.mxu0 0
    %2507 = vmatprep.subr.bf16.mxu0 0
    %2508 = vmatpush1.bf16.xpose.msra.mxu0 0
    %2509 = vmatprep.subr.bf16.mxu0 0
    %2510 = vmatpush1.bf16.xpose.msra.mxu0 0
    %2511 = vmatprep.subr.bf16.mxu0 0
    %2512 = vmatpush1.bf16.xpose.msra.mxu0 0
    %2513 = vmatprep.subr.bf16.mxu0 0
    %2514 = vmatpush1.bf16.xpose.msra.mxu0 0
    %2515 = vmatprep.subr.bf16.mxu0 0
    %2516 = vmatpush1.bf16.xpose.msra.mxu0 0
    %2517 = vmatprep.subr.bf16.mxu0 0
    %2518 = vmatpush1.bf16.xpose.msra.mxu0 0
    %2519 = vmatprep.mubr.bf16.mxu0 0
    %2520 = vmatmul.mubr.bf16.gmra.mrb[0].mxu0 %v2482
    %v2521 = vpop.f32.mrb[0].mxu0
    %v2522 = vadd.f32 %v1543, %v2521
    %v2523 = vpop.f32.mrb[0].mxu0
    %v2524 = vpop.f32.mrb[0].mxu0
    %v2525 = vpop.f32.mrb[0].mxu0
    %2526 = vdwg.mxu0
    %v2527 = vsel %vm531, %v2472, -inf
    %2528 = vmax.xlane.f32.xlu0 %v2527
    %v2529 = vpop.xlane.xlu0 %2528
    %v2530 = vsel %vm531, %v2522, -inf
    %2531 = vmax.xlane.f32.xlu0 %v2530
    %v2532 = vpop.xlane.xlu0 %2531
    %v2533 = vsub.f32 %v2472, %v2529
    %v2534 = vsub.f32 %v2522, %v2532
    %v2535 = vmul.f32 %v2533, 1.442695
    %v2536 = vpow.pop %v2535
    %v2537 = vmul.f32 %v2534, 1.442695
    %v2538 = vpow.pop %v2537
    %v2539 = vsel %vm531, %v2536, 0.0
    %2540 = vadd.xlane.f32.xlu0 %v2539
    %v2541 = vpop.xlane.xlu0 %2540
    %v2542 = vsel %vm531, %v2538, 0.0
    %2543 = vadd.xlane.f32.xlu0 %v2542
    %v2544 = vpop.xlane.xlu0 %2543
    %v2545 = vrcp.pop %v2541
    %v2546 = vrcp.pop %v2544
    %v2547 = vmul.f32 %v2536, %v2545
    %v2548 = vmul.f32 %v2538, %v2546
    %v2549 = vpack.c.bf16 %v2547, %v2547
    %v2550 = vpack.c.bf16 %v2548, %v2548
    %2551 = vrot.lane.b32.xlu0 %v1763, 104
    %v2552 = vpop.permute.xlu0 %2551
    %v2554 = vsel %vm531, %v2549, 0
    %v2557 = vsel %vm651, %v2552, 0
    %2559 = vmatprep.subr.bf16.mxu0 0
    %2560 = vmatpush1.bf16.msra.mxu0 %v2557
    %2561 = vmatprep.subr.bf16.mxu0 0
    %2562 = vmatpush1.bf16.msra.mxu0 0
    %2563 = vmatprep.subr.bf16.mxu0 0
    %2564 = vmatpush1.bf16.msra.mxu0 0
    %2565 = vmatprep.subr.bf16.mxu0 0
    %2566 = vmatpush1.bf16.msra.mxu0 0
    %2567 = vmatprep.subr.bf16.mxu0 0
    %2568 = vmatpush1.bf16.msra.mxu0 0
    %2569 = vmatprep.subr.bf16.mxu0 0
    %2570 = vmatpush1.bf16.msra.mxu0 0
    %2571 = vmatprep.subr.bf16.mxu0 0
    %2572 = vmatpush1.bf16.msra.mxu0 0
    %2573 = vmatprep.subr.bf16.mxu0 0
    %2574 = vmatpush1.bf16.msra.mxu0 0
    %2575 = vmatprep.subr.bf16.mxu0 0
    %2576 = vmatpush1.bf16.msra.mxu0 0
    %2577 = vmatprep.subr.bf16.mxu0 0
    %2578 = vmatpush1.bf16.msra.mxu0 0
    %2579 = vmatprep.subr.bf16.mxu0 0
    %2580 = vmatpush1.bf16.msra.mxu0 0
    %2581 = vmatprep.subr.bf16.mxu0 0
    %2582 = vmatpush1.bf16.msra.mxu0 0
    %2583 = vmatprep.subr.bf16.mxu0 0
    %2584 = vmatpush1.bf16.msra.mxu0 0
    %2585 = vmatprep.subr.bf16.mxu0 0
    %2586 = vmatpush1.bf16.msra.mxu0 0
    %2587 = vmatprep.subr.bf16.mxu0 0
    %2588 = vmatpush1.bf16.msra.mxu0 0
    %2589 = vmatprep.subr.bf16.mxu0 0
    %2590 = vmatpush1.bf16.msra.mxu0 0
    %2591 = vmatprep.mubr.bf16.mxu0 0
    %2592 = vmatmul.mubr.bf16.gmra.mrb[0].mxu0 %v2554
    %v2593 = vpop.f32.mrb[0].mxu0
    %v2594 = vadd.f32 0.0, %v2593
    %v2595 = vpop.f32.mrb[0].mxu0
    %v2596 = vpop.f32.mrb[0].mxu0
    %v2597 = vpop.f32.mrb[0].mxu0
    %2598 = vdwg.mxu0
    %2599 = vrot.lane.b32.xlu0 %v1764, 104
    %v2600 = vpop.permute.xlu0 %2599
    %v2602 = vsel %vm531, %v2550, 0
    %v2605 = vsel %vm651, %v2600, 0
    %2607 = vmatprep.subr.bf16.mxu0 0
    %2608 = vmatpush1.bf16.msra.mxu0 %v2605
    %2609 = vmatprep.subr.bf16.mxu0 0
    %2610 = vmatpush1.bf16.msra.mxu0 0
    %2611 = vmatprep.subr.bf16.mxu0 0
    %2612 = vmatpush1.bf16.msra.mxu0 0
    %2613 = vmatprep.subr.bf16.mxu0 0
    %2614 = vmatpush1.bf16.msra.mxu0 0
    %2615 = vmatprep.subr.bf16.mxu0 0
    %2616 = vmatpush1.bf16.msra.mxu0 0
    %2617 = vmatprep.subr.bf16.mxu0 0
    %2618 = vmatpush1.bf16.msra.mxu0 0
    %2619 = vmatprep.subr.bf16.mxu0 0
    %2620 = vmatpush1.bf16.msra.mxu0 0
    %2621 = vmatprep.subr.bf16.mxu0 0
    %2622 = vmatpush1.bf16.msra.mxu0 0
    %2623 = vmatprep.subr.bf16.mxu0 0
    %2624 = vmatpush1.bf16.msra.mxu0 0
    %2625 = vmatprep.subr.bf16.mxu0 0
    %2626 = vmatpush1.bf16.msra.mxu0 0
    %2627 = vmatprep.subr.bf16.mxu0 0
    %2628 = vmatpush1.bf16.msra.mxu0 0
    %2629 = vmatprep.subr.bf16.mxu0 0
    %2630 = vmatpush1.bf16.msra.mxu0 0
    %2631 = vmatprep.subr.bf16.mxu0 0
    %2632 = vmatpush1.bf16.msra.mxu0 0
    %2633 = vmatprep.subr.bf16.mxu0 0
    %2634 = vmatpush1.bf16.msra.mxu0 0
    %2635 = vmatprep.subr.bf16.mxu0 0
    %2636 = vmatpush1.bf16.msra.mxu0 0
    %2637 = vmatprep.subr.bf16.mxu0 0
    %2638 = vmatpush1.bf16.msra.mxu0 0
    %2639 = vmatprep.mubr.bf16.mxu0 0
    %2640 = vmatmul.mubr.bf16.gmra.mrb[0].mxu0 %v2602
    %v2641 = vpop.f32.mrb[0].mxu0
    %v2642 = vadd.f32 0.0, %v2641
    %v2643 = vpop.f32.mrb[0].mxu0
    %v2644 = vpop.f32.mrb[0].mxu0
    %v2645 = vpop.f32.mrb[0].mxu0
    %2646 = vdwg.mxu0
    %v2647 = vpack.c.bf16 %v2642, %v2594
    %2649 = vrot.lane.b32.xlu0 %v2647, 24
    %v2650 = vpop.permute.xlu0 %2649
    %2652 = vst.msk [vmem:[#allocation2] sm:$0xff] %vm1422, %v2650
    %v2653 = vld [vmem:[#allocation2] sm:$0xff]
    %v2654 = vld [vmem:[%s41] sm:$0xf]
    %v2655 = vld [vmem:[%s41 + $0x4] sm:$0xf]
    %v2656 = vld [vmem:[%s41 + $0x8] sm:$0xf]
    %v2657 = vld [vmem:[%s41 + $0xc] sm:$0xf]
    %v2658 = vld [vmem:[%s43] sm:$0x1]
    %v2660 = vlaneseq
    %v2661 = vshrl.u32 %v2660, 7
    %v2662 = vsub.s32 0, %v2661
    %v2663 = vrot.slane %v2658, %v2662
    %v2669 = vunpack.c.l.b16 %v2654
    %v2670 = vunpack.c.l.b16 %v2655
    %v2671 = vunpack.c.l.b16 %v2656
    %v2672 = vunpack.c.l.b16 %v2657
    %v2673 = vpack.c.b16 %v2670, %v2669
    %v2674 = vpack.c.b16 %v2672, %v2671
    %v2678 = vsel %vm340, %v2653, 0
    %2680 = vmatprep.subr.bf16.mxu0 0
    %2681 = vmatpush1.bf16.msra.mxu0 %v2673
    %2682 = vmatprep.subr.bf16.mxu0 0
    %2683 = vmatpush1.bf16.msra.mxu0 %v2674
    %2684 = vmatprep.subr.bf16.mxu0 0
    %2685 = vmatpush1.bf16.msra.mxu0 0
    %2686 = vmatprep.subr.bf16.mxu0 0
    %2687 = vmatpush1.bf16.msra.mxu0 0
    %2688 = vmatprep.subr.bf16.mxu0 0
    %2689 = vmatpush1.bf16.msra.mxu0 0
    %2690 = vmatprep.subr.bf16.mxu0 0
    %2691 = vmatpush1.bf16.msra.mxu0 0
    %2692 = vmatprep.subr.bf16.mxu0 0
    %2693 = vmatpush1.bf16.msra.mxu0 0
    %2694 = vmatprep.subr.bf16.mxu0 0
    %2695 = vmatpush1.bf16.msra.mxu0 0
    %2696 = vmatprep.subr.bf16.mxu0 0
    %2697 = vmatpush1.bf16.msra.mxu0 0
    %2698 = vmatprep.subr.bf16.mxu0 0
    %2699 = vmatpush1.bf16.msra.mxu0 0
    %2700 = vmatprep.subr.bf16.mxu0 0
    %2701 = vmatpush1.bf16.msra.mxu0 0
    %2702 = vmatprep.subr.bf16.mxu0 0
    %2703 = vmatpush1.bf16.msra.mxu0 0
    %2704 = vmatprep.subr.bf16.mxu0 0
    %2705 = vmatpush1.bf16.msra.mxu0 0
    %2706 = vmatprep.subr.bf16.mxu0 0
    %2707 = vmatpush1.bf16.msra.mxu0 0
    %2708 = vmatprep.subr.bf16.mxu0 0
    %2709 = vmatpush1.bf16.msra.mxu0 0
    %2710 = vmatprep.subr.bf16.mxu0 0
    %2711 = vmatpush1.bf16.msra.mxu0 0
    %2712 = vmatprep.mubr.bf16.mxu0 0
    %2713 = vmatmul.mubr.bf16.gmra.mrb[0].mxu0 %v2678
    %v2714 = vpop.f32.mrb[0].mxu0
    %v2715 = vadd.f32 %v2663, %v2714
    %v2716 = vpop.f32.mrb[0].mxu0
    %v2717 = vpop.f32.mrb[0].mxu0
    %v2718 = vadd.f32 %v2663, %v2717
    %v2719 = vpop.f32.mrb[0].mxu0
    %2720 = vdwg.mxu0
    %v2721 = vadd.f32 %v1537, %v2715
    %v2722 = vadd.f32 %v1538, %v2718
    %v2723 = vsel %vm340, %v2721, 0.0
    %2724 = vadd.xlane.f32.xlu0 %v2723
    %v2725 = vpop.xlane.xlu0 %2724
    %v2726 = vsel %vm340, %v2722, 0.0
    %2727 = vadd.xlane.f32.xlu0 %v2726
    %v2728 = vpop.xlane.xlu0 %2727
    %v2729 = vmul.f32 %v2725, %v1500
    %v2730 = vmul.f32 %v2728, %v1500
    %v2731 = vsub.f32 %v2721, %v2729
    %v2732 = vsub.f32 %v2722, %v2730
    %v2733 = vmul.f32 %v2731, %v2731
    %v2734 = vmul.f32 %v2732, %v2732
    %v2735 = vsel %vm340, %v2733, 0.0
    %2736 = vadd.xlane.f32.xlu0 %v2735
    %v2737 = vpop.xlane.xlu0 %2736
    %v2738 = vsel %vm340, %v2734, 0.0
    %2739 = vadd.xlane.f32.xlu0 %v2738
    %v2740 = vpop.xlane.xlu0 %2739
    %v2741 = vmul.f32 %v2737, %v1500
    %v2742 = vmul.f32 %v2740, %v1500
    %v2743 = vadd.f32 %v2741, 1e-05
    %v2744 = vadd.f32 %v2742, 1e-05
    %v2745 = vrsqrt.pop %v2743
    %v2746 = vrsqrt.pop %v2744
    %v2747 = vmul.f32 %v2731, %v2745
    %v2748 = vmul.f32 %v2732, %v2746
    %v2749 = vld [vmem:[#allocation24] sm:$0x1]
    %v2751 = vlaneseq
    %v2752 = vshrl.u32 %v2751, 7
    %v2753 = vsub.s32 0, %v2752
    %v2754 = vrot.slane %v2749, %v2753
    %v2756 = vmul.f32 %v2747, %v2754
    %v2757 = vmul.f32 %v2748, %v2754
    %v2758 = vld [vmem:[%s47] sm:$0x1]
    %v2760 = vlaneseq
    %v2761 = vshrl.u32 %v2760, 7
    %v2762 = vsub.s32 0, %v2761
    %v2763 = vrot.slane %v2758, %v2762
    %v2765 = vadd.f32 %v2756, %v2763
    %v2766 = vadd.f32 %v2757, %v2763
    %v2767 = vpack.c.bf16 %v2766, %v2765
    %v2768 = vld [vmem:[%s49] sm:$0xf]
    %v2769 = vld [vmem:[%s49 + $0x4] sm:$0xf]
    %v2770 = vld [vmem:[%s49 + $0x8] sm:$0xf]
    %v2771 = vld [vmem:[%s49 + $0xc] sm:$0xf]
    %v2772 = vld [vmem:[%s51] sm:$0x1]
    %v2774 = vlaneseq
    %v2775 = vshrl.u32 %v2774, 7
    %v2776 = vsub.s32 0, %v2775
    %v2777 = vrot.slane %v2772, %v2776
    %v2783 = vunpack.c.l.b16 %v2768
    %v2784 = vunpack.c.l.b16 %v2769
    %v2785 = vunpack.c.l.b16 %v2770
    %v2786 = vunpack.c.l.b16 %v2771
    %v2787 = vpack.c.b16 %v2784, %v2783
    %v2788 = vpack.c.b16 %v2786, %v2785
    %v2792 = vsel %vm340, %v2767, 0
    %2794 = vmatprep.subr.bf16.mxu0 0
    %2795 = vmatpush1.bf16.msra.mxu0 %v2787
    %2796 = vmatprep.subr.bf16.mxu0 0
    %2797 = vmatpush1.bf16.msra.mxu0 %v2788
    %2798 = vmatprep.subr.bf16.mxu0 0
    %2799 = vmatpush1.bf16.msra.mxu0 0
    %2800 = vmatprep.subr.bf16.mxu0 0
    %2801 = vmatpush1.bf16.msra.mxu0 0
    %2802 = vmatprep.subr.bf16.mxu0 0
    %2803 = vmatpush1.bf16.msra.mxu0 0
    %2804 = vmatprep.subr.bf16.mxu0 0
    %2805 = vmatpush1.bf16.msra.mxu0 0
    %2806 = vmatprep.subr.bf16.mxu0 0
    %2807 = vmatpush1.bf16.msra.mxu0 0
    %2808 = vmatprep.subr.bf16.mxu0 0
    %2809 = vmatpush1.bf16.msra.mxu0 0
    %2810 = vmatprep.subr.bf16.mxu0 0
    %2811 = vmatpush1.bf16.msra.mxu0 0
    %2812 = vmatprep.subr.bf16.mxu0 0
    %2813 = vmatpush1.bf16.msra.mxu0 0
    %2814 = vmatprep.subr.bf16.mxu0 0
    %2815 = vmatpush1.bf16.msra.mxu0 0
    %2816 = vmatprep.subr.bf16.mxu0 0
    %2817 = vmatpush1.bf16.msra.mxu0 0
    %2818 = vmatprep.subr.bf16.mxu0 0
    %2819 = vmatpush1.bf16.msra.mxu0 0
    %2820 = vmatprep.subr.bf16.mxu0 0
    %2821 = vmatpush1.bf16.msra.mxu0 0
    %2822 = vmatprep.subr.bf16.mxu0 0
    %2823 = vmatpush1.bf16.msra.mxu0 0
    %2824 = vmatprep.subr.bf16.mxu0 0
    %2825 = vmatpush1.bf16.msra.mxu0 0
    %2826 = vmatprep.mubr.bf16.mxu0 0
    %2827 = vmatmul.mubr.bf16.gmra.mrb[0].mxu0 %v2792
    %v2828 = vpop.f32.mrb[0].mxu0
    %v2829 = vadd.f32 %v2777, %v2828
    %v2830 = vpop.f32.mrb[0].mxu0
    %v2831 = vpop.f32.mrb[0].mxu0
    %v2832 = vadd.f32 %v2777, %v2831
    %v2833 = vpop.f32.mrb[0].mxu0
    %2834 = vdwg.mxu0
    %v2835 = vmax.f32 %v2829, 0.0
    %v2836 = vmax.f32 %v2832, 0.0
    %v2837 = vpack.c.bf16 %v2836, %v2835
    %v2838 = vld [vmem:[%s53] sm:$0xf]
    %v2839 = vld [vmem:[%s53 + $0x4] sm:$0xf]
    %v2840 = vld [vmem:[%s53 + $0x8] sm:$0xf]
    %v2841 = vld [vmem:[%s53 + $0xc] sm:$0xf]
    %v2842 = vld [vmem:[%s53 + $0x10] sm:$0xf]
    %v2843 = vld [vmem:[%s53 + $0x14] sm:$0xf]
    %v2844 = vld [vmem:[%s53 + $0x18] sm:$0xf]
    %v2845 = vld [vmem:[%s53 + $0x1c] sm:$0xf]
    %v2846 = vld [vmem:[%s55] sm:$0x1]
    %v2848 = vlaneseq
    %v2849 = vshrl.u32 %v2848, 7
    %v2850 = vsub.s32 0, %v2849
    %v2851 = vrot.slane %v2846, %v2850
    %v2861 = vunpack.c.l.b16 %v2838
    %v2862 = vunpack.c.l.b16 %v2839
    %v2863 = vunpack.c.l.b16 %v2840
    %v2864 = vunpack.c.l.b16 %v2841
    %v2865 = vunpack.c.l.b16 %v2842
    %v2866 = vunpack.c.l.b16 %v2843
    %v2867 = vunpack.c.l.b16 %v2844
    %v2868 = vunpack.c.l.b16 %v2845
    %v2869 = vpack.c.b16 %v2862, %v2861
    %v2870 = vpack.c.b16 %v2864, %v2863
    %v2871 = vpack.c.b16 %v2866, %v2865
    %v2872 = vpack.c.b16 %v2868, %v2867
    %vm2877 = vcmask 523264
    %v2879 = vsel %vm2877, %v2837, 0
    %2881 = vmatprep.subr.bf16.mxu0 0
    %2882 = vmatpush1.bf16.msra.mxu0 %v2869
    %2883 = vmatprep.subr.bf16.mxu0 0
    %2884 = vmatpush1.bf16.msra.mxu0 %v2870
    %2885 = vmatprep.subr.bf16.mxu0 0
    %2886 = vmatpush1.bf16.msra.mxu0 %v2871
    %2887 = vmatprep.subr.bf16.mxu0 0
    %2888 = vmatpush1.bf16.msra.mxu0 %v2872
    %2889 = vmatprep.subr.bf16.mxu0 0
    %2890 = vmatpush1.bf16.msra.mxu0 0
    %2891 = vmatprep.subr.bf16.mxu0 0
    %2892 = vmatpush1.bf16.msra.mxu0 0
    %2893 = vmatprep.subr.bf16.mxu0 0
    %2894 = vmatpush1.bf16.msra.mxu0 0
    %2895 = vmatprep.subr.bf16.mxu0 0
    %2896 = vmatpush1.bf16.msra.mxu0 0
    %2897 = vmatprep.subr.bf16.mxu0 0
    %2898 = vmatpush1.bf16.msra.mxu0 0
    %2899 = vmatprep.subr.bf16.mxu0 0
    %2900 = vmatpush1.bf16.msra.mxu0 0
    %2901 = vmatprep.subr.bf16.mxu0 0
    %2902 = vmatpush1.bf16.msra.mxu0 0
    %2903 = vmatprep.subr.bf16.mxu0 0
    %2904 = vmatpush1.bf16.msra.mxu0 0
    %2905 = vmatprep.subr.bf16.mxu0 0
    %2906 = vmatpush1.bf16.msra.mxu0 0
    %2907 = vmatprep.subr.bf16.mxu0 0
    %2908 = vmatpush1.bf16.msra.mxu0 0
    %2909 = vmatprep.subr.bf16.mxu0 0
    %2910 = vmatpush1.bf16.msra.mxu0 0
    %2911 = vmatprep.subr.bf16.mxu0 0
    %2912 = vmatpush1.bf16.msra.mxu0 0
    %2913 = vmatprep.mubr.bf16.mxu0 0
    %2914 = vmatmul.mubr.bf16.gmra.mrb[0].mxu0 %v2879
    %v2915 = vpop.f32.mrb[0].mxu0
    %v2916 = vadd.f32 %v2851, %v2915
    %v2917 = vpop.f32.mrb[0].mxu0
    %v2918 = vpop.f32.mrb[0].mxu0
    %v2919 = vadd.f32 %v2851, %v2918
    %v2920 = vpop.f32.mrb[0].mxu0
    %2921 = vdwg.mxu0
    %v2922 = vadd.f32 %v2916, %v2765
    %v2923 = vadd.f32 %v2919, %v2766
    %v2924 = vsel %vm340, %v2922, 0.0
    %2925 = vadd.xlane.f32.xlu0 %v2924
    %v2926 = vpop.xlane.xlu0 %2925
    %v2927 = vsel %vm340, %v2923, 0.0
    %2928 = vadd.xlane.f32.xlu0 %v2927
    %v2929 = vpop.xlane.xlu0 %2928
    %v2930 = vmul.f32 %v2926, %v1500
    %v2931 = vmul.f32 %v2929, %v1500
    %v2932 = vsub.f32 %v2922, %v2930
    %v2933 = vsub.f32 %v2923, %v2931
    %v2934 = vmul.f32 %v2932, %v2932
    %v2935 = vmul.f32 %v2933, %v2933
    %v2936 = vsel %vm340, %v2934, 0.0
    %2937 = vadd.xlane.f32.xlu0 %v2936
    %v2938 = vpop.xlane.xlu0 %2937
    %v2939 = vsel %vm340, %v2935, 0.0
    %2940 = vadd.xlane.f32.xlu0 %v2939
    %v2941 = vpop.xlane.xlu0 %2940
    %v2942 = vmul.f32 %v2938, %v1500
    %v2943 = vmul.f32 %v2941, %v1500
    %v2944 = vadd.f32 %v2942, 1e-05
    %v2945 = vadd.f32 %v2943, 1e-05
    %v2946 = vrsqrt.pop %v2944
    %v2947 = vrsqrt.pop %v2945
    %v2948 = vmul.f32 %v2932, %v2946
    %v2949 = vmul.f32 %v2933, %v2947
    %v2950 = vld [vmem:[%s57] sm:$0x1]
    %v2952 = vlaneseq
    %v2953 = vshrl.u32 %v2952, 7
    %v2954 = vsub.s32 0, %v2953
    %v2955 = vrot.slane %v2950, %v2954
    %v2957 = vmul.f32 %v2948, %v2955
    %v2958 = vmul.f32 %v2949, %v2955
    %v2959 = vld [vmem:[%s59] sm:$0x1]
    %v2961 = vlaneseq
    %v2962 = vshrl.u32 %v2961, 7
    %v2963 = vsub.s32 0, %v2962
    %v2964 = vrot.slane %v2959, %v2963
    %v2966 = vadd.f32 %v2957, %v2964
    %v2967 = vadd.f32 %v2958, %v2964
    %v2968 = vpack.c.bf16 %v2966, %v2966
    %v2969 = vpack.c.bf16 %v2967, %v2967
    %vm2970 = vcmask 257024
    %2971 = vst.msk [vmem:[#allocation26] sm:$0xf] %vm2970, %v2968
    %2972 = vst.msk [vmem:[#allocation26 + $0x4] sm:$0xf] %vm2970, %v2969
    // Predicated region
    $region178: #{tpu_custom_call.1} parent=1 // pred_check
      _
    $region179: #{tpu_custom_call.1} parent=1 // pred_check_branch
      %2974 = sbr.rel (0) target = $region181
    $region180: #{tpu_custom_call.1} parent=1 // pred_region
      %s2976 = ssub.s32 128, 128
      %2977 = vsyncadd [#allocation5], %s2976
      %s2978 = sshll.u32 [#allocation26], 4
      %s2979 = int_to_ptr.vmem [resolvable:$true] %s2978
      %2984 = dma.vmem_to_hbm [thread:$0]  %s2979, 128, %s61, [#allocation5], 64, 64, 4
    $region181: #{tpu_custom_call.1} parent=1 // pred_fallthru
      _
    // Predicated region
    $region182: #{tpu_custom_call.1} parent=1 // pred_check
      _
    $region183: #{tpu_custom_call.1} parent=1 // pred_check_branch
      %2986 = sbr.rel (0) target = $region185
    $region184: #{tpu_custom_call.1} parent=1 // pred_region
      %2987 = dma.done [#allocation5], 128
    $region185: #{tpu_custom_call.1} parent=1 // pred_fallthru
      _
    %2988 = vsyncpa [#allocation4], 1
    %2989 = vsyncpa [#allocation7], 1
    %2990 = vsyncpa [#allocation10], 1
    %2991 = vsyncpa [#allocation13], 1
    %2992 = vsyncpa [#allocation16], 1
    %2993 = vsyncpa [#allocation19], 1
    %2994 = vsyncpa [#allocation22], 1
    %2995 = vsyncpa [#allocation25], 1
    %2996 = vsyncpa [#allocation5], 1

// kernel: tpu_custom_call.1
$region0: #{tpu_custom_call.1}
  #allocation0 [shape = 'u32[]', space=smem, size = 0x4, offset = 0x4, fixed_abs, tag = 'smem constant byte address 0x4 - core index']
  #allocation1 [shape = 'u32[144,128]{1,0:T(1,128)}', space=vmem, size = 0x12000, scoped, tag = 'internal scratch']
  #allocation2 [shape = 'bf16[16,32]{1,0:T(16,128)(2,1)}', space=vmem, size = 0x1000, scoped, tag = 'scratch operand']
  %s0 = inlined_call_operand.smem [shape: u32[31], index: -1, kind: input, shape index: {}]
  %s1 = sld [smem:[%s0]]
  %s2 = scalar_lea.smem %s0, 1
  %s3 = sld [smem:[%s2]]
  %s4 = scalar_lea.smem %s0, 2
  %s5 = sld [smem:[%s4]]
  %s6 = scalar_lea.smem %s0, 3
  %s7 = sld [smem:[%s6]]
  %s8 = scalar_lea.smem %s0, 4
  %s9 = sld [smem:[%s8]]
  %s10 = scalar_lea.smem %s0, 5
  %s11 = sld [smem:[%s10]]
  %s12 = scalar_lea.smem %s0, 6
  %s13 = sld [smem:[%s12]]
  %s14 = scalar_lea.smem %s0, 7
  %s15 = sld [smem:[%s14]]
  %s16 = scalar_lea.smem %s0, 8
  %s17 = sld [smem:[%s16]]
  %s18 = scalar_lea.smem %s0, 9
  %s19 = sld [smem:[%s18]]
  %s20 = scalar_lea.smem %s0, 10
  %s21 = sld [smem:[%s20]]
  %s22 = scalar_lea.smem %s0, 11
  %s23 = sld [smem:[%s22]]
  %s24 = scalar_lea.smem %s0, 12
  %s25 = sld [smem:[%s24]]
  %s26 = scalar_lea.smem %s0, 13
  %s27 = sld [smem:[%s26]]
  %s28 = scalar_lea.smem %s0, 14
  %s29 = sld [smem:[%s28]]
  %s30 = scalar_lea.smem %s0, 15
  %s31 = sld [smem:[%s30]]
  %s32 = scalar_lea.smem %s0, 16
  %s33 = sld [smem:[%s32]]
  %s34 = scalar_lea.smem %s0, 17
  %s35 = sld [smem:[%s34]]
  %s36 = scalar_lea.smem %s0, 18
  %s37 = sld [smem:[%s36]]
  %s38 = scalar_lea.smem %s0, 19
  %s39 = sld [smem:[%s38]]
  %s40 = scalar_lea.smem %s0, 20
  %s41 = sld [smem:[%s40]]
  %s42 = scalar_lea.smem %s0, 21
  %s43 = sld [smem:[%s42]]
  %s44 = scalar_lea.smem %s0, 22
  %s45 = sld [smem:[%s44]]
  %s46 = scalar_lea.smem %s0, 23
  %s47 = sld [smem:[%s46]]
  %s48 = scalar_lea.smem %s0, 24
  %s49 = sld [smem:[%s48]]
  %s50 = scalar_lea.smem %s0, 25
  %s51 = sld [smem:[%s50]]
  %s52 = scalar_lea.smem %s0, 26
  %s53 = sld [smem:[%s52]]
  %s54 = scalar_lea.smem %s0, 27
  %s55 = sld [smem:[%s54]]
  %s56 = scalar_lea.smem %s0, 28
  %s57 = sld [smem:[%s56]]
  %s58 = scalar_lea.smem %s0, 29
  %s59 = sld [smem:[%s58]]
  %s60 = scalar_lea.smem %s0, 30
  %s61 = sld [smem:[%s60]]
  %s62 = sld [smem:[#allocation0]]
  $region186: #{tpu_custom_call.1} parent=0
    _
  %s64 = ssub.s32 1, %s62
  %s65 = scalar_select 0, %s64, %s62
  $region1: #{tpu_custom_call.1} parent=0
    #allocation3 [shape = 'u8[4096]{0}', space=vmem, size = 0x1000, scoped, tag = 'input window, operand 0, single buffered']
    #allocation4 [shape = 's32[1]{0}', space=sflag, size = 0x4, scoped, tag = 'scoped memory for tpu_custom_call.1']
    #allocation5 [shape = 's32[1]{0}', space=sflag, size = 0x4, scoped, tag = 'scoped memory for tpu_custom_call.1']
    #allocation6 [shape = 'u8[4096]{0}', space=vmem, size = 0x1000, scoped, tag = 'input window, operand 1, single buffered']
    #allocation7 [shape = 's32[1]{0}', space=sflag, size = 0x4, scoped, tag = 'scoped memory for tpu_custom_call.1']
    #allocation8 [shape = 'u8[4096]{0}', space=vmem, size = 0x1000, scoped, tag = 'input window, operand 2, single buffered']
    #allocation9 [shape = 'u8[4096]{0}', space=vmem, size = 0x1000, scoped, tag = 'input window, operand 3, single buffered']
    #allocation10 [shape = 's32[1]{0}', space=sflag, size = 0x4, scoped, tag = 'scoped memory for tpu_custom_call.1']
    #allocation11 [shape = 'u8[512]{0}', space=vmem, size = 0x400, scoped, tag = 'input window, operand 7, single buffered']
    #allocation12 [shape = 'u8[512]{0}', space=vmem, size = 0x400, scoped, tag = 'input window, operand 8, single buffered']
    #allocation13 [shape = 's32[1]{0}', space=sflag, size = 0x4, scoped, tag = 'scoped memory for tpu_custom_call.1']
    #allocation14 [shape = 'u8[512]{0}', space=vmem, size = 0x400, scoped, tag = 'input window, operand 9, single buffered']
    #allocation15 [shape = 'u8[512]{0}', space=vmem, size = 0x400, scoped, tag = 'input window, operand 11, single buffered']
    #allocation16 [shape = 's32[1]{0}', space=sflag, size = 0x4, scoped, tag = 'scoped memory for tpu_custom_call.1']
    #allocation17 [shape = 'u8[512]{0}', space=vmem, size = 0x400, scoped, tag = 'input window, operand 12, single buffered']
    #allocation18 [shape = 'u8[512]{0}', space=vmem, size = 0x400, scoped, tag = 'input window, operand 13, single buffered']
    #allocation19 [shape = 's32[1]{0}', space=sflag, size = 0x4, scoped, tag = 'scoped memory for tpu_custom_call.1']
    #allocation20 [shape = 'u8[8192]{0}', space=vmem, size = 0x2000, scoped, tag = 'input window, operand 15, single buffered']
    #allocation21 [shape = 'u8[8192]{0}', space=vmem, size = 0x2000, scoped, tag = 'input window, operand 16, single buffered']
    #allocation22 [shape = 's32[1]{0}', space=sflag, size = 0x4, scoped, tag = 'scoped memory for tpu_custom_call.1']
    #allocation23 [shape = 'u8[512]{0}', space=vmem, size = 0x400, scoped, tag = 'input window, operand 17, single buffered']
    #allocation24 [shape = 'u8[512]{0}', space=vmem, size = 0x400, scoped, tag = 'input window, operand 22, single buffered']
    #allocation25 [shape = 's32[1]{0}', space=sflag, size = 0x4, scoped, tag = 'scoped memory for tpu_custom_call.1']
    #allocation26 [shape = 'u8[4096]{0}', space=vmem, size = 0x1000, scoped, tag = 'output window, operand 0, single buffered']
    %66 = vsyncpa [#allocation4], 0
    %67 = vsyncpa [#allocation7], 0
    %68 = vsyncpa [#allocation10], 0
    %69 = vsyncpa [#allocation13], 0
    %70 = vsyncpa [#allocation16], 0
    %71 = vsyncpa [#allocation19], 0
    %72 = vsyncpa [#allocation22], 0
    %73 = vsyncpa [#allocation25], 0
    %74 = vsyncpa [#allocation5], 0
    // Predicated region
    $region2: #{tpu_custom_call.1} parent=1 // pred_check
      _
    $region3: #{tpu_custom_call.1} parent=1 // pred_check_branch
      %76 = sbr.rel (0) target = $region5
    $region4: #{tpu_custom_call.1} parent=1 // pred_region
      %s78 = ssub.s32 128, 128
      %79 = vsyncadd [#allocation4], %s78
      %s80 = sshll.u32 [#allocation3], 4
      %s81 = int_to_ptr.vmem [resolvable:$true] %s80
      %86 = dma.hbm_to_vmem [thread:$0]  %s1, 128, %s81, [#allocation4], 64, 64, 4
    $region5: #{tpu_custom_call.1} parent=1 // pred_fallthru
      _
    // Predicated region
    $region6: #{tpu_custom_call.1} parent=1 // pred_check
      _
    $region7: #{tpu_custom_call.1} parent=1 // pred_check_branch
      %88 = sbr.rel (0) target = $region9
    $region8: #{tpu_custom_call.1} parent=1 // pred_region
      %s90 = ssub.s32 128, 128
      %91 = vsyncadd [#allocation7], %s90
      %s92 = sshll.u32 [#allocation6], 4
      %s93 = int_to_ptr.vmem [resolvable:$true] %s92
      %98 = dma.hbm_to_vmem [thread:$0]  %s3, 128, %s93, [#allocation7], 64, 64, 4
    $region9: #{tpu_custom_call.1} parent=1 // pred_fallthru
      _
    // Predicated region
    $region10: #{tpu_custom_call.1} parent=1 // pred_check
      _
    $region11: #{tpu_custom_call.1} parent=1 // pred_check_branch
      %100 = sbr.rel (0) target = $region13
    $region12: #{tpu_custom_call.1} parent=1 // pred_region
      %s102 = ssub.s32 128, 128
      %103 = vsyncadd [#allocation7], %s102
      %s104 = sshll.u32 [#allocation8], 4
      %s105 = int_to_ptr.vmem [resolvable:$true] %s104
      %110 = dma.hbm_to_vmem [thread:$0]  %s5, 128, %s105, [#allocation7], 64, 64, 4
    $region13: #{tpu_custom_call.1} parent=1 // pred_fallthru
      _
    // Predicated region
    $region14: #{tpu_custom_call.1} parent=1 // pred_check
      _
    $region15: #{tpu_custom_call.1} parent=1 // pred_check_branch
      %112 = sbr.rel (0) target = $region17
    $region16: #{tpu_custom_call.1} parent=1 // pred_region
      %s114 = ssub.s32 128, 128
      %115 = vsyncadd [#allocation10], %s114
      %s116 = sshll.u32 [#allocation9], 4
      %s117 = int_to_ptr.vmem [resolvable:$true] %s116
      %122 = dma.hbm_to_vmem [thread:$0]  %s7, 128, %s117, [#allocation10], 64, 64, 4
    $region17: #{tpu_custom_call.1} parent=1 // pred_fallthru
      _
    // Predicated region
    $region18: #{tpu_custom_call.1} parent=1 // pred_check
      _
    $region19: #{tpu_custom_call.1} parent=1 // pred_check_branch
      %124 = sbr.rel (0) target = $region21
    $region20: #{tpu_custom_call.1} parent=1 // pred_region
      _
    $region21: #{tpu_custom_call.1} parent=1 // pred_fallthru
      _
    // Predicated region
    $region22: #{tpu_custom_call.1} parent=1 // pred_check
      _
    $region23: #{tpu_custom_call.1} parent=1 // pred_check_branch
      %126 = sbr.rel (0) target = $region25
    $region24: #{tpu_custom_call.1} parent=1 // pred_region
      _
    $region25: #{tpu_custom_call.1} parent=1 // pred_fallthru
      _
    // Predicated region
    $region26: #{tpu_custom_call.1} parent=1 // pred_check
      _
    $region27: #{tpu_custom_call.1} parent=1 // pred_check_branch
      %128 = sbr.rel (0) target = $region29
    $region28: #{tpu_custom_call.1} parent=1 // pred_region
      _
    $region29: #{tpu_custom_call.1} parent=1 // pred_fallthru
      _
    // Predicated region
    $region30: #{tpu_custom_call.1} parent=1 // pred_check
      _
    $region31: #{tpu_custom_call.1} parent=1 // pred_check_branch
      %130 = sbr.rel (0) target = $region33
    $region32: #{tpu_custom_call.1} parent=1 // pred_region
      %s132 = ssub.s32 16, 16
      %133 = vsyncadd [#allocation10], %s132
      %s135 = sshll.u32 [#allocation11], 4
      %s136 = int_to_ptr.vmem [resolvable:$true] %s135
      %138 = dma.hbm_to_vmem [thread:$0]  %s15, 16, %s136, [#allocation10]
    $region33: #{tpu_custom_call.1} parent=1 // pred_fallthru
      _
    // Predicated region
    $region34: #{tpu_custom_call.1} parent=1 // pred_check
      _
    $region35: #{tpu_custom_call.1} parent=1 // pred_check_branch
      %140 = sbr.rel (0) target = $region37
    $region36: #{tpu_custom_call.1} parent=1 // pred_region
      %s142 = ssub.s32 16, 16
      %143 = vsyncadd [#allocation13], %s142
      %s145 = sshll.u32 [#allocation12], 4
      %s146 = int_to_ptr.vmem [resolvable:$true] %s145
      %148 = dma.hbm_to_vmem [thread:$0]  %s17, 16, %s146, [#allocation13]
    $region37: #{tpu_custom_call.1} parent=1 // pred_fallthru
      _
    // Predicated region
    $region38: #{tpu_custom_call.1} parent=1 // pred_check
      _
    $region39: #{tpu_custom_call.1} parent=1 // pred_check_branch
      %150 = sbr.rel (0) target = $region41
    $region40: #{tpu_custom_call.1} parent=1 // pred_region
      %s152 = ssub.s32 16, 16
      %153 = vsyncadd [#allocation13], %s152
      %s155 = sshll.u32 [#allocation14], 4
      %s156 = int_to_ptr.vmem [resolvable:$true] %s155
      %158 = dma.hbm_to_vmem [thread:$0]  %s19, 16, %s156, [#allocation13]
    $region41: #{tpu_custom_call.1} parent=1 // pred_fallthru
      _
    // Predicated region
    $region42: #{tpu_custom_call.1} parent=1 // pred_check
      _
    $region43: #{tpu_custom_call.1} parent=1 // pred_check_branch
      %160 = sbr.rel (0) target = $region45
    $region44: #{tpu_custom_call.1} parent=1 // pred_region
      _
    $region45: #{tpu_custom_call.1} parent=1 // pred_fallthru
      _
    // Predicated region
    $region46: #{tpu_custom_call.1} parent=1 // pred_check
      _
    $region47: #{tpu_custom_call.1} parent=1 // pred_check_branch
      %162 = sbr.rel (0) target = $region49
    $region48: #{tpu_custom_call.1} parent=1 // pred_region
      %s164 = ssub.s32 16, 16
      %165 = vsyncadd [#allocation16], %s164
      %s167 = sshll.u32 [#allocation15], 4
      %s168 = int_to_ptr.vmem [resolvable:$true] %s167
      %170 = dma.hbm_to_vmem [thread:$0]  %s23, 16, %s168, [#allocation16]
    $region49: #{tpu_custom_call.1} parent=1 // pred_fallthru
      _
    // Predicated region
    $region50: #{tpu_custom_call.1} parent=1 // pred_check
      _
    $region51: #{tpu_custom_call.1} parent=1 // pred_check_branch
      %172 = sbr.rel (0) target = $region53
    $region52: #{tpu_custom_call.1} parent=1 // pred_region
      %s174 = ssub.s32 16, 16
      %175 = vsyncadd [#allocation16], %s174
      %s177 = sshll.u32 [#allocation17], 4
      %s178 = int_to_ptr.vmem [resolvable:$true] %s177
      %180 = dma.hbm_to_vmem [thread:$0]  %s25, 16, %s178, [#allocation16]
    $region53: #{tpu_custom_call.1} parent=1 // pred_fallthru
      _
    // Predicated region
    $region54: #{tpu_custom_call.1} parent=1 // pred_check
      _
    $region55: #{tpu_custom_call.1} parent=1 // pred_check_branch
      %182 = sbr.rel (0) target = $region57
    $region56: #{tpu_custom_call.1} parent=1 // pred_region
      %s184 = ssub.s32 16, 16
      %185 = vsyncadd [#allocation19], %s184
      %s187 = sshll.u32 [#allocation18], 4
      %s188 = int_to_ptr.vmem [resolvable:$true] %s187
      %190 = dma.hbm_to_vmem [thread:$0]  %s27, 16, %s188, [#allocation19]
    $region57: #{tpu_custom_call.1} parent=1 // pred_fallthru
      _
    // Predicated region
    $region58: #{tpu_custom_call.1} parent=1 // pred_check
      _
    $region59: #{tpu_custom_call.1} parent=1 // pred_check_branch
      %192 = sbr.rel (0) target = $region61
    $region60: #{tpu_custom_call.1} parent=1 // pred_region
      _
    $region61: #{tpu_custom_call.1} parent=1 // pred_fallthru
      _
    // Predicated region
    $region62: #{tpu_custom_call.1} parent=1 // pred_check
      _
    $region63: #{tpu_custom_call.1} parent=1 // pred_check_branch
      %194 = sbr.rel (0) target = $region65
    $region64: #{tpu_custom_call.1} parent=1 // pred_region
      %s196 = ssub.s32 256, 256
      %197 = vsyncadd [#allocation19], %s196
      %s198 = sshll.u32 [#allocation20], 4
      %s199 = int_to_ptr.vmem [resolvable:$true] %s198
      %204 = dma.hbm_to_vmem [thread:$0]  %s31, 256, %s199, [#allocation19], 64, 64, 4
    $region65: #{tpu_custom_call.1} parent=1 // pred_fallthru
      _
    // Predicated region
    $region66: #{tpu_custom_call.1} parent=1 // pred_check
      _
    $region67: #{tpu_custom_call.1} parent=1 // pred_check_branch
      %206 = sbr.rel (0) target = $region69
    $region68: #{tpu_custom_call.1} parent=1 // pred_region
      %s208 = ssub.s32 256, 256
      %209 = vsyncadd [#allocation22], %s208
      %s210 = sshll.u32 [#allocation21], 4
      %s211 = int_to_ptr.vmem [resolvable:$true] %s210
      %216 = dma.hbm_to_vmem [thread:$0]  %s33, 256, %s211, [#allocation22], 64, 64, 4
    $region69: #{tpu_custom_call.1} parent=1 // pred_fallthru
      _
    // Predicated region
    $region70: #{tpu_custom_call.1} parent=1 // pred_check
      _
    $region71: #{tpu_custom_call.1} parent=1 // pred_check_branch
      %218 = sbr.rel (0) target = $region73
    $region72: #{tpu_custom_call.1} parent=1 // pred_region
      %s220 = ssub.s32 16, 16
      %221 = vsyncadd [#allocation22], %s220
      %s223 = sshll.u32 [#allocation23], 4
      %s224 = int_to_ptr.vmem [resolvable:$true] %s223
      %226 = dma.hbm_to_vmem [thread:$0]  %s35, 16, %s224, [#allocation22]
    $region73: #{tpu_custom_call.1} parent=1 // pred_fallthru
      _
    // Predicated region
    $region74: #{tpu_custom_call.1} parent=1 // pred_check
      _
    $region75: #{tpu_custom_call.1} parent=1 // pred_check_branch
      %228 = sbr.rel (0) target = $region77
    $region76: #{tpu_custom_call.1} parent=1 // pred_region
      _
    $region77: #{tpu_custom_call.1} parent=1 // pred_fallthru
      _
    // Predicated region
    $region78: #{tpu_custom_call.1} parent=1 // pred_check
      _
    $region79: #{tpu_custom_call.1} parent=1 // pred_check_branch
      %230 = sbr.rel (0) target = $region81
    $region80: #{tpu_custom_call.1} parent=1 // pred_region
      _
    $region81: #{tpu_custom_call.1} parent=1 // pred_fallthru
      _
    // Predicated region
    $region82: #{tpu_custom_call.1} parent=1 // pred_check
      _
    $region83: #{tpu_custom_call.1} parent=1 // pred_check_branch
      %232 = sbr.rel (0) target = $region85
    $region84: #{tpu_custom_call.1} parent=1 // pred_region
      _
    $region85: #{tpu_custom_call.1} parent=1 // pred_fallthru
      _
    // Predicated region
    $region86: #{tpu_custom_call.1} parent=1 // pred_check
      _
    $region87: #{tpu_custom_call.1} parent=1 // pred_check_branch
      %234 = sbr.rel (0) target = $region89
    $region88: #{tpu_custom_call.1} parent=1 // pred_region
      _
    $region89: #{tpu_custom_call.1} parent=1 // pred_fallthru
      _
    // Predicated region
    $region90: #{tpu_custom_call.1} parent=1 // pred_check
      _
    $region91: #{tpu_custom_call.1} parent=1 // pred_check_branch
      %236 = sbr.rel (0) target = $region93
    $region92: #{tpu_custom_call.1} parent=1 // pred_region
      %s238 = ssub.s32 16, 16
      %239 = vsyncadd [#allocation25], %s238
      %s241 = sshll.u32 [#allocation24], 4
      %s242 = int_to_ptr.vmem [resolvable:$true] %s241
      %244 = dma.hbm_to_vmem [thread:$0]  %s45, 16, %s242, [#allocation25]
    $region93: #{tpu_custom_call.1} parent=1 // pred_fallthru
      _
    // Predicated region
    $region94: #{tpu_custom_call.1} parent=1 // pred_check
      _
    $region95: #{tpu_custom_call.1} parent=1 // pred_check_branch
      %246 = sbr.rel (0) target = $region97
    $region96: #{tpu_custom_call.1} parent=1 // pred_region
      _
    $region97: #{tpu_custom_call.1} parent=1 // pred_fallthru
      _
    // Predicated region
    $region98: #{tpu_custom_call.1} parent=1 // pred_check
      _
    $region99: #{tpu_custom_call.1} parent=1 // pred_check_branch
      %248 = sbr.rel (0) target = $region101
    $region100: #{tpu_custom_call.1} parent=1 // pred_region
      _
    $region101: #{tpu_custom_call.1} parent=1 // pred_fallthru
      _
    // Predicated region
    $region102: #{tpu_custom_call.1} parent=1 // pred_check
      _
    $region103: #{tpu_custom_call.1} parent=1 // pred_check_branch
      %250 = sbr.rel (0) target = $region105
    $region104: #{tpu_custom_call.1} parent=1 // pred_region
      _
    $region105: #{tpu_custom_call.1} parent=1 // pred_fallthru
      _
    // Predicated region
    $region106: #{tpu_custom_call.1} parent=1 // pred_check
      _
    $region107: #{tpu_custom_call.1} parent=1 // pred_check_branch
      %252 = sbr.rel (0) target = $region109
    $region108: #{tpu_custom_call.1} parent=1 // pred_region
      _
    $region109: #{tpu_custom_call.1} parent=1 // pred_fallthru
      _
    // Predicated region
    $region110: #{tpu_custom_call.1} parent=1 // pred_check
      _
    $region111: #{tpu_custom_call.1} parent=1 // pred_check_branch
      %254 = sbr.rel (0) target = $region113
    $region112: #{tpu_custom_call.1} parent=1 // pred_region
      _
    $region113: #{tpu_custom_call.1} parent=1 // pred_fallthru
      _
    // Predicated region
    $region114: #{tpu_custom_call.1} parent=1 // pred_check
      _
    $region115: #{tpu_custom_call.1} parent=1 // pred_check_branch
      %256 = sbr.rel (0) target = $region117
    $region116: #{tpu_custom_call.1} parent=1 // pred_region
      _
    $region117: #{tpu_custom_call.1} parent=1 // pred_fallthru
      _
    // Predicated region
    $region118: #{tpu_custom_call.1} parent=1 // pred_check
      _
    $region119: #{tpu_custom_call.1} parent=1 // pred_check_branch
      %258 = sbr.rel (0) target = $region121
    $region120: #{tpu_custom_call.1} parent=1 // pred_region
      _
    $region121: #{tpu_custom_call.1} parent=1 // pred_fallthru
      _
    // Predicated region
    $region122: #{tpu_custom_call.1} parent=1 // pred_check
      _
    $region123: #{tpu_custom_call.1} parent=1 // pred_check_branch
      %260 = sbr.rel (0) target = $region125
    $region124: #{tpu_custom_call.1} parent=1 // pred_region
      %261 = dma.done [#allocation4], 128
    $region125: #{tpu_custom_call.1} parent=1 // pred_fallthru
      _
    // Predicated region
    $region126: #{tpu_custom_call.1} parent=1 // pred_check
      _
    $region127: #{tpu_custom_call.1} parent=1 // pred_check_branch
      %263 = sbr.rel (0) target = $region129
    $region128: #{tpu_custom_call.1} parent=1 // pred_region
      %264 = dma.done [#allocation7], 128
    $region129: #{tpu_custom_call.1} parent=1 // pred_fallthru
      _
    // Predicated region
    $region130: #{tpu_custom_call.1} parent=1 // pred_check
      _
    $region131: #{tpu_custom_call.1} parent=1 // pred_check_branch
      %266 = sbr.rel (0) target = $region133
    $region132: #{tpu_custom_call.1} parent=1 // pred_region
      %267 = dma.done [#allocation7], 128
    $region133: #{tpu_custom_call.1} parent=1 // pred_fallthru
      _
    // Predicated region
    $region134: #{tpu_custom_call.1} parent=1 // pred_check
      _
    $region135: #{tpu_custom_call.1} parent=1 // pred_check_branch
      %269 = sbr.rel (0) target = $region137
    $region136: #{tpu_custom_call.1} parent=1 // pred_region
      %270 = dma.done [#allocation10], 128
    $region137: #{tpu_custom_call.1} parent=1 // pred_fallthru
      _
    // Predicated region
    $region138: #{tpu_custom_call.1} parent=1 // pred_check
      _
    $region139: #{tpu_custom_call.1} parent=1 // pred_check_branch
      %272 = sbr.rel (0) target = $region141
    $region140: #{tpu_custom_call.1} parent=1 // pred_region
      %273 = dma.done [#allocation10], 16
    $region141: #{tpu_custom_call.1} parent=1 // pred_fallthru
      _
    // Predicated region
    $region142: #{tpu_custom_call.1} parent=1 // pred_check
      _
    $region143: #{tpu_custom_call.1} parent=1 // pred_check_branch
      %275 = sbr.rel (0) target = $region145
    $region144: #{tpu_custom_call.1} parent=1 // pred_region
      %276 = dma.done [#allocation13], 16
    $region145: #{tpu_custom_call.1} parent=1 // pred_fallthru
      _
    // Predicated region
    $region146: #{tpu_custom_call.1} parent=1 // pred_check
      _
    $region147: #{tpu_custom_call.1} parent=1 // pred_check_branch
      %278 = sbr.rel (0) target = $region149
    $region148: #{tpu_custom_call.1} parent=1 // pred_region
      %279 = dma.done [#allocation13], 16
    $region149: #{tpu_custom_call.1} parent=1 // pred_fallthru
      _
    // Predicated region
    $region150: #{tpu_custom_call.1} parent=1 // pred_check
      _
    $region151: #{tpu_custom_call.1} parent=1 // pred_check_branch
      %281 = sbr.rel (0) target = $region153
    $region152: #{tpu_custom_call.1} parent=1 // pred_region
      %282 = dma.done [#allocation16], 16
    $region153: #{tpu_custom_call.1} parent=1 // pred_fallthru
      _
    // Predicated region
    $region154: #{tpu_custom_call.1} parent=1 // pred_check
      _
    $region155: #{tpu_custom_call.1} parent=1 // pred_check_branch
      %284 = sbr.rel (0) target = $region157
    $region156: #{tpu_custom_call.1} parent=1 // pred_region
      %285 = dma.done [#allocation16], 16
    $region157: #{tpu_custom_call.1} parent=1 // pred_fallthru
      _
    // Predicated region
    $region158: #{tpu_custom_call.1} parent=1 // pred_check
      _
    $region159: #{tpu_custom_call.1} parent=1 // pred_check_branch
      %287 = sbr.rel (0) target = $region161
    $region160: #{tpu_custom_call.1} parent=1 // pred_region
      %288 = dma.done [#allocation19], 16
    $region161: #{tpu_custom_call.1} parent=1 // pred_fallthru
      _
    // Predicated region
    $region162: #{tpu_custom_call.1} parent=1 // pred_check
      _
    $region163: #{tpu_custom_call.1} parent=1 // pred_check_branch
      %290 = sbr.rel (0) target = $region165
    $region164: #{tpu_custom_call.1} parent=1 // pred_region
      %291 = dma.done [#allocation19], 256
    $region165: #{tpu_custom_call.1} parent=1 // pred_fallthru
      _
    // Predicated region
    $region166: #{tpu_custom_call.1} parent=1 // pred_check
      _
    $region167: #{tpu_custom_call.1} parent=1 // pred_check_branch
      %293 = sbr.rel (0) target = $region169
    $region168: #{tpu_custom_call.1} parent=1 // pred_region
      %294 = dma.done [#allocation22], 256
    $region169: #{tpu_custom_call.1} parent=1 // pred_fallthru
      _
    // Predicated region
    $region170: #{tpu_custom_call.1} parent=1 // pred_check
      _
    $region171: #{tpu_custom_call.1} parent=1 // pred_check_branch
      %296 = sbr.rel (0) target = $region173
    $region172: #{tpu_custom_call.1} parent=1 // pred_region
      %297 = dma.done [#allocation22], 16
    $region173: #{tpu_custom_call.1} parent=1 // pred_fallthru
      _
    // Predicated region
    $region174: #{tpu_custom_call.1} parent=1 // pred_check
      _
    $region175: #{tpu_custom_call.1} parent=1 // pred_check_branch
      %299 = sbr.rel (0) target = $region177
    $region176: #{tpu_custom_call.1} parent=1 // pred_region
      %300 = dma.done [#allocation25], 16
    $region177: #{tpu_custom_call.1} parent=1 // pred_fallthru
      _
    %v302 = vld [vmem:[#allocation3] sm:$0xf]
    %v303 = vld [vmem:[#allocation3 + $0x4] sm:$0xf]
    %v304 = vunpack.c.l.bf16 %v302
    %v305 = vunpack.c.l.bf16 %v303
    %v306 = vld [vmem:[#allocation6] sm:$0xf]
    %v307 = vld [vmem:[#allocation6 + $0x4] sm:$0xf]
    %v308 = vld [vmem:[#allocation8] sm:$0xf]
    %v309 = vld [vmem:[#allocation8 + $0x4] sm:$0xf]
    %v310 = vunpack.c.l.bf16 %v308
    %v311 = vunpack.c.l.bf16 %v309
    %v312 = vld [vmem:[%s9] sm:$0xf]
    %v313 = vld [vmem:[%s9 + $0x4] sm:$0xf]
    %v314 = vld [vmem:[%s9 + $0x8] sm:$0xf]
    %v315 = vld [vmem:[%s9 + $0xc] sm:$0xf]
    %v316 = vld [vmem:[#allocation11] sm:$0x1]
    %v318 = vlaneseq
    %v319 = vshrl.u32 %v318, 7
    %v320 = vsub.s32 0, %v319
    %v321 = vrot.slane %v316, %v320
    %v325 = vunpack.c.l.b16 %v302
    %v326 = vunpack.c.l.b16 %v303
    %v327 = vpack.c.b16 %v326, %v325
    %v332 = vunpack.c.l.b16 %v312
    %v333 = vunpack.c.l.b16 %v313
    %v334 = vunpack.c.l.b16 %v314
    %v335 = vunpack.c.l.b16 %v315
    %v336 = vpack.c.b16 %v333, %v332
    %v337 = vpack.c.b16 %v335, %v334
    %vm340 = vcmask 261120
    %v342 = vsel %vm340, %v327, 0
    %344 = vmatprep.subr.bf16.mxu0 0
    %345 = vmatpush1.bf16.msra.mxu0 %v336
    %346 = vmatprep.subr.bf16.mxu0 0
    %347 = vmatpush1.bf16.msra.mxu0 %v337
    %348 = vmatprep.subr.bf16.mxu0 0
    %349 = vmatpush1.bf16.msra.mxu0 0
    %350 = vmatprep.subr.bf16.mxu0 0
    %351 = vmatpush1.bf16.msra.mxu0 0
    %352 = vmatprep.subr.bf16.mxu0 0
    %353 = vmatpush1.bf16.msra.mxu0 0
    %354 = vmatprep.subr.bf16.mxu0 0
    %355 = vmatpush1.bf16.msra.mxu0 0
    %356 = vmatprep.subr.bf16.mxu0 0
    %357 = vmatpush1.bf16.msra.mxu0 0
    %358 = vmatprep.subr.bf16.mxu0 0
    %359 = vmatpush1.bf16.msra.mxu0 0
    %360 = vmatprep.subr.bf16.mxu0 0
    %361 = vmatpush1.bf16.msra.mxu0 0
    %362 = vmatprep.subr.bf16.mxu0 0
    %363 = vmatpush1.bf16.msra.mxu0 0
    %364 = vmatprep.subr.bf16.mxu0 0
    %365 = vmatpush1.bf16.msra.mxu0 0
    %366 = vmatprep.subr.bf16.mxu0 0
    %367 = vmatpush1.bf16.msra.mxu0 0
    %368 = vmatprep.subr.bf16.mxu0 0
    %369 = vmatpush1.bf16.msra.mxu0 0
    %370 = vmatprep.subr.bf16.mxu0 0
    %371 = vmatpush1.bf16.msra.mxu0 0
    %372 = vmatprep.subr.bf16.mxu0 0
    %373 = vmatpush1.bf16.msra.mxu0 0
    %374 = vmatprep.subr.bf16.mxu0 0
    %375 = vmatpush1.bf16.msra.mxu0 0
    %376 = vmatprep.mubr.bf16.mxu0 0
    %377 = vmatmul.mubr.bf16.gmra.mrb[0].mxu0 %v342
    %v378 = vpop.f32.mrb[0].mxu0
    %v379 = vadd.f32 %v321, %v378
    %v380 = vpop.f32.mrb[0].mxu0
    %v381 = vpop.f32.mrb[0].mxu0
    %v382 = vadd.f32 %v321, %v381
    %v383 = vpop.f32.mrb[0].mxu0
    %384 = vdwg.mxu0
    %v385 = vpack.c.bf16 %v382, %v379
    %v387 = vunpack.c.l.b16 %v385
    %v388 = vunpack.c.h.b16 %v385
    %v389 = vpack.c.b16 %v387, %v387
    %v390 = vpack.c.b16 %v388, %v388
    %v391 = vld [vmem:[%s11] sm:$0xf]
    %v392 = vld [vmem:[%s11 + $0x4] sm:$0xf]
    %v393 = vld [vmem:[%s11 + $0x8] sm:$0xf]
    %v394 = vld [vmem:[%s11 + $0xc] sm:$0xf]
    %v395 = vld [vmem:[#allocation12] sm:$0x1]
    %v397 = vlaneseq
    %v398 = vshrl.u32 %v397, 7
    %v399 = vsub.s32 0, %v398
    %v400 = vrot.slane %v395, %v399
    %v406 = vunpack.c.l.b16 %v391
    %v407 = vunpack.c.l.b16 %v392
    %v408 = vunpack.c.l.b16 %v393
    %v409 = vunpack.c.l.b16 %v394
    %v410 = vpack.c.b16 %v407, %v406
    %v411 = vpack.c.b16 %v409, %v408
    %414 = vmatprep.subr.bf16.mxu0 0
    %415 = vmatpush1.bf16.msra.mxu0 %v410
    %416 = vmatprep.subr.bf16.mxu0 0
    %417 = vmatpush1.bf16.msra.mxu0 %v411
    %418 = vmatprep.subr.bf16.mxu0 0
    %419 = vmatpush1.bf16.msra.mxu0 0
    %420 = vmatprep.subr.bf16.mxu0 0
    %421 = vmatpush1.bf16.msra.mxu0 0
    %422 = vmatprep.subr.bf16.mxu0 0
    %423 = vmatpush1.bf16.msra.mxu0 0
    %424 = vmatprep.subr.bf16.mxu0 0
    %425 = vmatpush1.bf16.msra.mxu0 0
    %426 = vmatprep.subr.bf16.mxu0 0
    %427 = vmatpush1.bf16.msra.mxu0 0
    %428 = vmatprep.subr.bf16.mxu0 0
    %429 = vmatpush1.bf16.msra.mxu0 0
    %430 = vmatprep.subr.bf16.mxu0 0
    %431 = vmatpush1.bf16.msra.mxu0 0
    %432 = vmatprep.subr.bf16.mxu0 0
    %433 = vmatpush1.bf16.msra.mxu0 0
    %434 = vmatprep.subr.bf16.mxu0 0
    %435 = vmatpush1.bf16.msra.mxu0 0
    %436 = vmatprep.subr.bf16.mxu0 0
    %437 = vmatpush1.bf16.msra.mxu0 0
    %438 = vmatprep.subr.bf16.mxu0 0
    %439 = vmatpush1.bf16.msra.mxu0 0
    %440 = vmatprep.subr.bf16.mxu0 0
    %441 = vmatpush1.bf16.msra.mxu0 0
    %442 = vmatprep.subr.bf16.mxu0 0
    %443 = vmatpush1.bf16.msra.mxu0 0
    %444 = vmatprep.subr.bf16.mxu0 0
    %445 = vmatpush1.bf16.msra.mxu0 0
    %446 = vmatprep.mubr.bf16.mxu0 0
    %447 = vmatmul.mubr.bf16.gmra.mrb[0].mxu0 %v342
    %v448 = vpop.f32.mrb[0].mxu0
    %v449 = vadd.f32 %v400, %v448
    %v450 = vpop.f32.mrb[0].mxu0
    %v451 = vpop.f32.mrb[0].mxu0
    %v452 = vadd.f32 %v400, %v451
    %v453 = vpop.f32.mrb[0].mxu0
    %454 = vdwg.mxu0
    %v455 = vpack.c.bf16 %v452, %v449
    %v457 = vunpack.c.l.b16 %v455
    %v458 = vunpack.c.h.b16 %v455
    %v459 = vpack.c.b16 %v457, %v457
    %v460 = vpack.c.b16 %v458, %v458
    %v461 = vld [vmem:[%s13] sm:$0xf]
    %v462 = vld [vmem:[%s13 + $0x4] sm:$0xf]
    %v463 = vld [vmem:[%s13 + $0x8] sm:$0xf]
    %v464 = vld [vmem:[%s13 + $0xc] sm:$0xf]
    %v465 = vld [vmem:[#allocation14] sm:$0x1]
    %v467 = vlaneseq
    %v468 = vshrl.u32 %v467, 7
    %v469 = vsub.s32 0, %v468
    %v470 = vrot.slane %v465, %v469
    %v476 = vunpack.c.l.b16 %v461
    %v477 = vunpack.c.l.b16 %v462
    %v478 = vunpack.c.l.b16 %v463
    %v479 = vunpack.c.l.b16 %v464
    %v480 = vpack.c.b16 %v477, %v476
    %v481 = vpack.c.b16 %v479, %v478
    %484 = vmatprep.subr.bf16.mxu0 0
    %485 = vmatpush1.bf16.msra.mxu0 %v480
    %486 = vmatprep.subr.bf16.mxu0 0
    %487 = vmatpush1.bf16.msra.mxu0 %v481
    %488 = vmatprep.subr.bf16.mxu0 0
    %489 = vmatpush1.bf16.msra.mxu0 0
    %490 = vmatprep.subr.bf16.mxu0 0
    %491 = vmatpush1.bf16.msra.mxu0 0
    %492 = vmatprep.subr.bf16.mxu0 0
    %493 = vmatpush1.bf16.msra.mxu0 0
    %494 = vmatprep.subr.bf16.mxu0 0
    %495 = vmatpush1.bf16.msra.mxu0 0
    %496 = vmatprep.subr.bf16.mxu0 0
    %497 = vmatpush1.bf16.msra.mxu0 0
    %498 = vmatprep.subr.bf16.mxu0 0
    %499 = vmatpush1.bf16.msra.mxu0 0
    %500 = vmatprep.subr.bf16.mxu0 0
    %501 = vmatpush1.bf16.msra.mxu0 0
    %502 = vmatprep.subr.bf16.mxu0 0
    %503 = vmatpush1.bf16.msra.mxu0 0
    %504 = vmatprep.subr.bf16.mxu0 0
    %505 = vmatpush1.bf16.msra.mxu0 0
    %506 = vmatprep.subr.bf16.mxu0 0
    %507 = vmatpush1.bf16.msra.mxu0 0
    %508 = vmatprep.subr.bf16.mxu0 0
    %509 = vmatpush1.bf16.msra.mxu0 0
    %510 = vmatprep.subr.bf16.mxu0 0
    %511 = vmatpush1.bf16.msra.mxu0 0
    %512 = vmatprep.subr.bf16.mxu0 0
    %513 = vmatpush1.bf16.msra.mxu0 0
    %514 = vmatprep.subr.bf16.mxu0 0
    %515 = vmatpush1.bf16.msra.mxu0 0
    %516 = vmatprep.mubr.bf16.mxu0 0
    %517 = vmatmul.mubr.bf16.gmra.mrb[0].mxu0 %v342
    %v518 = vpop.f32.mrb[0].mxu0
    %v519 = vadd.f32 %v470, %v518
    %v520 = vpop.f32.mrb[0].mxu0
    %v521 = vpop.f32.mrb[0].mxu0
    %v522 = vadd.f32 %v470, %v521
    %v523 = vpop.f32.mrb[0].mxu0
    %524 = vdwg.mxu0
    %v525 = vpack.c.bf16 %v522, %v519
    %v527 = vunpack.c.l.b16 %v525
    %v528 = vunpack.c.h.b16 %v525
    %v529 = vpack.c.b16 %v527, %v527
    %v530 = vpack.c.b16 %v528, %v528
    %vm531 = vcmask 64512
    %v533 = vsel %vm531, %v389, 0
    %v536 = vsel %vm531, %v459, 0
    %538 = vmatprep.subr.bf16.mxu0 0
    %539 = vmatpush1.bf16.xpose.msra.mxu0 %v536
    %540 = vmatprep.subr.bf16.mxu0 0
    %541 = vmatpush1.bf16.xpose.msra.mxu0 0
    %542 = vmatprep.subr.bf16.mxu0 0
    %543 = vmatpush1.bf16.xpose.msra.mxu0 0
    %544 = vmatprep.subr.bf16.mxu0 0
    %545 = vmatpush1.bf16.xpose.msra.mxu0 0
    %546 = vmatprep.subr.bf16.mxu0 0
    %547 = vmatpush1.bf16.xpose.msra.mxu0 0
    %548 = vmatprep.subr.bf16.mxu0 0
    %549 = vmatpush1.bf16.xpose.msra.mxu0 0
    %550 = vmatprep.subr.bf16.mxu0 0
    %551 = vmatpush1.bf16.xpose.msra.mxu0 0
    %552 = vmatprep.subr.bf16.mxu0 0
    %553 = vmatpush1.bf16.xpose.msra.mxu0 0
    %554 = vmatprep.subr.bf16.mxu0 0
    %555 = vmatpush1.bf16.xpose.msra.mxu0 0
    %556 = vmatprep.subr.bf16.mxu0 0
    %557 = vmatpush1.bf16.xpose.msra.mxu0 0
    %558 = vmatprep.subr.bf16.mxu0 0
    %559 = vmatpush1.bf16.xpose.msra.mxu0 0
    %560 = vmatprep.subr.bf16.mxu0 0
    %561 = vmatpush1.bf16.xpose.msra.mxu0 0
    %562 = vmatprep.subr.bf16.mxu0 0
    %563 = vmatpush1.bf16.xpose.msra.mxu0 0
    %564 = vmatprep.subr.bf16.mxu0 0
    %565 = vmatpush1.bf16.xpose.msra.mxu0 0
    %566 = vmatprep.subr.bf16.mxu0 0
    %567 = vmatpush1.bf16.xpose.msra.mxu0 0
    %568 = vmatprep.subr.bf16.mxu0 0
    %569 = vmatpush1.bf16.xpose.msra.mxu0 0
    %570 = vmatprep.mubr.bf16.mxu0 0
    %571 = vmatmul.mubr.bf16.gmra.mrb[0].mxu0 %v533
    %v572 = vpop.f32.mrb[0].mxu0
    %v573 = vadd.f32 %v310, %v572
    %v574 = vpop.f32.mrb[0].mxu0
    %v575 = vpop.f32.mrb[0].mxu0
    %v576 = vpop.f32.mrb[0].mxu0
    %577 = vdwg.mxu0
    %v579 = vsel %vm531, %v390, 0
    %v582 = vsel %vm531, %v460, 0
    %584 = vmatprep.subr.bf16.mxu0 0
    %585 = vmatpush1.bf16.xpose.msra.mxu0 %v582
    %586 = vmatprep.subr.bf16.mxu0 0
    %587 = vmatpush1.bf16.xpose.msra.mxu0 0
    %588 = vmatprep.subr.bf16.mxu0 0
    %589 = vmatpush1.bf16.xpose.msra.mxu0 0
    %590 = vmatprep.subr.bf16.mxu0 0
    %591 = vmatpush1.bf16.xpose.msra.mxu0 0
    %592 = vmatprep.subr.bf16.mxu0 0
    %593 = vmatpush1.bf16.xpose.msra.mxu0 0
    %594 = vmatprep.subr.bf16.mxu0 0
    %595 = vmatpush1.bf16.xpose.msra.mxu0 0
    %596 = vmatprep.subr.bf16.mxu0 0
    %597 = vmatpush1.bf16.xpose.msra.mxu0 0
    %598 = vmatprep.subr.bf16.mxu0 0
    %599 = vmatpush1.bf16.xpose.msra.mxu0 0
    %600 = vmatprep.subr.bf16.mxu0 0
    %601 = vmatpush1.bf16.xpose.msra.mxu0 0
    %602 = vmatprep.subr.bf16.mxu0 0
    %603 = vmatpush1.bf16.xpose.msra.mxu0 0
    %604 = vmatprep.subr.bf16.mxu0 0
    %605 = vmatpush1.bf16.xpose.msra.mxu0 0
    %606 = vmatprep.subr.bf16.mxu0 0
    %607 = vmatpush1.bf16.xpose.msra.mxu0 0
    %608 = vmatprep.subr.bf16.mxu0 0
    %609 = vmatpush1.bf16.xpose.msra.mxu0 0
    %610 = vmatprep.subr.bf16.mxu0 0
    %611 = vmatpush1.bf16.xpose.msra.mxu0 0
    %612 = vmatprep.subr.bf16.mxu0 0
    %613 = vmatpush1.bf16.xpose.msra.mxu0 0
    %614 = vmatprep.subr.bf16.mxu0 0
    %615 = vmatpush1.bf16.xpose.msra.mxu0 0
    %616 = vmatprep.mubr.bf16.mxu0 0
    %617 = vmatmul.mubr.bf16.gmra.mrb[0].mxu0 %v579
    %v618 = vpop.f32.mrb[0].mxu0
    %v619 = vadd.f32 %v311, %v618
    %v620 = vpop.f32.mrb[0].mxu0
    %v621 = vpop.f32.mrb[0].mxu0
    %v622 = vpop.f32.mrb[0].mxu0
    %623 = vdwg.mxu0
    %v624 = vsel %vm531, %v573, -inf
    %625 = vmax.xlane.f32.xlu0 %v624
    %v626 = vpop.xlane.xlu0 %625
    %v627 = vsel %vm531, %v619, -inf
    %628 = vmax.xlane.f32.xlu0 %v627
    %v629 = vpop.xlane.xlu0 %628
    %v630 = vsub.f32 %v573, %v626
    %v631 = vsub.f32 %v619, %v629
    %v632 = vmul.f32 %v630, 1.442695
    %v633 = vpow.pop %v632
    %v634 = vmul.f32 %v631, 1.442695
    %v635 = vpow.pop %v634
    %v636 = vsel %vm531, %v633, 0.0
    %637 = vadd.xlane.f32.xlu0 %v636
    %v638 = vpop.xlane.xlu0 %637
    %v639 = vsel %vm531, %v635, 0.0
    %640 = vadd.xlane.f32.xlu0 %v639
    %v641 = vpop.xlane.xlu0 %640
    %v642 = vrcp.pop %v638
    %v643 = vrcp.pop %v641
    %v644 = vmul.f32 %v633, %v642
    %v645 = vmul.f32 %v635, %v643
    %v646 = vpack.c.bf16 %v644, %v644
    %v647 = vpack.c.bf16 %v645, %v645
    %v649 = vsel %vm531, %v646, 0
    %vm651 = vcmask 1043456
    %v653 = vsel %vm651, %v529, 0
    %655 = vmatprep.subr.bf16.mxu0 0
    %656 = vmatpush1.bf16.msra.mxu0 %v653
    %657 = vmatprep.subr.bf16.mxu0 0
    %658 = vmatpush1.bf16.msra.mxu0 0
    %659 = vmatprep.subr.bf16.mxu0 0
    %660 = vmatpush1.bf16.msra.mxu0 0
    %661 = vmatprep.subr.bf16.mxu0 0
    %662 = vmatpush1.bf16.msra.mxu0 0
    %663 = vmatprep.subr.bf16.mxu0 0
    %664 = vmatpush1.bf16.msra.mxu0 0
    %665 = vmatprep.subr.bf16.mxu0 0
    %666 = vmatpush1.bf16.msra.mxu0 0
    %667 = vmatprep.subr.bf16.mxu0 0
    %668 = vmatpush1.bf16.msra.mxu0 0
    %669 = vmatprep.subr.bf16.mxu0 0
    %670 = vmatpush1.bf16.msra.mxu0 0
    %671 = vmatprep.subr.bf16.mxu0 0
    %672 = vmatpush1.bf16.msra.mxu0 0
    %673 = vmatprep.subr.bf16.mxu0 0
    %674 = vmatpush1.bf16.msra.mxu0 0
    %675 = vmatprep.subr.bf16.mxu0 0
    %676 = vmatpush1.bf16.msra.mxu0 0
    %677 = vmatprep.subr.bf16.mxu0 0
    %678 = vmatpush1.bf16.msra.mxu0 0
    %679 = vmatprep.subr.bf16.mxu0 0
    %680 = vmatpush1.bf16.msra.mxu0 0
    %681 = vmatprep.subr.bf16.mxu0 0
    %682 = vmatpush1.bf16.msra.mxu0 0
    %683 = vmatprep.subr.bf16.mxu0 0
    %684 = vmatpush1.bf16.msra.mxu0 0
    %685 = vmatprep.subr.bf16.mxu0 0
    %686 = vmatpush1.bf16.msra.mxu0 0
    %687 = vmatprep.mubr.bf16.mxu0 0
    %688 = vmatmul.mubr.bf16.gmra.mrb[0].mxu0 %v649
    %v689 = vpop.f32.mrb[0].mxu0
    %v690 = vadd.f32 0.0, %v689
    %v691 = vpop.f32.mrb[0].mxu0
    %v692 = vpop.f32.mrb[0].mxu0
    %v693 = vpop.f32.mrb[0].mxu0
    %694 = vdwg.mxu0
    %v696 = vsel %vm531, %v647, 0
    %v699 = vsel %vm651, %v530, 0
    %701 = vmatprep.subr.bf16.mxu0 0
    %702 = vmatpush1.bf16.msra.mxu0 %v699
    %703 = vmatprep.subr.bf16.mxu0 0
    %704 = vmatpush1.bf16.msra.mxu0 0
    %705 = vmatprep.subr.bf16.mxu0 0
    %706 = vmatpush1.bf16.msra.mxu0 0
    %707 = vmatprep.subr.bf16.mxu0 0
    %708 = vmatpush1.bf16.msra.mxu0 0
    %709 = vmatprep.subr.bf16.mxu0 0
    %710 = vmatpush1.bf16.msra.mxu0 0
    %711 = vmatprep.subr.bf16.mxu0 0
    %712 = vmatpush1.bf16.msra.mxu0 0
    %713 = vmatprep.subr.bf16.mxu0 0
    %714 = vmatpush1.bf16.msra.mxu0 0
    %715 = vmatprep.subr.bf16.mxu0 0
    %716 = vmatpush1.bf16.msra.mxu0 0
    %717 = vmatprep.subr.bf16.mxu0 0
    %718 = vmatpush1.bf16.msra.mxu0 0
    %719 = vmatprep.subr.bf16.mxu0 0
    %720 = vmatpush1.bf16.msra.mxu0 0
    %721 = vmatprep.subr.bf16.mxu0 0
    %722 = vmatpush1.bf16.msra.mxu0 0
    %723 = vmatprep.subr.bf16.mxu0 0
    %724 = vmatpush1.bf16.msra.mxu0 0
    %725 = vmatprep.subr.bf16.mxu0 0
    %726 = vmatpush1.bf16.msra.mxu0 0
    %727 = vmatprep.subr.bf16.mxu0 0
    %728 = vmatpush1.bf16.msra.mxu0 0
    %729 = vmatprep.subr.bf16.mxu0 0
    %730 = vmatpush1.bf16.msra.mxu0 0
    %731 = vmatprep.subr.bf16.mxu0 0
    %732 = vmatpush1.bf16.msra.mxu0 0
    %733 = vmatprep.mubr.bf16.mxu0 0
    %734 = vmatmul.mubr.bf16.gmra.mrb[0].mxu0 %v696
    %v735 = vpop.f32.mrb[0].mxu0
    %v736 = vadd.f32 0.0, %v735
    %v737 = vpop.f32.mrb[0].mxu0
    %v738 = vpop.f32.mrb[0].mxu0
    %v739 = vpop.f32.mrb[0].mxu0
    %740 = vdwg.mxu0
    %v741 = vpack.c.bf16 %v736, %v690
    %742 = vst.msk [vmem:[#allocation2] sm:$0xff] %vm531, %v741
    %743 = vrot.lane.b32.xlu0 %v389, 120
    %v744 = vpop.permute.xlu0 %743
    %745 = vrot.lane.b32.xlu0 %v459, 120
    %v746 = vpop.permute.xlu0 %745
    %v748 = vsel %vm531, %v744, 0
    %v751 = vsel %vm531, %v746, 0
    %753 = vmatprep.subr.bf16.mxu0 0
    %754 = vmatpush1.bf16.xpose.msra.mxu0 %v751
    %755 = vmatprep.subr.bf16.mxu0 0
    %756 = vmatpush1.bf16.xpose.msra.mxu0 0
    %757 = vmatprep.subr.bf16.mxu0 0
    %758 = vmatpush1.bf16.xpose.msra.mxu0 0
    %759 = vmatprep.subr.bf16.mxu0 0
    %760 = vmatpush1.bf16.xpose.msra.mxu0 0
    %761 = vmatprep.subr.bf16.mxu0 0
    %762 = vmatpush1.bf16.xpose.msra.mxu0 0
    %763 = vmatprep.subr.bf16.mxu0 0
    %764 = vmatpush1.bf16.xpose.msra.mxu0 0
    %765 = vmatprep.subr.bf16.mxu0 0
    %766 = vmatpush1.bf16.xpose.msra.mxu0 0
    %767 = vmatprep.subr.bf16.mxu0 0
    %768 = vmatpush1.bf16.xpose.msra.mxu0 0
    %769 = vmatprep.subr.bf16.mxu0 0
    %770 = vmatpush1.bf16.xpose.msra.mxu0 0
    %771 = vmatprep.subr.bf16.mxu0 0
    %772 = vmatpush1.bf16.xpose.msra.mxu0 0
    %773 = vmatprep.subr.bf16.mxu0 0
    %774 = vmatpush1.bf16.xpose.msra.mxu0 0
    %775 = vmatprep.subr.bf16.mxu0 0
    %776 = vmatpush1.bf16.xpose.msra.mxu0 0
    %777 = vmatprep.subr.bf16.mxu0 0
    %778 = vmatpush1.bf16.xpose.msra.mxu0 0
    %779 = vmatprep.subr.bf16.mxu0 0
    %780 = vmatpush1.bf16.xpose.msra.mxu0 0
    %781 = vmatprep.subr.bf16.mxu0 0
    %782 = vmatpush1.bf16.xpose.msra.mxu0 0
    %783 = vmatprep.subr.bf16.mxu0 0
    %784 = vmatpush1.bf16.xpose.msra.mxu0 0
    %785 = vmatprep.mubr.bf16.mxu0 0
    %786 = vmatmul.mubr.bf16.gmra.mrb[0].mxu0 %v748
    %v787 = vpop.f32.mrb[0].mxu0
    %v788 = vadd.f32 %v310, %v787
    %v789 = vpop.f32.mrb[0].mxu0
    %v790 = vpop.f32.mrb[0].mxu0
    %v791 = vpop.f32.mrb[0].mxu0
    %792 = vdwg.mxu0
    %793 = vrot.lane.b32.xlu0 %v390, 120
    %v794 = vpop.permute.xlu0 %793
    %795 = vrot.lane.b32.xlu0 %v460, 120
    %v796 = vpop.permute.xlu0 %795
    %v798 = vsel %vm531, %v794, 0
    %v801 = vsel %vm531, %v796, 0
    %803 = vmatprep.subr.bf16.mxu0 0
    %804 = vmatpush1.bf16.xpose.msra.mxu0 %v801
    %805 = vmatprep.subr.bf16.mxu0 0
    %806 = vmatpush1.bf16.xpose.msra.mxu0 0
    %807 = vmatprep.subr.bf16.mxu0 0
    %808 = vmatpush1.bf16.xpose.msra.mxu0 0
    %809 = vmatprep.subr.bf16.mxu0 0
    %810 = vmatpush1.bf16.xpose.msra.mxu0 0
    %811 = vmatprep.subr.bf16.mxu0 0
    %812 = vmatpush1.bf16.xpose.msra.mxu0 0
    %813 = vmatprep.subr.bf16.mxu0 0
    %814 = vmatpush1.bf16.xpose.msra.mxu0 0
    %815 = vmatprep.subr.bf16.mxu0 0
    %816 = vmatpush1.bf16.xpose.msra.mxu0 0
    %817 = vmatprep.subr.bf16.mxu0 0
    %818 = vmatpush1.bf16.xpose.msra.mxu0 0
    %819 = vmatprep.subr.bf16.mxu0 0
    %820 = vmatpush1.bf16.xpose.msra.mxu0 0
    %821 = vmatprep.subr.bf16.mxu0 0
    %822 = vmatpush1.bf16.xpose.msra.mxu0 0
    %823 = vmatprep.subr.bf16.mxu0 0
    %824 = vmatpush1.bf16.xpose.msra.mxu0 0
    %825 = vmatprep.subr.bf16.mxu0 0
    %826 = vmatpush1.bf16.xpose.msra.mxu0 0
    %827 = vmatprep.subr.bf16.mxu0 0
    %828 = vmatpush1.bf16.xpose.msra.mxu0 0
    %829 = vmatprep.subr.bf16.mxu0 0
    %830 = vmatpush1.bf16.xpose.msra.mxu0 0
    %831 = vmatprep.subr.bf16.mxu0 0
    %832 = vmatpush1.bf16.xpose.msra.mxu0 0
    %833 = vmatprep.subr.bf16.mxu0 0
    %834 = vmatpush1.bf16.xpose.msra.mxu0 0
    %835 = vmatprep.mubr.bf16.mxu0 0
    %836 = vmatmul.mubr.bf16.gmra.mrb[0].mxu0 %v798
    %v837 = vpop.f32.mrb[0].mxu0
    %v838 = vadd.f32 %v311, %v837
    %v839 = vpop.f32.mrb[0].mxu0
    %v840 = vpop.f32.mrb[0].mxu0
    %v841 = vpop.f32.mrb[0].mxu0
    %842 = vdwg.mxu0
    %v843 = vsel %vm531, %v788, -inf
    %844 = vmax.xlane.f32.xlu0 %v843
    %v845 = vpop.xlane.xlu0 %844
    %v846 = vsel %vm531, %v838, -inf
    %847 = vmax.xlane.f32.xlu0 %v846
    %v848 = vpop.xlane.xlu0 %847
    %v849 = vsub.f32 %v788, %v845
    %v850 = vsub.f32 %v838, %v848
    %v851 = vmul.f32 %v849, 1.442695
    %v852 = vpow.pop %v851
    %v853 = vmul.f32 %v850, 1.442695
    %v854 = vpow.pop %v853
    %v855 = vsel %vm531, %v852, 0.0
    %856 = vadd.xlane.f32.xlu0 %v855
    %v857 = vpop.xlane.xlu0 %856
    %v858 = vsel %vm531, %v854, 0.0
    %859 = vadd.xlane.f32.xlu0 %v858
    %v860 = vpop.xlane.xlu0 %859
    %v861 = vrcp.pop %v857
    %v862 = vrcp.pop %v860
    %v863 = vmul.f32 %v852, %v861
    %v864 = vmul.f32 %v854, %v862
    %v865 = vpack.c.bf16 %v863, %v863
    %v866 = vpack.c.bf16 %v864, %v864
    %867 = vrot.lane.b32.xlu0 %v529, 120
    %v868 = vpop.permute.xlu0 %867
    %v870 = vsel %vm531, %v865, 0
    %v873 = vsel %vm651, %v868, 0
    %875 = vmatprep.subr.bf16.mxu0 0
    %876 = vmatpush1.bf16.msra.mxu0 %v873
    %877 = vmatprep.subr.bf16.mxu0 0
    %878 = vmatpush1.bf16.msra.mxu0 0
    %879 = vmatprep.subr.bf16.mxu0 0
    %880 = vmatpush1.bf16.msra.mxu0 0
    %881 = vmatprep.subr.bf16.mxu0 0
    %882 = vmatpush1.bf16.msra.mxu0 0
    %883 = vmatprep.subr.bf16.mxu0 0
    %884 = vmatpush1.bf16.msra.mxu0 0
    %885 = vmatprep.subr.bf16.mxu0 0
    %886 = vmatpush1.bf16.msra.mxu0 0
    %887 = vmatprep.subr.bf16.mxu0 0
    %888 = vmatpush1.bf16.msra.mxu0 0
    %889 = vmatprep.subr.bf16.mxu0 0
    %890 = vmatpush1.bf16.msra.mxu0 0
    %891 = vmatprep.subr.bf16.mxu0 0
    %892 = vmatpush1.bf16.msra.mxu0 0
    %893 = vmatprep.subr.bf16.mxu0 0
    %894 = vmatpush1.bf16.msra.mxu0 0
    %895 = vmatprep.subr.bf16.mxu0 0
    %896 = vmatpush1.bf16.msra.mxu0 0
    %897 = vmatprep.subr.bf16.mxu0 0
    %898 = vmatpush1.bf16.msra.mxu0 0
    %899 = vmatprep.subr.bf16.mxu0 0
    %900 = vmatpush1.bf16.msra.mxu0 0
    %901 = vmatprep.subr.bf16.mxu0 0
    %902 = vmatpush1.bf16.msra.mxu0 0
    %903 = vmatprep.subr.bf16.mxu0 0
    %904 = vmatpush1.bf16.msra.mxu0 0
    %905 = vmatprep.subr.bf16.mxu0 0
    %906 = vmatpush1.bf16.msra.mxu0 0
    %907 = vmatprep.mubr.bf16.mxu0 0
    %908 = vmatmul.mubr.bf16.gmra.mrb[0].mxu0 %v870
    %v909 = vpop.f32.mrb[0].mxu0
    %v910 = vadd.f32 0.0, %v909
    %v911 = vpop.f32.mrb[0].mxu0
    %v912 = vpop.f32.mrb[0].mxu0
    %v913 = vpop.f32.mrb[0].mxu0
    %914 = vdwg.mxu0
    %915 = vrot.lane.b32.xlu0 %v530, 120
    %v916 = vpop.permute.xlu0 %915
    %v918 = vsel %vm531, %v866, 0
    %v921 = vsel %vm651, %v916, 0
    %923 = vmatprep.subr.bf16.mxu0 0
    %924 = vmatpush1.bf16.msra.mxu0 %v921
    %925 = vmatprep.subr.bf16.mxu0 0
    %926 = vmatpush1.bf16.msra.mxu0 0
    %927 = vmatprep.subr.bf16.mxu0 0
    %928 = vmatpush1.bf16.msra.mxu0 0
    %929 = vmatprep.subr.bf16.mxu0 0
    %930 = vmatpush1.bf16.msra.mxu0 0
    %931 = vmatprep.subr.bf16.mxu0 0
    %932 = vmatpush1.bf16.msra.mxu0 0
    %933 = vmatprep.subr.bf16.mxu0 0
    %934 = vmatpush1.bf16.msra.mxu0 0
    %935 = vmatprep.subr.bf16.mxu0 0
    %936 = vmatpush1.bf16.msra.mxu0 0
    %937 = vmatprep.subr.bf16.mxu0 0
    %938 = vmatpush1.bf16.msra.mxu0 0
    %939 = vmatprep.subr.bf16.mxu0 0
    %940 = vmatpush1.bf16.msra.mxu0 0
    %941 = vmatprep.subr.bf16.mxu0 0
    %942 = vmatpush1.bf16.msra.mxu0 0
    %943 = vmatprep.subr.bf16.mxu0 0
    %944 = vmatpush1.bf16.msra.mxu0 0
    %945 = vmatprep.subr.bf16.mxu0 0
    %946 = vmatpush1.bf16.msra.mxu0 0
    %947 = vmatprep.subr.bf16.mxu0 0
    %948 = vmatpush1.bf16.msra.mxu0 0
    %949 = vmatprep.subr.bf16.mxu0 0
    %950 = vmatpush1.bf16.msra.mxu0 0
    %951 = vmatprep.subr.bf16.mxu0 0
    %952 = vmatpush1.bf16.msra.mxu0 0
    %953 = vmatprep.subr.bf16.mxu0 0
    %954 = vmatpush1.bf16.msra.mxu0 0
    %955 = vmatprep.mubr.bf16.mxu0 0
    %956 = vmatmul.mubr.bf16.gmra.mrb[0].mxu0 %v918
    %v957 = vpop.f32.mrb[0].mxu0
    %v958 = vadd.f32 0.0, %v957
    %v959 = vpop.f32.mrb[0].mxu0
    %v960 = vpop.f32.mrb[0].mxu0
    %v961 = vpop.f32.mrb[0].mxu0
    %962 = vdwg.mxu0
    %v963 = vpack.c.bf16 %v958, %v910
    %965 = vrot.lane.b32.xlu0 %v963, 8
    %v966 = vpop.permute.xlu0 %965
    %vm968 = vcmask 130112
    %969 = vst.msk [vmem:[#allocation2] sm:$0xff] %vm968, %v966
    %970 = vrot.lane.b32.xlu0 %v389, 112
    %v971 = vpop.permute.xlu0 %970
    %972 = vrot.lane.b32.xlu0 %v459, 112
    %v973 = vpop.permute.xlu0 %972
    %v975 = vsel %vm531, %v971, 0
    %v978 = vsel %vm531, %v973, 0
    %980 = vmatprep.subr.bf16.mxu0 0
    %981 = vmatpush1.bf16.xpose.msra.mxu0 %v978
    %982 = vmatprep.subr.bf16.mxu0 0
    %983 = vmatpush1.bf16.xpose.msra.mxu0 0
    %984 = vmatprep.subr.bf16.mxu0 0
    %985 = vmatpush1.bf16.xpose.msra.mxu0 0
    %986 = vmatprep.subr.bf16.mxu0 0
    %987 = vmatpush1.bf16.xpose.msra.mxu0 0
    %988 = vmatprep.subr.bf16.mxu0 0
    %989 = vmatpush1.bf16.xpose.msra.mxu0 0
    %990 = vmatprep.subr.bf16.mxu0 0
    %991 = vmatpush1.bf16.xpose.msra.mxu0 0
    %992 = vmatprep.subr.bf16.mxu0 0
    %993 = vmatpush1.bf16.xpose.msra.mxu0 0
    %994 = vmatprep.subr.bf16.mxu0 0
    %995 = vmatpush1.bf16.xpose.msra.mxu0 0
    %996 = vmatprep.subr.bf16.mxu0 0
    %997 = vmatpush1.bf16.xpose.msra.mxu0 0
    %998 = vmatprep.subr.bf16.mxu0 0
    %999 = vmatpush1.bf16.xpose.msra.mxu0 0
    %1000 = vmatprep.subr.bf16.mxu0 0
    %1001 = vmatpush1.bf16.xpose.msra.mxu0 0
    %1002 = vmatprep.subr.bf16.mxu0 0
    %1003 = vmatpush1.bf16.xpose.msra.mxu0 0
    %1004 = vmatprep.subr.bf16.mxu0 0
    %1005 = vmatpush1.bf16.xpose.msra.mxu0 0
    %1006 = vmatprep.subr.bf16.mxu0 0
    %1007 = vmatpush1.bf16.xpose.msra.mxu0 0
    %1008 = vmatprep.subr.bf16.mxu0 0
    %1009 = vmatpush1.bf16.xpose.msra.mxu0 0
    %1010 = vmatprep.subr.bf16.mxu0 0
    %1011 = vmatpush1.bf16.xpose.msra.mxu0 0
    %1012 = vmatprep.mubr.bf16.mxu0 0
    %1013 = vmatmul.mubr.bf16.gmra.mrb[0].mxu0 %v975
    %v1014 = vpop.f32.mrb[0].mxu0
    %v1015 = vadd.f32 %v310, %v1014
    %v1016 = vpop.f32.mrb[0].mxu0
    %v1017 = vpop.f32.mrb[0].mxu0
    %v1018 = vpop.f32.mrb[0].mxu0
    %1019 = vdwg.mxu0
    %1020 = vrot.lane.b32.xlu0 %v390, 112
    %v1021 = vpop.permute.xlu0 %1020
    %1022 = vrot.lane.b32.xlu0 %v460, 112
    %v1023 = vpop.permute.xlu0 %1022
    %v1025 = vsel %vm531, %v1021, 0
    %v1028 = vsel %vm531, %v1023, 0
    %1030 = vmatprep.subr.bf16.mxu0 0
    %1031 = vmatpush1.bf16.xpose.msra.mxu0 %v1028
    %1032 = vmatprep.subr.bf16.mxu0 0
    %1033 = vmatpush1.bf16.xpose.msra.mxu0 0
    %1034 = vmatprep.subr.bf16.mxu0 0
    %1035 = vmatpush1.bf16.xpose.msra.mxu0 0
    %1036 = vmatprep.subr.bf16.mxu0 0
    %1037 = vmatpush1.bf16.xpose.msra.mxu0 0
    %1038 = vmatprep.subr.bf16.mxu0 0
    %1039 = vmatpush1.bf16.xpose.msra.mxu0 0
    %1040 = vmatprep.subr.bf16.mxu0 0
    %1041 = vmatpush1.bf16.xpose.msra.mxu0 0
    %1042 = vmatprep.subr.bf16.mxu0 0
    %1043 = vmatpush1.bf16.xpose.msra.mxu0 0
    %1044 = vmatprep.subr.bf16.mxu0 0
    %1045 = vmatpush1.bf16.xpose.msra.mxu0 0
    %1046 = vmatprep.subr.bf16.mxu0 0
    %1047 = vmatpush1.bf16.xpose.msra.mxu0 0
    %1048 = vmatprep.subr.bf16.mxu0 0
    %1049 = vmatpush1.bf16.xpose.msra.mxu0 0
    %1050 = vmatprep.subr.bf16.mxu0 0
    %1051 = vmatpush1.bf16.xpose.msra.mxu0 0
    %1052 = vmatprep.subr.bf16.mxu0 0
    %1053 = vmatpush1.bf16.xpose.msra.mxu0 0
    %1054 = vmatprep.subr.bf16.mxu0 0
    %1055 = vmatpush1.bf16.xpose.msra.mxu0 0
    %1056 = vmatprep.subr.bf16.mxu0 0
    %1057 = vmatpush1.bf16.xpose.msra.mxu0 0
    %1058 = vmatprep.subr.bf16.mxu0 0
    %1059 = vmatpush1.bf16.xpose.msra.mxu0 0
    %1060 = vmatprep.subr.bf16.mxu0 0
    %1061 = vmatpush1.bf16.xpose.msra.mxu0 0
    %1062 = vmatprep.mubr.bf16.mxu0 0
    %1063 = vmatmul.mubr.bf16.gmra.mrb[0].mxu0 %v1025
    %v1064 = vpop.f32.mrb[0].mxu0
    %v1065 = vadd.f32 %v311, %v1064
    %v1066 = vpop.f32.mrb[0].mxu0
    %v1067 = vpop.f32.mrb[0].mxu0
    %v1068 = vpop.f32.mrb[0].mxu0
    %1069 = vdwg.mxu0
    %v1070 = vsel %vm531, %v1015, -inf
    %1071 = vmax.xlane.f32.xlu0 %v1070
    %v1072 = vpop.xlane.xlu0 %1071
    %v1073 = vsel %vm531, %v1065, -inf
    %1074 = vmax.xlane.f32.xlu0 %v1073
    %v1075 = vpop.xlane.xlu0 %1074
    %v1076 = vsub.f32 %v1015, %v1072
    %v1077 = vsub.f32 %v1065, %v1075
    %v1078 = vmul.f32 %v1076, 1.442695
    %v1079 = vpow.pop %v1078
    %v1080 = vmul.f32 %v1077, 1.442695
    %v1081 = vpow.pop %v1080
    %v1082 = vsel %vm531, %v1079, 0.0
    %1083 = vadd.xlane.f32.xlu0 %v1082
    %v1084 = vpop.xlane.xlu0 %1083
    %v1085 = vsel %vm531, %v1081, 0.0
    %1086 = vadd.xlane.f32.xlu0 %v1085
    %v1087 = vpop.xlane.xlu0 %1086
    %v1088 = vrcp.pop %v1084
    %v1089 = vrcp.pop %v1087
    %v1090 = vmul.f32 %v1079, %v1088
    %v1091 = vmul.f32 %v1081, %v1089
    %v1092 = vpack.c.bf16 %v1090, %v1090
    %v1093 = vpack.c.bf16 %v1091, %v1091
    %1094 = vrot.lane.b32.xlu0 %v529, 112
    %v1095 = vpop.permute.xlu0 %1094
    %v1097 = vsel %vm531, %v1092, 0
    %v1100 = vsel %vm651, %v1095, 0
    %1102 = vmatprep.subr.bf16.mxu0 0
    %1103 = vmatpush1.bf16.msra.mxu0 %v1100
    %1104 = vmatprep.subr.bf16.mxu0 0
    %1105 = vmatpush1.bf16.msra.mxu0 0
    %1106 = vmatprep.subr.bf16.mxu0 0
    %1107 = vmatpush1.bf16.msra.mxu0 0
    %1108 = vmatprep.subr.bf16.mxu0 0
    %1109 = vmatpush1.bf16.msra.mxu0 0
    %1110 = vmatprep.subr.bf16.mxu0 0
    %1111 = vmatpush1.bf16.msra.mxu0 0
    %1112 = vmatprep.subr.bf16.mxu0 0
    %1113 = vmatpush1.bf16.msra.mxu0 0
    %1114 = vmatprep.subr.bf16.mxu0 0
    %1115 = vmatpush1.bf16.msra.mxu0 0
    %1116 = vmatprep.subr.bf16.mxu0 0
    %1117 = vmatpush1.bf16.msra.mxu0 0
    %1118 = vmatprep.subr.bf16.mxu0 0
    %1119 = vmatpush1.bf16.msra.mxu0 0
    %1120 = vmatprep.subr.bf16.mxu0 0
    %1121 = vmatpush1.bf16.msra.mxu0 0
    %1122 = vmatprep.subr.bf16.mxu0 0
    %1123 = vmatpush1.bf16.msra.mxu0 0
    %1124 = vmatprep.subr.bf16.mxu0 0
    %1125 = vmatpush1.bf16.msra.mxu0 0
    %1126 = vmatprep.subr.bf16.mxu0 0
    %1127 = vmatpush1.bf16.msra.mxu0 0
    %1128 = vmatprep.subr.bf16.mxu0 0
    %1129 = vmatpush1.bf16.msra.mxu0 0
    %1130 = vmatprep.subr.bf16.mxu0 0
    %1131 = vmatpush1.bf16.msra.mxu0 0
    %1132 = vmatprep.subr.bf16.mxu0 0
    %1133 = vmatpush1.bf16.msra.mxu0 0
    %1134 = vmatprep.mubr.bf16.mxu0 0
    %1135 = vmatmul.mubr.bf16.gmra.mrb[0].mxu0 %v1097
    %v1136 = vpop.f32.mrb[0].mxu0
    %v1137 = vadd.f32 0.0, %v1136
    %v1138 = vpop.f32.mrb[0].mxu0
    %v1139 = vpop.f32.mrb[0].mxu0
    %v1140 = vpop.f32.mrb[0].mxu0
    %1141 = vdwg.mxu0
    %1142 = vrot.lane.b32.xlu0 %v530, 112
    %v1143 = vpop.permute.xlu0 %1142
    %v1145 = vsel %vm531, %v1093, 0
    %v1148 = vsel %vm651, %v1143, 0
    %1150 = vmatprep.subr.bf16.mxu0 0
    %1151 = vmatpush1.bf16.msra.mxu0 %v1148
    %1152 = vmatprep.subr.bf16.mxu0 0
    %1153 = vmatpush1.bf16.msra.mxu0 0
    %1154 = vmatprep.subr.bf16.mxu0 0
    %1155 = vmatpush1.bf16.msra.mxu0 0
    %1156 = vmatprep.subr.bf16.mxu0 0
    %1157 = vmatpush1.bf16.msra.mxu0 0
    %1158 = vmatprep.subr.bf16.mxu0 0
    %1159 = vmatpush1.bf16.msra.mxu0 0
    %1160 = vmatprep.subr.bf16.mxu0 0
    %1161 = vmatpush1.bf16.msra.mxu0 0
    %1162 = vmatprep.subr.bf16.mxu0 0
    %1163 = vmatpush1.bf16.msra.mxu0 0
    %1164 = vmatprep.subr.bf16.mxu0 0
    %1165 = vmatpush1.bf16.msra.mxu0 0
    %1166 = vmatprep.subr.bf16.mxu0 0
    %1167 = vmatpush1.bf16.msra.mxu0 0
    %1168 = vmatprep.subr.bf16.mxu0 0
    %1169 = vmatpush1.bf16.msra.mxu0 0
    %1170 = vmatprep.subr.bf16.mxu0 0
    %1171 = vmatpush1.bf16.msra.mxu0 0
    %1172 = vmatprep.subr.bf16.mxu0 0
    %1173 = vmatpush1.bf16.msra.mxu0 0
    %1174 = vmatprep.subr.bf16.mxu0 0
    %1175 = vmatpush1.bf16.msra.mxu0 0
    %1176 = vmatprep.subr.bf16.mxu0 0
    %1177 = vmatpush1.bf16.msra.mxu0 0
    %1178 = vmatprep.subr.bf16.mxu0 0
    %1179 = vmatpush1.bf16.msra.mxu0 0
    %1180 = vmatprep.subr.bf16.mxu0 0
    %1181 = vmatpush1.bf16.msra.mxu0 0
    %1182 = vmatprep.mubr.bf16.mxu0 0
    %1183 = vmatmul.mubr.bf16.gmra.mrb[0].mxu0 %v1145
    %v1184 = vpop.f32.mrb[0].mxu0
    %v1185 = vadd.f32 0.0, %v1184
    %v1186 = vpop.f32.mrb[0].mxu0
    %v1187 = vpop.f32.mrb[0].mxu0
    %v1188 = vpop.f32.mrb[0].mxu0
    %1189 = vdwg.mxu0
    %v1190 = vpack.c.bf16 %v1185, %v1137
    %1192 = vrot.lane.b32.xlu0 %v1190, 16
    %v1193 = vpop.permute.xlu0 %1192
    %vm1195 = vcmask 195712
    %1196 = vst.msk [vmem:[#allocation2] sm:$0xff] %vm1195, %v1193
    %1197 = vrot.lane.b32.xlu0 %v389, 104
    %v1198 = vpop.permute.xlu0 %1197
    %1199 = vrot.lane.b32.xlu0 %v459, 104
    %v1200 = vpop.permute.xlu0 %1199
    %v1202 = vsel %vm531, %v1198, 0
    %v1205 = vsel %vm531, %v1200, 0
    %1207 = vmatprep.subr.bf16.mxu0 0
    %1208 = vmatpush1.bf16.xpose.msra.mxu0 %v1205
    %1209 = vmatprep.subr.bf16.mxu0 0
    %1210 = vmatpush1.bf16.xpose.msra.mxu0 0
    %1211 = vmatprep.subr.bf16.mxu0 0
    %1212 = vmatpush1.bf16.xpose.msra.mxu0 0
    %1213 = vmatprep.subr.bf16.mxu0 0
    %1214 = vmatpush1.bf16.xpose.msra.mxu0 0
    %1215 = vmatprep.subr.bf16.mxu0 0
    %1216 = vmatpush1.bf16.xpose.msra.mxu0 0
    %1217 = vmatprep.subr.bf16.mxu0 0
    %1218 = vmatpush1.bf16.xpose.msra.mxu0 0
    %1219 = vmatprep.subr.bf16.mxu0 0
    %1220 = vmatpush1.bf16.xpose.msra.mxu0 0
    %1221 = vmatprep.subr.bf16.mxu0 0
    %1222 = vmatpush1.bf16.xpose.msra.mxu0 0
    %1223 = vmatprep.subr.bf16.mxu0 0
    %1224 = vmatpush1.bf16.xpose.msra.mxu0 0
    %1225 = vmatprep.subr.bf16.mxu0 0
    %1226 = vmatpush1.bf16.xpose.msra.mxu0 0
    %1227 = vmatprep.subr.bf16.mxu0 0
    %1228 = vmatpush1.bf16.xpose.msra.mxu0 0
    %1229 = vmatprep.subr.bf16.mxu0 0
    %1230 = vmatpush1.bf16.xpose.msra.mxu0 0
    %1231 = vmatprep.subr.bf16.mxu0 0
    %1232 = vmatpush1.bf16.xpose.msra.mxu0 0
    %1233 = vmatprep.subr.bf16.mxu0 0
    %1234 = vmatpush1.bf16.xpose.msra.mxu0 0
    %1235 = vmatprep.subr.bf16.mxu0 0
    %1236 = vmatpush1.bf16.xpose.msra.mxu0 0
    %1237 = vmatprep.subr.bf16.mxu0 0
    %1238 = vmatpush1.bf16.xpose.msra.mxu0 0
    %1239 = vmatprep.mubr.bf16.mxu0 0
    %1240 = vmatmul.mubr.bf16.gmra.mrb[0].mxu0 %v1202
    %v1241 = vpop.f32.mrb[0].mxu0
    %v1242 = vadd.f32 %v310, %v1241
    %v1243 = vpop.f32.mrb[0].mxu0
    %v1244 = vpop.f32.mrb[0].mxu0
    %v1245 = vpop.f32.mrb[0].mxu0
    %1246 = vdwg.mxu0
    %1247 = vrot.lane.b32.xlu0 %v390, 104
    %v1248 = vpop.permute.xlu0 %1247
    %1249 = vrot.lane.b32.xlu0 %v460, 104
    %v1250 = vpop.permute.xlu0 %1249
    %v1252 = vsel %vm531, %v1248, 0
    %v1255 = vsel %vm531, %v1250, 0
    %1257 = vmatprep.subr.bf16.mxu0 0
    %1258 = vmatpush1.bf16.xpose.msra.mxu0 %v1255
    %1259 = vmatprep.subr.bf16.mxu0 0
    %1260 = vmatpush1.bf16.xpose.msra.mxu0 0
    %1261 = vmatprep.subr.bf16.mxu0 0
    %1262 = vmatpush1.bf16.xpose.msra.mxu0 0
    %1263 = vmatprep.subr.bf16.mxu0 0
    %1264 = vmatpush1.bf16.xpose.msra.mxu0 0
    %1265 = vmatprep.subr.bf16.mxu0 0
    %1266 = vmatpush1.bf16.xpose.msra.mxu0 0
    %1267 = vmatprep.subr.bf16.mxu0 0
    %1268 = vmatpush1.bf16.xpose.msra.mxu0 0
    %1269 = vmatprep.subr.bf16.mxu0 0
    %1270 = vmatpush1.bf16.xpose.msra.mxu0 0
    %1271 = vmatprep.subr.bf16.mxu0 0
    %1272 = vmatpush1.bf16.xpose.msra.mxu0 0
    %1273 = vmatprep.subr.bf16.mxu0 0
    %1274 = vmatpush1.bf16.xpose.msra.mxu0 0
    %1275 = vmatprep.subr.bf16.mxu0 0
    %1276 = vmatpush1.bf16.xpose.msra.mxu0 0
    %1277 = vmatprep.subr.bf16.mxu0 0
    %1278 = vmatpush1.bf16.xpose.msra.mxu0 0
    %1279 = vmatprep.subr.bf16.mxu0 0
    %1280 = vmatpush1.bf16.xpose.msra.mxu0 0
    %1281 = vmatprep.subr.bf16.mxu0 0
    %1282 = vmatpush1.bf16.xpose.msra.mxu0 0
    %1283 = vmatprep.subr.bf16.mxu0 0
    %1284 = vmatpush1.bf16.xpose.msra.mxu0 0
    %1285 = vmatprep.subr.bf16.mxu0 0
    %1286 = vmatpush1.bf16.xpose.msra.mxu0 0
    %1287 = vmatprep.subr.bf16.mxu0 0
    %1288 = vmatpush1.bf16.xpose.msra.mxu0 0
    %1289 = vmatprep.mubr.bf16.mxu0 0
    %1290 = vmatmul.mubr.bf16.gmra.mrb[0].mxu0 %v1252
    %v1291 = vpop.f32.mrb[0].mxu0
    %v1292 = vadd.f32 %v311, %v1291
    %v1293 = vpop.f32.mrb[0].mxu0
    %v1294 = vpop.f32.mrb[0].mxu0
    %v1295 = vpop.f32.mrb[0].mxu0
    %1296 = vdwg.mxu0
    %v1297 = vsel %vm531, %v1242, -inf
    %1298 = vmax.xlane.f32.xlu0 %v1297
    %v1299 = vpop.xlane.xlu0 %1298
    %v1300 = vsel %vm531, %v1292, -inf
    %1301 = vmax.xlane.f32.xlu0 %v1300
    %v1302 = vpop.xlane.xlu0 %1301
    %v1303 = vsub.f32 %v1242, %v1299
    %v1304 = vsub.f32 %v1292, %v1302
    %v1305 = vmul.f32 %v1303, 1.442695
    %v1306 = vpow.pop %v1305
    %v1307 = vmul.f32 %v1304, 1.442695
    %v1308 = vpow.pop %v1307
    %v1309 = vsel %vm531, %v1306, 0.0
    %1310 = vadd.xlane.f32.xlu0 %v1309
    %v1311 = vpop.xlane.xlu0 %1310
    %v1312 = vsel %vm531, %v1308, 0.0
    %1313 = vadd.xlane.f32.xlu0 %v1312
    %v1314 = vpop.xlane.xlu0 %1313
    %v1315 = vrcp.pop %v1311
    %v1316 = vrcp.pop %v1314
    %v1317 = vmul.f32 %v1306, %v1315
    %v1318 = vmul.f32 %v1308, %v1316
    %v1319 = vpack.c.bf16 %v1317, %v1317
    %v1320 = vpack.c.bf16 %v1318, %v1318
    %1321 = vrot.lane.b32.xlu0 %v529, 104
    %v1322 = vpop.permute.xlu0 %1321
    %v1324 = vsel %vm531, %v1319, 0
    %v1327 = vsel %vm651, %v1322, 0
    %1329 = vmatprep.subr.bf16.mxu0 0
    %1330 = vmatpush1.bf16.msra.mxu0 %v1327
    %1331 = vmatprep.subr.bf16.mxu0 0
    %1332 = vmatpush1.bf16.msra.mxu0 0
    %1333 = vmatprep.subr.bf16.mxu0 0
    %1334 = vmatpush1.bf16.msra.mxu0 0
    %1335 = vmatprep.subr.bf16.mxu0 0
    %1336 = vmatpush1.bf16.msra.mxu0 0
    %1337 = vmatprep.subr.bf16.mxu0 0
    %1338 = vmatpush1.bf16.msra.mxu0 0
    %1339 = vmatprep.subr.bf16.mxu0 0
    %1340 = vmatpush1.bf16.msra.mxu0 0
    %1341 = vmatprep.subr.bf16.mxu0 0
    %1342 = vmatpush1.bf16.msra.mxu0 0
    %1343 = vmatprep.subr.bf16.mxu0 0
    %1344 = vmatpush1.bf16.msra.mxu0 0
    %1345 = vmatprep.subr.bf16.mxu0 0
    %1346 = vmatpush1.bf16.msra.mxu0 0
    %1347 = vmatprep.subr.bf16.mxu0 0
    %1348 = vmatpush1.bf16.msra.mxu0 0
    %1349 = vmatprep.subr.bf16.mxu0 0
    %1350 = vmatpush1.bf16.msra.mxu0 0
    %1351 = vmatprep.subr.bf16.mxu0 0
    %1352 = vmatpush1.bf16.msra.mxu0 0
    %1353 = vmatprep.subr.bf16.mxu0 0
    %1354 = vmatpush1.bf16.msra.mxu0 0
    %1355 = vmatprep.subr.bf16.mxu0 0
    %1356 = vmatpush1.bf16.msra.mxu0 0
    %1357 = vmatprep.subr.bf16.mxu0 0
    %1358 = vmatpush1.bf16.msra.mxu0 0
    %1359 = vmatprep.subr.bf16.mxu0 0
    %1360 = vmatpush1.bf16.msra.mxu0 0
    %1361 = vmatprep.mubr.bf16.mxu0 0
    %1362 = vmatmul.mubr.bf16.gmra.mrb[0].mxu0 %v1324
    %v1363 = vpop.f32.mrb[0].mxu0
    %v1364 = vadd.f32 0.0, %v1363
    %v1365 = vpop.f32.mrb[0].mxu0
    %v1366 = vpop.f32.mrb[0].mxu0
    %v1367 = vpop.f32.mrb[0].mxu0
    %1368 = vdwg.mxu0
    %1369 = vrot.lane.b32.xlu0 %v530, 104
    %v1370 = vpop.permute.xlu0 %1369
    %v1372 = vsel %vm531, %v1320, 0
    %v1375 = vsel %vm651, %v1370, 0
    %1377 = vmatprep.subr.bf16.mxu0 0
    %1378 = vmatpush1.bf16.msra.mxu0 %v1375
    %1379 = vmatprep.subr.bf16.mxu0 0
    %1380 = vmatpush1.bf16.msra.mxu0 0
    %1381 = vmatprep.subr.bf16.mxu0 0
    %1382 = vmatpush1.bf16.msra.mxu0 0
    %1383 = vmatprep.subr.bf16.mxu0 0
    %1384 = vmatpush1.bf16.msra.mxu0 0
    %1385 = vmatprep.subr.bf16.mxu0 0
    %1386 = vmatpush1.bf16.msra.mxu0 0
    %1387 = vmatprep.subr.bf16.mxu0 0
    %1388 = vmatpush1.bf16.msra.mxu0 0
    %1389 = vmatprep.subr.bf16.mxu0 0
    %1390 = vmatpush1.bf16.msra.mxu0 0
    %1391 = vmatprep.subr.bf16.mxu0 0
    %1392 = vmatpush1.bf16.msra.mxu0 0
    %1393 = vmatprep.subr.bf16.mxu0 0
    %1394 = vmatpush1.bf16.msra.mxu0 0
    %1395 = vmatprep.subr.bf16.mxu0 0
    %1396 = vmatpush1.bf16.msra.mxu0 0
    %1397 = vmatprep.subr.bf16.mxu0 0
    %1398 = vmatpush1.bf16.msra.mxu0 0
    %1399 = vmatprep.subr.bf16.mxu0 0
    %1400 = vmatpush1.bf16.msra.mxu0 0
    %1401 = vmatprep.subr.bf16.mxu0 0
    %1402 = vmatpush1.bf16.msra.mxu0 0
    %1403 = vmatprep.subr.bf16.mxu0 0
    %1404 = vmatpush1.bf16.msra.mxu0 0
    %1405 = vmatprep.subr.bf16.mxu0 0
    %1406 = vmatpush1.bf16.msra.mxu0 0
    %1407 = vmatprep.subr.bf16.mxu0 0
    %1408 = vmatpush1.bf16.msra.mxu0 0
    %1409 = vmatprep.mubr.bf16.mxu0 0
    %1410 = vmatmul.mubr.bf16.gmra.mrb[0].mxu0 %v1372
    %v1411 = vpop.f32.mrb[0].mxu0
    %v1412 = vadd.f32 0.0, %v1411
    %v1413 = vpop.f32.mrb[0].mxu0
    %v1414 = vpop.f32.mrb[0].mxu0
    %v1415 = vpop.f32.mrb[0].mxu0
    %1416 = vdwg.mxu0
    %v1417 = vpack.c.bf16 %v1412, %v1364
    %1419 = vrot.lane.b32.xlu0 %v1417, 24
    %v1420 = vpop.permute.xlu0 %1419
    %vm1422 = vcmask 261312
    %1423 = vst.msk [vmem:[#allocation2] sm:$0xff] %vm1422, %v1420
    %v1424 = vld [vmem:[#allocation2] sm:$0xff]
    %v1425 = vld [vmem:[%s21] sm:$0xf]
    %v1426 = vld [vmem:[%s21 + $0x4] sm:$0xf]
    %v1427 = vld [vmem:[%s21 + $0x8] sm:$0xf]
    %v1428 = vld [vmem:[%s21 + $0xc] sm:$0xf]
    %v1429 = vld [vmem:[#allocation15] sm:$0x1]
    %v1431 = vlaneseq
    %v1432 = vshrl.u32 %v1431, 7
    %v1433 = vsub.s32 0, %v1432
    %v1434 = vrot.slane %v1429, %v1433
    %v1440 = vunpack.c.l.b16 %v1425
    %v1441 = vunpack.c.l.b16 %v1426
    %v1442 = vunpack.c.l.b16 %v1427
    %v1443 = vunpack.c.l.b16 %v1428
    %v1444 = vpack.c.b16 %v1441, %v1440
    %v1445 = vpack.c.b16 %v1443, %v1442
    %v1449 = vsel %vm340, %v1424, 0
    %1451 = vmatprep.subr.bf16.mxu0 0
    %1452 = vmatpush1.bf16.msra.mxu0 %v1444
    %1453 = vmatprep.subr.bf16.mxu0 0
    %1454 = vmatpush1.bf16.msra.mxu0 %v1445
    %1455 = vmatprep.subr.bf16.mxu0 0
    %1456 = vmatpush1.bf16.msra.mxu0 0
    %1457 = vmatprep.subr.bf16.mxu0 0
    %1458 = vmatpush1.bf16.msra.mxu0 0
    %1459 = vmatprep.subr.bf16.mxu0 0
    %1460 = vmatpush1.bf16.msra.mxu0 0
    %1461 = vmatprep.subr.bf16.mxu0 0
    %1462 = vmatpush1.bf16.msra.mxu0 0
    %1463 = vmatprep.subr.bf16.mxu0 0
    %1464 = vmatpush1.bf16.msra.mxu0 0
    %1465 = vmatprep.subr.bf16.mxu0 0
    %1466 = vmatpush1.bf16.msra.mxu0 0
    %1467 = vmatprep.subr.bf16.mxu0 0
    %1468 = vmatpush1.bf16.msra.mxu0 0
    %1469 = vmatprep.subr.bf16.mxu0 0
    %1470 = vmatpush1.bf16.msra.mxu0 0
    %1471 = vmatprep.subr.bf16.mxu0 0
    %1472 = vmatpush1.bf16.msra.mxu0 0
    %1473 = vmatprep.subr.bf16.mxu0 0
    %1474 = vmatpush1.bf16.msra.mxu0 0
    %1475 = vmatprep.subr.bf16.mxu0 0
    %1476 = vmatpush1.bf16.msra.mxu0 0
    %1477 = vmatprep.subr.bf16.mxu0 0
    %1478 = vmatpush1.bf16.msra.mxu0 0
    %1479 = vmatprep.subr.bf16.mxu0 0
    %1480 = vmatpush1.bf16.msra.mxu0 0
    %1481 = vmatprep.subr.bf16.mxu0 0
    %1482 = vmatpush1.bf16.msra.mxu0 0
    %1483 = vmatprep.mubr.bf16.mxu0 0
    %1484 = vmatmul.mubr.bf16.gmra.mrb[0].mxu0 %v1449
    %v1485 = vpop.f32.mrb[0].mxu0
    %v1486 = vadd.f32 %v1434, %v1485
    %v1487 = vpop.f32.mrb[0].mxu0
    %v1488 = vpop.f32.mrb[0].mxu0
    %v1489 = vadd.f32 %v1434, %v1488
    %v1490 = vpop.f32.mrb[0].mxu0
    %1491 = vdwg.mxu0
    %v1492 = vadd.f32 %v304, %v1486
    %v1493 = vadd.f32 %v305, %v1489
    %v1494 = vsel %vm340, %v1492, 0.0
    %1495 = vadd.xlane.f32.xlu0 %v1494
    %v1496 = vpop.xlane.xlu0 %1495
    %v1497 = vsel %vm340, %v1493, 0.0
    %1498 = vadd.xlane.f32.xlu0 %v1497
    %v1499 = vpop.xlane.xlu0 %1498
    %v1500 = vrcp.pop 32.0
    %v1501 = vmul.f32 %v1496, %v1500
    %v1502 = vmul.f32 %v1499, %v1500
    %v1503 = vsub.f32 %v1492, %v1501
    %v1504 = vsub.f32 %v1493, %v1502
    %v1505 = vmul.f32 %v1503, %v1503
    %v1506 = vmul.f32 %v1504, %v1504
    %v1507 = vsel %vm340, %v1505, 0.0
    %1508 = vadd.xlane.f32.xlu0 %v1507
    %v1509 = vpop.xlane.xlu0 %1508
    %v1510 = vsel %vm340, %v1506, 0.0
    %1511 = vadd.xlane.f32.xlu0 %v1510
    %v1512 = vpop.xlane.xlu0 %1511
    %v1513 = vmul.f32 %v1509, %v1500
    %v1514 = vmul.f32 %v1512, %v1500
    %v1515 = vadd.f32 %v1513, 1e-05
    %v1516 = vadd.f32 %v1514, 1e-05
    %v1517 = vrsqrt.pop %v1515
    %v1518 = vrsqrt.pop %v1516
    %v1519 = vmul.f32 %v1503, %v1517
    %v1520 = vmul.f32 %v1504, %v1518
    %v1521 = vld [vmem:[#allocation17] sm:$0x1]
    %v1523 = vlaneseq
    %v1524 = vshrl.u32 %v1523, 7
    %v1525 = vsub.s32 0, %v1524
    %v1526 = vrot.slane %v1521, %v1525
    %v1528 = vmul.f32 %v1519, %v1526
    %v1529 = vmul.f32 %v1520, %v1526
    %v1530 = vld [vmem:[#allocation18] sm:$0x1]
    %v1532 = vlaneseq
    %v1533 = vshrl.u32 %v1532, 7
    %v1534 = vsub.s32 0, %v1533
    %v1535 = vrot.slane %v1530, %v1534
    %v1537 = vadd.f32 %v1528, %v1535
    %v1538 = vadd.f32 %v1529, %v1535
    %v1539 = vpack.c.bf16 %v1538, %v1537
    %v1540 = vld [vmem:[#allocation9] sm:$0xf]
    %v1541 = vld [vmem:[#allocation9 + $0x4] sm:$0xf]
    %v1542 = vunpack.c.l.bf16 %v1540
    %v1543 = vunpack.c.l.bf16 %v1541
    %v1544 = vld [vmem:[%s29] sm:$0xf]
    %v1545 = vld [vmem:[%s29 + $0x4] sm:$0xf]
    %v1546 = vld [vmem:[%s29 + $0x8] sm:$0xf]
    %v1547 = vld [vmem:[%s29 + $0xc] sm:$0xf]
    %v1548 = vld [vmem:[#allocation23] sm:$0x1]
    %v1550 = vlaneseq
    %v1551 = vshrl.u32 %v1550, 7
    %v1552 = vsub.s32 0, %v1551
    %v1553 = vrot.slane %v1548, %v1552
    %v1559 = vunpack.c.l.b16 %v1544
    %v1560 = vunpack.c.l.b16 %v1545
    %v1561 = vunpack.c.l.b16 %v1546
    %v1562 = vunpack.c.l.b16 %v1547
    %v1563 = vpack.c.b16 %v1560, %v1559
    %v1564 = vpack.c.b16 %v1562, %v1561
    %v1568 = vsel %vm340, %v1539, 0
    %1570 = vmatprep.subr.bf16.mxu0 0
    %1571 = vmatpush1.bf16.msra.mxu0 %v1563
    %1572 = vmatprep.subr.bf16.mxu0 0
    %1573 = vmatpush1.bf16.msra.mxu0 %v1564
    %1574 = vmatprep.subr.bf16.mxu0 0
    %1575 = vmatpush1.bf16.msra.mxu0 0
    %1576 = vmatprep.subr.bf16.mxu0 0
    %1577 = vmatpush1.bf16.msra.mxu0 0
    %1578 = vmatprep.subr.bf16.mxu0 0
    %1579 = vmatpush1.bf16.msra.mxu0 0
    %1580 = vmatprep.subr.bf16.mxu0 0
    %1581 = vmatpush1.bf16.msra.mxu0 0
    %1582 = vmatprep.subr.bf16.mxu0 0
    %1583 = vmatpush1.bf16.msra.mxu0 0
    %1584 = vmatprep.subr.bf16.mxu0 0
    %1585 = vmatpush1.bf16.msra.mxu0 0
    %1586 = vmatprep.subr.bf16.mxu0 0
    %1587 = vmatpush1.bf16.msra.mxu0 0
    %1588 = vmatprep.subr.bf16.mxu0 0
    %1589 = vmatpush1.bf16.msra.mxu0 0
    %1590 = vmatprep.subr.bf16.mxu0 0
    %1591 = vmatpush1.bf16.msra.mxu0 0
    %1592 = vmatprep.subr.bf16.mxu0 0
    %1593 = vmatpush1.bf16.msra.mxu0 0
    %1594 = vmatprep.subr.bf16.mxu0 0
    %1595 = vmatpush1.bf16.msra.mxu0 0
    %1596 = vmatprep.subr.bf16.mxu0 0
    %1597 = vmatpush1.bf16.msra.mxu0 0
    %1598 = vmatprep.subr.bf16.mxu0 0
    %1599 = vmatpush1.bf16.msra.mxu0 0
    %1600 = vmatprep.subr.bf16.mxu0 0
    %1601 = vmatpush1.bf16.msra.mxu0 0
    %1602 = vmatprep.mubr.bf16.mxu0 0
    %1603 = vmatmul.mubr.bf16.gmra.mrb[0].mxu0 %v1568
    %v1604 = vpop.f32.mrb[0].mxu0
    %v1605 = vadd.f32 %v1553, %v1604
    %v1606 = vpop.f32.mrb[0].mxu0
    %v1607 = vpop.f32.mrb[0].mxu0
    %v1608 = vadd.f32 %v1553, %v1607
    %v1609 = vpop.f32.mrb[0].mxu0
    %1610 = vdwg.mxu0
    %v1611 = vpack.c.bf16 %v1608, %v1605
    %v1613 = vunpack.c.l.b16 %v1611
    %v1614 = vunpack.c.h.b16 %v1611
    %v1615 = vpack.c.b16 %v1613, %v1613
    %v1616 = vpack.c.b16 %v1614, %v1614
    %v1617 = vld [vmem:[#allocation20] sm:$0xf]
    %v1618 = vld [vmem:[#allocation20 + $0x4] sm:$0xf]
    %v1619 = vld [vmem:[#allocation20 + $0x8] sm:$0xf]
    %v1620 = vld [vmem:[#allocation20 + $0xc] sm:$0xf]
    %v1621 = vld [vmem:[%s37] sm:$0x1]
    %v1623 = vlaneseq
    %v1624 = vshrl.u32 %v1623, 7
    %v1625 = vsub.s32 0, %v1624
    %v1626 = vrot.slane %v1621, %v1625
    %v1630 = vunpack.c.l.b16 %v306
    %v1631 = vunpack.c.l.b16 %v307
    %v1632 = vpack.c.b16 %v1631, %v1630
    %v1637 = vunpack.c.l.b16 %v1617
    %v1638 = vunpack.c.l.b16 %v1618
    %v1639 = vunpack.c.l.b16 %v1619
    %v1640 = vunpack.c.l.b16 %v1620
    %v1641 = vpack.c.b16 %v1638, %v1637
    %v1642 = vpack.c.b16 %v1640, %v1639
    %v1646 = vsel %vm340, %v1632, 0
    %1648 = vmatprep.subr.bf16.mxu0 0
    %1649 = vmatpush1.bf16.msra.mxu0 %v1641
    %1650 = vmatprep.subr.bf16.mxu0 0
    %1651 = vmatpush1.bf16.msra.mxu0 %v1642
    %1652 = vmatprep.subr.bf16.mxu0 0
    %1653 = vmatpush1.bf16.msra.mxu0 0
    %1654 = vmatprep.subr.bf16.mxu0 0
    %1655 = vmatpush1.bf16.msra.mxu0 0
    %1656 = vmatprep.subr.bf16.mxu0 0
    %1657 = vmatpush1.bf16.msra.mxu0 0
    %1658 = vmatprep.subr.bf16.mxu0 0
    %1659 = vmatpush1.bf16.msra.mxu0 0
    %1660 = vmatprep.subr.bf16.mxu0 0
    %1661 = vmatpush1.bf16.msra.mxu0 0
    %1662 = vmatprep.subr.bf16.mxu0 0
    %1663 = vmatpush1.bf16.msra.mxu0 0
    %1664 = vmatprep.subr.bf16.mxu0 0
    %1665 = vmatpush1.bf16.msra.mxu0 0
    %1666 = vmatprep.subr.bf16.mxu0 0
    %1667 = vmatpush1.bf16.msra.mxu0 0
    %1668 = vmatprep.subr.bf16.mxu0 0
    %1669 = vmatpush1.bf16.msra.mxu0 0
    %1670 = vmatprep.subr.bf16.mxu0 0
    %1671 = vmatpush1.bf16.msra.mxu0 0
    %1672 = vmatprep.subr.bf16.mxu0 0
    %1673 = vmatpush1.bf16.msra.mxu0 0
    %1674 = vmatprep.subr.bf16.mxu0 0
    %1675 = vmatpush1.bf16.msra.mxu0 0
    %1676 = vmatprep.subr.bf16.mxu0 0
    %1677 = vmatpush1.bf16.msra.mxu0 0
    %1678 = vmatprep.subr.bf16.mxu0 0
    %1679 = vmatpush1.bf16.msra.mxu0 0
    %1680 = vmatprep.mubr.bf16.mxu0 0
    %1681 = vmatmul.mubr.bf16.gmra.mrb[0].mxu0 %v1646
    %v1682 = vpop.f32.mrb[0].mxu0
    %v1683 = vadd.f32 %v1626, %v1682
    %v1684 = vpop.f32.mrb[0].mxu0
    %v1685 = vpop.f32.mrb[0].mxu0
    %v1686 = vadd.f32 %v1626, %v1685
    %v1687 = vpop.f32.mrb[0].mxu0
    %1688 = vdwg.mxu0
    %v1689 = vpack.c.bf16 %v1686, %v1683
    %v1691 = vunpack.c.l.b16 %v1689
    %v1692 = vunpack.c.h.b16 %v1689
    %v1693 = vpack.c.b16 %v1691, %v1691
    %v1694 = vpack.c.b16 %v1692, %v1692
    %v1695 = vld [vmem:[#allocation21] sm:$0xf]
    %v1696 = vld [vmem:[#allocation21 + $0x4] sm:$0xf]
    %v1697 = vld [vmem:[#allocation21 + $0x8] sm:$0xf]
    %v1698 = vld [vmem:[#allocation21 + $0xc] sm:$0xf]
    %v1699 = vld [vmem:[%s39] sm:$0x1]
    %v1701 = vlaneseq
    %v1702 = vshrl.u32 %v1701, 7
    %v1703 = vsub.s32 0, %v1702
    %v1704 = vrot.slane %v1699, %v1703
    %v1710 = vunpack.c.l.b16 %v1695
    %v1711 = vunpack.c.l.b16 %v1696
    %v1712 = vunpack.c.l.b16 %v1697
    %v1713 = vunpack.c.l.b16 %v1698
    %v1714 = vpack.c.b16 %v1711, %v1710
    %v1715 = vpack.c.b16 %v1713, %v1712
    %1718 = vmatprep.subr.bf16.mxu0 0
    %1719 = vmatpush1.bf16.msra.mxu0 %v1714
    %1720 = vmatprep.subr.bf16.mxu0 0
    %1721 = vmatpush1.bf16.msra.mxu0 %v1715
    %1722 = vmatprep.subr.bf16.mxu0 0
    %1723 = vmatpush1.bf16.msra.mxu0 0
    %1724 = vmatprep.subr.bf16.mxu0 0
    %1725 = vmatpush1.bf16.msra.mxu0 0
    %1726 = vmatprep.subr.bf16.mxu0 0
    %1727 = vmatpush1.bf16.msra.mxu0 0
    %1728 = vmatprep.subr.bf16.mxu0 0
    %1729 = vmatpush1.bf16.msra.mxu0 0
    %1730 = vmatprep.subr.bf16.mxu0 0
    %1731 = vmatpush1.bf16.msra.mxu0 0
    %1732 = vmatprep.subr.bf16.mxu0 0
    %1733 = vmatpush1.bf16.msra.mxu0 0
    %1734 = vmatprep.subr.bf16.mxu0 0
    %1735 = vmatpush1.bf16.msra.mxu0 0
    %1736 = vmatprep.subr.bf16.mxu0 0
    %1737 = vmatpush1.bf16.msra.mxu0 0
    %1738 = vmatprep.subr.bf16.mxu0 0
    %1739 = vmatpush1.bf16.msra.mxu0 0
    %1740 = vmatprep.subr.bf16.mxu0 0
    %1741 = vmatpush1.bf16.msra.mxu0 0
    %1742 = vmatprep.subr.bf16.mxu0 0
    %1743 = vmatpush1.bf16.msra.mxu0 0
    %1744 = vmatprep.subr.bf16.mxu0 0
    %1745 = vmatpush1.bf16.msra.mxu0 0
    %1746 = vmatprep.subr.bf16.mxu0 0
    %1747 = vmatpush1.bf16.msra.mxu0 0
    %1748 = vmatprep.subr.bf16.mxu0 0
    %1749 = vmatpush1.bf16.msra.mxu0 0
    %1750 = vmatprep.mubr.bf16.mxu0 0
    %1751 = vmatmul.mubr.bf16.gmra.mrb[0].mxu0 %v1646
    %v1752 = vpop.f32.mrb[0].mxu0
    %v1753 = vadd.f32 %v1704, %v1752
    %v1754 = vpop.f32.mrb[0].mxu0
    %v1755 = vpop.f32.mrb[0].mxu0
    %v1756 = vadd.f32 %v1704, %v1755
    %v1757 = vpop.f32.mrb[0].mxu0
    %1758 = vdwg.mxu0
    %v1759 = vpack.c.bf16 %v1756, %v1753
    %v1761 = vunpack.c.l.b16 %v1759
    %v1762 = vunpack.c.h.b16 %v1759
    %v1763 = vpack.c.b16 %v1761, %v1761
    %v1764 = vpack.c.b16 %v1762, %v1762
    %v1766 = vsel %vm531, %v1615, 0
    %v1769 = vsel %vm531, %v1693, 0
    %1771 = vmatprep.subr.bf16.mxu0 0
    %1772 = vmatpush1.bf16.xpose.msra.mxu0 %v1769
    %1773 = vmatprep.subr.bf16.mxu0 0
    %1774 = vmatpush1.bf16.xpose.msra.mxu0 0
    %1775 = vmatprep.subr.bf16.mxu0 0
    %1776 = vmatpush1.bf16.xpose.msra.mxu0 0
    %1777 = vmatprep.subr.bf16.mxu0 0
    %1778 = vmatpush1.bf16.xpose.msra.mxu0 0
    %1779 = vmatprep.subr.bf16.mxu0 0
    %1780 = vmatpush1.bf16.xpose.msra.mxu0 0
    %1781 = vmatprep.subr.bf16.mxu0 0
    %1782 = vmatpush1.bf16.xpose.msra.mxu0 0
    %1783 = vmatprep.subr.bf16.mxu0 0
    %1784 = vmatpush1.bf16.xpose.msra.mxu0 0
    %1785 = vmatprep.subr.bf16.mxu0 0
    %1786 = vmatpush1.bf16.xpose.msra.mxu0 0
    %1787 = vmatprep.subr.bf16.mxu0 0
    %1788 = vmatpush1.bf16.xpose.msra.mxu0 0
    %1789 = vmatprep.subr.bf16.mxu0 0
    %1790 = vmatpush1.bf16.xpose.msra.mxu0 0
    %1791 = vmatprep.subr.bf16.mxu0 0
    %1792 = vmatpush1.bf16.xpose.msra.mxu0 0
    %1793 = vmatprep.subr.bf16.mxu0 0
    %1794 = vmatpush1.bf16.xpose.msra.mxu0 0
    %1795 = vmatprep.subr.bf16.mxu0 0
    %1796 = vmatpush1.bf16.xpose.msra.mxu0 0
    %1797 = vmatprep.subr.bf16.mxu0 0
    %1798 = vmatpush1.bf16.xpose.msra.mxu0 0
    %1799 = vmatprep.subr.bf16.mxu0 0
    %1800 = vmatpush1.bf16.xpose.msra.mxu0 0
    %1801 = vmatprep.subr.bf16.mxu0 0
    %1802 = vmatpush1.bf16.xpose.msra.mxu0 0
    %1803 = vmatprep.mubr.bf16.mxu0 0
    %1804 = vmatmul.mubr.bf16.gmra.mrb[0].mxu0 %v1766
    %v1805 = vpop.f32.mrb[0].mxu0
    %v1806 = vadd.f32 %v1542, %v1805
    %v1807 = vpop.f32.mrb[0].mxu0
    %v1808 = vpop.f32.mrb[0].mxu0
    %v1809 = vpop.f32.mrb[0].mxu0
    %1810 = vdwg.mxu0
    %v1812 = vsel %vm531, %v1616, 0
    %v1815 = vsel %vm531, %v1694, 0
    %1817 = vmatprep.subr.bf16.mxu0 0
    %1818 = vmatpush1.bf16.xpose.msra.mxu0 %v1815
    %1819 = vmatprep.subr.bf16.mxu0 0
    %1820 = vmatpush1.bf16.xpose.msra.mxu0 0
    %1821 = vmatprep.subr.bf16.mxu0 0
    %1822 = vmatpush1.bf16.xpose.msra.mxu0 0
    %1823 = vmatprep.subr.bf16.mxu0 0
    %1824 = vmatpush1.bf16.xpose.msra.mxu0 0
    %1825 = vmatprep.subr.bf16.mxu0 0
    %1826 = vmatpush1.bf16.xpose.msra.mxu0 0
    %1827 = vmatprep.subr.bf16.mxu0 0
    %1828 = vmatpush1.bf16.xpose.msra.mxu0 0
    %1829 = vmatprep.subr.bf16.mxu0 0
    %1830 = vmatpush1.bf16.xpose.msra.mxu0 0
    %1831 = vmatprep.subr.bf16.mxu0 0
    %1832 = vmatpush1.bf16.xpose.msra.mxu0 0
    %1833 = vmatprep.subr.bf16.mxu0 0
    %1834 = vmatpush1.bf16.xpose.msra.mxu0 0
    %1835 = vmatprep.subr.bf16.mxu0 0
    %1836 = vmatpush1.bf16.xpose.msra.mxu0 0
    %1837 = vmatprep.subr.bf16.mxu0 0
    %1838 = vmatpush1.bf16.xpose.msra.mxu0 0
    %1839 = vmatprep.subr.bf16.mxu0 0
    %1840 = vmatpush1.bf16.xpose.msra.mxu0 0
    %1841 = vmatprep.subr.bf16.mxu0 0
    %1842 = vmatpush1.bf16.xpose.msra.mxu0 0
    %1843 = vmatprep.subr.bf16.mxu0 0
    %1844 = vmatpush1.bf16.xpose.msra.mxu0 0
    %1845 = vmatprep.subr.bf16.mxu0 0
    %1846 = vmatpush1.bf16.xpose.msra.mxu0 0
    %1847 = vmatprep.subr.bf16.mxu0 0
    %1848 = vmatpush1.bf16.xpose.msra.mxu0 0
    %1849 = vmatprep.mubr.bf16.mxu0 0
    %1850 = vmatmul.mubr.bf16.gmra.mrb[0].mxu0 %v1812
    %v1851 = vpop.f32.mrb[0].mxu0
    %v1852 = vadd.f32 %v1543, %v1851
    %v1853 = vpop.f32.mrb[0].mxu0
    %v1854 = vpop.f32.mrb[0].mxu0
    %v1855 = vpop.f32.mrb[0].mxu0
    %1856 = vdwg.mxu0
    %v1857 = vsel %vm531, %v1806, -inf
    %1858 = vmax.xlane.f32.xlu0 %v1857
    %v1859 = vpop.xlane.xlu0 %1858
    %v1860 = vsel %vm531, %v1852, -inf
    %1861 = vmax.xlane.f32.xlu0 %v1860
    %v1862 = vpop.xlane.xlu0 %1861
    %v1863 = vsub.f32 %v1806, %v1859
    %v1864 = vsub.f32 %v1852, %v1862
    %v1865 = vmul.f32 %v1863, 1.442695
    %v1866 = vpow.pop %v1865
    %v1867 = vmul.f32 %v1864, 1.442695
    %v1868 = vpow.pop %v1867
    %v1869 = vsel %vm531, %v1866, 0.0
    %1870 = vadd.xlane.f32.xlu0 %v1869
    %v1871 = vpop.xlane.xlu0 %1870
    %v1872 = vsel %vm531, %v1868, 0.0
    %1873 = vadd.xlane.f32.xlu0 %v1872
    %v1874 = vpop.xlane.xlu0 %1873
    %v1875 = vrcp.pop %v1871
    %v1876 = vrcp.pop %v1874
    %v1877 = vmul.f32 %v1866, %v1875
    %v1878 = vmul.f32 %v1868, %v1876
    %v1879 = vpack.c.bf16 %v1877, %v1877
    %v1880 = vpack.c.bf16 %v1878, %v1878
    %v1882 = vsel %vm531, %v1879, 0
    %v1885 = vsel %vm651, %v1763, 0
    %1887 = vmatprep.subr.bf16.mxu0 0
    %1888 = vmatpush1.bf16.msra.mxu0 %v1885
    %1889 = vmatprep.subr.bf16.mxu0 0
    %1890 = vmatpush1.bf16.msra.mxu0 0
    %1891 = vmatprep.subr.bf16.mxu0 0
    %1892 = vmatpush1.bf16.msra.mxu0 0
    %1893 = vmatprep.subr.bf16.mxu0 0
    %1894 = vmatpush1.bf16.msra.mxu0 0
    %1895 = vmatprep.subr.bf16.mxu0 0
    %1896 = vmatpush1.bf16.msra.mxu0 0
    %1897 = vmatprep.subr.bf16.mxu0 0
    %1898 = vmatpush1.bf16.msra.mxu0 0
    %1899 = vmatprep.subr.bf16.mxu0 0
    %1900 = vmatpush1.bf16.msra.mxu0 0
    %1901 = vmatprep.subr.bf16.mxu0 0
    %1902 = vmatpush1.bf16.msra.mxu0 0
    %1903 = vmatprep.subr.bf16.mxu0 0
    %1904 = vmatpush1.bf16.msra.mxu0 0
    %1905 = vmatprep.subr.bf16.mxu0 0
    %1906 = vmatpush1.bf16.msra.mxu0 0
    %1907 = vmatprep.subr.bf16.mxu0 0
    %1908 = vmatpush1.bf16.msra.mxu0 0
    %1909 = vmatprep.subr.bf16.mxu0 0
    %1910 = vmatpush1.bf16.msra.mxu0 0
    %1911 = vmatprep.subr.bf16.mxu0 0
    %1912 = vmatpush1.bf16.msra.mxu0 0
    %1913 = vmatprep.subr.bf16.mxu0 0
    %1914 = vmatpush1.bf16.msra.mxu0 0
    %1915 = vmatprep.subr.bf16.mxu0 0
    %1916 = vmatpush1.bf16.msra.mxu0 0
    %1917 = vmatprep.subr.bf16.mxu0 0
    %1918 = vmatpush1.bf16.msra.mxu0 0
    %1919 = vmatprep.mubr.bf16.mxu0 0
    %1920 = vmatmul.mubr.bf16.gmra.mrb[0].mxu0 %v1882
    %v1921 = vpop.f32.mrb[0].mxu0
    %v1922 = vadd.f32 0.0, %v1921
    %v1923 = vpop.f32.mrb[0].mxu0
    %v1924 = vpop.f32.mrb[0].mxu0
    %v1925 = vpop.f32.mrb[0].mxu0
    %1926 = vdwg.mxu0
    %v1928 = vsel %vm531, %v1880, 0
    %v1931 = vsel %vm651, %v1764, 0
    %1933 = vmatprep.subr.bf16.mxu0 0
    %1934 = vmatpush1.bf16.msra.mxu0 %v1931
    %1935 = vmatprep.subr.bf16.mxu0 0
    %1936 = vmatpush1.bf16.msra.mxu0 0
    %1937 = vmatprep.subr.bf16.mxu0 0
    %1938 = vmatpush1.bf16.msra.mxu0 0
    %1939 = vmatprep.subr.bf16.mxu0 0
    %1940 = vmatpush1.bf16.msra.mxu0 0
    %1941 = vmatprep.subr.bf16.mxu0 0
    %1942 = vmatpush1.bf16.msra.mxu0 0
    %1943 = vmatprep.subr.bf16.mxu0 0
    %1944 = vmatpush1.bf16.msra.mxu0 0
    %1945 = vmatprep.subr.bf16.mxu0 0
    %1946 = vmatpush1.bf16.msra.mxu0 0
    %1947 = vmatprep.subr.bf16.mxu0 0
    %1948 = vmatpush1.bf16.msra.mxu0 0
    %1949 = vmatprep.subr.bf16.mxu0 0
    %1950 = vmatpush1.bf16.msra.mxu0 0
    %1951 = vmatprep.subr.bf16.mxu0 0
    %1952 = vmatpush1.bf16.msra.mxu0 0
    %1953 = vmatprep.subr.bf16.mxu0 0
    %1954 = vmatpush1.bf16.msra.mxu0 0
    %1955 = vmatprep.subr.bf16.mxu0 0
    %1956 = vmatpush1.bf16.msra.mxu0 0
    %1957 = vmatprep.subr.bf16.mxu0 0
    %1958 = vmatpush1.bf16.msra.mxu0 0
    %1959 = vmatprep.subr.bf16.mxu0 0
    %1960 = vmatpush1.bf16.msra.mxu0 0
    %1961 = vmatprep.subr.bf16.mxu0 0
    %1962 = vmatpush1.bf16.msra.mxu0 0
    %1963 = vmatprep.subr.bf16.mxu0 0
    %1964 = vmatpush1.bf16.msra.mxu0 0
    %1965 = vmatprep.mubr.bf16.mxu0 0
    %1966 = vmatmul.mubr.bf16.gmra.mrb[0].mxu0 %v1928
    %v1967 = vpop.f32.mrb[0].mxu0
    %v1968 = vadd.f32 0.0, %v1967
    %v1969 = vpop.f32.mrb[0].mxu0
    %v1970 = vpop.f32.mrb[0].mxu0
    %v1971 = vpop.f32.mrb[0].mxu0
    %1972 = vdwg.mxu0
    %v1973 = vpack.c.bf16 %v1968, %v1922
    %1974 = vst.msk [vmem:[#allocation2] sm:$0xff] %vm531, %v1973
    %1975 = vrot.lane.b32.xlu0 %v1615, 120
    %v1976 = vpop.permute.xlu0 %1975
    %1977 = vrot.lane.b32.xlu0 %v1693, 120
    %v1978 = vpop.permute.xlu0 %1977
    %v1980 = vsel %vm531, %v1976, 0
    %v1983 = vsel %vm531, %v1978, 0
    %1985 = vmatprep.subr.bf16.mxu0 0
    %1986 = vmatpush1.bf16.xpose.msra.mxu0 %v1983
    %1987 = vmatprep.subr.bf16.mxu0 0
    %1988 = vmatpush1.bf16.xpose.msra.mxu0 0
    %1989 = vmatprep.subr.bf16.mxu0 0
    %1990 = vmatpush1.bf16.xpose.msra.mxu0 0
    %1991 = vmatprep.subr.bf16.mxu0 0
    %1992 = vmatpush1.bf16.xpose.msra.mxu0 0
    %1993 = vmatprep.subr.bf16.mxu0 0
    %1994 = vmatpush1.bf16.xpose.msra.mxu0 0
    %1995 = vmatprep.subr.bf16.mxu0 0
    %1996 = vmatpush1.bf16.xpose.msra.mxu0 0
    %1997 = vmatprep.subr.bf16.mxu0 0
    %1998 = vmatpush1.bf16.xpose.msra.mxu0 0
    %1999 = vmatprep.subr.bf16.mxu0 0
    %2000 = vmatpush1.bf16.xpose.msra.mxu0 0
    %2001 = vmatprep.subr.bf16.mxu0 0
    %2002 = vmatpush1.bf16.xpose.msra.mxu0 0
    %2003 = vmatprep.subr.bf16.mxu0 0
    %2004 = vmatpush1.bf16.xpose.msra.mxu0 0
    %2005 = vmatprep.subr.bf16.mxu0 0
    %2006 = vmatpush1.bf16.xpose.msra.mxu0 0
    %2007 = vmatprep.subr.bf16.mxu0 0
    %2008 = vmatpush1.bf16.xpose.msra.mxu0 0
    %2009 = vmatprep.subr.bf16.mxu0 0
    %2010 = vmatpush1.bf16.xpose.msra.mxu0 0
    %2011 = vmatprep.subr.bf16.mxu0 0
    %2012 = vmatpush1.bf16.xpose.msra.mxu0 0
    %2013 = vmatprep.subr.bf16.mxu0 0
    %2014 = vmatpush1.bf16.xpose.msra.mxu0 0
    %2015 = vmatprep.subr.bf16.mxu0 0
    %2016 = vmatpush1.bf16.xpose.msra.mxu0 0
    %2017 = vmatprep.mubr.bf16.mxu0 0
    %2018 = vmatmul.mubr.bf16.gmra.mrb[0].mxu0 %v1980
    %v2019 = vpop.f32.mrb[0].mxu0
    %v2020 = vadd.f32 %v1542, %v2019
    %v2021 = vpop.f32.mrb[0].mxu0
    %v2022 = vpop.f32.mrb[0].mxu0
    %v2023 = vpop.f32.mrb[0].mxu0
    %2024 = vdwg.mxu0
    %2025 = vrot.lane.b32.xlu0 %v1616, 120
    %v2026 = vpop.permute.xlu0 %2025
    %2027 = vrot.lane.b32.xlu0 %v1694, 120
    %v2028 = vpop.permute.xlu0 %2027
    %v2030 = vsel %vm531, %v2026, 0
    %v2033 = vsel %vm531, %v2028, 0
    %2035 = vmatprep.subr.bf16.mxu0 0
    %2036 = vmatpush1.bf16.xpose.msra.mxu0 %v2033
    %2037 = vmatprep.subr.bf16.mxu0 0
    %2038 = vmatpush1.bf16.xpose.msra.mxu0 0
    %2039 = vmatprep.subr.bf16.mxu0 0
    %2040 = vmatpush1.bf16.xpose.msra.mxu0 0
    %2041 = vmatprep.subr.bf16.mxu0 0
    %2042 = vmatpush1.bf16.xpose.msra.mxu0 0
    %2043 = vmatprep.subr.bf16.mxu0 0
    %2044 = vmatpush1.bf16.xpose.msra.mxu0 0
    %2045 = vmatprep.subr.bf16.mxu0 0
    %2046 = vmatpush1.bf16.xpose.msra.mxu0 0
    %2047 = vmatprep.subr.bf16.mxu0 0
    %2048 = vmatpush1.bf16.xpose.msra.mxu0 0
    %2049 = vmatprep.subr.bf16.mxu0 0
    %2050 = vmatpush1.bf16.xpose.msra.mxu0 0
    %2051 = vmatprep.subr.bf16.mxu0 0
    %2052 = vmatpush1.bf16.xpose.msra.mxu0 0
    %2053 = vmatprep.subr.bf16.mxu0 0
    %2054 = vmatpush1.bf16.xpose.msra.mxu0 0
    %2055 = vmatprep.subr.bf16.mxu0 0
    %2056 = vmatpush1.bf16.xpose.msra.mxu0 0
    %2057 = vmatprep.subr.bf16.mxu0 0
    %2058 = vmatpush1.bf16.xpose.msra.mxu0 0
    %2059 = vmatprep.subr.bf16.mxu0 0
    %2060 = vmatpush1.bf16.xpose.msra.mxu0 0
    %2061 = vmatprep.subr.bf16.mxu0 0
    %2062 = vmatpush1.bf16.xpose.msra.mxu0 0
    %2063 = vmatprep.subr.bf16.mxu0 0
    %2064 = vmatpush1.bf16.xpose.msra.mxu0 0
    %2065 = vmatprep.subr.bf16.mxu0 0
    %2066 = vmatpush1.bf16.xpose.msra.mxu0 0
    %2067 = vmatprep.mubr.bf16.mxu0 0
    %2068 = vmatmul.mubr.bf16.gmra.mrb[0].mxu0 %v2030
    %v2069 = vpop.f32.mrb[0].mxu0
    %v2070 = vadd.f32 %v1543, %v2069
    %v2071 = vpop.f32.mrb[0].mxu0
    %v2072 = vpop.f32.mrb[0].mxu0
    %v2073 = vpop.f32.mrb[0].mxu0
    %2074 = vdwg.mxu0
    %v2075 = vsel %vm531, %v2020, -inf
    %2076 = vmax.xlane.f32.xlu0 %v2075
    %v2077 = vpop.xlane.xlu0 %2076
    %v2078 = vsel %vm531, %v2070, -inf
    %2079 = vmax.xlane.f32.xlu0 %v2078
    %v2080 = vpop.xlane.xlu0 %2079
    %v2081 = vsub.f32 %v2020, %v2077
    %v2082 = vsub.f32 %v2070, %v2080
    %v2083 = vmul.f32 %v2081, 1.442695
    %v2084 = vpow.pop %v2083
    %v2085 = vmul.f32 %v2082, 1.442695
    %v2086 = vpow.pop %v2085
    %v2087 = vsel %vm531, %v2084, 0.0
    %2088 = vadd.xlane.f32.xlu0 %v2087
    %v2089 = vpop.xlane.xlu0 %2088
    %v2090 = vsel %vm531, %v2086, 0.0
    %2091 = vadd.xlane.f32.xlu0 %v2090
    %v2092 = vpop.xlane.xlu0 %2091
    %v2093 = vrcp.pop %v2089
    %v2094 = vrcp.pop %v2092
    %v2095 = vmul.f32 %v2084, %v2093
    %v2096 = vmul.f32 %v2086, %v2094
    %v2097 = vpack.c.bf16 %v2095, %v2095
    %v2098 = vpack.c.bf16 %v2096, %v2096
    %2099 = vrot.lane.b32.xlu0 %v1763, 120
    %v2100 = vpop.permute.xlu0 %2099
    %v2102 = vsel %vm531, %v2097, 0
    %v2105 = vsel %vm651, %v2100, 0
    %2107 = vmatprep.subr.bf16.mxu0 0
    %2108 = vmatpush1.bf16.msra.mxu0 %v2105
    %2109 = vmatprep.subr.bf16.mxu0 0
    %2110 = vmatpush1.bf16.msra.mxu0 0
    %2111 = vmatprep.subr.bf16.mxu0 0
    %2112 = vmatpush1.bf16.msra.mxu0 0
    %2113 = vmatprep.subr.bf16.mxu0 0
    %2114 = vmatpush1.bf16.msra.mxu0 0
    %2115 = vmatprep.subr.bf16.mxu0 0
    %2116 = vmatpush1.bf16.msra.mxu0 0
    %2117 = vmatprep.subr.bf16.mxu0 0
    %2118 = vmatpush1.bf16.msra.mxu0 0
    %2119 = vmatprep.subr.bf16.mxu0 0
    %2120 = vmatpush1.bf16.msra.mxu0 0
    %2121 = vmatprep.subr.bf16.mxu0 0
    %2122 = vmatpush1.bf16.msra.mxu0 0
    %2123 = vmatprep.subr.bf16.mxu0 0
    %2124 = vmatpush1.bf16.msra.mxu0 0
    %2125 = vmatprep.subr.bf16.mxu0 0
    %2126 = vmatpush1.bf16.msra.mxu0 0
    %2127 = vmatprep.subr.bf16.mxu0 0
    %2128 = vmatpush1.bf16.msra.mxu0 0
    %2129 = vmatprep.subr.bf16.mxu0 0
    %2130 = vmatpush1.bf16.msra.mxu0 0
    %2131 = vmatprep.subr.bf16.mxu0 0
    %2132 = vmatpush1.bf16.msra.mxu0 0
    %2133 = vmatprep.subr.bf16.mxu0 0
    %2134 = vmatpush1.bf16.msra.mxu0 0
    %2135 = vmatprep.subr.bf16.mxu0 0
    %2136 = vmatpush1.bf16.msra.mxu0 0
    %2137 = vmatprep.subr.bf16.mxu0 0
    %2138 = vmatpush1.bf16.msra.mxu0 0
    %2139 = vmatprep.mubr.bf16.mxu0 0
    %2140 = vmatmul.mubr.bf16.gmra.mrb[0].mxu0 %v2102
    %v2141 = vpop.f32.mrb[0].mxu0
    %v2142 = vadd.f32 0.0, %v2141
    %v2143 = vpop.f32.mrb[0].mxu0
    %v2144 = vpop.f32.mrb[0].mxu0
    %v2145 = vpop.f32.mrb[0].mxu0
    %2146 = vdwg.mxu0
    %2147 = vrot.lane.b32.xlu0 %v1764, 120
    %v2148 = vpop.permute.xlu0 %2147
    %v2150 = vsel %vm531, %v2098, 0
    %v2153 = vsel %vm651, %v2148, 0
    %2155 = vmatprep.subr.bf16.mxu0 0
    %2156 = vmatpush1.bf16.msra.mxu0 %v2153
    %2157 = vmatprep.subr.bf16.mxu0 0
    %2158 = vmatpush1.bf16.msra.mxu0 0
    %2159 = vmatprep.subr.bf16.mxu0 0
    %2160 = vmatpush1.bf16.msra.mxu0 0
    %2161 = vmatprep.subr.bf16.mxu0 0
    %2162 = vmatpush1.bf16.msra.mxu0 0
    %2163 = vmatprep.subr.bf16.mxu0 0
    %2164 = vmatpush1.bf16.msra.mxu0 0
    %2165 = vmatprep.subr.bf16.mxu0 0
    %2166 = vmatpush1.bf16.msra.mxu0 0
    %2167 = vmatprep.subr.bf16.mxu0 0
    %2168 = vmatpush1.bf16.msra.mxu0 0
    %2169 = vmatprep.subr.bf16.mxu0 0
    %2170 = vmatpush1.bf16.msra.mxu0 0
    %2171 = vmatprep.subr.bf16.mxu0 0
    %2172 = vmatpush1.bf16.msra.mxu0 0
    %2173 = vmatprep.subr.bf16.mxu0 0
    %2174 = vmatpush1.bf16.msra.mxu0 0
    %2175 = vmatprep.subr.bf16.mxu0 0
    %2176 = vmatpush1.bf16.msra.mxu0 0
    %2177 = vmatprep.subr.bf16.mxu0 0
    %2178 = vmatpush1.bf16.msra.mxu0 0
    %2179 = vmatprep.subr.bf16.mxu0 0
    %2180 = vmatpush1.bf16.msra.mxu0 0
    %2181 = vmatprep.subr.bf16.mxu0 0
    %2182 = vmatpush1.bf16.msra.mxu0 0
    %2183 = vmatprep.subr.bf16.mxu0 0
    %2184 = vmatpush1.bf16.msra.mxu0 0
    %2185 = vmatprep.subr.bf16.mxu0 0
    %2186 = vmatpush1.bf16.msra.mxu0 0
    %2187 = vmatprep.mubr.bf16.mxu0 0
    %2188 = vmatmul.mubr.bf16.gmra.mrb[0].mxu0 %v2150
    %v2189 = vpop.f32.mrb[0].mxu0
    %v2190 = vadd.f32 0.0, %v2189
    %v2191 = vpop.f32.mrb[0].mxu0
    %v2192 = vpop.f32.mrb[0].mxu0
    %v2193 = vpop.f32.mrb[0].mxu0
    %2194 = vdwg.mxu0
    %v2195 = vpack.c.bf16 %v2190, %v2142
    %2197 = vrot.lane.b32.xlu0 %v2195, 8
    %v2198 = vpop.permute.xlu0 %2197
    %2200 = vst.msk [vmem:[#allocation2] sm:$0xff] %vm968, %v2198
    %2201 = vrot.lane.b32.xlu0 %v1615, 112
    %v2202 = vpop.permute.xlu0 %2201
    %2203 = vrot.lane.b32.xlu0 %v1693, 112
    %v2204 = vpop.permute.xlu0 %2203
    %v2206 = vsel %vm531, %v2202, 0
    %v2209 = vsel %vm531, %v2204, 0
    %2211 = vmatprep.subr.bf16.mxu0 0
    %2212 = vmatpush1.bf16.xpose.msra.mxu0 %v2209
    %2213 = vmatprep.subr.bf16.mxu0 0
    %2214 = vmatpush1.bf16.xpose.msra.mxu0 0
    %2215 = vmatprep.subr.bf16.mxu0 0
    %2216 = vmatpush1.bf16.xpose.msra.mxu0 0
    %2217 = vmatprep.subr.bf16.mxu0 0
    %2218 = vmatpush1.bf16.xpose.msra.mxu0 0
    %2219 = vmatprep.subr.bf16.mxu0 0
    %2220 = vmatpush1.bf16.xpose.msra.mxu0 0
    %2221 = vmatprep.subr.bf16.mxu0 0
    %2222 = vmatpush1.bf16.xpose.msra.mxu0 0
    %2223 = vmatprep.subr.bf16.mxu0 0
    %2224 = vmatpush1.bf16.xpose.msra.mxu0 0
    %2225 = vmatprep.subr.bf16.mxu0 0
    %2226 = vmatpush1.bf16.xpose.msra.mxu0 0
    %2227 = vmatprep.subr.bf16.mxu0 0
    %2228 = vmatpush1.bf16.xpose.msra.mxu0 0
    %2229 = vmatprep.subr.bf16.mxu0 0
    %2230 = vmatpush1.bf16.xpose.msra.mxu0 0
    %2231 = vmatprep.subr.bf16.mxu0 0
    %2232 = vmatpush1.bf16.xpose.msra.mxu0 0
    %2233 = vmatprep.subr.bf16.mxu0 0
    %2234 = vmatpush1.bf16.xpose.msra.mxu0 0
    %2235 = vmatprep.subr.bf16.mxu0 0
    %2236 = vmatpush1.bf16.xpose.msra.mxu0 0
    %2237 = vmatprep.subr.bf16.mxu0 0
    %2238 = vmatpush1.bf16.xpose.msra.mxu0 0
    %2239 = vmatprep.subr.bf16.mxu0 0
    %2240 = vmatpush1.bf16.xpose.msra.mxu0 0
    %2241 = vmatprep.subr.bf16.mxu0 0
    %2242 = vmatpush1.bf16.xpose.msra.mxu0 0
    %2243 = vmatprep.mubr.bf16.mxu0 0
    %2244 = vmatmul.mubr.bf16.gmra.mrb[0].mxu0 %v2206
    %v2245 = vpop.f32.mrb[0].mxu0
    %v2246 = vadd.f32 %v1542, %v2245
    %v2247 = vpop.f32.mrb[0].mxu0
    %v2248 = vpop.f32.mrb[0].mxu0
    %v2249 = vpop.f32.mrb[0].mxu0
    %2250 = vdwg.mxu0
    %2251 = vrot.lane.b32.xlu0 %v1616, 112
    %v2252 = vpop.permute.xlu0 %2251
    %2253 = vrot.lane.b32.xlu0 %v1694, 112
    %v2254 = vpop.permute.xlu0 %2253
    %v2256 = vsel %vm531, %v2252, 0
    %v2259 = vsel %vm531, %v2254, 0
    %2261 = vmatprep.subr.bf16.mxu0 0
    %2262 = vmatpush1.bf16.xpose.msra.mxu0 %v2259
    %2263 = vmatprep.subr.bf16.mxu0 0
    %2264 = vmatpush1.bf16.xpose.msra.mxu0 0
    %2265 = vmatprep.subr.bf16.mxu0 0
    %2266 = vmatpush1.bf16.xpose.msra.mxu0 0
    %2267 = vmatprep.subr.bf16.mxu0 0
    %2268 = vmatpush1.bf16.xpose.msra.mxu0 0
    %2269 = vmatprep.subr.bf16.mxu0 0
    %2270 = vmatpush1.bf16.xpose.msra.mxu0 0
    %2271 = vmatprep.subr.bf16.mxu0 0
    %2272 = vmatpush1.bf16.xpose.msra.mxu0 0
    %2273 = vmatprep.subr.bf16.mxu0 0
    %2274 = vmatpush1.bf16.xpose.msra.mxu0 0
    %2275 = vmatprep.subr.bf16.mxu0 0
    %2276 = vmatpush1.bf16.xpose.msra.mxu0 0
    %2277 = vmatprep.subr.bf16.mxu0 0
    %2278 = vmatpush1.bf16.xpose.msra.mxu0 0
    %2279 = vmatprep.subr.bf16.mxu0 0
    %2280 = vmatpush1.bf16.xpose.msra.mxu0 0
    %2281 = vmatprep.subr.bf16.mxu0 0
    %2282 = vmatpush1.bf16.xpose.msra.mxu0 0
    %2283 = vmatprep.subr.bf16.mxu0 0
    %2284 = vmatpush1.bf16.xpose.msra.mxu0 0
    %2285 = vmatprep.subr.bf16.mxu0 0
    %2286 = vmatpush1.bf16.xpose.msra.mxu0 0
    %2287 = vmatprep.subr.bf16.mxu0 0
    %2288 = vmatpush1.bf16.xpose.msra.mxu0 0
    %2289 = vmatprep.subr.bf16.mxu0 0
    %2290 = vmatpush1.bf16.xpose.msra.mxu0 0
    %2291 = vmatprep.subr.bf16.mxu0 0
    %2292 = vmatpush1.bf16.xpose.msra.mxu0 0
    %2293 = vmatprep.mubr.bf16.mxu0 0
    %2294 = vmatmul.mubr.bf16.gmra.mrb[0].mxu0 %v2256
    %v2295 = vpop.f32.mrb[0].mxu0
    %v2296 = vadd.f32 %v1543, %v2295
    %v2297 = vpop.f32.mrb[0].mxu0
    %v2298 = vpop.f32.mrb[0].mxu0
    %v2299 = vpop.f32.mrb[0].mxu0
    %2300 = vdwg.mxu0
    %v2301 = vsel %vm531, %v2246, -inf
    %2302 = vmax.xlane.f32.xlu0 %v2301
    %v2303 = vpop.xlane.xlu0 %2302
    %v2304 = vsel %vm531, %v2296, -inf
    %2305 = vmax.xlane.f32.xlu0 %v2304
    %v2306 = vpop.xlane.xlu0 %2305
    %v2307 = vsub.f32 %v2246, %v2303
    %v2308 = vsub.f32 %v2296, %v2306
    %v2309 = vmul.f32 %v2307, 1.442695
    %v2310 = vpow.pop %v2309
    %v2311 = vmul.f32 %v2308, 1.442695
    %v2312 = vpow.pop %v2311
    %v2313 = vsel %vm531, %v2310, 0.0
    %2314 = vadd.xlane.f32.xlu0 %v2313
    %v2315 = vpop.xlane.xlu0 %2314
    %v2316 = vsel %vm531, %v2312, 0.0
    %2317 = vadd.xlane.f32.xlu0 %v2316
    %v2318 = vpop.xlane.xlu0 %2317
    %v2319 = vrcp.pop %v2315
    %v2320 = vrcp.pop %v2318
    %v2321 = vmul.f32 %v2310, %v2319
    %v2322 = vmul.f32 %v2312, %v2320
    %v2323 = vpack.c.bf16 %v2321, %v2321
    %v2324 = vpack.c.bf16 %v2322, %v2322
    %2325 = vrot.lane.b32.xlu0 %v1763, 112
    %v2326 = vpop.permute.xlu0 %2325
    %v2328 = vsel %vm531, %v2323, 0
    %v2331 = vsel %vm651, %v2326, 0
    %2333 = vmatprep.subr.bf16.mxu0 0
    %2334 = vmatpush1.bf16.msra.mxu0 %v2331
    %2335 = vmatprep.subr.bf16.mxu0 0
    %2336 = vmatpush1.bf16.msra.mxu0 0
    %2337 = vmatprep.subr.bf16.mxu0 0
    %2338 = vmatpush1.bf16.msra.mxu0 0
    %2339 = vmatprep.subr.bf16.mxu0 0
    %2340 = vmatpush1.bf16.msra.mxu0 0
    %2341 = vmatprep.subr.bf16.mxu0 0
    %2342 = vmatpush1.bf16.msra.mxu0 0
    %2343 = vmatprep.subr.bf16.mxu0 0
    %2344 = vmatpush1.bf16.msra.mxu0 0
    %2345 = vmatprep.subr.bf16.mxu0 0
    %2346 = vmatpush1.bf16.msra.mxu0 0
    %2347 = vmatprep.subr.bf16.mxu0 0
    %2348 = vmatpush1.bf16.msra.mxu0 0
    %2349 = vmatprep.subr.bf16.mxu0 0
    %2350 = vmatpush1.bf16.msra.mxu0 0
    %2351 = vmatprep.subr.bf16.mxu0 0
    %2352 = vmatpush1.bf16.msra.mxu0 0
    %2353 = vmatprep.subr.bf16.mxu0 0
    %2354 = vmatpush1.bf16.msra.mxu0 0
    %2355 = vmatprep.subr.bf16.mxu0 0
    %2356 = vmatpush1.bf16.msra.mxu0 0
    %2357 = vmatprep.subr.bf16.mxu0 0
    %2358 = vmatpush1.bf16.msra.mxu0 0
    %2359 = vmatprep.subr.bf16.mxu0 0
    %2360 = vmatpush1.bf16.msra.mxu0 0
    %2361 = vmatprep.subr.bf16.mxu0 0
    %2362 = vmatpush1.bf16.msra.mxu0 0
    %2363 = vmatprep.subr.bf16.mxu0 0
    %2364 = vmatpush1.bf16.msra.mxu0 0
    %2365 = vmatprep.mubr.bf16.mxu0 0
    %2366 = vmatmul.mubr.bf16.gmra.mrb[0].mxu0 %v2328
    %v2367 = vpop.f32.mrb[0].mxu0
    %v2368 = vadd.f32 0.0, %v2367
    %v2369 = vpop.f32.mrb[0].mxu0
    %v2370 = vpop.f32.mrb[0].mxu0
    %v2371 = vpop.f32.mrb[0].mxu0
    %2372 = vdwg.mxu0
    %2373 = vrot.lane.b32.xlu0 %v1764, 112
    %v2374 = vpop.permute.xlu0 %2373
    %v2376 = vsel %vm531, %v2324, 0
    %v2379 = vsel %vm651, %v2374, 0
    %2381 = vmatprep.subr.bf16.mxu0 0
    %2382 = vmatpush1.bf16.msra.mxu0 %v2379
    %2383 = vmatprep.subr.bf16.mxu0 0
    %2384 = vmatpush1.bf16.msra.mxu0 0
    %2385 = vmatprep.subr.bf16.mxu0 0
    %2386 = vmatpush1.bf16.msra.mxu0 0
    %2387 = vmatprep.subr.bf16.mxu0 0
    %2388 = vmatpush1.bf16.msra.mxu0 0
    %2389 = vmatprep.subr.bf16.mxu0 0
    %2390 = vmatpush1.bf16.msra.mxu0 0
    %2391 = vmatprep.subr.bf16.mxu0 0
    %2392 = vmatpush1.bf16.msra.mxu0 0
    %2393 = vmatprep.subr.bf16.mxu0 0
    %2394 = vmatpush1.bf16.msra.mxu0 0
    %2395 = vmatprep.subr.bf16.mxu0 0
    %2396 = vmatpush1.bf16.msra.mxu0 0
    %2397 = vmatprep.subr.bf16.mxu0 0
    %2398 = vmatpush1.bf16.msra.mxu0 0
    %2399 = vmatprep.subr.bf16.mxu0 0
    %2400 = vmatpush1.bf16.msra.mxu0 0
    %2401 = vmatprep.subr.bf16.mxu0 0
    %2402 = vmatpush1.bf16.msra.mxu0 0
    %2403 = vmatprep.subr.bf16.mxu0 0
    %2404 = vmatpush1.bf16.msra.mxu0 0
    %2405 = vmatprep.subr.bf16.mxu0 0
    %2406 = vmatpush1.bf16.msra.mxu0 0
    %2407 = vmatprep.subr.bf16.mxu0 0
    %2408 = vmatpush1.bf16.msra.mxu0 0
    %2409 = vmatprep.subr.bf16.mxu0 0
    %2410 = vmatpush1.bf16.msra.mxu0 0
    %2411 = vmatprep.subr.bf16.mxu0 0
    %2412 = vmatpush1.bf16.msra.mxu0 0
    %2413 = vmatprep.mubr.bf16.mxu0 0
    %2414 = vmatmul.mubr.bf16.gmra.mrb[0].mxu0 %v2376
    %v2415 = vpop.f32.mrb[0].mxu0
    %v2416 = vadd.f32 0.0, %v2415
    %v2417 = vpop.f32.mrb[0].mxu0
    %v2418 = vpop.f32.mrb[0].mxu0
    %v2419 = vpop.f32.mrb[0].mxu0
    %2420 = vdwg.mxu0
    %v2421 = vpack.c.bf16 %v2416, %v2368
    %2423 = vrot.lane.b32.xlu0 %v2421, 16
    %v2424 = vpop.permute.xlu0 %2423
    %2426 = vst.msk [vmem:[#allocation2] sm:$0xff] %vm1195, %v2424
    %2427 = vrot.lane.b32.xlu0 %v1615, 104
    %v2428 = vpop.permute.xlu0 %2427
    %2429 = vrot.lane.b32.xlu0 %v1693, 104
    %v2430 = vpop.permute.xlu0 %2429
    %v2432 = vsel %vm531, %v2428, 0
    %v2435 = vsel %vm531, %v2430, 0
    %2437 = vmatprep.subr.bf16.mxu0 0
    %2438 = vmatpush1.bf16.xpose.msra.mxu0 %v2435
    %2439 = vmatprep.subr.bf16.mxu0 0
    %2440 = vmatpush1.bf16.xpose.msra.mxu0 0
    %2441 = vmatprep.subr.bf16.mxu0 0
    %2442 = vmatpush1.bf16.xpose.msra.mxu0 0
    %2443 = vmatprep.subr.bf16.mxu0 0
    %2444 = vmatpush1.bf16.xpose.msra.mxu0 0
    %2445 = vmatprep.subr.bf16.mxu0 0
    %2446 = vmatpush1.bf16.xpose.msra.mxu0 0
    %2447 = vmatprep.subr.bf16.mxu0 0
    %2448 = vmatpush1.bf16.xpose.msra.mxu0 0
    %2449 = vmatprep.subr.bf16.mxu0 0
    %2450 = vmatpush1.bf16.xpose.msra.mxu0 0
    %2451 = vmatprep.subr.bf16.mxu0 0
    %2452 = vmatpush1.bf16.xpose.msra.mxu0 0
    %2453 = vmatprep.subr.bf16.mxu0 0
    %2454 = vmatpush1.bf16.xpose.msra.mxu0 0
    %2455 = vmatprep.subr.bf16.mxu0 0
    %2456 = vmatpush1.bf16.xpose.msra.mxu0 0
    %2457 = vmatprep.subr.bf16.mxu0 0
    %2458 = vmatpush1.bf16.xpose.msra.mxu0 0
    %2459 = vmatprep.subr.bf16.mxu0 0
    %2460 = vmatpush1.bf16.xpose.msra.mxu0 0
    %2461 = vmatprep.subr.bf16.mxu0 0
    %2462 = vmatpush1.bf16.xpose.msra.mxu0 0
    %2463 = vmatprep.subr.bf16.mxu0 0
    %2464 = vmatpush1.bf16.xpose.msra.mxu0 0
    %2465 = vmatprep.subr.bf16.mxu0 0
    %2466 = vmatpush1.bf16.xpose.msra.mxu0 0
    %2467 = vmatprep.subr.bf16.mxu0 0
    %2468 = vmatpush1.bf16.xpose.msra.mxu0 0
    %2469 = vmatprep.mubr.bf16.mxu0 0
    %2470 = vmatmul.mubr.bf16.gmra.mrb[0].mxu0 %v2432
    %v2471 = vpop.f32.mrb[0].mxu0
    %v2472 = vadd.f32 %v1542, %v2471
    %v2473 = vpop.f32.mrb[0].mxu0
    %v2474 = vpop.f32.mrb[0].mxu0
    %v2475 = vpop.f32.mrb[0].mxu0
    %2476 = vdwg.mxu0
    %2477 = vrot.lane.b32.xlu0 %v1616, 104
    %v2478 = vpop.permute.xlu0 %2477
    %2479 = vrot.lane.b32.xlu0 %v1694, 104
    %v2480 = vpop.permute.xlu0 %2479
    %v2482 = vsel %vm531, %v2478, 0
    %v2485 = vsel %vm531, %v2480, 0
    %2487 = vmatprep.subr.bf16.mxu0 0
    %2488 = vmatpush1.bf16.xpose.msra.mxu0 %v2485
    %2489 = vmatprep.subr.bf16.mxu0 0
    %2490 = vmatpush1.bf16.xpose.msra.mxu0 0
    %2491 = vmatprep.subr.bf16.mxu0 0
    %2492 = vmatpush1.bf16.xpose.msra.mxu0 0
    %2493 = vmatprep.subr.bf16.mxu0 0
    %2494 = vmatpush1.bf16.xpose.msra.mxu0 0
    %2495 = vmatprep.subr.bf16.mxu0 0
    %2496 = vmatpush1.bf16.xpose.msra.mxu0 0
    %2497 = vmatprep.subr.bf16.mxu0 0
    %2498 = vmatpush1.bf16.xpose.msra.mxu0 0
    %2499 = vmatprep.subr.bf16.mxu0 0
    %2500 = vmatpush1.bf16.xpose.msra.mxu0 0
    %2501 = vmatprep.subr.bf16.mxu0 0
    %2502 = vmatpush1.bf16.xpose.msra.mxu0 0
    %2503 = vmatprep.subr.bf16.mxu0 0
    %2504 = vmatpush1.bf16.xpose.msra.mxu0 0
    %2505 = vmatprep.subr.bf16.mxu0 0
    %2506 = vmatpush1.bf16.xpose.msra.mxu0 0
    %2507 = vmatprep.subr.bf16.mxu0 0
    %2508 = vmatpush1.bf16.xpose.msra.mxu0 0
    %2509 = vmatprep.subr.bf16.mxu0 0
    %2510 = vmatpush1.bf16.xpose.msra.mxu0 0
    %2511 = vmatprep.subr.bf16.mxu0 0
    %2512 = vmatpush1.bf16.xpose.msra.mxu0 0
    %2513 = vmatprep.subr.bf16.mxu0 0
    %2514 = vmatpush1.bf16.xpose.msra.mxu0 0
    %2515 = vmatprep.subr.bf16.mxu0 0
    %2516 = vmatpush1.bf16.xpose.msra.mxu0 0
    %2517 = vmatprep.subr.bf16.mxu0 0
    %2518 = vmatpush1.bf16.xpose.msra.mxu0 0
    %2519 = vmatprep.mubr.bf16.mxu0 0
    %2520 = vmatmul.mubr.bf16.gmra.mrb[0].mxu0 %v2482
    %v2521 = vpop.f32.mrb[0].mxu0
    %v2522 = vadd.f32 %v1543, %v2521
    %v2523 = vpop.f32.mrb[0].mxu0
    %v2524 = vpop.f32.mrb[0].mxu0
    %v2525 = vpop.f32.mrb[0].mxu0
    %2526 = vdwg.mxu0
    %v2527 = vsel %vm531, %v2472, -inf
    %2528 = vmax.xlane.f32.xlu0 %v2527
    %v2529 = vpop.xlane.xlu0 %2528
    %v2530 = vsel %vm531, %v2522, -inf
    %2531 = vmax.xlane.f32.xlu0 %v2530
    %v2532 = vpop.xlane.xlu0 %2531
    %v2533 = vsub.f32 %v2472, %v2529
    %v2534 = vsub.f32 %v2522, %v2532
    %v2535 = vmul.f32 %v2533, 1.442695
    %v2536 = vpow.pop %v2535
    %v2537 = vmul.f32 %v2534, 1.442695
    %v2538 = vpow.pop %v2537
    %v2539 = vsel %vm531, %v2536, 0.0
    %2540 = vadd.xlane.f32.xlu0 %v2539
    %v2541 = vpop.xlane.xlu0 %2540
    %v2542 = vsel %vm531, %v2538, 0.0
    %2543 = vadd.xlane.f32.xlu0 %v2542
    %v2544 = vpop.xlane.xlu0 %2543
    %v2545 = vrcp.pop %v2541
    %v2546 = vrcp.pop %v2544
    %v2547 = vmul.f32 %v2536, %v2545
    %v2548 = vmul.f32 %v2538, %v2546
    %v2549 = vpack.c.bf16 %v2547, %v2547
    %v2550 = vpack.c.bf16 %v2548, %v2548
    %2551 = vrot.lane.b32.xlu0 %v1763, 104
    %v2552 = vpop.permute.xlu0 %2551
    %v2554 = vsel %vm531, %v2549, 0
    %v2557 = vsel %vm651, %v2552, 0
    %2559 = vmatprep.subr.bf16.mxu0 0
    %2560 = vmatpush1.bf16.msra.mxu0 %v2557
    %2561 = vmatprep.subr.bf16.mxu0 0
    %2562 = vmatpush1.bf16.msra.mxu0 0
    %2563 = vmatprep.subr.bf16.mxu0 0
    %2564 = vmatpush1.bf16.msra.mxu0 0
    %2565 = vmatprep.subr.bf16.mxu0 0
    %2566 = vmatpush1.bf16.msra.mxu0 0
    %2567 = vmatprep.subr.bf16.mxu0 0
    %2568 = vmatpush1.bf16.msra.mxu0 0
    %2569 = vmatprep.subr.bf16.mxu0 0
    %2570 = vmatpush1.bf16.msra.mxu0 0
    %2571 = vmatprep.subr.bf16.mxu0 0
    %2572 = vmatpush1.bf16.msra.mxu0 0
    %2573 = vmatprep.subr.bf16.mxu0 0
    %2574 = vmatpush1.bf16.msra.mxu0 0
    %2575 = vmatprep.subr.bf16.mxu0 0
    %2576 = vmatpush1.bf16.msra.mxu0 0
    %2577 = vmatprep.subr.bf16.mxu0 0
    %2578 = vmatpush1.bf16.msra.mxu0 0
    %2579 = vmatprep.subr.bf16.mxu0 0
    %2580 = vmatpush1.bf16.msra.mxu0 0
    %2581 = vmatprep.subr.bf16.mxu0 0
    %2582 = vmatpush1.bf16.msra.mxu0 0
    %2583 = vmatprep.subr.bf16.mxu0 0
    %2584 = vmatpush1.bf16.msra.mxu0 0
    %2585 = vmatprep.subr.bf16.mxu0 0
    %2586 = vmatpush1.bf16.msra.mxu0 0
    %2587 = vmatprep.subr.bf16.mxu0 0
    %2588 = vmatpush1.bf16.msra.mxu0 0
    %2589 = vmatprep.subr.bf16.mxu0 0
    %2590 = vmatpush1.bf16.msra.mxu0 0
    %2591 = vmatprep.mubr.bf16.mxu0 0
    %2592 = vmatmul.mubr.bf16.gmra.mrb[0].mxu0 %v2554
    %v2593 = vpop.f32.mrb[0].mxu0
    %v2594 = vadd.f32 0.0, %v2593
    %v2595 = vpop.f32.mrb[0].mxu0
    %v2596 = vpop.f32.mrb[0].mxu0
    %v2597 = vpop.f32.mrb[0].mxu0
    %2598 = vdwg.mxu0
    %2599 = vrot.lane.b32.xlu0 %v1764, 104
    %v2600 = vpop.permute.xlu0 %2599
    %v2602 = vsel %vm531, %v2550, 0
    %v2605 = vsel %vm651, %v2600, 0
    %2607 = vmatprep.subr.bf16.mxu0 0
    %2608 = vmatpush1.bf16.msra.mxu0 %v2605
    %2609 = vmatprep.subr.bf16.mxu0 0
    %2610 = vmatpush1.bf16.msra.mxu0 0
    %2611 = vmatprep.subr.bf16.mxu0 0
    %2612 = vmatpush1.bf16.msra.mxu0 0
    %2613 = vmatprep.subr.bf16.mxu0 0
    %2614 = vmatpush1.bf16.msra.mxu0 0
    %2615 = vmatprep.subr.bf16.mxu0 0
    %2616 = vmatpush1.bf16.msra.mxu0 0
    %2617 = vmatprep.subr.bf16.mxu0 0
    %2618 = vmatpush1.bf16.msra.mxu0 0
    %2619 = vmatprep.subr.bf16.mxu0 0
    %2620 = vmatpush1.bf16.msra.mxu0 0
    %2621 = vmatprep.subr.bf16.mxu0 0
    %2622 = vmatpush1.bf16.msra.mxu0 0
    %2623 = vmatprep.subr.bf16.mxu0 0
    %2624 = vmatpush1.bf16.msra.mxu0 0
    %2625 = vmatprep.subr.bf16.mxu0 0
    %2626 = vmatpush1.bf16.msra.mxu0 0
    %2627 = vmatprep.subr.bf16.mxu0 0
    %2628 = vmatpush1.bf16.msra.mxu0 0
    %2629 = vmatprep.subr.bf16.mxu0 0
    %2630 = vmatpush1.bf16.msra.mxu0 0
    %2631 = vmatprep.subr.bf16.mxu0 0
    %2632 = vmatpush1.bf16.msra.mxu0 0
    %2633 = vmatprep.subr.bf16.mxu0 0
    %2634 = vmatpush1.bf16.msra.mxu0 0
    %2635 = vmatprep.subr.bf16.mxu0 0
    %2636 = vmatpush1.bf16.msra.mxu0 0
    %2637 = vmatprep.subr.bf16.mxu0 0
    %2638 = vmatpush1.bf16.msra.mxu0 0
    %2639 = vmatprep.mubr.bf16.mxu0 0
    %2640 = vmatmul.mubr.bf16.gmra.mrb[0].mxu0 %v2602
    %v2641 = vpop.f32.mrb[0].mxu0
    %v2642 = vadd.f32 0.0, %v2641
    %v2643 = vpop.f32.mrb[0].mxu0
    %v2644 = vpop.f32.mrb[0].mxu0
    %v2645 = vpop.f32.mrb[0].mxu0
    %2646 = vdwg.mxu0
    %v2647 = vpack.c.bf16 %v2642, %v2594
    %2649 = vrot.lane.b32.xlu0 %v2647, 24
    %v2650 = vpop.permute.xlu0 %2649
    %2652 = vst.msk [vmem:[#allocation2] sm:$0xff] %vm1422, %v2650
    %v2653 = vld [vmem:[#allocation2] sm:$0xff]
    %v2654 = vld [vmem:[%s41] sm:$0xf]
    %v2655 = vld [vmem:[%s41 + $0x4] sm:$0xf]
    %v2656 = vld [vmem:[%s41 + $0x8] sm:$0xf]
    %v2657 = vld [vmem:[%s41 + $0xc] sm:$0xf]
    %v2658 = vld [vmem:[%s43] sm:$0x1]
    %v2660 = vlaneseq
    %v2661 = vshrl.u32 %v2660, 7
    %v2662 = vsub.s32 0, %v2661
    %v2663 = vrot.slane %v2658, %v2662
    %v2669 = vunpack.c.l.b16 %v2654
    %v2670 = vunpack.c.l.b16 %v2655
    %v2671 = vunpack.c.l.b16 %v2656
    %v2672 = vunpack.c.l.b16 %v2657
    %v2673 = vpack.c.b16 %v2670, %v2669
    %v2674 = vpack.c.b16 %v2672, %v2671
    %v2678 = vsel %vm340, %v2653, 0
    %2680 = vmatprep.subr.bf16.mxu0 0
    %2681 = vmatpush1.bf16.msra.mxu0 %v2673
    %2682 = vmatprep.subr.bf16.mxu0 0
    %2683 = vmatpush1.bf16.msra.mxu0 %v2674
    %2684 = vmatprep.subr.bf16.mxu0 0
    %2685 = vmatpush1.bf16.msra.mxu0 0
    %2686 = vmatprep.subr.bf16.mxu0 0
    %2687 = vmatpush1.bf16.msra.mxu0 0
    %2688 = vmatprep.subr.bf16.mxu0 0
    %2689 = vmatpush1.bf16.msra.mxu0 0
    %2690 = vmatprep.subr.bf16.mxu0 0
    %2691 = vmatpush1.bf16.msra.mxu0 0
    %2692 = vmatprep.subr.bf16.mxu0 0
    %2693 = vmatpush1.bf16.msra.mxu0 0
    %2694 = vmatprep.subr.bf16.mxu0 0
    %2695 = vmatpush1.bf16.msra.mxu0 0
    %2696 = vmatprep.subr.bf16.mxu0 0
    %2697 = vmatpush1.bf16.msra.mxu0 0
    %2698 = vmatprep.subr.bf16.mxu0 0
    %2699 = vmatpush1.bf16.msra.mxu0 0
    %2700 = vmatprep.subr.bf16.mxu0 0
    %2701 = vmatpush1.bf16.msra.mxu0 0
    %2702 = vmatprep.subr.bf16.mxu0 0
    %2703 = vmatpush1.bf16.msra.mxu0 0
    %2704 = vmatprep.subr.bf16.mxu0 0
    %2705 = vmatpush1.bf16.msra.mxu0 0
    %2706 = vmatprep.subr.bf16.mxu0 0
    %2707 = vmatpush1.bf16.msra.mxu0 0
    %2708 = vmatprep.subr.bf16.mxu0 0
    %2709 = vmatpush1.bf16.msra.mxu0 0
    %2710 = vmatprep.subr.bf16.mxu0 0
    %2711 = vmatpush1.bf16.msra.mxu0 0
    %2712 = vmatprep.mubr.bf16.mxu0 0
    %2713 = vmatmul.mubr.bf16.gmra.mrb[0].mxu0 %v2678
    %v2714 = vpop.f32.mrb[0].mxu0
    %v2715 = vadd.f32 %v2663, %v2714
    %v2716 = vpop.f32.mrb[0].mxu0
    %v2717 = vpop.f32.mrb[0].mxu0
    %v2718 = vadd.f32 %v2663, %v2717
    %v2719 = vpop.f32.mrb[0].mxu0
    %2720 = vdwg.mxu0
    %v2721 = vadd.f32 %v1537, %v2715
    %v2722 = vadd.f32 %v1538, %v2718
    %v2723 = vsel %vm340, %v2721, 0.0
    %2724 = vadd.xlane.f32.xlu0 %v2723
    %v2725 = vpop.xlane.xlu0 %2724
    %v2726 = vsel %vm340, %v2722, 0.0
    %2727 = vadd.xlane.f32.xlu0 %v2726
    %v2728 = vpop.xlane.xlu0 %2727
    %v2729 = vmul.f32 %v2725, %v1500
    %v2730 = vmul.f32 %v2728, %v1500
    %v2731 = vsub.f32 %v2721, %v2729
    %v2732 = vsub.f32 %v2722, %v2730
    %v2733 = vmul.f32 %v2731, %v2731
    %v2734 = vmul.f32 %v2732, %v2732
    %v2735 = vsel %vm340, %v2733, 0.0
    %2736 = vadd.xlane.f32.xlu0 %v2735
    %v2737 = vpop.xlane.xlu0 %2736
    %v2738 = vsel %vm340, %v2734, 0.0
    %2739 = vadd.xlane.f32.xlu0 %v2738
    %v2740 = vpop.xlane.xlu0 %2739
    %v2741 = vmul.f32 %v2737, %v1500
    %v2742 = vmul.f32 %v2740, %v1500
    %v2743 = vadd.f32 %v2741, 1e-05
    %v2744 = vadd.f32 %v2742, 1e-05
    %v2745 = vrsqrt.pop %v2743
    %v2746 = vrsqrt.pop %v2744
    %v2747 = vmul.f32 %v2731, %v2745
    %v2748 = vmul.f32 %v2732, %v2746
    %v2749 = vld [vmem:[#allocation24] sm:$0x1]
    %v2751 = vlaneseq
    %v2752 = vshrl.u32 %v2751, 7
    %v2753 = vsub.s32 0, %v2752
    %v2754 = vrot.slane %v2749, %v2753
    %v2756 = vmul.f32 %v2747, %v2754
    %v2757 = vmul.f32 %v2748, %v2754
    %v2758 = vld [vmem:[%s47] sm:$0x1]
    %v2760 = vlaneseq
    %v2761 = vshrl.u32 %v2760, 7
    %v2762 = vsub.s32 0, %v2761
    %v2763 = vrot.slane %v2758, %v2762
    %v2765 = vadd.f32 %v2756, %v2763
    %v2766 = vadd.f32 %v2757, %v2763
    %v2767 = vpack.c.bf16 %v2766, %v2765
    %v2768 = vld [vmem:[%s49] sm:$0xf]
    %v2769 = vld [vmem:[%s49 + $0x4] sm:$0xf]
    %v2770 = vld [vmem:[%s49 + $0x8] sm:$0xf]
    %v2771 = vld [vmem:[%s49 + $0xc] sm:$0xf]
    %v2772 = vld [vmem:[%s51] sm:$0x1]
    %v2774 = vlaneseq
    %v2775 = vshrl.u32 %v2774, 7
    %v2776 = vsub.s32 0, %v2775
    %v2777 = vrot.slane %v2772, %v2776
    %v2783 = vunpack.c.l.b16 %v2768
    %v2784 = vunpack.c.l.b16 %v2769
    %v2785 = vunpack.c.l.b16 %v2770
    %v2786 = vunpack.c.l.b16 %v2771
    %v2787 = vpack.c.b16 %v2784, %v2783
    %v2788 = vpack.c.b16 %v2786, %v2785
    %v2792 = vsel %vm340, %v2767, 0
    %2794 = vmatprep.subr.bf16.mxu0 0
    %2795 = vmatpush1.bf16.msra.mxu0 %v2787
    %2796 = vmatprep.subr.bf16.mxu0 0
    %2797 = vmatpush1.bf16.msra.mxu0 %v2788
    %2798 = vmatprep.subr.bf16.mxu0 0
    %2799 = vmatpush1.bf16.msra.mxu0 0
    %2800 = vmatprep.subr.bf16.mxu0 0
    %2801 = vmatpush1.bf16.msra.mxu0 0
    %2802 = vmatprep.subr.bf16.mxu0 0
    %2803 = vmatpush1.bf16.msra.mxu0 0
    %2804 = vmatprep.subr.bf16.mxu0 0
    %2805 = vmatpush1.bf16.msra.mxu0 0
    %2806 = vmatprep.subr.bf16.mxu0 0
    %2807 = vmatpush1.bf16.msra.mxu0 0
    %2808 = vmatprep.subr.bf16.mxu0 0
    %2809 = vmatpush1.bf16.msra.mxu0 0
    %2810 = vmatprep.subr.bf16.mxu0 0
    %2811 = vmatpush1.bf16.msra.mxu0 0
    %2812 = vmatprep.subr.bf16.mxu0 0
    %2813 = vmatpush1.bf16.msra.mxu0 0
    %2814 = vmatprep.subr.bf16.mxu0 0
    %2815 = vmatpush1.bf16.msra.mxu0 0
    %2816 = vmatprep.subr.bf16.mxu0 0
    %2817 = vmatpush1.bf16.msra.mxu0 0
    %2818 = vmatprep.subr.bf16.mxu0 0
    %2819 = vmatpush1.bf16.msra.mxu0 0
    %2820 = vmatprep.subr.bf16.mxu0 0
    %2821 = vmatpush1.bf16.msra.mxu0 0
    %2822 = vmatprep.subr.bf16.mxu0 0
    %2823 = vmatpush1.bf16.msra.mxu0 0
    %2824 = vmatprep.subr.bf16.mxu0 0
    %2825 = vmatpush1.bf16.msra.mxu0 0
    %2826 = vmatprep.mubr.bf16.mxu0 0
    %2827 = vmatmul.mubr.bf16.gmra.mrb[0].mxu0 %v2792
    %v2828 = vpop.f32.mrb[0].mxu0
    %v2829 = vadd.f32 %v2777, %v2828
    %v2830 = vpop.f32.mrb[0].mxu0
    %v2831 = vpop.f32.mrb[0].mxu0
    %v2832 = vadd.f32 %v2777, %v2831
    %v2833 = vpop.f32.mrb[0].mxu0
    %2834 = vdwg.mxu0
    %v2835 = vmax.f32 %v2829, 0.0
    %v2836 = vmax.f32 %v2832, 0.0
    %v2837 = vpack.c.bf16 %v2836, %v2835
    %v2838 = vld [vmem:[%s53] sm:$0xf]
    %v2839 = vld [vmem:[%s53 + $0x4] sm:$0xf]
    %v2840 = vld [vmem:[%s53 + $0x8] sm:$0xf]
    %v2841 = vld [vmem:[%s53 + $0xc] sm:$0xf]
    %v2842 = vld [vmem:[%s53 + $0x10] sm:$0xf]
    %v2843 = vld [vmem:[%s53 + $0x14] sm:$0xf]
    %v2844 = vld [vmem:[%s53 + $0x18] sm:$0xf]
    %v2845 = vld [vmem:[%s53 + $0x1c] sm:$0xf]
    %v2846 = vld [vmem:[%s55] sm:$0x1]
    %v2848 = vlaneseq
    %v2849 = vshrl.u32 %v2848, 7
    %v2850 = vsub.s32 0, %v2849
    %v2851 = vrot.slane %v2846, %v2850
    %v2861 = vunpack.c.l.b16 %v2838
    %v2862 = vunpack.c.l.b16 %v2839
    %v2863 = vunpack.c.l.b16 %v2840
    %v2864 = vunpack.c.l.b16 %v2841
    %v2865 = vunpack.c.l.b16 %v2842
    %v2866 = vunpack.c.l.b16 %v2843
    %v2867 = vunpack.c.l.b16 %v2844
    %v2868 = vunpack.c.l.b16 %v2845
    %v2869 = vpack.c.b16 %v2862, %v2861
    %v2870 = vpack.c.b16 %v2864, %v2863
    %v2871 = vpack.c.b16 %v2866, %v2865
    %v2872 = vpack.c.b16 %v2868, %v2867
    %vm2877 = vcmask 523264
    %v2879 = vsel %vm2877, %v2837, 0
    %2881 = vmatprep.subr.bf16.mxu0 0
    %2882 = vmatpush1.bf16.msra.mxu0 %v2869
    %2883 = vmatprep.subr.bf16.mxu0 0
    %2884 = vmatpush1.bf16.msra.mxu0 %v2870
    %2885 = vmatprep.subr.bf16.mxu0 0
    %2886 = vmatpush1.bf16.msra.mxu0 %v2871
    %2887 = vmatprep.subr.bf16.mxu0 0
    %2888 = vmatpush1.bf16.msra.mxu0 %v2872
    %2889 = vmatprep.subr.bf16.mxu0 0
    %2890 = vmatpush1.bf16.msra.mxu0 0
    %2891 = vmatprep.subr.bf16.mxu0 0
    %2892 = vmatpush1.bf16.msra.mxu0 0
    %2893 = vmatprep.subr.bf16.mxu0 0
    %2894 = vmatpush1.bf16.msra.mxu0 0
    %2895 = vmatprep.subr.bf16.mxu0 0
    %2896 = vmatpush1.bf16.msra.mxu0 0
    %2897 = vmatprep.subr.bf16.mxu0 0
    %2898 = vmatpush1.bf16.msra.mxu0 0
    %2899 = vmatprep.subr.bf16.mxu0 0
    %2900 = vmatpush1.bf16.msra.mxu0 0
    %2901 = vmatprep.subr.bf16.mxu0 0
    %2902 = vmatpush1.bf16.msra.mxu0 0
    %2903 = vmatprep.subr.bf16.mxu0 0
    %2904 = vmatpush1.bf16.msra.mxu0 0
    %2905 = vmatprep.subr.bf16.mxu0 0
    %2906 = vmatpush1.bf16.msra.mxu0 0
    %2907 = vmatprep.subr.bf16.mxu0 0
    %2908 = vmatpush1.bf16.msra.mxu0 0
    %2909 = vmatprep.subr.bf16.mxu0 0
    %2910 = vmatpush1.bf16.msra.mxu0 0
    %2911 = vmatprep.subr.bf16.mxu0 0
    %2912 = vmatpush1.bf16.msra.mxu0 0
    %2913 = vmatprep.mubr.bf16.mxu0 0
    %2914 = vmatmul.mubr.bf16.gmra.mrb[0].mxu0 %v2879
    %v2915 = vpop.f32.mrb[0].mxu0
    %v2916 = vadd.f32 %v2851, %v2915
    %v2917 = vpop.f32.mrb[0].mxu0
    %v2918 = vpop.f32.mrb[0].mxu0
    %v2919 = vadd.f32 %v2851, %v2918
    %v2920 = vpop.f32.mrb[0].mxu0
    %2921 = vdwg.mxu0
    %v2922 = vadd.f32 %v2916, %v2765
    %v2923 = vadd.f32 %v2919, %v2766
    %v2924 = vsel %vm340, %v2922, 0.0
    %2925 = vadd.xlane.f32.xlu0 %v2924
    %v2926 = vpop.xlane.xlu0 %2925
    %v2927 = vsel %vm340, %v2923, 0.0
    %2928 = vadd.xlane.f32.xlu0 %v2927
    %v2929 = vpop.xlane.xlu0 %2928
    %v2930 = vmul.f32 %v2926, %v1500
    %v2931 = vmul.f32 %v2929, %v1500
    %v2932 = vsub.f32 %v2922, %v2930
    %v2933 = vsub.f32 %v2923, %v2931
    %v2934 = vmul.f32 %v2932, %v2932
    %v2935 = vmul.f32 %v2933, %v2933
    %v2936 = vsel %vm340, %v2934, 0.0
    %2937 = vadd.xlane.f32.xlu0 %v2936
    %v2938 = vpop.xlane.xlu0 %2937
    %v2939 = vsel %vm340, %v2935, 0.0
    %2940 = vadd.xlane.f32.xlu0 %v2939
    %v2941 = vpop.xlane.xlu0 %2940
    %v2942 = vmul.f32 %v2938, %v1500
    %v2943 = vmul.f32 %v2941, %v1500
    %v2944 = vadd.f32 %v2942, 1e-05
    %v2945 = vadd.f32 %v2943, 1e-05
    %v2946 = vrsqrt.pop %v2944
    %v2947 = vrsqrt.pop %v2945
    %v2948 = vmul.f32 %v2932, %v2946
    %v2949 = vmul.f32 %v2933, %v2947
    %v2950 = vld [vmem:[%s57] sm:$0x1]
    %v2952 = vlaneseq
    %v2953 = vshrl.u32 %v2952, 7
    %v2954 = vsub.s32 0, %v2953
    %v2955 = vrot.slane %v2950, %v2954
    %v2957 = vmul.f32 %v2948, %v2955
    %v2958 = vmul.f32 %v2949, %v2955
    %v2959 = vld [vmem:[%s59] sm:$0x1]
    %v2961 = vlaneseq
    %v2962 = vshrl.u32 %v2961, 7
    %v2963 = vsub.s32 0, %v2962
    %v2964 = vrot.slane %v2959, %v2963
    %v2966 = vadd.f32 %v2957, %v2964
    %v2967 = vadd.f32 %v2958, %v2964
    %v2968 = vpack.c.bf16 %v2966, %v2966
    %v2969 = vpack.c.bf16 %v2967, %v2967
    %vm2970 = vcmask 257024
    %2971 = vst.msk [vmem:[#allocation26] sm:$0xf] %vm2970, %v2968
    %2972 = vst.msk [vmem:[#allocation26 + $0x4] sm:$0xf] %vm2970, %v2969
    // Predicated region
    $region178: #{tpu_custom_call.1} parent=1 // pred_check
      _
    $region179: #{tpu_custom_call.1} parent=1 // pred_check_branch
      %2974 = sbr.rel (0) target = $region181
    $region180: #{tpu_custom_call.1} parent=1 // pred_region
      %s2976 = ssub.s32 128, 128
      %2977 = vsyncadd [#allocation5], %s2976
      %s2978 = sshll.u32 [#allocation26], 4
      %s2979 = int_to_ptr.vmem [resolvable:$true] %s2978
      %2984 = dma.vmem_to_hbm [thread:$0]  %s2979, 128, %s61, [#allocation5], 64, 64, 4
    $region181: #{tpu_custom_call.1} parent=1 // pred_fallthru
      _
    // Predicated region
    $region182: #{tpu_custom_call.1} parent=1 // pred_check
      _
    $region183: #{tpu_custom_call.1} parent=1 // pred_check_branch
      %2986 = sbr.rel (0) target = $region185
    $region184: #{tpu_custom_call.1} parent=1 // pred_region
      %2987 = dma.done [#allocation5], 128
    $region185: #{tpu_custom_call.1} parent=1 // pred_fallthru
      _
    %2988 = vsyncpa [#allocation4], 1
    %2989 = vsyncpa [#allocation7], 1
    %2990 = vsyncpa [#allocation10], 1
    %2991 = vsyncpa [#allocation13], 1
    %2992 = vsyncpa [#allocation16], 1
    %2993 = vsyncpa [#allocation19], 1
    %2994 = vsyncpa [#allocation22], 1
    %2995 = vsyncpa [#allocation25], 1
    %2996 = vsyncpa [#allocation5], 1

</llo_original>
